<compile_context>
chip_gen: v7x
topology: tpu7x:2x2x1
jax: 0.10.0
libtpu: 0.0.40
codegen_flags: <defaults>
</compile_context>

<pallas_src>
import functools
import math

import jax
import jax.numpy as jnp
from jax.experimental import pallas as pl
from jax.experimental.pallas import tpu as pltpu

LANE = 128


def _round_up(x, m):
    return ((x + m - 1) // m) * m


def _choose_tile_k(kp):
    """Pick a K tile (multiple of 128): one block if small, else the largest
    candidate that divides kp evenly (no padded weight bytes in HBM)."""
    if kp <= 1024:
        return kp
    for cand in (1024, 896, 768, 640, 512):
        if kp % cand == 0:
            return cand
    return 512


# ---------------------------------------------------------------------------
# Fused  act( x @ W'^T + shift' )  Pallas kernel.
# BN scale is pre-folded into W'; bias + BN shift pre-folded into shift'.
# Grid: (K_steps,) with the full N dimension resident per step.
# ---------------------------------------------------------------------------
def _fused_linear_kernel(x_ref, wT_ref, shift_ref, o_ref, acc_ref, *, activation):
    k = pl.program_id(0)

    @pl.when(k == 0)
    def _():
        acc_ref[...] = jnp.zeros_like(acc_ref)

    acc_ref[...] += jnp.dot(x_ref[...], wT_ref[...],
                            preferred_element_type=jnp.float32)

    @pl.when(k == pl.num_programs(0) - 1)
    def _():
        y = acc_ref[...] + shift_ref[...]
        if activation == "relu":
            y = jnp.maximum(y, 0.0)
        elif activation == "sigmoid":
            y = jax.nn.sigmoid(y)
        o_ref[...] = y.astype(o_ref.dtype)


def fused_linear(x, layer, activation):
    """x: [B, K] f32.  `layer` holds pre-transposed/padded/folded params."""
    b_sz, k_in = x.shape
    assert k_in == layer["k"], (k_in, layer["k"])
    kp, np_, tile_k = layer["kp"], layer["np"], layer["tile_k"]

    x = x.astype(layer["wT"].dtype)
    if kp != k_in:
        x = jnp.pad(x, ((0, 0), (0, kp - k_in)))

    grid = (kp // tile_k,)
    out = pl.pallas_call(
        functools.partial(_fused_linear_kernel, activation=activation),
        out_shape=jax.ShapeDtypeStruct((b_sz, np_), jnp.float32),
        grid_spec=pltpu.PrefetchScalarGridSpec(
            num_scalar_prefetch=0,
            grid=grid,
            in_specs=[
                pl.BlockSpec((b_sz, tile_k), lambda k: (0, k)),   # x (K-tiled)
                pl.BlockSpec((tile_k, np_), lambda k: (k, 0)),    # W'^T (K-tiled, full N)
                pl.BlockSpec((1, np_), lambda k: (0, 0)),         # shift (resident)
            ],
            out_specs=pl.BlockSpec((b_sz, np_), lambda k: (0, 0)),
            scratch_shapes=[pltpu.VMEM((b_sz, np_), jnp.float32)],
        ),
        compiler_params=pltpu.CompilerParams(
            dimension_semantics=("arbitrary",),
            vmem_limit_bytes=32 * 1024 * 1024),
    )(x, layer["wT"], layer["shift"])

    if np_ != layer["n"]:
        out = out[:, :layer["n"]]
    return out


# ---------------------------------------------------------------------------
# One-time parameter preparation (transpose + pad + fold BN/bias + bf16 cast).
# ---------------------------------------------------------------------------
def prep_fused_layer(lin, bn=None, eps=1e-5, weight_dtype=jnp.bfloat16):
    w, b = lin                                   # w: [N, K] (PyTorch layout)
    n_out, k_in = w.shape
    if bn is not None:
        gamma, beta, mean, var = bn
        scale = gamma * jax.lax.rsqrt(var + eps)
        shift = (b - mean) * scale + beta        # bias folded into shift
    else:
        scale = jnp.ones((n_out,), jnp.float32)
        shift = b
    w_folded = w * scale[:, None]                # BN scale folded into weights

    kp = _round_up(k_in, LANE)
    tile_k = _choose_tile_k(kp)
    kp = _round_up(kp, tile_k)
    np_ = _round_up(n_out, LANE)

    wT = jnp.pad(w_folded.T, ((0, kp - k_in), (0, np_ - n_out))).astype(weight_dtype)
    shift_p = jnp.pad(shift, (0, np_ - n_out)).reshape(1, np_).astype(jnp.float32)

    return dict(wT=wT, shift=shift_p, k=k_in, kp=kp, n=n_out, np=np_, tile_k=tile_k)


def prepare_spectra_params(params):
    return {
        "fc1": prep_fused_layer(params["fc1"], params["fc1_bn"]),
        "fc2": prep_fused_layer(params["fc2"], params["fc2_bn"]),
        "f_fc1": prep_fused_layer(params["f_fc1"], params["f_fc1_bn"]),
        "f_fc2": prep_fused_layer(params["f_fc2"], params["f_fc2_bn"]),
        "fc5": prep_fused_layer(params["fc5"], None),
    }


# ---------------------------------------------------------------------------
# Parameter initialization (deterministic, PyTorch-like shapes)
# ---------------------------------------------------------------------------
def _init_linear(key, out_f, in_f):
    kw, kb = jax.random.split(key)
    bound = 1.0 / math.sqrt(in_f)
    w = jax.random.uniform(kw, (out_f, in_f), jnp.float32, -bound, bound)
    b = jax.random.uniform(kb, (out_f,), jnp.float32, -bound, bound)
    return w, b


def _init_bn(key, n):
    k1, k2, k3, k4 = jax.random.split(key, 4)
    gamma = jax.random.uniform(k1, (n,), jnp.float32, 0.8, 1.2)
    beta = jax.random.uniform(k2, (n,), jnp.float32, -0.1, 0.1)
    mean = jax.random.uniform(k3, (n,), jnp.float32, -0.1, 0.1)
    var = jax.random.uniform(k4, (n,), jnp.float32, 0.5, 1.5)
    return gamma, beta, mean, var


def init_spectra_params(key, num_classes, split_at):
    diff = 3400 - split_at
    ks = jax.random.split(key, 10)
    return {
        # main branch ("functional group" region)
        "fc1": _init_linear(ks[0], diff, diff),
        "fc1_bn": _init_bn(ks[1], diff),
        "fc2": _init_linear(ks[2], 256, diff),
        "fc2_bn": _init_bn(ks[3], 256),
        # fingerprint branch
        "f_fc1": _init_linear(ks[4], split_at, split_at),
        "f_fc1_bn": _init_bn(ks[5], split_at),
        "f_fc2": _init_linear(ks[6], 256, split_at),
        "f_fc2_bn": _init_bn(ks[7], 256),
        # head
        "fc5": _init_linear(ks[8], num_classes, 512),
    }


# ---------------------------------------------------------------------------
# SpectraModel forward (Pallas).  Dropout == identity (eval mode).
# ---------------------------------------------------------------------------
def spectra_forward(prepped, x_func, x_fing):
    # x_func: [B, 1, diff], x_fing: [B, 1, split_at]
    xf = jnp.squeeze(x_func, axis=1)
    xg = jnp.squeeze(x_fing, axis=1)

    # main branch
    xf = fused_linear(xf, prepped["fc1"], "relu")
    xf = fused_linear(xf, prepped["fc2"], "relu")
    # fingerprint branch
    xg = fused_linear(xg, prepped["f_fc1"], "relu")
    xg = fused_linear(xg, prepped["f_fc2"], "relu")
    # concat + head + sigmoid
    x = jnp.concatenate([xf, xg], axis=1)            # [B, 512]
    return fused_linear(x, prepped["fc5"], "sigmoid")


# ---------------------------------------------------------------------------
# Pure-JAX f32 reference (for correctness check)
# ---------------------------------------------------------------------------
def _ref_layer(x, lin, bn, eps=1e-5):
    w, b = lin
    gamma, beta, mean, var = bn
    y = x @ w.T + b
    y = (y - mean) * jax.lax.rsqrt(var + eps) * gamma + beta
    return jnp.maximum(y, 0.0)


def spectra_reference(params, x_func, x_fing):
    xf = jnp.squeeze(x_func, axis=1)
    xg = jnp.squeeze(x_fing, axis=1)
    xf = _ref_layer(xf, params["fc1"], params["fc1_bn"])
    xf = _ref_layer(xf, params["fc2"], params["fc2_bn"])
    xg = _ref_layer(xg, params["f_fc1"], params["f_fc1_bn"])
    xg = _ref_layer(xg, params["f_fc2"], params["f_fc2_bn"])
    x = jnp.concatenate([xf, xg], axis=1)
    w, b = params["fc5"]
    return jax.nn.sigmoid(x @ w.T + b)


if __name__ == "__main__":
    num_classes = 16
    split_at = 200              # diff = 3400 - 200 = 3200
    diff = 3400 - split_at
    B = 8

    key = jax.random.PRNGKey(0)
    kp, kx1, kx2 = jax.random.split(key, 3)
    params = init_spectra_params(kp, num_classes, split_at)
    prepped = prepare_spectra_params(params)      # one-time weight prep

    x_func = jax.random.normal(kx1, (B, 1, diff), jnp.float32)
    x_fing = jax.random.normal(kx2, (B, 1, split_at), jnp.float32)

    fwd = jax.jit(functools.partial(spectra_forward, prepped))
    out = jax.block_until_ready(fwd(x_func, x_fing))
    ref = jax.block_until_ready(spectra_reference(params, x_func, x_fing))

    assert out.shape == (B, num_classes), out.shape
    assert jnp.allclose(out, ref, atol=2e-2, rtol=2e-2), (
        float(jnp.max(jnp.abs(out - ref))))
    print("KERNEL_OK")
</pallas_src>

<mosaic_0001>
module attributes {stable_mosaic.version = 11 : i64} {
  func.func @_fused_linear_kernel(%arg0: i32, %arg1: memref<8x640xbf16, #tpu.memory_space<vmem>>, %arg2: memref<640x3200xbf16, #tpu.memory_space<vmem>>, %arg3: memref<1x3200xf32, #tpu.memory_space<vmem>>, %arg4: memref<8x3200xf32, #tpu.memory_space<vmem>>, %arg5: memref<8x3200xf32, #tpu.memory_space<vmem>>) attributes {dimension_semantics = [#tpu.dimension_semantics<arbitrary>], iteration_bounds = array<i64: 5>, scalar_prefetch = 0 : i64, scratch_operands = 1 : i64, tpu.core_type = #tpu.core_type<tc>, window_params = [{transform_indices = @transform_0, window_bounds = array<i64: 8, 640>}, {transform_indices = @transform_1, window_bounds = array<i64: 640, 3200>}, {pipeline_mode = #tpu.pipeline_mode<synchronous>, transform_indices = @transform_2, window_bounds = array<i64: 1, 3200>}, {pipeline_mode = #tpu.pipeline_mode<synchronous>, transform_indices = @transform_3, window_bounds = array<i64: 8, 3200>}]} {
    %c0_i32 = arith.constant 0 : i32
    %0 = arith.cmpi eq, %arg0, %c0_i32 : i32
    %1 = arith.extui %0 : i1 to i32
    %c0_i32_0 = arith.constant 0 : i32
    %2 = arith.cmpi ne, %1, %c0_i32_0 : i32
    scf.if %2 {
      %cst_9 = arith.constant 0.000000e+00 : f32
      %12 = vector.broadcast %cst_9 : f32 to vector<8x3200xf32>
      %c0_10 = arith.constant 0 : index
      %c0_11 = arith.constant 0 : index
      %13 = vector.load %arg5[%c0_10, %c0_11] : memref<8x3200xf32, #tpu.memory_space<vmem>>, vector<8x3200xf32>
      tpu.vector_store %arg5[%c0_10, %c0_11], %12 {strides = array<i32>} : memref<8x3200xf32, #tpu.memory_space<vmem>>, vector<8x3200xf32>,
    } else {
    }
    %c0 = arith.constant 0 : index
    %c0_1 = arith.constant 0 : index
    %3 = vector.load %arg5[%c0, %c0_1] : memref<8x3200xf32, #tpu.memory_space<vmem>>, vector<8x3200xf32>
    %c0_2 = arith.constant 0 : index
    %c0_3 = arith.constant 0 : index
    %4 = vector.load %arg1[%c0_2, %c0_3] : memref<8x640xbf16, #tpu.memory_space<vmem>>, vector<8x640xbf16>
    %c0_4 = arith.constant 0 : index
    %c0_5 = arith.constant 0 : index
    %5 = vector.load %arg2[%c0_4, %c0_5] : memref<640x3200xbf16, #tpu.memory_space<vmem>>, vector<640x3200xbf16>
    %cst = arith.constant dense<0.000000e+00> : vector<8x3200xf32>
    %6 = tpu.matmul %4, %5, %cst {dimension_numbers = #tpu.dot_dimension_numbers<[1], [0], [0], [1], [0, 0, 1, 1], [], []>} : vector<8x640xbf16>, vector<640x3200xbf16>, vector<8x3200xf32> -> vector<8x3200xf32>
    %7 = arith.addf %3, %6 : vector<8x3200xf32>
    %c0_6 = arith.constant 0 : index
    %c0_7 = arith.constant 0 : index
    %8 = vector.load %arg5[%c0_6, %c0_7] : memref<8x3200xf32, #tpu.memory_space<vmem>>, vector<8x3200xf32>
    tpu.vector_store %arg5[%c0_6, %c0_7], %7 {strides = array<i32>} : memref<8x3200xf32, #tpu.memory_space<vmem>>, vector<8x3200xf32>,
    %c4_i32 = arith.constant 4 : i32
    %9 = arith.cmpi eq, %arg0, %c4_i32 : i32
    %10 = arith.extui %9 : i1 to i32
    %c0_i32_8 = arith.constant 0 : i32
    %11 = arith.cmpi ne, %10, %c0_i32_8 : i32
    scf.if %11 {
      %c0_9 = arith.constant 0 : index
      %c0_10 = arith.constant 0 : index
      %12 = vector.load %arg5[%c0_9, %c0_10] : memref<8x3200xf32, #tpu.memory_space<vmem>>, vector<8x3200xf32>
      %c0_11 = arith.constant 0 : index
      %c0_12 = arith.constant 0 : index
      %13 = vector.load %arg3[%c0_11, %c0_12] : memref<1x3200xf32, #tpu.memory_space<vmem>>, vector<1x3200xf32>
      %14 = vector.broadcast %13 : vector<1x3200xf32> to vector<8x3200xf32>
      %15 = arith.addf %12, %14 : vector<8x3200xf32>
      %cst_13 = arith.constant 0.000000e+00 : f32
      %16 = vector.broadcast %cst_13 : f32 to vector<8x3200xf32>
      %17 = arith.maximumf %15, %16 : vector<8x3200xf32>
      %c0_14 = arith.constant 0 : index
      %c0_15 = arith.constant 0 : index
      %18 = vector.load %arg4[%c0_14, %c0_15] : memref<8x3200xf32, #tpu.memory_space<vmem>>, vector<8x3200xf32>
      tpu.vector_store %arg4[%c0_14, %c0_15], %17 {strides = array<i32>} : memref<8x3200xf32, #tpu.memory_space<vmem>>, vector<8x3200xf32>,
    } else {
    }
    return
  }
  func.func @transform_0(%arg0: i32) -> (i32, i32) {
    %c0_i32 = arith.constant 0 : i32
    %c0_i32_0 = arith.constant 0 : i32
    return %c0_i32, %arg0 : i32, i32
  }
  func.func @transform_1(%arg0: i32) -> (i32, i32) {
    %c0_i32 = arith.constant 0 : i32
    %c0_i32_0 = arith.constant 0 : i32
    return %arg0, %c0_i32 : i32, i32
  }
  func.func @transform_2(%arg0: i32) -> (i32, i32) {
    %c0_i32 = arith.constant 0 : i32
    %c0_i32_0 = arith.constant 0 : i32
    %c0_i32_1 = arith.constant 0 : i32
    return %c0_i32, %c0_i32_0 : i32, i32
  }
  func.func @transform_3(%arg0: i32) -> (i32, i32) {
    %c0_i32 = arith.constant 0 : i32
    %c0_i32_0 = arith.constant 0 : i32
    %c0_i32_1 = arith.constant 0 : i32
    return %c0_i32, %c0_i32_0 : i32, i32
  }
}

module attributes {stable_mosaic.version = 11 : i64} {
  func.func @_fused_linear_kernel(%arg0: i32, %arg1: memref<8x640xbf16, #tpu.memory_space<vmem>>, %arg2: memref<640x256xbf16, #tpu.memory_space<vmem>>, %arg3: memref<1x256xf32, #tpu.memory_space<vmem>>, %arg4: memref<8x256xf32, #tpu.memory_space<vmem>>, %arg5: memref<8x256xf32, #tpu.memory_space<vmem>>) attributes {dimension_semantics = [#tpu.dimension_semantics<arbitrary>], iteration_bounds = array<i64: 5>, scalar_prefetch = 0 : i64, scratch_operands = 1 : i64, tpu.core_type = #tpu.core_type<tc>, window_params = [{transform_indices = @transform_0, window_bounds = array<i64: 8, 640>}, {transform_indices = @transform_1, window_bounds = array<i64: 640, 256>}, {pipeline_mode = #tpu.pipeline_mode<synchronous>, transform_indices = @transform_2, window_bounds = array<i64: 1, 256>}, {pipeline_mode = #tpu.pipeline_mode<synchronous>, transform_indices = @transform_3, window_bounds = array<i64: 8, 256>}]} {
    %c0_i32 = arith.constant 0 : i32
    %0 = arith.cmpi eq, %arg0, %c0_i32 : i32
    %1 = arith.extui %0 : i1 to i32
    %c0_i32_0 = arith.constant 0 : i32
    %2 = arith.cmpi ne, %1, %c0_i32_0 : i32
    scf.if %2 {
      %cst_9 = arith.constant 0.000000e+00 : f32
      %12 = vector.broadcast %cst_9 : f32 to vector<8x256xf32>
      %c0_10 = arith.constant 0 : index
      %c0_11 = arith.constant 0 : index
      %13 = vector.load %arg5[%c0_10, %c0_11] : memref<8x256xf32, #tpu.memory_space<vmem>>, vector<8x256xf32>
      tpu.vector_store %arg5[%c0_10, %c0_11], %12 {strides = array<i32>} : memref<8x256xf32, #tpu.memory_space<vmem>>, vector<8x256xf32>,
    } else {
    }
    %c0 = arith.constant 0 : index
    %c0_1 = arith.constant 0 : index
    %3 = vector.load %arg5[%c0, %c0_1] : memref<8x256xf32, #tpu.memory_space<vmem>>, vector<8x256xf32>
    %c0_2 = arith.constant 0 : index
    %c0_3 = arith.constant 0 : index
    %4 = vector.load %arg1[%c0_2, %c0_3] : memref<8x640xbf16, #tpu.memory_space<vmem>>, vector<8x640xbf16>
    %c0_4 = arith.constant 0 : index
    %c0_5 = arith.constant 0 : index
    %5 = vector.load %arg2[%c0_4, %c0_5] : memref<640x256xbf16, #tpu.memory_space<vmem>>, vector<640x256xbf16>
    %cst = arith.constant dense<0.000000e+00> : vector<8x256xf32>
    %6 = tpu.matmul %4, %5, %cst {dimension_numbers = #tpu.dot_dimension_numbers<[1], [0], [0], [1], [0, 0, 1, 1], [], []>} : vector<8x640xbf16>, vector<640x256xbf16>, vector<8x256xf32> -> vector<8x256xf32>
    %7 = arith.addf %3, %6 : vector<8x256xf32>
    %c0_6 = arith.constant 0 : index
    %c0_7 = arith.constant 0 : index
    %8 = vector.load %arg5[%c0_6, %c0_7] : memref<8x256xf32, #tpu.memory_space<vmem>>, vector<8x256xf32>
    tpu.vector_store %arg5[%c0_6, %c0_7], %7 {strides = array<i32>} : memref<8x256xf32, #tpu.memory_space<vmem>>, vector<8x256xf32>,
    %c4_i32 = arith.constant 4 : i32
    %9 = arith.cmpi eq, %arg0, %c4_i32 : i32
    %10 = arith.extui %9 : i1 to i32
    %c0_i32_8 = arith.constant 0 : i32
    %11 = arith.cmpi ne, %10, %c0_i32_8 : i32
    scf.if %11 {
      %c0_9 = arith.constant 0 : index
      %c0_10 = arith.constant 0 : index
      %12 = vector.load %arg5[%c0_9, %c0_10] : memref<8x256xf32, #tpu.memory_space<vmem>>, vector<8x256xf32>
      %c0_11 = arith.constant 0 : index
      %c0_12 = arith.constant 0 : index
      %13 = vector.load %arg3[%c0_11, %c0_12] : memref<1x256xf32, #tpu.memory_space<vmem>>, vector<1x256xf32>
      %14 = vector.broadcast %13 : vector<1x256xf32> to vector<8x256xf32>
      %15 = arith.addf %12, %14 : vector<8x256xf32>
      %cst_13 = arith.constant 0.000000e+00 : f32
      %16 = vector.broadcast %cst_13 : f32 to vector<8x256xf32>
      %17 = arith.maximumf %15, %16 : vector<8x256xf32>
      %c0_14 = arith.constant 0 : index
      %c0_15 = arith.constant 0 : index
      %18 = vector.load %arg4[%c0_14, %c0_15] : memref<8x256xf32, #tpu.memory_space<vmem>>, vector<8x256xf32>
      tpu.vector_store %arg4[%c0_14, %c0_15], %17 {strides = array<i32>} : memref<8x256xf32, #tpu.memory_space<vmem>>, vector<8x256xf32>,
    } else {
    }
    return
  }
  func.func @transform_0(%arg0: i32) -> (i32, i32) {
    %c0_i32 = arith.constant 0 : i32
    %c0_i32_0 = arith.constant 0 : i32
    return %c0_i32, %arg0 : i32, i32
  }
  func.func @transform_1(%arg0: i32) -> (i32, i32) {
    %c0_i32 = arith.constant 0 : i32
    %c0_i32_0 = arith.constant 0 : i32
    return %arg0, %c0_i32 : i32, i32
  }
  func.func @transform_2(%arg0: i32) -> (i32, i32) {
    %c0_i32 = arith.constant 0 : i32
    %c0_i32_0 = arith.constant 0 : i32
    %c0_i32_1 = arith.constant 0 : i32
    return %c0_i32, %c0_i32_0 : i32, i32
  }
  func.func @transform_3(%arg0: i32) -> (i32, i32) {
    %c0_i32 = arith.constant 0 : i32
    %c0_i32_0 = arith.constant 0 : i32
    %c0_i32_1 = arith.constant 0 : i32
    return %c0_i32, %c0_i32_0 : i32, i32
  }
}

module attributes {stable_mosaic.version = 11 : i64} {
  func.func @_fused_linear_kernel(%arg0: i32, %arg1: memref<8x256xbf16, #tpu.memory_space<vmem>>, %arg2: memref<256x256xbf16, #tpu.memory_space<vmem>>, %arg3: memref<1x256xf32, #tpu.memory_space<vmem>>, %arg4: memref<8x256xf32, #tpu.memory_space<vmem>>, %arg5: memref<8x256xf32, #tpu.memory_space<vmem>>) attributes {dimension_semantics = [#tpu.dimension_semantics<arbitrary>], iteration_bounds = array<i64: 1>, scalar_prefetch = 0 : i64, scratch_operands = 1 : i64, tpu.core_type = #tpu.core_type<tc>, window_params = [{transform_indices = @transform_0, window_bounds = array<i64: 8, 256>}, {transform_indices = @transform_1, window_bounds = array<i64: 256, 256>}, {pipeline_mode = #tpu.pipeline_mode<synchronous>, transform_indices = @transform_2, window_bounds = array<i64: 1, 256>}, {pipeline_mode = #tpu.pipeline_mode<synchronous>, transform_indices = @transform_3, window_bounds = array<i64: 8, 256>}]} {
    %c0_i32 = arith.constant 0 : i32
    %0 = arith.cmpi eq, %arg0, %c0_i32 : i32
    %1 = arith.extui %0 : i1 to i32
    %c0_i32_0 = arith.constant 0 : i32
    %2 = arith.cmpi ne, %1, %c0_i32_0 : i32
    scf.if %2 {
      %cst_10 = arith.constant 0.000000e+00 : f32
      %12 = vector.broadcast %cst_10 : f32 to vector<8x256xf32>
      %c0_11 = arith.constant 0 : index
      %c0_12 = arith.constant 0 : index
      %13 = vector.load %arg5[%c0_11, %c0_12] : memref<8x256xf32, #tpu.memory_space<vmem>>, vector<8x256xf32>
      tpu.vector_store %arg5[%c0_11, %c0_12], %12 {strides = array<i32>} : memref<8x256xf32, #tpu.memory_space<vmem>>, vector<8x256xf32>,
    } else {
    }
    %c0 = arith.constant 0 : index
    %c0_1 = arith.constant 0 : index
    %3 = vector.load %arg5[%c0, %c0_1] : memref<8x256xf32, #tpu.memory_space<vmem>>, vector<8x256xf32>
    %c0_2 = arith.constant 0 : index
    %c0_3 = arith.constant 0 : index
    %4 = vector.load %arg1[%c0_2, %c0_3] : memref<8x256xbf16, #tpu.memory_space<vmem>>, vector<8x256xbf16>
    %c0_4 = arith.constant 0 : index
    %c0_5 = arith.constant 0 : index
    %5 = vector.load %arg2[%c0_4, %c0_5] : memref<256x256xbf16, #tpu.memory_space<vmem>>, vector<256x256xbf16>
    %cst = arith.constant dense<0.000000e+00> : vector<8x256xf32>
    %6 = tpu.matmul %4, %5, %cst {dimension_numbers = #tpu.dot_dimension_numbers<[1], [0], [0], [1], [0, 0, 1, 1], [], []>} : vector<8x256xbf16>, vector<256x256xbf16>, vector<8x256xf32> -> vector<8x256xf32>
    %7 = arith.addf %3, %6 : vector<8x256xf32>
    %c0_6 = arith.constant 0 : index
    %c0_7 = arith.constant 0 : index
    %8 = vector.load %arg5[%c0_6, %c0_7] : memref<8x256xf32, #tpu.memory_space<vmem>>, vector<8x256xf32>
    tpu.vector_store %arg5[%c0_6, %c0_7], %7 {strides = array<i32>} : memref<8x256xf32, #tpu.memory_space<vmem>>, vector<8x256xf32>,
    %c0_i32_8 = arith.constant 0 : i32
    %9 = arith.cmpi eq, %arg0, %c0_i32_8 : i32
    %10 = arith.extui %9 : i1 to i32
    %c0_i32_9 = arith.constant 0 : i32
    %11 = arith.cmpi ne, %10, %c0_i32_9 : i32
    scf.if %11 {
      %c0_10 = arith.constant 0 : index
      %c0_11 = arith.constant 0 : index
      %12 = vector.load %arg5[%c0_10, %c0_11] : memref<8x256xf32, #tpu.memory_space<vmem>>, vector<8x256xf32>
      %c0_12 = arith.constant 0 : index
      %c0_13 = arith.constant 0 : index
      %13 = vector.load %arg3[%c0_12, %c0_13] : memref<1x256xf32, #tpu.memory_space<vmem>>, vector<1x256xf32>
      %14 = vector.broadcast %13 : vector<1x256xf32> to vector<8x256xf32>
      %15 = arith.addf %12, %14 : vector<8x256xf32>
      %cst_14 = arith.constant 0.000000e+00 : f32
      %16 = vector.broadcast %cst_14 : f32 to vector<8x256xf32>
      %17 = arith.maximumf %15, %16 : vector<8x256xf32>
      %c0_15 = arith.constant 0 : index
      %c0_16 = arith.constant 0 : index
      %18 = vector.load %arg4[%c0_15, %c0_16] : memref<8x256xf32, #tpu.memory_space<vmem>>, vector<8x256xf32>
      tpu.vector_store %arg4[%c0_15, %c0_16], %17 {strides = array<i32>} : memref<8x256xf32, #tpu.memory_space<vmem>>, vector<8x256xf32>,
    } else {
    }
    return
  }
  func.func @transform_0(%arg0: i32) -> (i32, i32) {
    %c0_i32 = arith.constant 0 : i32
    %c0_i32_0 = arith.constant 0 : i32
    return %c0_i32, %arg0 : i32, i32
  }
  func.func @transform_1(%arg0: i32) -> (i32, i32) {
    %c0_i32 = arith.constant 0 : i32
    %c0_i32_0 = arith.constant 0 : i32
    return %arg0, %c0_i32 : i32, i32
  }
  func.func @transform_2(%arg0: i32) -> (i32, i32) {
    %c0_i32 = arith.constant 0 : i32
    %c0_i32_0 = arith.constant 0 : i32
    %c0_i32_1 = arith.constant 0 : i32
    return %c0_i32, %c0_i32_0 : i32, i32
  }
  func.func @transform_3(%arg0: i32) -> (i32, i32) {
    %c0_i32 = arith.constant 0 : i32
    %c0_i32_0 = arith.constant 0 : i32
    %c0_i32_1 = arith.constant 0 : i32
    return %c0_i32, %c0_i32_0 : i32, i32
  }
}

module attributes {stable_mosaic.version = 11 : i64} {
  func.func @_fused_linear_kernel(%arg0: i32, %arg1: memref<8x512xbf16, #tpu.memory_space<vmem>>, %arg2: memref<512x128xbf16, #tpu.memory_space<vmem>>, %arg3: memref<1x128xf32, #tpu.memory_space<vmem>>, %arg4: memref<8x128xf32, #tpu.memory_space<vmem>>, %arg5: memref<8x128xf32, #tpu.memory_space<vmem>>) attributes {dimension_semantics = [#tpu.dimension_semantics<arbitrary>], iteration_bounds = array<i64: 1>, scalar_prefetch = 0 : i64, scratch_operands = 1 : i64, tpu.core_type = #tpu.core_type<tc>, window_params = [{transform_indices = @transform_0, window_bounds = array<i64: 8, 512>}, {transform_indices = @transform_1, window_bounds = array<i64: 512, 128>}, {pipeline_mode = #tpu.pipeline_mode<synchronous>, transform_indices = @transform_2, window_bounds = array<i64: 1, 128>}, {pipeline_mode = #tpu.pipeline_mode<synchronous>, transform_indices = @transform_3, window_bounds = array<i64: 8, 128>}]} {
    %c0_i32 = arith.constant 0 : i32
    %0 = arith.cmpi eq, %arg0, %c0_i32 : i32
    %1 = arith.extui %0 : i1 to i32
    %c0_i32_0 = arith.constant 0 : i32
    %2 = arith.cmpi ne, %1, %c0_i32_0 : i32
    scf.if %2 {
      %cst_10 = arith.constant 0.000000e+00 : f32
      %12 = vector.broadcast %cst_10 : f32 to vector<8x128xf32>
      %c0_11 = arith.constant 0 : index
      %c0_12 = arith.constant 0 : index
      %13 = vector.load %arg5[%c0_11, %c0_12] : memref<8x128xf32, #tpu.memory_space<vmem>>, vector<8x128xf32>
      tpu.vector_store %arg5[%c0_11, %c0_12], %12 {strides = array<i32>} : memref<8x128xf32, #tpu.memory_space<vmem>>, vector<8x128xf32>,
    } else {
    }
    %c0 = arith.constant 0 : index
    %c0_1 = arith.constant 0 : index
    %3 = vector.load %arg5[%c0, %c0_1] : memref<8x128xf32, #tpu.memory_space<vmem>>, vector<8x128xf32>
    %c0_2 = arith.constant 0 : index
    %c0_3 = arith.constant 0 : index
    %4 = vector.load %arg1[%c0_2, %c0_3] : memref<8x512xbf16, #tpu.memory_space<vmem>>, vector<8x512xbf16>
    %c0_4 = arith.constant 0 : index
    %c0_5 = arith.constant 0 : index
    %5 = vector.load %arg2[%c0_4, %c0_5] : memref<512x128xbf16, #tpu.memory_space<vmem>>, vector<512x128xbf16>
    %cst = arith.constant dense<0.000000e+00> : vector<8x128xf32>
    %6 = tpu.matmul %4, %5, %cst {dimension_numbers = #tpu.dot_dimension_numbers<[1], [0], [0], [1], [0, 0, 1, 1], [], []>} : vector<8x512xbf16>, vector<512x128xbf16>, vector<8x128xf32> -> vector<8x128xf32>
    %7 = arith.addf %3, %6 : vector<8x128xf32>
    %c0_6 = arith.constant 0 : index
    %c0_7 = arith.constant 0 : index
    %8 = vector.load %arg5[%c0_6, %c0_7] : memref<8x128xf32, #tpu.memory_space<vmem>>, vector<8x128xf32>
    tpu.vector_store %arg5[%c0_6, %c0_7], %7 {strides = array<i32>} : memref<8x128xf32, #tpu.memory_space<vmem>>, vector<8x128xf32>,
    %c0_i32_8 = arith.constant 0 : i32
    %9 = arith.cmpi eq, %arg0, %c0_i32_8 : i32
    %10 = arith.extui %9 : i1 to i32
    %c0_i32_9 = arith.constant 0 : i32
    %11 = arith.cmpi ne, %10, %c0_i32_9 : i32
    scf.if %11 {
      %c0_10 = arith.constant 0 : index
      %c0_11 = arith.constant 0 : index
      %12 = vector.load %arg5[%c0_10, %c0_11] : memref<8x128xf32, #tpu.memory_space<vmem>>, vector<8x128xf32>
      %c0_12 = arith.constant 0 : index
      %c0_13 = arith.constant 0 : index
      %13 = vector.load %arg3[%c0_12, %c0_13] : memref<1x128xf32, #tpu.memory_space<vmem>>, vector<1x128xf32>
      %14 = vector.broadcast %13 : vector<1x128xf32> to vector<8x128xf32>
      %15 = arith.addf %12, %14 : vector<8x128xf32>
      %16 = arith.negf %15 : vector<8x128xf32>
      %17 = math.exp %16 : vector<8x128xf32>
      %cst_14 = arith.constant 1.000000e+00 : f32
      %18 = vector.broadcast %cst_14 : f32 to vector<8x128xf32>
      %19 = arith.addf %18, %17 : vector<8x128xf32>
      %20 = arith.divf %18, %19 : vector<8x128xf32>
      %c0_15 = arith.constant 0 : index
      %c0_16 = arith.constant 0 : index
      %21 = vector.load %arg4[%c0_15, %c0_16] : memref<8x128xf32, #tpu.memory_space<vmem>>, vector<8x128xf32>
      tpu.vector_store %arg4[%c0_15, %c0_16], %20 {strides = array<i32>} : memref<8x128xf32, #tpu.memory_space<vmem>>, vector<8x128xf32>,
    } else {
    }
    return
  }
  func.func @transform_0(%arg0: i32) -> (i32, i32) {
    %c0_i32 = arith.constant 0 : i32
    %c0_i32_0 = arith.constant 0 : i32
    return %c0_i32, %arg0 : i32, i32
  }
  func.func @transform_1(%arg0: i32) -> (i32, i32) {
    %c0_i32 = arith.constant 0 : i32
    %c0_i32_0 = arith.constant 0 : i32
    return %arg0, %c0_i32 : i32, i32
  }
  func.func @transform_2(%arg0: i32) -> (i32, i32) {
    %c0_i32 = arith.constant 0 : i32
    %c0_i32_0 = arith.constant 0 : i32
    %c0_i32_1 = arith.constant 0 : i32
    return %c0_i32, %c0_i32_0 : i32, i32
  }
  func.func @transform_3(%arg0: i32) -> (i32, i32) {
    %c0_i32 = arith.constant 0 : i32
    %c0_i32_0 = arith.constant 0 : i32
    %c0_i32_1 = arith.constant 0 : i32
    return %c0_i32, %c0_i32_0 : i32, i32
  }
}

</mosaic_0001>

<llo_original>
// kernel: spectra_forward.6
$region0: #{spectra_forward.6}
  #allocation0 [shape = 'u32[]', space=smem, size = 0x4, offset = 0x4, fixed_abs, tag = 'smem constant byte address 0x4 - core index']
  #allocation1 [shape = 'u32[144,128]{1,0:T(1,128)}', space=vmem, size = 0x12000, scoped, tag = 'internal scratch']
  #allocation2 [shape = 'f32[8,256]{1,0:T(8,128)}', space=vmem, size = 0x2000, scoped, tag = 'scratch operand']
  %s0 = inlined_call_operand.vmem [shape: bf16[8,3200], index: 0, kind: input, shape index: {}]
  %s1 = inlined_call_operand.vmem [shape: bf16[3200,256], index: 1, kind: input, shape index: {}]
  %s2 = inlined_call_operand.vmem [shape: f32[1,256], index: 2, kind: input, shape index: {}]
  %s3 = inlined_call_operand.vmem [shape: f32[8,256], index: 3, kind: output, shape index: {}]
  %s4 = sld [smem:[#allocation0]]
  $region53: #{spectra_forward.6} parent=0
    _
  %s6 = ssub.s32 1, %s4
  %s7 = scalar_select 0, %s6, %s4
  loop: start=0, step=1, limit=7
  $region2: #{spectra_forward.6} parent=0 // loop_pre_header
    _
  $region3: #{spectra_forward.6} parent=0 // loop_header
    %s9 = sphi 0, %s13
    %p10 = scmp.ge.s32.totalorder %s9, 7
    %s19 = sphi 0, %s21
    %s22 = sphi 0, %s19
    %s23 = sphi 0, %s22
    %s39 = sphi 0, %s23
    %s45 = sphi 0, %s47
    %s48 = sphi 0, %s45
    %s49 = sphi 0, %s48
    %s65 = sphi 0, %s49
    %s69 = sphi 0, %s69
    %s71 = sphi 0, %s69
    %s72 = sphi 0, %s71
    %s86 = sphi 0, %s72
    %s90 = sphi 0, %s90
    %s92 = sphi 0, %s90
    %s93 = sphi 0, %s92
    %s107 = sphi 0, %s93
  $region4: #{spectra_forward.6} parent=0 // loop_header_branch
    %12 = sbr.rel (%p10) target = $region8
  $region5: #{spectra_forward.6} parent=0 // loop_body
    %s14 = ssub.s32 %s9, 1
    %s15 = ssub.s32 %s9, 2
    %s16 = sadd.s32 %s9, 1
    %s17 = ssub.s32 %s9, %s16
    %p18 = scmp.eq.s32.totalorder %s17, 0
    %s20 = sadd.s32 %s19, 1
    %s21 = scalar_select %p18, %s19, %s20
    %p24 = pneg %p18
    %p25 = scmp.eq.s32.totalorder %s9, 4
    %p26 = por %p24, %p25
    %p27 = scmp.ne.s32.totalorder %s19, %s22
    %p28 = scmp.eq.s32.totalorder %s9, 0
    %p29 = por %p27, %p28
    %p30 = scmp.ne.s32.totalorder %s19, %s22
    %p31 = scmp.eq.s32.totalorder %s14, 4
    %p32 = por %p30, %p31
    %p33 = scmp.ne.s32.totalorder %s22, %s23
    %p34 = scmp.eq.s32.totalorder %s14, 0
    %p35 = por %p33, %p34
    %p36 = scmp.ne.s32.totalorder %s22, %s23
    %p37 = scmp.eq.s32.totalorder %s15, 4
    %p38 = por %p36, %p37
    %p40 = scmp.ne.s32.totalorder %s23, %s39
    %p41 = scmp.eq.s32.totalorder %s15, 0
    %p42 = por %p40, %p41
    %s43 = ssub.s32 %s9, %s16
    %p44 = scmp.eq.s32.totalorder %s43, 0
    %s46 = sadd.s32 %s45, 1
    %s47 = scalar_select %p44, %s45, %s46
    %p50 = pneg %p44
    %p51 = scmp.eq.s32.totalorder %s9, 4
    %p52 = por %p50, %p51
    %p53 = scmp.ne.s32.totalorder %s45, %s48
    %p54 = scmp.eq.s32.totalorder %s9, 0
    %p55 = por %p53, %p54
    %p56 = scmp.ne.s32.totalorder %s45, %s48
    %p57 = scmp.eq.s32.totalorder %s14, 4
    %p58 = por %p56, %p57
    %p59 = scmp.ne.s32.totalorder %s48, %s49
    %p60 = scmp.eq.s32.totalorder %s14, 0
    %p61 = por %p59, %p60
    %p62 = scmp.ne.s32.totalorder %s48, %s49
    %p63 = scmp.eq.s32.totalorder %s15, 4
    %p64 = por %p62, %p63
    %p66 = scmp.ne.s32.totalorder %s49, %s65
    %p67 = scmp.eq.s32.totalorder %s15, 0
    %p68 = por %p66, %p67
    %s70 = sadd.s32 %s69, 1
    %p73 = scmp.eq.s32.totalorder %s9, 4
    %p74 = scmp.ne.s32.totalorder %s69, %s71
    %p75 = scmp.eq.s32.totalorder %s9, 0
    %p76 = por %p74, %p75
    %p77 = scmp.ne.s32.totalorder %s69, %s71
    %p78 = scmp.eq.s32.totalorder %s14, 4
    %p79 = por %p77, %p78
    %p80 = scmp.ne.s32.totalorder %s71, %s72
    %p81 = scmp.eq.s32.totalorder %s14, 0
    %p82 = por %p80, %p81
    %p83 = scmp.ne.s32.totalorder %s71, %s72
    %p84 = scmp.eq.s32.totalorder %s15, 4
    %p85 = por %p83, %p84
    %p87 = scmp.ne.s32.totalorder %s72, %s86
    %p88 = scmp.eq.s32.totalorder %s15, 0
    %p89 = por %p87, %p88
    %s91 = sadd.s32 %s90, 1
    %p94 = scmp.eq.s32.totalorder %s9, 4
    %p95 = scmp.ne.s32.totalorder %s90, %s92
    %p96 = scmp.eq.s32.totalorder %s9, 0
    %p97 = por %p95, %p96
    %p98 = scmp.ne.s32.totalorder %s90, %s92
    %p99 = scmp.eq.s32.totalorder %s14, 4
    %p100 = por %p98, %p99
    %p101 = scmp.ne.s32.totalorder %s92, %s93
    %p102 = scmp.eq.s32.totalorder %s14, 0
    %p103 = por %p101, %p102
    %p104 = scmp.ne.s32.totalorder %s92, %s93
    %p105 = scmp.eq.s32.totalorder %s15, 4
    %p106 = por %p104, %p105
    %p108 = scmp.ne.s32.totalorder %s93, %s107
    %p109 = scmp.eq.s32.totalorder %s15, 0
    %p110 = por %p108, %p109
    %p111 = scmp.le.s32.totalorder 1, %s9
    %p112 = scmp.lt.s32.totalorder %s9, 6
    %p113 = pnand %p111, %p112
    %p114 = pneg %p113
    // Predicated region
    $region9: #{spectra_forward.6} parent=5 // pred_check
      _
    $region10: #{spectra_forward.6} parent=5 // pred_check_branch
      %116 = sbr.rel (%p113) target = $region12
    $region11: #{spectra_forward.6} parent=5 // pred_region
      %s117 = ssub.s32 %s9, 1
      // Predicated region
      $region13: #{spectra_forward.6} parent=11 // pred_check
        %p118 = pneg %p82
      $region14: #{spectra_forward.6} parent=11 // pred_check_branch
        %120 = sbr.rel (%p118) target = $region16
      $region15: #{spectra_forward.6} parent=11 // pred_region
        _
      $region16: #{spectra_forward.6} parent=11 // pred_fallthru
        _
    $region12: #{spectra_forward.6} parent=5 // pred_fallthru
      _
    %p121 = scmp.lt.s32.totalorder %s9, 5
    // Predicated region
    $region17: #{spectra_forward.6} parent=5 // pred_check
      %p122 = pneg %p121
    $region18: #{spectra_forward.6} parent=5 // pred_check_branch
      %124 = sbr.rel (%p122) target = $region20
    $region19: #{spectra_forward.6} parent=5 // pred_region
      // Predicated region
      $region21: #{spectra_forward.6} parent=19 // pred_check
        %p125 = pneg %p29
      $region22: #{spectra_forward.6} parent=19 // pred_check_branch
        %127 = sbr.rel (%p125) target = $region24
      $region23: #{spectra_forward.6} parent=19 // pred_region
        %s128 = smul.u32 5, %s9
        %p129 = scmp.lt.s32.totalorder %s128, 24
        %s130 = scalar_select %p129, %s128, 24
        %s131 = smul.addr %s130, 4
        %s132 = scalar_lea.vmem %s0, %s131
        %s133 = smul.u32 5, %s9
      $region24: #{spectra_forward.6} parent=19 // pred_fallthru
        _
      // Predicated region
      $region25: #{spectra_forward.6} parent=19 // pred_check
        %p134 = pneg %p55
      $region26: #{spectra_forward.6} parent=19 // pred_check_branch
        %136 = sbr.rel (%p134) target = $region28
      $region27: #{spectra_forward.6} parent=19 // pred_region
        %s137 = smul.u32 80, %s9
        %p138 = scmp.lt.s32.totalorder %s137, 399
        %s139 = scalar_select %p138, %s137, 399
        %s140 = smul.addr %s139, 2
        %s141 = smul.addr %s140, 4
        %s142 = scalar_lea.vmem %s1, %s141
        %s143 = smul.u32 80, %s9
      $region28: #{spectra_forward.6} parent=19 // pred_fallthru
        _
    $region20: #{spectra_forward.6} parent=5 // pred_fallthru
      _
    %p144 = scmp.le.s32.totalorder 1, %s9
    %p145 = scmp.lt.s32.totalorder %s9, 6
    %p146 = pnand %p144, %p145
    %p147 = pneg %p146
    // Predicated region
    $region29: #{spectra_forward.6} parent=5 // pred_check
      _
    $region30: #{spectra_forward.6} parent=5 // pred_check_branch
      %149 = sbr.rel (%p146) target = $region32
    $region31: #{spectra_forward.6} parent=5 // pred_region
      %s150 = ssub.s32 %s9, 1
      %s151 = smul.u32 5, %s14
      %p152 = scmp.lt.s32.totalorder %s151, 24
      %s153 = scalar_select %p152, %s151, 24
      %s154 = smul.addr %s153, 4
      %s155 = scalar_lea.vmem %s0, %s154
      %p156 = pneg %p35
      %p157 = pneg %p32
      %s158 = smul.u32 80, %s14
      %p159 = scmp.lt.s32.totalorder %s158, 399
      %s160 = scalar_select %p159, %s158, 399
      %s161 = smul.addr %s160, 2
      %s162 = smul.addr %s161, 4
      %s163 = scalar_lea.vmem %s1, %s162
      %p164 = pneg %p61
      %p165 = pneg %p58
      %p166 = pneg %p82
      %p167 = pneg %p79
      %p168 = pneg %p103
      %p169 = pneg %p100
      %s170 = smul.u32 5, %s14
      %p171 = scmp.lt.s32.totalorder %s170, 24
      %s172 = scalar_select %p171, %s170, 24
      %s173 = smul.addr %s172, 4
      %s174 = scalar_lea.vmem %s0, %s173
      %s175 = smul.u32 5, %s14
      %s176 = smul.u32 80, %s14
      %p177 = scmp.lt.s32.totalorder %s176, 399
      %s178 = scalar_select %p177, %s176, 399
      %s179 = smul.addr %s178, 2
      %s180 = smul.addr %s179, 4
      %s181 = scalar_lea.vmem %s1, %s180
      %s182 = smul.u32 80, %s14
      %p184 = scmp.eq.s32.totalorder %s14, 0
      // Predicated region
      $region33: #{spectra_forward.6} parent=31 // pred_check
        %p185 = pneg %p184
      $region34: #{spectra_forward.6} parent=31 // pred_check_branch
        %187 = sbr.rel (%p185) target = $region36
      $region35: #{spectra_forward.6} parent=31 // pred_region
        %188 = vst [vmem:[#allocation2] sm:$0xff] 0.0
        %189 = vst [vmem:[#allocation2 + $0x8] sm:$0xff] 0.0
      $region36: #{spectra_forward.6} parent=31 // pred_fallthru
        _
      %v190 = vld [vmem:[#allocation2] sm:$0xff]
      %v191 = vld [vmem:[#allocation2 + $0x8] sm:$0xff]
      %v192 = vld [vmem:[%s174] sm:$0xff]
      %v193 = vld [vmem:[%s174 + $0x8] sm:$0xff]
      %v194 = vld [vmem:[%s174 + $0x10] sm:$0xf]
      %v195 = vld [vmem:[%s181] sm:$0xff]
      %v196 = vld [vmem:[%s181 + $0x8] sm:$0xff]
      %v197 = vld [vmem:[%s181 + $0x10] sm:$0xff]
      %v198 = vld [vmem:[%s181 + $0x18] sm:$0xff]
      %v199 = vld [vmem:[%s181 + $0x20] sm:$0xff]
      %v200 = vld [vmem:[%s181 + $0x28] sm:$0xff]
      %v201 = vld [vmem:[%s181 + $0x30] sm:$0xff]
      %v202 = vld [vmem:[%s181 + $0x38] sm:$0xff]
      %v203 = vld [vmem:[%s181 + $0x40] sm:$0xff]
      %v204 = vld [vmem:[%s181 + $0x48] sm:$0xff]
      %v205 = vld [vmem:[%s181 + $0x50] sm:$0xff]
      %v206 = vld [vmem:[%s181 + $0x58] sm:$0xff]
      %v207 = vld [vmem:[%s181 + $0x60] sm:$0xff]
      %v208 = vld [vmem:[%s181 + $0x68] sm:$0xff]
      %v209 = vld [vmem:[%s181 + $0x70] sm:$0xff]
      %v210 = vld [vmem:[%s181 + $0x78] sm:$0xff]
      %v211 = vld [vmem:[%s181 + $0x80] sm:$0xff]
      %v212 = vld [vmem:[%s181 + $0x88] sm:$0xff]
      %v213 = vld [vmem:[%s181 + $0x90] sm:$0xff]
      %v214 = vld [vmem:[%s181 + $0x98] sm:$0xff]
      %v215 = vld [vmem:[%s181 + $0xa0] sm:$0xff]
      %v216 = vld [vmem:[%s181 + $0xa8] sm:$0xff]
      %v217 = vld [vmem:[%s181 + $0xb0] sm:$0xff]
      %v218 = vld [vmem:[%s181 + $0xb8] sm:$0xff]
      %v219 = vld [vmem:[%s181 + $0xc0] sm:$0xff]
      %v220 = vld [vmem:[%s181 + $0xc8] sm:$0xff]
      %v221 = vld [vmem:[%s181 + $0xd0] sm:$0xff]
      %v222 = vld [vmem:[%s181 + $0xd8] sm:$0xff]
      %v223 = vld [vmem:[%s181 + $0xe0] sm:$0xff]
      %v224 = vld [vmem:[%s181 + $0xe8] sm:$0xff]
      %v225 = vld [vmem:[%s181 + $0xf0] sm:$0xff]
      %v226 = vld [vmem:[%s181 + $0xf8] sm:$0xff]
      %v227 = vld [vmem:[%s181 + $0x100] sm:$0xff]
      %v228 = vld [vmem:[%s181 + $0x108] sm:$0xff]
      %v229 = vld [vmem:[%s181 + $0x110] sm:$0xff]
      %v230 = vld [vmem:[%s181 + $0x118] sm:$0xff]
      %v231 = vld [vmem:[%s181 + $0x120] sm:$0xff]
      %v232 = vld [vmem:[%s181 + $0x128] sm:$0xff]
      %v233 = vld [vmem:[%s181 + $0x130] sm:$0xff]
      %v234 = vld [vmem:[%s181 + $0x138] sm:$0xff]
      %v235 = vld [vmem:[%s181 + $0x140] sm:$0xff]
      %v236 = vld [vmem:[%s181 + $0x148] sm:$0xff]
      %v237 = vld [vmem:[%s181 + $0x150] sm:$0xff]
      %v238 = vld [vmem:[%s181 + $0x158] sm:$0xff]
      %v239 = vld [vmem:[%s181 + $0x160] sm:$0xff]
      %v240 = vld [vmem:[%s181 + $0x168] sm:$0xff]
      %v241 = vld [vmem:[%s181 + $0x170] sm:$0xff]
      %v242 = vld [vmem:[%s181 + $0x178] sm:$0xff]
      %v243 = vld [vmem:[%s181 + $0x180] sm:$0xff]
      %v244 = vld [vmem:[%s181 + $0x188] sm:$0xff]
      %v245 = vld [vmem:[%s181 + $0x190] sm:$0xff]
      %v246 = vld [vmem:[%s181 + $0x198] sm:$0xff]
      %v247 = vld [vmem:[%s181 + $0x1a0] sm:$0xff]
      %v248 = vld [vmem:[%s181 + $0x1a8] sm:$0xff]
      %v249 = vld [vmem:[%s181 + $0x1b0] sm:$0xff]
      %v250 = vld [vmem:[%s181 + $0x1b8] sm:$0xff]
      %v251 = vld [vmem:[%s181 + $0x1c0] sm:$0xff]
      %v252 = vld [vmem:[%s181 + $0x1c8] sm:$0xff]
      %v253 = vld [vmem:[%s181 + $0x1d0] sm:$0xff]
      %v254 = vld [vmem:[%s181 + $0x1d8] sm:$0xff]
      %v255 = vld [vmem:[%s181 + $0x1e0] sm:$0xff]
      %v256 = vld [vmem:[%s181 + $0x1e8] sm:$0xff]
      %v257 = vld [vmem:[%s181 + $0x1f0] sm:$0xff]
      %v258 = vld [vmem:[%s181 + $0x1f8] sm:$0xff]
      %v259 = vld [vmem:[%s181 + $0x200] sm:$0xff]
      %v260 = vld [vmem:[%s181 + $0x208] sm:$0xff]
      %v261 = vld [vmem:[%s181 + $0x210] sm:$0xff]
      %v262 = vld [vmem:[%s181 + $0x218] sm:$0xff]
      %v263 = vld [vmem:[%s181 + $0x220] sm:$0xff]
      %v264 = vld [vmem:[%s181 + $0x228] sm:$0xff]
      %v265 = vld [vmem:[%s181 + $0x230] sm:$0xff]
      %v266 = vld [vmem:[%s181 + $0x238] sm:$0xff]
      %v267 = vld [vmem:[%s181 + $0x240] sm:$0xff]
      %v268 = vld [vmem:[%s181 + $0x248] sm:$0xff]
      %v269 = vld [vmem:[%s181 + $0x250] sm:$0xff]
      %v270 = vld [vmem:[%s181 + $0x258] sm:$0xff]
      %v271 = vld [vmem:[%s181 + $0x260] sm:$0xff]
      %v272 = vld [vmem:[%s181 + $0x268] sm:$0xff]
      %v273 = vld [vmem:[%s181 + $0x270] sm:$0xff]
      %v274 = vld [vmem:[%s181 + $0x278] sm:$0xff]
      %v278 = vunpack.c.l.b16 %v192
      %v279 = vunpack.c.h.b16 %v192
      %v280 = vunpack.c.l.b16 %v193
      %v281 = vunpack.c.h.b16 %v193
      %v282 = vunpack.c.l.b16 %v194
      %v283 = vpack.c.b16 %v278, %v278
      %v284 = vpack.c.b16 %v279, %v279
      %v285 = vpack.c.b16 %v280, %v280
      %v286 = vpack.c.b16 %v281, %v281
      %v287 = vpack.c.b16 %v282, %v282
      %v373 = vunpack.c.l.b16 %v195
      %v374 = vunpack.c.h.b16 %v195
      %v375 = vunpack.c.l.b16 %v196
      %v376 = vunpack.c.h.b16 %v196
      %v377 = vunpack.c.l.b16 %v197
      %v378 = vunpack.c.h.b16 %v197
      %v379 = vunpack.c.l.b16 %v198
      %v380 = vunpack.c.h.b16 %v198
      %v381 = vunpack.c.l.b16 %v199
      %v382 = vunpack.c.h.b16 %v199
      %v383 = vunpack.c.l.b16 %v200
      %v384 = vunpack.c.h.b16 %v200
      %v385 = vunpack.c.l.b16 %v201
      %v386 = vunpack.c.h.b16 %v201
      %v387 = vunpack.c.l.b16 %v202
      %v388 = vunpack.c.h.b16 %v202
      %v389 = vunpack.c.l.b16 %v203
      %v390 = vunpack.c.h.b16 %v203
      %v391 = vunpack.c.l.b16 %v204
      %v392 = vunpack.c.h.b16 %v204
      %v393 = vunpack.c.l.b16 %v205
      %v394 = vunpack.c.h.b16 %v205
      %v395 = vunpack.c.l.b16 %v206
      %v396 = vunpack.c.h.b16 %v206
      %v397 = vunpack.c.l.b16 %v207
      %v398 = vunpack.c.h.b16 %v207
      %v399 = vunpack.c.l.b16 %v208
      %v400 = vunpack.c.h.b16 %v208
      %v401 = vunpack.c.l.b16 %v209
      %v402 = vunpack.c.h.b16 %v209
      %v403 = vunpack.c.l.b16 %v210
      %v404 = vunpack.c.h.b16 %v210
      %v405 = vunpack.c.l.b16 %v211
      %v406 = vunpack.c.h.b16 %v211
      %v407 = vunpack.c.l.b16 %v212
      %v408 = vunpack.c.h.b16 %v212
      %v409 = vunpack.c.l.b16 %v213
      %v410 = vunpack.c.h.b16 %v213
      %v411 = vunpack.c.l.b16 %v214
      %v412 = vunpack.c.h.b16 %v214
      %v413 = vunpack.c.l.b16 %v215
      %v414 = vunpack.c.h.b16 %v215
      %v415 = vunpack.c.l.b16 %v216
      %v416 = vunpack.c.h.b16 %v216
      %v417 = vunpack.c.l.b16 %v217
      %v418 = vunpack.c.h.b16 %v217
      %v419 = vunpack.c.l.b16 %v218
      %v420 = vunpack.c.h.b16 %v218
      %v421 = vunpack.c.l.b16 %v219
      %v422 = vunpack.c.h.b16 %v219
      %v423 = vunpack.c.l.b16 %v220
      %v424 = vunpack.c.h.b16 %v220
      %v425 = vunpack.c.l.b16 %v221
      %v426 = vunpack.c.h.b16 %v221
      %v427 = vunpack.c.l.b16 %v222
      %v428 = vunpack.c.h.b16 %v222
      %v429 = vunpack.c.l.b16 %v223
      %v430 = vunpack.c.h.b16 %v223
      %v431 = vunpack.c.l.b16 %v224
      %v432 = vunpack.c.h.b16 %v224
      %v433 = vunpack.c.l.b16 %v225
      %v434 = vunpack.c.h.b16 %v225
      %v435 = vunpack.c.l.b16 %v226
      %v436 = vunpack.c.h.b16 %v226
      %v437 = vunpack.c.l.b16 %v227
      %v438 = vunpack.c.h.b16 %v227
      %v439 = vunpack.c.l.b16 %v228
      %v440 = vunpack.c.h.b16 %v228
      %v441 = vunpack.c.l.b16 %v229
      %v442 = vunpack.c.h.b16 %v229
      %v443 = vunpack.c.l.b16 %v230
      %v444 = vunpack.c.h.b16 %v230
      %v445 = vunpack.c.l.b16 %v231
      %v446 = vunpack.c.h.b16 %v231
      %v447 = vunpack.c.l.b16 %v232
      %v448 = vunpack.c.h.b16 %v232
      %v449 = vunpack.c.l.b16 %v233
      %v450 = vunpack.c.h.b16 %v233
      %v451 = vunpack.c.l.b16 %v234
      %v452 = vunpack.c.h.b16 %v234
      %v453 = vunpack.c.l.b16 %v235
      %v454 = vunpack.c.h.b16 %v235
      %v455 = vunpack.c.l.b16 %v236
      %v456 = vunpack.c.h.b16 %v236
      %v457 = vunpack.c.l.b16 %v237
      %v458 = vunpack.c.h.b16 %v237
      %v459 = vunpack.c.l.b16 %v238
      %v460 = vunpack.c.h.b16 %v238
      %v461 = vunpack.c.l.b16 %v239
      %v462 = vunpack.c.h.b16 %v239
      %v463 = vunpack.c.l.b16 %v240
      %v464 = vunpack.c.h.b16 %v240
      %v465 = vunpack.c.l.b16 %v241
      %v466 = vunpack.c.h.b16 %v241
      %v467 = vunpack.c.l.b16 %v242
      %v468 = vunpack.c.h.b16 %v242
      %v469 = vunpack.c.l.b16 %v243
      %v470 = vunpack.c.h.b16 %v243
      %v471 = vunpack.c.l.b16 %v244
      %v472 = vunpack.c.h.b16 %v244
      %v473 = vunpack.c.l.b16 %v245
      %v474 = vunpack.c.h.b16 %v245
      %v475 = vunpack.c.l.b16 %v246
      %v476 = vunpack.c.h.b16 %v246
      %v477 = vunpack.c.l.b16 %v247
      %v478 = vunpack.c.h.b16 %v247
      %v479 = vunpack.c.l.b16 %v248
      %v480 = vunpack.c.h.b16 %v248
      %v481 = vunpack.c.l.b16 %v249
      %v482 = vunpack.c.h.b16 %v249
      %v483 = vunpack.c.l.b16 %v250
      %v484 = vunpack.c.h.b16 %v250
      %v485 = vunpack.c.l.b16 %v251
      %v486 = vunpack.c.h.b16 %v251
      %v487 = vunpack.c.l.b16 %v252
      %v488 = vunpack.c.h.b16 %v252
      %v489 = vunpack.c.l.b16 %v253
      %v490 = vunpack.c.h.b16 %v253
      %v491 = vunpack.c.l.b16 %v254
      %v492 = vunpack.c.h.b16 %v254
      %v493 = vunpack.c.l.b16 %v255
      %v494 = vunpack.c.h.b16 %v255
      %v495 = vunpack.c.l.b16 %v256
      %v496 = vunpack.c.h.b16 %v256
      %v497 = vunpack.c.l.b16 %v257
      %v498 = vunpack.c.h.b16 %v257
      %v499 = vunpack.c.l.b16 %v258
      %v500 = vunpack.c.h.b16 %v258
      %v501 = vunpack.c.l.b16 %v259
      %v502 = vunpack.c.h.b16 %v259
      %v503 = vunpack.c.l.b16 %v260
      %v504 = vunpack.c.h.b16 %v260
      %v505 = vunpack.c.l.b16 %v261
      %v506 = vunpack.c.h.b16 %v261
      %v507 = vunpack.c.l.b16 %v262
      %v508 = vunpack.c.h.b16 %v262
      %v509 = vunpack.c.l.b16 %v263
      %v510 = vunpack.c.h.b16 %v263
      %v511 = vunpack.c.l.b16 %v264
      %v512 = vunpack.c.h.b16 %v264
      %v513 = vunpack.c.l.b16 %v265
      %v514 = vunpack.c.h.b16 %v265
      %v515 = vunpack.c.l.b16 %v266
      %v516 = vunpack.c.h.b16 %v266
      %v517 = vunpack.c.l.b16 %v267
      %v518 = vunpack.c.h.b16 %v267
      %v519 = vunpack.c.l.b16 %v268
      %v520 = vunpack.c.h.b16 %v268
      %v521 = vunpack.c.l.b16 %v269
      %v522 = vunpack.c.h.b16 %v269
      %v523 = vunpack.c.l.b16 %v270
      %v524 = vunpack.c.h.b16 %v270
      %v525 = vunpack.c.l.b16 %v271
      %v526 = vunpack.c.h.b16 %v271
      %v527 = vunpack.c.l.b16 %v272
      %v528 = vunpack.c.h.b16 %v272
      %v529 = vunpack.c.l.b16 %v273
      %v530 = vunpack.c.h.b16 %v273
      %v531 = vunpack.c.l.b16 %v274
      %v532 = vunpack.c.h.b16 %v274
      %v533 = vpack.c.b16 %v375, %v373
      %v534 = vpack.c.b16 %v376, %v374
      %v535 = vpack.c.b16 %v379, %v377
      %v536 = vpack.c.b16 %v380, %v378
      %v537 = vpack.c.b16 %v383, %v381
      %v538 = vpack.c.b16 %v384, %v382
      %v539 = vpack.c.b16 %v387, %v385
      %v540 = vpack.c.b16 %v388, %v386
      %v541 = vpack.c.b16 %v391, %v389
      %v542 = vpack.c.b16 %v392, %v390
      %v543 = vpack.c.b16 %v395, %v393
      %v544 = vpack.c.b16 %v396, %v394
      %v545 = vpack.c.b16 %v399, %v397
      %v546 = vpack.c.b16 %v400, %v398
      %v547 = vpack.c.b16 %v403, %v401
      %v548 = vpack.c.b16 %v404, %v402
      %v549 = vpack.c.b16 %v407, %v405
      %v550 = vpack.c.b16 %v408, %v406
      %v551 = vpack.c.b16 %v411, %v409
      %v552 = vpack.c.b16 %v412, %v410
      %v553 = vpack.c.b16 %v415, %v413
      %v554 = vpack.c.b16 %v416, %v414
      %v555 = vpack.c.b16 %v419, %v417
      %v556 = vpack.c.b16 %v420, %v418
      %v557 = vpack.c.b16 %v423, %v421
      %v558 = vpack.c.b16 %v424, %v422
      %v559 = vpack.c.b16 %v427, %v425
      %v560 = vpack.c.b16 %v428, %v426
      %v561 = vpack.c.b16 %v431, %v429
      %v562 = vpack.c.b16 %v432, %v430
      %v563 = vpack.c.b16 %v435, %v433
      %v564 = vpack.c.b16 %v436, %v434
      %v565 = vpack.c.b16 %v439, %v437
      %v566 = vpack.c.b16 %v440, %v438
      %v567 = vpack.c.b16 %v443, %v441
      %v568 = vpack.c.b16 %v444, %v442
      %v569 = vpack.c.b16 %v447, %v445
      %v570 = vpack.c.b16 %v448, %v446
      %v571 = vpack.c.b16 %v451, %v449
      %v572 = vpack.c.b16 %v452, %v450
      %v573 = vpack.c.b16 %v455, %v453
      %v574 = vpack.c.b16 %v456, %v454
      %v575 = vpack.c.b16 %v459, %v457
      %v576 = vpack.c.b16 %v460, %v458
      %v577 = vpack.c.b16 %v463, %v461
      %v578 = vpack.c.b16 %v464, %v462
      %v579 = vpack.c.b16 %v467, %v465
      %v580 = vpack.c.b16 %v468, %v466
      %v581 = vpack.c.b16 %v471, %v469
      %v582 = vpack.c.b16 %v472, %v470
      %v583 = vpack.c.b16 %v475, %v473
      %v584 = vpack.c.b16 %v476, %v474
      %v585 = vpack.c.b16 %v479, %v477
      %v586 = vpack.c.b16 %v480, %v478
      %v587 = vpack.c.b16 %v483, %v481
      %v588 = vpack.c.b16 %v484, %v482
      %v589 = vpack.c.b16 %v487, %v485
      %v590 = vpack.c.b16 %v488, %v486
      %v591 = vpack.c.b16 %v491, %v489
      %v592 = vpack.c.b16 %v492, %v490
      %v593 = vpack.c.b16 %v495, %v493
      %v594 = vpack.c.b16 %v496, %v494
      %v595 = vpack.c.b16 %v499, %v497
      %v596 = vpack.c.b16 %v500, %v498
      %v597 = vpack.c.b16 %v503, %v501
      %v598 = vpack.c.b16 %v504, %v502
      %v599 = vpack.c.b16 %v507, %v505
      %v600 = vpack.c.b16 %v508, %v506
      %v601 = vpack.c.b16 %v511, %v509
      %v602 = vpack.c.b16 %v512, %v510
      %v603 = vpack.c.b16 %v515, %v513
      %v604 = vpack.c.b16 %v516, %v514
      %v605 = vpack.c.b16 %v519, %v517
      %v606 = vpack.c.b16 %v520, %v518
      %v607 = vpack.c.b16 %v523, %v521
      %v608 = vpack.c.b16 %v524, %v522
      %v609 = vpack.c.b16 %v527, %v525
      %v610 = vpack.c.b16 %v528, %v526
      %v611 = vpack.c.b16 %v531, %v529
      %v612 = vpack.c.b16 %v532, %v530
      %693 = vmatprep.subr.bf16.mxu0 %v534
      %694 = vmatpush1.bf16.msra.mxu0 %v533
      %695 = vmatprep.subr.bf16.mxu0 %v536
      %696 = vmatpush1.bf16.msra.mxu0 %v535
      %697 = vmatprep.subr.bf16.mxu0 %v538
      %698 = vmatpush1.bf16.msra.mxu0 %v537
      %699 = vmatprep.subr.bf16.mxu0 %v540
      %700 = vmatpush1.bf16.msra.mxu0 %v539
      %701 = vmatprep.subr.bf16.mxu0 %v542
      %702 = vmatpush1.bf16.msra.mxu0 %v541
      %703 = vmatprep.subr.bf16.mxu0 %v544
      %704 = vmatpush1.bf16.msra.mxu0 %v543
      %705 = vmatprep.subr.bf16.mxu0 %v546
      %706 = vmatpush1.bf16.msra.mxu0 %v545
      %707 = vmatprep.subr.bf16.mxu0 %v548
      %708 = vmatpush1.bf16.msra.mxu0 %v547
      %709 = vmatprep.subr.bf16.mxu0 %v550
      %710 = vmatpush1.bf16.msra.mxu0 %v549
      %711 = vmatprep.subr.bf16.mxu0 %v552
      %712 = vmatpush1.bf16.msra.mxu0 %v551
      %713 = vmatprep.subr.bf16.mxu0 %v554
      %714 = vmatpush1.bf16.msra.mxu0 %v553
      %715 = vmatprep.subr.bf16.mxu0 %v556
      %716 = vmatpush1.bf16.msra.mxu0 %v555
      %717 = vmatprep.subr.bf16.mxu0 %v558
      %718 = vmatpush1.bf16.msra.mxu0 %v557
      %719 = vmatprep.subr.bf16.mxu0 %v560
      %720 = vmatpush1.bf16.msra.mxu0 %v559
      %721 = vmatprep.subr.bf16.mxu0 %v562
      %722 = vmatpush1.bf16.msra.mxu0 %v561
      %723 = vmatprep.subr.bf16.mxu0 %v564
      %724 = vmatpush1.bf16.msra.mxu0 %v563
      %725 = vmatprep.mubr.bf16.mxu0 %v284
      %726 = vmatmul.mubr.bf16.gmra.mrb[0].mxu0 %v283
      %v727 = vpop.f32.mrb[0].mxu0
      %v728 = vadd.f32 0.0, %v727
      %v729 = vpop.f32.mrb[0].mxu0
      %v730 = vadd.f32 0.0, %v729
      %v731 = vpop.f32.mrb[0].mxu0
      %v732 = vpop.f32.mrb[0].mxu0
      %733 = vdwg.mxu0
      %734 = vmatprep.subr.bf16.mxu0 %v566
      %735 = vmatpush1.bf16.msra.mxu0 %v565
      %736 = vmatprep.subr.bf16.mxu0 %v568
      %737 = vmatpush1.bf16.msra.mxu0 %v567
      %738 = vmatprep.subr.bf16.mxu0 %v570
      %739 = vmatpush1.bf16.msra.mxu0 %v569
      %740 = vmatprep.subr.bf16.mxu0 %v572
      %741 = vmatpush1.bf16.msra.mxu0 %v571
      %742 = vmatprep.subr.bf16.mxu0 %v574
      %743 = vmatpush1.bf16.msra.mxu0 %v573
      %744 = vmatprep.subr.bf16.mxu0 %v576
      %745 = vmatpush1.bf16.msra.mxu0 %v575
      %746 = vmatprep.subr.bf16.mxu0 %v578
      %747 = vmatpush1.bf16.msra.mxu0 %v577
      %748 = vmatprep.subr.bf16.mxu0 %v580
      %749 = vmatpush1.bf16.msra.mxu0 %v579
      %750 = vmatprep.subr.bf16.mxu0 %v582
      %751 = vmatpush1.bf16.msra.mxu0 %v581
      %752 = vmatprep.subr.bf16.mxu0 %v584
      %753 = vmatpush1.bf16.msra.mxu0 %v583
      %754 = vmatprep.subr.bf16.mxu0 %v586
      %755 = vmatpush1.bf16.msra.mxu0 %v585
      %756 = vmatprep.subr.bf16.mxu0 %v588
      %757 = vmatpush1.bf16.msra.mxu0 %v587
      %758 = vmatprep.subr.bf16.mxu0 %v590
      %759 = vmatpush1.bf16.msra.mxu0 %v589
      %760 = vmatprep.subr.bf16.mxu0 %v592
      %761 = vmatpush1.bf16.msra.mxu0 %v591
      %762 = vmatprep.subr.bf16.mxu0 %v594
      %763 = vmatpush1.bf16.msra.mxu0 %v593
      %764 = vmatprep.subr.bf16.mxu0 %v596
      %765 = vmatpush1.bf16.msra.mxu0 %v595
      %766 = vmatprep.mubr.bf16.mxu0 %v286
      %767 = vmatmul.mubr.bf16.gmra.mrb[0].mxu0 %v285
      %v768 = vpop.f32.mrb[0].mxu0
      %v769 = vadd.f32 %v728, %v768
      %v770 = vpop.f32.mrb[0].mxu0
      %v771 = vadd.f32 %v730, %v770
      %v772 = vpop.f32.mrb[0].mxu0
      %v773 = vpop.f32.mrb[0].mxu0
      %774 = vdwg.mxu0
      %775 = vmatprep.subr.bf16.mxu0 %v598
      %776 = vmatpush1.bf16.msra.mxu0 %v597
      %777 = vmatprep.subr.bf16.mxu0 %v600
      %778 = vmatpush1.bf16.msra.mxu0 %v599
      %779 = vmatprep.subr.bf16.mxu0 %v602
      %780 = vmatpush1.bf16.msra.mxu0 %v601
      %781 = vmatprep.subr.bf16.mxu0 %v604
      %782 = vmatpush1.bf16.msra.mxu0 %v603
      %783 = vmatprep.subr.bf16.mxu0 %v606
      %784 = vmatpush1.bf16.msra.mxu0 %v605
      %785 = vmatprep.subr.bf16.mxu0 %v608
      %786 = vmatpush1.bf16.msra.mxu0 %v607
      %787 = vmatprep.subr.bf16.mxu0 %v610
      %788 = vmatpush1.bf16.msra.mxu0 %v609
      %789 = vmatprep.subr.bf16.mxu0 %v612
      %790 = vmatpush1.bf16.msra.mxu0 %v611
      %791 = vmatprep.subr.bf16.mxu0 0
      %792 = vmatpush1.bf16.msra.mxu0 0
      %793 = vmatprep.subr.bf16.mxu0 0
      %794 = vmatpush1.bf16.msra.mxu0 0
      %795 = vmatprep.subr.bf16.mxu0 0
      %796 = vmatpush1.bf16.msra.mxu0 0
      %797 = vmatprep.subr.bf16.mxu0 0
      %798 = vmatpush1.bf16.msra.mxu0 0
      %799 = vmatprep.subr.bf16.mxu0 0
      %800 = vmatpush1.bf16.msra.mxu0 0
      %801 = vmatprep.subr.bf16.mxu0 0
      %802 = vmatpush1.bf16.msra.mxu0 0
      %803 = vmatprep.subr.bf16.mxu0 0
      %804 = vmatpush1.bf16.msra.mxu0 0
      %805 = vmatprep.subr.bf16.mxu0 0
      %806 = vmatpush1.bf16.msra.mxu0 0
      %807 = vmatprep.mubr.bf16.mxu0 0
      %808 = vmatmul.mubr.bf16.gmra.mrb[0].mxu0 %v287
      %v809 = vpop.f32.mrb[0].mxu0
      %v810 = vadd.f32 %v769, %v809
      %v811 = vpop.f32.mrb[0].mxu0
      %v812 = vadd.f32 %v771, %v811
      %v813 = vpop.f32.mrb[0].mxu0
      %v814 = vpop.f32.mrb[0].mxu0
      %815 = vdwg.mxu0
      %v816 = vadd.f32 %v190, %v810
      %v817 = vadd.f32 %v191, %v812
      %818 = vst [vmem:[#allocation2] sm:$0xff] %v816
      %819 = vst [vmem:[#allocation2 + $0x8] sm:$0xff] %v817
      %p820 = scmp.eq.s32.totalorder %s14, 4
      // Predicated region
      $region37: #{spectra_forward.6} parent=31 // pred_check
        %p821 = pneg %p820
      $region38: #{spectra_forward.6} parent=31 // pred_check_branch
        %823 = sbr.rel (%p821) target = $region40
      $region39: #{spectra_forward.6} parent=31 // pred_region
        %v824 = vld [vmem:[#allocation2] sm:$0xff]
        %v825 = vld [vmem:[#allocation2 + $0x8] sm:$0xff]
        %v826 = vld [vmem:[%s2] sm:$0x3]
        %v828 = vlaneseq
        %v829 = vshrl.u32 %v828, 7
        %v830 = vsub.s32 0, %v829
        %v831 = vrot.slane %v826, %v830
        %v832 = vlaneseq
        %v833 = vshrl.u32 %v832, 7
        %v834 = vsub.s32 1, %v833
        %v835 = vrot.slane %v826, %v834
        %v838 = vadd.f32 %v824, %v831
        %v839 = vadd.f32 %v825, %v835
        %v840 = vmax.f32 %v838, 0.0
        %v841 = vmax.f32 %v839, 0.0
        %842 = vst [vmem:[%s3] sm:$0xff] %v840
        %843 = vst [vmem:[%s3 + $0x8] sm:$0xff] %v841
      $region40: #{spectra_forward.6} parent=31 // pred_fallthru
        _
      // Predicated region
      $region41: #{spectra_forward.6} parent=31 // pred_check
        %p844 = pneg %p100
      $region42: #{spectra_forward.6} parent=31 // pred_check_branch
        %846 = sbr.rel (%p844) target = $region44
      $region43: #{spectra_forward.6} parent=31 // pred_region
        _
      $region44: #{spectra_forward.6} parent=31 // pred_fallthru
        _
      // Predicated region
      $region45: #{spectra_forward.6} parent=31 // pred_check
        %p847 = pneg %p100
      $region46: #{spectra_forward.6} parent=31 // pred_check_branch
        %849 = sbr.rel (%p847) target = $region48
      $region47: #{spectra_forward.6} parent=31 // pred_region
        _
      $region48: #{spectra_forward.6} parent=31 // pred_fallthru
        _
    $region32: #{spectra_forward.6} parent=5 // pred_fallthru
      _
    %p850 = scmp.le.s32.totalorder 2, %s9
    // Predicated region
    $region49: #{spectra_forward.6} parent=5 // pred_check
      %p851 = pneg %p850
    $region50: #{spectra_forward.6} parent=5 // pred_check_branch
      %853 = sbr.rel (%p851) target = $region52
    $region51: #{spectra_forward.6} parent=5 // pred_region
      %s854 = ssub.s32 %s9, 2
    $region52: #{spectra_forward.6} parent=5 // pred_fallthru
      _
  $region6: #{spectra_forward.6} parent=0 // loop_footer
    %s13 = sadd.s32 1, %s9
  $region7: #{spectra_forward.6} parent=0 // loop_footer_branch
    %8 = sbr.rel target = $region3
  $region8: #{spectra_forward.6} parent=0 // loop_exit
    _

// kernel: spectra_forward.7
$region0: #{spectra_forward.7}
  #allocation0 [shape = 'u32[]', space=smem, size = 0x4, offset = 0x4, fixed_abs, tag = 'smem constant byte address 0x4 - core index']
  #allocation1 [shape = 'u32[144,128]{1,0:T(1,128)}', space=vmem, size = 0x12000, scoped, tag = 'internal scratch']
  #allocation2 [shape = 'f32[8,256]{1,0:T(8,128)}', space=vmem, size = 0x2000, scoped, tag = 'scratch operand']
  %s0 = inlined_call_operand.vmem [shape: bf16[8,256], index: 0, kind: input, shape index: {}]
  %s1 = inlined_call_operand.vmem [shape: bf16[256,256], index: 1, kind: input, shape index: {}]
  %s2 = inlined_call_operand.vmem [shape: f32[1,256], index: 2, kind: input, shape index: {}]
  %s3 = inlined_call_operand.vmem [shape: f32[8,256], index: 3, kind: output, shape index: {}]
  %s4 = sld [smem:[#allocation0]]
  $region30: #{spectra_forward.7} parent=0
    _
  %s6 = ssub.s32 1, %s4
  %s7 = scalar_select 0, %s6, %s4
  // Predicated region
  $region2: #{spectra_forward.7} parent=0 // pred_check
    _
  $region3: #{spectra_forward.7} parent=0 // pred_check_branch
    %9 = sbr.rel (0) target = $region5
  $region4: #{spectra_forward.7} parent=0 // pred_region
    _
  $region5: #{spectra_forward.7} parent=0 // pred_fallthru
    _
  // Predicated region
  $region6: #{spectra_forward.7} parent=0 // pred_check
    _
  $region7: #{spectra_forward.7} parent=0 // pred_check_branch
    %11 = sbr.rel (0) target = $region9
  $region8: #{spectra_forward.7} parent=0 // pred_region
    _
  $region9: #{spectra_forward.7} parent=0 // pred_fallthru
    _
  // Predicated region
  $region10: #{spectra_forward.7} parent=0 // pred_check
    _
  $region11: #{spectra_forward.7} parent=0 // pred_check_branch
    %13 = sbr.rel (0) target = $region13
  $region12: #{spectra_forward.7} parent=0 // pred_region
    _
  $region13: #{spectra_forward.7} parent=0 // pred_fallthru
    _
  %p14 = scmp.eq.s32.totalorder 0, 0
  // Predicated region
  $region14: #{spectra_forward.7} parent=0 // pred_check
    %p15 = pneg %p14
  $region15: #{spectra_forward.7} parent=0 // pred_check_branch
    %17 = sbr.rel (%p15) target = $region17
  $region16: #{spectra_forward.7} parent=0 // pred_region
    %18 = vst [vmem:[#allocation2] sm:$0xff] 0.0
    %19 = vst [vmem:[#allocation2 + $0x8] sm:$0xff] 0.0
  $region17: #{spectra_forward.7} parent=0 // pred_fallthru
    _
  %v20 = vld [vmem:[#allocation2] sm:$0xff]
  %v21 = vld [vmem:[#allocation2 + $0x8] sm:$0xff]
  %v22 = vld [vmem:[%s0] sm:$0xff]
  %v23 = vld [vmem:[%s1] sm:$0xff]
  %v24 = vld [vmem:[%s1 + $0x8] sm:$0xff]
  %v25 = vld [vmem:[%s1 + $0x10] sm:$0xff]
  %v26 = vld [vmem:[%s1 + $0x18] sm:$0xff]
  %v27 = vld [vmem:[%s1 + $0x20] sm:$0xff]
  %v28 = vld [vmem:[%s1 + $0x28] sm:$0xff]
  %v29 = vld [vmem:[%s1 + $0x30] sm:$0xff]
  %v30 = vld [vmem:[%s1 + $0x38] sm:$0xff]
  %v31 = vld [vmem:[%s1 + $0x40] sm:$0xff]
  %v32 = vld [vmem:[%s1 + $0x48] sm:$0xff]
  %v33 = vld [vmem:[%s1 + $0x50] sm:$0xff]
  %v34 = vld [vmem:[%s1 + $0x58] sm:$0xff]
  %v35 = vld [vmem:[%s1 + $0x60] sm:$0xff]
  %v36 = vld [vmem:[%s1 + $0x68] sm:$0xff]
  %v37 = vld [vmem:[%s1 + $0x70] sm:$0xff]
  %v38 = vld [vmem:[%s1 + $0x78] sm:$0xff]
  %v39 = vld [vmem:[%s1 + $0x80] sm:$0xff]
  %v40 = vld [vmem:[%s1 + $0x88] sm:$0xff]
  %v41 = vld [vmem:[%s1 + $0x90] sm:$0xff]
  %v42 = vld [vmem:[%s1 + $0x98] sm:$0xff]
  %v43 = vld [vmem:[%s1 + $0xa0] sm:$0xff]
  %v44 = vld [vmem:[%s1 + $0xa8] sm:$0xff]
  %v45 = vld [vmem:[%s1 + $0xb0] sm:$0xff]
  %v46 = vld [vmem:[%s1 + $0xb8] sm:$0xff]
  %v47 = vld [vmem:[%s1 + $0xc0] sm:$0xff]
  %v48 = vld [vmem:[%s1 + $0xc8] sm:$0xff]
  %v49 = vld [vmem:[%s1 + $0xd0] sm:$0xff]
  %v50 = vld [vmem:[%s1 + $0xd8] sm:$0xff]
  %v51 = vld [vmem:[%s1 + $0xe0] sm:$0xff]
  %v52 = vld [vmem:[%s1 + $0xe8] sm:$0xff]
  %v53 = vld [vmem:[%s1 + $0xf0] sm:$0xff]
  %v54 = vld [vmem:[%s1 + $0xf8] sm:$0xff]
  %v56 = vunpack.c.l.b16 %v22
  %v57 = vunpack.c.h.b16 %v22
  %v58 = vpack.c.b16 %v56, %v56
  %v59 = vpack.c.b16 %v57, %v57
  %v94 = vunpack.c.l.b16 %v23
  %v95 = vunpack.c.h.b16 %v23
  %v96 = vunpack.c.l.b16 %v24
  %v97 = vunpack.c.h.b16 %v24
  %v98 = vunpack.c.l.b16 %v25
  %v99 = vunpack.c.h.b16 %v25
  %v100 = vunpack.c.l.b16 %v26
  %v101 = vunpack.c.h.b16 %v26
  %v102 = vunpack.c.l.b16 %v27
  %v103 = vunpack.c.h.b16 %v27
  %v104 = vunpack.c.l.b16 %v28
  %v105 = vunpack.c.h.b16 %v28
  %v106 = vunpack.c.l.b16 %v29
  %v107 = vunpack.c.h.b16 %v29
  %v108 = vunpack.c.l.b16 %v30
  %v109 = vunpack.c.h.b16 %v30
  %v110 = vunpack.c.l.b16 %v31
  %v111 = vunpack.c.h.b16 %v31
  %v112 = vunpack.c.l.b16 %v32
  %v113 = vunpack.c.h.b16 %v32
  %v114 = vunpack.c.l.b16 %v33
  %v115 = vunpack.c.h.b16 %v33
  %v116 = vunpack.c.l.b16 %v34
  %v117 = vunpack.c.h.b16 %v34
  %v118 = vunpack.c.l.b16 %v35
  %v119 = vunpack.c.h.b16 %v35
  %v120 = vunpack.c.l.b16 %v36
  %v121 = vunpack.c.h.b16 %v36
  %v122 = vunpack.c.l.b16 %v37
  %v123 = vunpack.c.h.b16 %v37
  %v124 = vunpack.c.l.b16 %v38
  %v125 = vunpack.c.h.b16 %v38
  %v126 = vunpack.c.l.b16 %v39
  %v127 = vunpack.c.h.b16 %v39
  %v128 = vunpack.c.l.b16 %v40
  %v129 = vunpack.c.h.b16 %v40
  %v130 = vunpack.c.l.b16 %v41
  %v131 = vunpack.c.h.b16 %v41
  %v132 = vunpack.c.l.b16 %v42
  %v133 = vunpack.c.h.b16 %v42
  %v134 = vunpack.c.l.b16 %v43
  %v135 = vunpack.c.h.b16 %v43
  %v136 = vunpack.c.l.b16 %v44
  %v137 = vunpack.c.h.b16 %v44
  %v138 = vunpack.c.l.b16 %v45
  %v139 = vunpack.c.h.b16 %v45
  %v140 = vunpack.c.l.b16 %v46
  %v141 = vunpack.c.h.b16 %v46
  %v142 = vunpack.c.l.b16 %v47
  %v143 = vunpack.c.h.b16 %v47
  %v144 = vunpack.c.l.b16 %v48
  %v145 = vunpack.c.h.b16 %v48
  %v146 = vunpack.c.l.b16 %v49
  %v147 = vunpack.c.h.b16 %v49
  %v148 = vunpack.c.l.b16 %v50
  %v149 = vunpack.c.h.b16 %v50
  %v150 = vunpack.c.l.b16 %v51
  %v151 = vunpack.c.h.b16 %v51
  %v152 = vunpack.c.l.b16 %v52
  %v153 = vunpack.c.h.b16 %v52
  %v154 = vunpack.c.l.b16 %v53
  %v155 = vunpack.c.h.b16 %v53
  %v156 = vunpack.c.l.b16 %v54
  %v157 = vunpack.c.h.b16 %v54
  %v158 = vpack.c.b16 %v96, %v94
  %v159 = vpack.c.b16 %v97, %v95
  %v160 = vpack.c.b16 %v100, %v98
  %v161 = vpack.c.b16 %v101, %v99
  %v162 = vpack.c.b16 %v104, %v102
  %v163 = vpack.c.b16 %v105, %v103
  %v164 = vpack.c.b16 %v108, %v106
  %v165 = vpack.c.b16 %v109, %v107
  %v166 = vpack.c.b16 %v112, %v110
  %v167 = vpack.c.b16 %v113, %v111
  %v168 = vpack.c.b16 %v116, %v114
  %v169 = vpack.c.b16 %v117, %v115
  %v170 = vpack.c.b16 %v120, %v118
  %v171 = vpack.c.b16 %v121, %v119
  %v172 = vpack.c.b16 %v124, %v122
  %v173 = vpack.c.b16 %v125, %v123
  %v174 = vpack.c.b16 %v128, %v126
  %v175 = vpack.c.b16 %v129, %v127
  %v176 = vpack.c.b16 %v132, %v130
  %v177 = vpack.c.b16 %v133, %v131
  %v178 = vpack.c.b16 %v136, %v134
  %v179 = vpack.c.b16 %v137, %v135
  %v180 = vpack.c.b16 %v140, %v138
  %v181 = vpack.c.b16 %v141, %v139
  %v182 = vpack.c.b16 %v144, %v142
  %v183 = vpack.c.b16 %v145, %v143
  %v184 = vpack.c.b16 %v148, %v146
  %v185 = vpack.c.b16 %v149, %v147
  %v186 = vpack.c.b16 %v152, %v150
  %v187 = vpack.c.b16 %v153, %v151
  %v188 = vpack.c.b16 %v156, %v154
  %v189 = vpack.c.b16 %v157, %v155
  %222 = vmatprep.subr.bf16.mxu0 %v159
  %223 = vmatpush1.bf16.msra.mxu0 %v158
  %224 = vmatprep.subr.bf16.mxu0 %v161
  %225 = vmatpush1.bf16.msra.mxu0 %v160
  %226 = vmatprep.subr.bf16.mxu0 %v163
  %227 = vmatpush1.bf16.msra.mxu0 %v162
  %228 = vmatprep.subr.bf16.mxu0 %v165
  %229 = vmatpush1.bf16.msra.mxu0 %v164
  %230 = vmatprep.subr.bf16.mxu0 %v167
  %231 = vmatpush1.bf16.msra.mxu0 %v166
  %232 = vmatprep.subr.bf16.mxu0 %v169
  %233 = vmatpush1.bf16.msra.mxu0 %v168
  %234 = vmatprep.subr.bf16.mxu0 %v171
  %235 = vmatpush1.bf16.msra.mxu0 %v170
  %236 = vmatprep.subr.bf16.mxu0 %v173
  %237 = vmatpush1.bf16.msra.mxu0 %v172
  %238 = vmatprep.subr.bf16.mxu0 %v175
  %239 = vmatpush1.bf16.msra.mxu0 %v174
  %240 = vmatprep.subr.bf16.mxu0 %v177
  %241 = vmatpush1.bf16.msra.mxu0 %v176
  %242 = vmatprep.subr.bf16.mxu0 %v179
  %243 = vmatpush1.bf16.msra.mxu0 %v178
  %244 = vmatprep.subr.bf16.mxu0 %v181
  %245 = vmatpush1.bf16.msra.mxu0 %v180
  %246 = vmatprep.subr.bf16.mxu0 %v183
  %247 = vmatpush1.bf16.msra.mxu0 %v182
  %248 = vmatprep.subr.bf16.mxu0 %v185
  %249 = vmatpush1.bf16.msra.mxu0 %v184
  %250 = vmatprep.subr.bf16.mxu0 %v187
  %251 = vmatpush1.bf16.msra.mxu0 %v186
  %252 = vmatprep.subr.bf16.mxu0 %v189
  %253 = vmatpush1.bf16.msra.mxu0 %v188
  %254 = vmatprep.mubr.bf16.mxu0 %v59
  %255 = vmatmul.mubr.bf16.gmra.mrb[0].mxu0 %v58
  %v256 = vpop.f32.mrb[0].mxu0
  %v257 = vadd.f32 0.0, %v256
  %v258 = vpop.f32.mrb[0].mxu0
  %v259 = vadd.f32 0.0, %v258
  %v260 = vpop.f32.mrb[0].mxu0
  %v261 = vpop.f32.mrb[0].mxu0
  %262 = vdwg.mxu0
  %v263 = vadd.f32 %v20, %v257
  %v264 = vadd.f32 %v21, %v259
  %265 = vst [vmem:[#allocation2] sm:$0xff] %v263
  %266 = vst [vmem:[#allocation2 + $0x8] sm:$0xff] %v264
  // Predicated region
  $region18: #{spectra_forward.7} parent=0 // pred_check
    %p267 = pneg %p14
  $region19: #{spectra_forward.7} parent=0 // pred_check_branch
    %269 = sbr.rel (%p267) target = $region21
  $region20: #{spectra_forward.7} parent=0 // pred_region
    %v270 = vld [vmem:[#allocation2] sm:$0xff]
    %v271 = vld [vmem:[#allocation2 + $0x8] sm:$0xff]
    %v272 = vld [vmem:[%s2] sm:$0x3]
    %v274 = vlaneseq
    %v275 = vshrl.u32 %v274, 7
    %v276 = vsub.s32 0, %v275
    %v277 = vrot.slane %v272, %v276
    %v278 = vlaneseq
    %v279 = vshrl.u32 %v278, 7
    %v280 = vsub.s32 1, %v279
    %v281 = vrot.slane %v272, %v280
    %v284 = vadd.f32 %v270, %v277
    %v285 = vadd.f32 %v271, %v281
    %v286 = vmax.f32 %v284, 0.0
    %v287 = vmax.f32 %v285, 0.0
    %288 = vst [vmem:[%s3] sm:$0xff] %v286
    %289 = vst [vmem:[%s3 + $0x8] sm:$0xff] %v287
  $region21: #{spectra_forward.7} parent=0 // pred_fallthru
    _
  // Predicated region
  $region22: #{spectra_forward.7} parent=0 // pred_check
    _
  $region23: #{spectra_forward.7} parent=0 // pred_check_branch
    %291 = sbr.rel (0) target = $region25
  $region24: #{spectra_forward.7} parent=0 // pred_region
    _
  $region25: #{spectra_forward.7} parent=0 // pred_fallthru
    _
  // Predicated region
  $region26: #{spectra_forward.7} parent=0 // pred_check
    _
  $region27: #{spectra_forward.7} parent=0 // pred_check_branch
    %293 = sbr.rel (0) target = $region29
  $region28: #{spectra_forward.7} parent=0 // pred_region
    _
  $region29: #{spectra_forward.7} parent=0 // pred_fallthru
    _

// kernel: spectra_forward.9
$region0: #{spectra_forward.9}
  #allocation0 [shape = 'u32[]', space=smem, size = 0x4, offset = 0x4, fixed_abs, tag = 'smem constant byte address 0x4 - core index']
  #allocation1 [shape = 'u32[144,128]{1,0:T(1,128)}', space=vmem, size = 0x12000, scoped, tag = 'internal scratch']
  #allocation2 [shape = 'f32[8,128]{1,0:T(8,128)}', space=vmem, size = 0x1000, scoped, tag = 'scratch operand']
  %s0 = inlined_call_operand.vmem [shape: bf16[8,512], index: 0, kind: input, shape index: {}]
  %s1 = inlined_call_operand.vmem [shape: bf16[512,128], index: 1, kind: input, shape index: {}]
  %s2 = inlined_call_operand.vmem [shape: f32[1,128], index: 2, kind: input, shape index: {}]
  %s3 = inlined_call_operand.hbm [shape: f32[8,128], index: 3, kind: output, shape index: {}]
  %s4 = sld [smem:[#allocation0]]
  $region30: #{spectra_forward.9} parent=0
    _
  %s6 = ssub.s32 1, %s4
  %s7 = scalar_select 0, %s6, %s4
  $region1: #{spectra_forward.9} parent=0
    #allocation3 [shape = 'u8[4096]{0}', space=vmem, size = 0x1000, scoped, tag = 'output window, operand 0, single buffered']
    #allocation4 [shape = 's32[1]{0}', space=sflag, size = 0x4, scoped, tag = 'scoped memory for spectra_forward.9']
    %8 = vsyncpa [#allocation4], 0
    // Predicated region
    $region2: #{spectra_forward.9} parent=1 // pred_check
      _
    $region3: #{spectra_forward.9} parent=1 // pred_check_branch
      %10 = sbr.rel (0) target = $region5
    $region4: #{spectra_forward.9} parent=1 // pred_region
      _
    $region5: #{spectra_forward.9} parent=1 // pred_fallthru
      _
    // Predicated region
    $region6: #{spectra_forward.9} parent=1 // pred_check
      _
    $region7: #{spectra_forward.9} parent=1 // pred_check_branch
      %12 = sbr.rel (0) target = $region9
    $region8: #{spectra_forward.9} parent=1 // pred_region
      _
    $region9: #{spectra_forward.9} parent=1 // pred_fallthru
      _
    // Predicated region
    $region10: #{spectra_forward.9} parent=1 // pred_check
      _
    $region11: #{spectra_forward.9} parent=1 // pred_check_branch
      %14 = sbr.rel (0) target = $region13
    $region12: #{spectra_forward.9} parent=1 // pred_region
      _
    $region13: #{spectra_forward.9} parent=1 // pred_fallthru
      _
    %p16 = scmp.eq.s32.totalorder 0, 0
    // Predicated region
    $region14: #{spectra_forward.9} parent=1 // pred_check
      %p17 = pneg %p16
    $region15: #{spectra_forward.9} parent=1 // pred_check_branch
      %19 = sbr.rel (%p17) target = $region17
    $region16: #{spectra_forward.9} parent=1 // pred_region
      %20 = vst [vmem:[#allocation2] sm:$0xff] 0.0
    $region17: #{spectra_forward.9} parent=1 // pred_fallthru
      _
    %v21 = vld [vmem:[#allocation2] sm:$0xff]
    %v22 = vld [vmem:[%s0] sm:$0xff]
    %v23 = vld [vmem:[%s0 + $0x8] sm:$0xff]
    %v24 = vld [vmem:[%s1] sm:$0xf]
    %v25 = vld [vmem:[%s1 + $0x4] sm:$0xf]
    %v26 = vld [vmem:[%s1 + $0x8] sm:$0xf]
    %v27 = vld [vmem:[%s1 + $0xc] sm:$0xf]
    %v28 = vld [vmem:[%s1 + $0x10] sm:$0xf]
    %v29 = vld [vmem:[%s1 + $0x14] sm:$0xf]
    %v30 = vld [vmem:[%s1 + $0x18] sm:$0xf]
    %v31 = vld [vmem:[%s1 + $0x1c] sm:$0xf]
    %v32 = vld [vmem:[%s1 + $0x20] sm:$0xf]
    %v33 = vld [vmem:[%s1 + $0x24] sm:$0xf]
    %v34 = vld [vmem:[%s1 + $0x28] sm:$0xf]
    %v35 = vld [vmem:[%s1 + $0x2c] sm:$0xf]
    %v36 = vld [vmem:[%s1 + $0x30] sm:$0xf]
    %v37 = vld [vmem:[%s1 + $0x34] sm:$0xf]
    %v38 = vld [vmem:[%s1 + $0x38] sm:$0xf]
    %v39 = vld [vmem:[%s1 + $0x3c] sm:$0xf]
    %v40 = vld [vmem:[%s1 + $0x40] sm:$0xf]
    %v41 = vld [vmem:[%s1 + $0x44] sm:$0xf]
    %v42 = vld [vmem:[%s1 + $0x48] sm:$0xf]
    %v43 = vld [vmem:[%s1 + $0x4c] sm:$0xf]
    %v44 = vld [vmem:[%s1 + $0x50] sm:$0xf]
    %v45 = vld [vmem:[%s1 + $0x54] sm:$0xf]
    %v46 = vld [vmem:[%s1 + $0x58] sm:$0xf]
    %v47 = vld [vmem:[%s1 + $0x5c] sm:$0xf]
    %v48 = vld [vmem:[%s1 + $0x60] sm:$0xf]
    %v49 = vld [vmem:[%s1 + $0x64] sm:$0xf]
    %v50 = vld [vmem:[%s1 + $0x68] sm:$0xf]
    %v51 = vld [vmem:[%s1 + $0x6c] sm:$0xf]
    %v52 = vld [vmem:[%s1 + $0x70] sm:$0xf]
    %v53 = vld [vmem:[%s1 + $0x74] sm:$0xf]
    %v54 = vld [vmem:[%s1 + $0x78] sm:$0xf]
    %v55 = vld [vmem:[%s1 + $0x7c] sm:$0xf]
    %v56 = vld [vmem:[%s1 + $0x80] sm:$0xf]
    %v57 = vld [vmem:[%s1 + $0x84] sm:$0xf]
    %v58 = vld [vmem:[%s1 + $0x88] sm:$0xf]
    %v59 = vld [vmem:[%s1 + $0x8c] sm:$0xf]
    %v60 = vld [vmem:[%s1 + $0x90] sm:$0xf]
    %v61 = vld [vmem:[%s1 + $0x94] sm:$0xf]
    %v62 = vld [vmem:[%s1 + $0x98] sm:$0xf]
    %v63 = vld [vmem:[%s1 + $0x9c] sm:$0xf]
    %v64 = vld [vmem:[%s1 + $0xa0] sm:$0xf]
    %v65 = vld [vmem:[%s1 + $0xa4] sm:$0xf]
    %v66 = vld [vmem:[%s1 + $0xa8] sm:$0xf]
    %v67 = vld [vmem:[%s1 + $0xac] sm:$0xf]
    %v68 = vld [vmem:[%s1 + $0xb0] sm:$0xf]
    %v69 = vld [vmem:[%s1 + $0xb4] sm:$0xf]
    %v70 = vld [vmem:[%s1 + $0xb8] sm:$0xf]
    %v71 = vld [vmem:[%s1 + $0xbc] sm:$0xf]
    %v72 = vld [vmem:[%s1 + $0xc0] sm:$0xf]
    %v73 = vld [vmem:[%s1 + $0xc4] sm:$0xf]
    %v74 = vld [vmem:[%s1 + $0xc8] sm:$0xf]
    %v75 = vld [vmem:[%s1 + $0xcc] sm:$0xf]
    %v76 = vld [vmem:[%s1 + $0xd0] sm:$0xf]
    %v77 = vld [vmem:[%s1 + $0xd4] sm:$0xf]
    %v78 = vld [vmem:[%s1 + $0xd8] sm:$0xf]
    %v79 = vld [vmem:[%s1 + $0xdc] sm:$0xf]
    %v80 = vld [vmem:[%s1 + $0xe0] sm:$0xf]
    %v81 = vld [vmem:[%s1 + $0xe4] sm:$0xf]
    %v82 = vld [vmem:[%s1 + $0xe8] sm:$0xf]
    %v83 = vld [vmem:[%s1 + $0xec] sm:$0xf]
    %v84 = vld [vmem:[%s1 + $0xf0] sm:$0xf]
    %v85 = vld [vmem:[%s1 + $0xf4] sm:$0xf]
    %v86 = vld [vmem:[%s1 + $0xf8] sm:$0xf]
    %v87 = vld [vmem:[%s1 + $0xfc] sm:$0xf]
    %v90 = vunpack.c.l.b16 %v22
    %v91 = vunpack.c.h.b16 %v22
    %v92 = vunpack.c.l.b16 %v23
    %v93 = vunpack.c.h.b16 %v23
    %v94 = vpack.c.b16 %v90, %v90
    %v95 = vpack.c.b16 %v91, %v91
    %v96 = vpack.c.b16 %v92, %v92
    %v97 = vpack.c.b16 %v93, %v93
    %v166 = vunpack.c.l.b16 %v24
    %v167 = vunpack.c.l.b16 %v25
    %v168 = vunpack.c.l.b16 %v26
    %v169 = vunpack.c.l.b16 %v27
    %v170 = vunpack.c.l.b16 %v28
    %v171 = vunpack.c.l.b16 %v29
    %v172 = vunpack.c.l.b16 %v30
    %v173 = vunpack.c.l.b16 %v31
    %v174 = vunpack.c.l.b16 %v32
    %v175 = vunpack.c.l.b16 %v33
    %v176 = vunpack.c.l.b16 %v34
    %v177 = vunpack.c.l.b16 %v35
    %v178 = vunpack.c.l.b16 %v36
    %v179 = vunpack.c.l.b16 %v37
    %v180 = vunpack.c.l.b16 %v38
    %v181 = vunpack.c.l.b16 %v39
    %v182 = vunpack.c.l.b16 %v40
    %v183 = vunpack.c.l.b16 %v41
    %v184 = vunpack.c.l.b16 %v42
    %v185 = vunpack.c.l.b16 %v43
    %v186 = vunpack.c.l.b16 %v44
    %v187 = vunpack.c.l.b16 %v45
    %v188 = vunpack.c.l.b16 %v46
    %v189 = vunpack.c.l.b16 %v47
    %v190 = vunpack.c.l.b16 %v48
    %v191 = vunpack.c.l.b16 %v49
    %v192 = vunpack.c.l.b16 %v50
    %v193 = vunpack.c.l.b16 %v51
    %v194 = vunpack.c.l.b16 %v52
    %v195 = vunpack.c.l.b16 %v53
    %v196 = vunpack.c.l.b16 %v54
    %v197 = vunpack.c.l.b16 %v55
    %v198 = vunpack.c.l.b16 %v56
    %v199 = vunpack.c.l.b16 %v57
    %v200 = vunpack.c.l.b16 %v58
    %v201 = vunpack.c.l.b16 %v59
    %v202 = vunpack.c.l.b16 %v60
    %v203 = vunpack.c.l.b16 %v61
    %v204 = vunpack.c.l.b16 %v62
    %v205 = vunpack.c.l.b16 %v63
    %v206 = vunpack.c.l.b16 %v64
    %v207 = vunpack.c.l.b16 %v65
    %v208 = vunpack.c.l.b16 %v66
    %v209 = vunpack.c.l.b16 %v67
    %v210 = vunpack.c.l.b16 %v68
    %v211 = vunpack.c.l.b16 %v69
    %v212 = vunpack.c.l.b16 %v70
    %v213 = vunpack.c.l.b16 %v71
    %v214 = vunpack.c.l.b16 %v72
    %v215 = vunpack.c.l.b16 %v73
    %v216 = vunpack.c.l.b16 %v74
    %v217 = vunpack.c.l.b16 %v75
    %v218 = vunpack.c.l.b16 %v76
    %v219 = vunpack.c.l.b16 %v77
    %v220 = vunpack.c.l.b16 %v78
    %v221 = vunpack.c.l.b16 %v79
    %v222 = vunpack.c.l.b16 %v80
    %v223 = vunpack.c.l.b16 %v81
    %v224 = vunpack.c.l.b16 %v82
    %v225 = vunpack.c.l.b16 %v83
    %v226 = vunpack.c.l.b16 %v84
    %v227 = vunpack.c.l.b16 %v85
    %v228 = vunpack.c.l.b16 %v86
    %v229 = vunpack.c.l.b16 %v87
    %v230 = vpack.c.b16 %v167, %v166
    %v231 = vpack.c.b16 %v169, %v168
    %v232 = vpack.c.b16 %v171, %v170
    %v233 = vpack.c.b16 %v173, %v172
    %v234 = vpack.c.b16 %v175, %v174
    %v235 = vpack.c.b16 %v177, %v176
    %v236 = vpack.c.b16 %v179, %v178
    %v237 = vpack.c.b16 %v181, %v180
    %v238 = vpack.c.b16 %v183, %v182
    %v239 = vpack.c.b16 %v185, %v184
    %v240 = vpack.c.b16 %v187, %v186
    %v241 = vpack.c.b16 %v189, %v188
    %v242 = vpack.c.b16 %v191, %v190
    %v243 = vpack.c.b16 %v193, %v192
    %v244 = vpack.c.b16 %v195, %v194
    %v245 = vpack.c.b16 %v197, %v196
    %v246 = vpack.c.b16 %v199, %v198
    %v247 = vpack.c.b16 %v201, %v200
    %v248 = vpack.c.b16 %v203, %v202
    %v249 = vpack.c.b16 %v205, %v204
    %v250 = vpack.c.b16 %v207, %v206
    %v251 = vpack.c.b16 %v209, %v208
    %v252 = vpack.c.b16 %v211, %v210
    %v253 = vpack.c.b16 %v213, %v212
    %v254 = vpack.c.b16 %v215, %v214
    %v255 = vpack.c.b16 %v217, %v216
    %v256 = vpack.c.b16 %v219, %v218
    %v257 = vpack.c.b16 %v221, %v220
    %v258 = vpack.c.b16 %v223, %v222
    %v259 = vpack.c.b16 %v225, %v224
    %v260 = vpack.c.b16 %v227, %v226
    %v261 = vpack.c.b16 %v229, %v228
    %294 = vmatprep.subr.bf16.mxu0 0
    %295 = vmatpush1.bf16.msra.mxu0 %v230
    %296 = vmatprep.subr.bf16.mxu0 0
    %297 = vmatpush1.bf16.msra.mxu0 %v231
    %298 = vmatprep.subr.bf16.mxu0 0
    %299 = vmatpush1.bf16.msra.mxu0 %v232
    %300 = vmatprep.subr.bf16.mxu0 0
    %301 = vmatpush1.bf16.msra.mxu0 %v233
    %302 = vmatprep.subr.bf16.mxu0 0
    %303 = vmatpush1.bf16.msra.mxu0 %v234
    %304 = vmatprep.subr.bf16.mxu0 0
    %305 = vmatpush1.bf16.msra.mxu0 %v235
    %306 = vmatprep.subr.bf16.mxu0 0
    %307 = vmatpush1.bf16.msra.mxu0 %v236
    %308 = vmatprep.subr.bf16.mxu0 0
    %309 = vmatpush1.bf16.msra.mxu0 %v237
    %310 = vmatprep.subr.bf16.mxu0 0
    %311 = vmatpush1.bf16.msra.mxu0 %v238
    %312 = vmatprep.subr.bf16.mxu0 0
    %313 = vmatpush1.bf16.msra.mxu0 %v239
    %314 = vmatprep.subr.bf16.mxu0 0
    %315 = vmatpush1.bf16.msra.mxu0 %v240
    %316 = vmatprep.subr.bf16.mxu0 0
    %317 = vmatpush1.bf16.msra.mxu0 %v241
    %318 = vmatprep.subr.bf16.mxu0 0
    %319 = vmatpush1.bf16.msra.mxu0 %v242
    %320 = vmatprep.subr.bf16.mxu0 0
    %321 = vmatpush1.bf16.msra.mxu0 %v243
    %322 = vmatprep.subr.bf16.mxu0 0
    %323 = vmatpush1.bf16.msra.mxu0 %v244
    %324 = vmatprep.subr.bf16.mxu0 0
    %325 = vmatpush1.bf16.msra.mxu0 %v245
    %326 = vmatprep.mubr.bf16.mxu0 %v95
    %327 = vmatmul.mubr.bf16.gmra.mrb[0].mxu0 %v94
    %v328 = vpop.f32.mrb[0].mxu0
    %v329 = vadd.f32 0.0, %v328
    %v330 = vpop.f32.mrb[0].mxu0
    %v331 = vpop.f32.mrb[0].mxu0
    %v332 = vpop.f32.mrb[0].mxu0
    %333 = vdwg.mxu0
    %334 = vmatprep.subr.bf16.mxu0 0
    %335 = vmatpush1.bf16.msra.mxu0 %v246
    %336 = vmatprep.subr.bf16.mxu0 0
    %337 = vmatpush1.bf16.msra.mxu0 %v247
    %338 = vmatprep.subr.bf16.mxu0 0
    %339 = vmatpush1.bf16.msra.mxu0 %v248
    %340 = vmatprep.subr.bf16.mxu0 0
    %341 = vmatpush1.bf16.msra.mxu0 %v249
    %342 = vmatprep.subr.bf16.mxu0 0
    %343 = vmatpush1.bf16.msra.mxu0 %v250
    %344 = vmatprep.subr.bf16.mxu0 0
    %345 = vmatpush1.bf16.msra.mxu0 %v251
    %346 = vmatprep.subr.bf16.mxu0 0
    %347 = vmatpush1.bf16.msra.mxu0 %v252
    %348 = vmatprep.subr.bf16.mxu0 0
    %349 = vmatpush1.bf16.msra.mxu0 %v253
    %350 = vmatprep.subr.bf16.mxu0 0
    %351 = vmatpush1.bf16.msra.mxu0 %v254
    %352 = vmatprep.subr.bf16.mxu0 0
    %353 = vmatpush1.bf16.msra.mxu0 %v255
    %354 = vmatprep.subr.bf16.mxu0 0
    %355 = vmatpush1.bf16.msra.mxu0 %v256
    %356 = vmatprep.subr.bf16.mxu0 0
    %357 = vmatpush1.bf16.msra.mxu0 %v257
    %358 = vmatprep.subr.bf16.mxu0 0
    %359 = vmatpush1.bf16.msra.mxu0 %v258
    %360 = vmatprep.subr.bf16.mxu0 0
    %361 = vmatpush1.bf16.msra.mxu0 %v259
    %362 = vmatprep.subr.bf16.mxu0 0
    %363 = vmatpush1.bf16.msra.mxu0 %v260
    %364 = vmatprep.subr.bf16.mxu0 0
    %365 = vmatpush1.bf16.msra.mxu0 %v261
    %366 = vmatprep.mubr.bf16.mxu0 %v97
    %367 = vmatmul.mubr.bf16.gmra.mrb[0].mxu0 %v96
    %v368 = vpop.f32.mrb[0].mxu0
    %v369 = vadd.f32 %v329, %v368
    %v370 = vpop.f32.mrb[0].mxu0
    %v371 = vpop.f32.mrb[0].mxu0
    %v372 = vpop.f32.mrb[0].mxu0
    %373 = vdwg.mxu0
    %v374 = vadd.f32 %v21, %v369
    %375 = vst [vmem:[#allocation2] sm:$0xff] %v374
    // Predicated region
    $region18: #{spectra_forward.9} parent=1 // pred_check
      %p376 = pneg %p16
    $region19: #{spectra_forward.9} parent=1 // pred_check_branch
      %378 = sbr.rel (%p376) target = $region21
    $region20: #{spectra_forward.9} parent=1 // pred_region
      %v379 = vld [vmem:[#allocation2] sm:$0xff]
      %v380 = vld [vmem:[%s2] sm:$0x1]
      %v382 = vlaneseq
      %v383 = vshrl.u32 %v382, 7
      %v384 = vsub.s32 0, %v383
      %v385 = vrot.slane %v380, %v384
      %v387 = vadd.f32 %v379, %v385
      %v388 = vxor.u32 %v387, 2147483648
      %v389 = vmul.f32 %v388, 1.442695
      %v390 = vpow.pop %v389
      %v391 = vadd.f32 %v390, 1.0
      %v392 = vrcp.pop %v391
      %v393 = vmul.f32 1.0, %v392
      %394 = vst [vmem:[#allocation3] sm:$0xff] %v393
    $region21: #{spectra_forward.9} parent=1 // pred_fallthru
      _
    // Predicated region
    $region22: #{spectra_forward.9} parent=1 // pred_check
      _
    $region23: #{spectra_forward.9} parent=1 // pred_check_branch
      %396 = sbr.rel (0) target = $region25
    $region24: #{spectra_forward.9} parent=1 // pred_region
      %s398 = ssub.s32 128, 128
      %399 = vsyncadd [#allocation4], %s398
      %s401 = sshll.u32 [#allocation3], 4
      %s402 = int_to_ptr.vmem [resolvable:$true] %s401
      %404 = dma.vmem_to_hbm [thread:$0]  %s402, 128, %s3, [#allocation4]
    $region25: #{spectra_forward.9} parent=1 // pred_fallthru
      _
    // Predicated region
    $region26: #{spectra_forward.9} parent=1 // pred_check
      _
    $region27: #{spectra_forward.9} parent=1 // pred_check_branch
      %406 = sbr.rel (0) target = $region29
    $region28: #{spectra_forward.9} parent=1 // pred_region
      %407 = dma.done [#allocation4], 128
    $region29: #{spectra_forward.9} parent=1 // pred_fallthru
      _
    %408 = vsyncpa [#allocation4], 1

// kernel: spectra_forward.5
$region0: #{spectra_forward.5}
  #allocation0 [shape = 'u32[]', space=smem, size = 0x4, offset = 0x4, fixed_abs, tag = 'smem constant byte address 0x4 - core index']
  #allocation1 [shape = 'u32[144,128]{1,0:T(1,128)}', space=vmem, size = 0x12000, scoped, tag = 'internal scratch']
  #allocation2 [shape = 'f32[8,3200]{1,0:T(8,128)}', space=vmem, size = 0x19000, scoped, tag = 'scratch operand']
  %s0 = inlined_call_operand.vmem [shape: bf16[8,3200], index: 0, kind: input, shape index: {}]
  %s1 = inlined_call_operand.vmem [shape: bf16[3200,3200], index: 1, kind: input, shape index: {}]
  %s2 = inlined_call_operand.vmem [shape: f32[1,3200], index: 2, kind: input, shape index: {}]
  %s3 = inlined_call_operand.vmem [shape: f32[8,3200], index: 3, kind: output, shape index: {}]
  %s4 = sld [smem:[#allocation0]]
  $region53: #{spectra_forward.5} parent=0
    _
  %s6 = ssub.s32 1, %s4
  %s7 = scalar_select 0, %s6, %s4
  loop: start=0, step=1, limit=7
  $region2: #{spectra_forward.5} parent=0 // loop_pre_header
    _
  $region3: #{spectra_forward.5} parent=0 // loop_header
    %s9 = sphi 0, %s13
    %p10 = scmp.ge.s32.totalorder %s9, 7
    %s19 = sphi 0, %s21
    %s22 = sphi 0, %s19
    %s23 = sphi 0, %s22
    %s39 = sphi 0, %s23
    %s45 = sphi 0, %s47
    %s48 = sphi 0, %s45
    %s49 = sphi 0, %s48
    %s65 = sphi 0, %s49
    %s69 = sphi 0, %s69
    %s71 = sphi 0, %s69
    %s72 = sphi 0, %s71
    %s86 = sphi 0, %s72
    %s90 = sphi 0, %s90
    %s92 = sphi 0, %s90
    %s93 = sphi 0, %s92
    %s107 = sphi 0, %s93
  $region4: #{spectra_forward.5} parent=0 // loop_header_branch
    %12 = sbr.rel (%p10) target = $region8
  $region5: #{spectra_forward.5} parent=0 // loop_body
    %s14 = ssub.s32 %s9, 1
    %s15 = ssub.s32 %s9, 2
    %s16 = sadd.s32 %s9, 1
    %s17 = ssub.s32 %s9, %s16
    %p18 = scmp.eq.s32.totalorder %s17, 0
    %s20 = sadd.s32 %s19, 1
    %s21 = scalar_select %p18, %s19, %s20
    %p24 = pneg %p18
    %p25 = scmp.eq.s32.totalorder %s9, 4
    %p26 = por %p24, %p25
    %p27 = scmp.ne.s32.totalorder %s19, %s22
    %p28 = scmp.eq.s32.totalorder %s9, 0
    %p29 = por %p27, %p28
    %p30 = scmp.ne.s32.totalorder %s19, %s22
    %p31 = scmp.eq.s32.totalorder %s14, 4
    %p32 = por %p30, %p31
    %p33 = scmp.ne.s32.totalorder %s22, %s23
    %p34 = scmp.eq.s32.totalorder %s14, 0
    %p35 = por %p33, %p34
    %p36 = scmp.ne.s32.totalorder %s22, %s23
    %p37 = scmp.eq.s32.totalorder %s15, 4
    %p38 = por %p36, %p37
    %p40 = scmp.ne.s32.totalorder %s23, %s39
    %p41 = scmp.eq.s32.totalorder %s15, 0
    %p42 = por %p40, %p41
    %s43 = ssub.s32 %s9, %s16
    %p44 = scmp.eq.s32.totalorder %s43, 0
    %s46 = sadd.s32 %s45, 1
    %s47 = scalar_select %p44, %s45, %s46
    %p50 = pneg %p44
    %p51 = scmp.eq.s32.totalorder %s9, 4
    %p52 = por %p50, %p51
    %p53 = scmp.ne.s32.totalorder %s45, %s48
    %p54 = scmp.eq.s32.totalorder %s9, 0
    %p55 = por %p53, %p54
    %p56 = scmp.ne.s32.totalorder %s45, %s48
    %p57 = scmp.eq.s32.totalorder %s14, 4
    %p58 = por %p56, %p57
    %p59 = scmp.ne.s32.totalorder %s48, %s49
    %p60 = scmp.eq.s32.totalorder %s14, 0
    %p61 = por %p59, %p60
    %p62 = scmp.ne.s32.totalorder %s48, %s49
    %p63 = scmp.eq.s32.totalorder %s15, 4
    %p64 = por %p62, %p63
    %p66 = scmp.ne.s32.totalorder %s49, %s65
    %p67 = scmp.eq.s32.totalorder %s15, 0
    %p68 = por %p66, %p67
    %s70 = sadd.s32 %s69, 1
    %p73 = scmp.eq.s32.totalorder %s9, 4
    %p74 = scmp.ne.s32.totalorder %s69, %s71
    %p75 = scmp.eq.s32.totalorder %s9, 0
    %p76 = por %p74, %p75
    %p77 = scmp.ne.s32.totalorder %s69, %s71
    %p78 = scmp.eq.s32.totalorder %s14, 4
    %p79 = por %p77, %p78
    %p80 = scmp.ne.s32.totalorder %s71, %s72
    %p81 = scmp.eq.s32.totalorder %s14, 0
    %p82 = por %p80, %p81
    %p83 = scmp.ne.s32.totalorder %s71, %s72
    %p84 = scmp.eq.s32.totalorder %s15, 4
    %p85 = por %p83, %p84
    %p87 = scmp.ne.s32.totalorder %s72, %s86
    %p88 = scmp.eq.s32.totalorder %s15, 0
    %p89 = por %p87, %p88
    %s91 = sadd.s32 %s90, 1
    %p94 = scmp.eq.s32.totalorder %s9, 4
    %p95 = scmp.ne.s32.totalorder %s90, %s92
    %p96 = scmp.eq.s32.totalorder %s9, 0
    %p97 = por %p95, %p96
    %p98 = scmp.ne.s32.totalorder %s90, %s92
    %p99 = scmp.eq.s32.totalorder %s14, 4
    %p100 = por %p98, %p99
    %p101 = scmp.ne.s32.totalorder %s92, %s93
    %p102 = scmp.eq.s32.totalorder %s14, 0
    %p103 = por %p101, %p102
    %p104 = scmp.ne.s32.totalorder %s92, %s93
    %p105 = scmp.eq.s32.totalorder %s15, 4
    %p106 = por %p104, %p105
    %p108 = scmp.ne.s32.totalorder %s93, %s107
    %p109 = scmp.eq.s32.totalorder %s15, 0
    %p110 = por %p108, %p109
    %p111 = scmp.le.s32.totalorder 1, %s9
    %p112 = scmp.lt.s32.totalorder %s9, 6
    %p113 = pnand %p111, %p112
    %p114 = pneg %p113
    // Predicated region
    $region9: #{spectra_forward.5} parent=5 // pred_check
      _
    $region10: #{spectra_forward.5} parent=5 // pred_check_branch
      %116 = sbr.rel (%p113) target = $region12
    $region11: #{spectra_forward.5} parent=5 // pred_region
      %s117 = ssub.s32 %s9, 1
      // Predicated region
      $region13: #{spectra_forward.5} parent=11 // pred_check
        %p118 = pneg %p82
      $region14: #{spectra_forward.5} parent=11 // pred_check_branch
        %120 = sbr.rel (%p118) target = $region16
      $region15: #{spectra_forward.5} parent=11 // pred_region
        _
      $region16: #{spectra_forward.5} parent=11 // pred_fallthru
        _
    $region12: #{spectra_forward.5} parent=5 // pred_fallthru
      _
    %p121 = scmp.lt.s32.totalorder %s9, 5
    // Predicated region
    $region17: #{spectra_forward.5} parent=5 // pred_check
      %p122 = pneg %p121
    $region18: #{spectra_forward.5} parent=5 // pred_check_branch
      %124 = sbr.rel (%p122) target = $region20
    $region19: #{spectra_forward.5} parent=5 // pred_region
      // Predicated region
      $region21: #{spectra_forward.5} parent=19 // pred_check
        %p125 = pneg %p29
      $region22: #{spectra_forward.5} parent=19 // pred_check_branch
        %127 = sbr.rel (%p125) target = $region24
      $region23: #{spectra_forward.5} parent=19 // pred_region
        %s128 = smul.u32 5, %s9
        %p129 = scmp.lt.s32.totalorder %s128, 24
        %s130 = scalar_select %p129, %s128, 24
        %s131 = smul.addr %s130, 4
        %s132 = scalar_lea.vmem %s0, %s131
        %s133 = smul.u32 5, %s9
      $region24: #{spectra_forward.5} parent=19 // pred_fallthru
        _
      // Predicated region
      $region25: #{spectra_forward.5} parent=19 // pred_check
        %p134 = pneg %p55
      $region26: #{spectra_forward.5} parent=19 // pred_check_branch
        %136 = sbr.rel (%p134) target = $region28
      $region27: #{spectra_forward.5} parent=19 // pred_region
        %s137 = smul.u32 80, %s9
        %p138 = scmp.lt.s32.totalorder %s137, 399
        %s139 = scalar_select %p138, %s137, 399
        %s140 = smul.addr %s139, 25
        %s141 = smul.addr %s140, 4
        %s142 = scalar_lea.vmem %s1, %s141
        %s143 = smul.u32 80, %s9
      $region28: #{spectra_forward.5} parent=19 // pred_fallthru
        _
    $region20: #{spectra_forward.5} parent=5 // pred_fallthru
      _
    %p144 = scmp.le.s32.totalorder 1, %s9
    %p145 = scmp.lt.s32.totalorder %s9, 6
    %p146 = pnand %p144, %p145
    %p147 = pneg %p146
    // Predicated region
    $region29: #{spectra_forward.5} parent=5 // pred_check
      _
    $region30: #{spectra_forward.5} parent=5 // pred_check_branch
      %149 = sbr.rel (%p146) target = $region32
    $region31: #{spectra_forward.5} parent=5 // pred_region
      %s150 = ssub.s32 %s9, 1
      %s151 = smul.u32 5, %s14
      %p152 = scmp.lt.s32.totalorder %s151, 24
      %s153 = scalar_select %p152, %s151, 24
      %s154 = smul.addr %s153, 4
      %s155 = scalar_lea.vmem %s0, %s154
      %p156 = pneg %p35
      %p157 = pneg %p32
      %s158 = smul.u32 80, %s14
      %p159 = scmp.lt.s32.totalorder %s158, 399
      %s160 = scalar_select %p159, %s158, 399
      %s161 = smul.addr %s160, 25
      %s162 = smul.addr %s161, 4
      %s163 = scalar_lea.vmem %s1, %s162
      %p164 = pneg %p61
      %p165 = pneg %p58
      %p166 = pneg %p82
      %p167 = pneg %p79
      %p168 = pneg %p103
      %p169 = pneg %p100
      %s170 = smul.u32 5, %s14
      %p171 = scmp.lt.s32.totalorder %s170, 24
      %s172 = scalar_select %p171, %s170, 24
      %s173 = smul.addr %s172, 4
      %s174 = scalar_lea.vmem %s0, %s173
      %s175 = smul.u32 5, %s14
      %s176 = smul.u32 80, %s14
      %p177 = scmp.lt.s32.totalorder %s176, 399
      %s178 = scalar_select %p177, %s176, 399
      %s179 = smul.addr %s178, 25
      %s180 = smul.addr %s179, 4
      %s181 = scalar_lea.vmem %s1, %s180
      %s182 = smul.u32 80, %s14
      %p184 = scmp.eq.s32.totalorder %s14, 0
      // Predicated region
      $region33: #{spectra_forward.5} parent=31 // pred_check
        %p185 = pneg %p184
      $region34: #{spectra_forward.5} parent=31 // pred_check_branch
        %187 = sbr.rel (%p185) target = $region36
      $region35: #{spectra_forward.5} parent=31 // pred_region
        %188 = vst [vmem:[#allocation2] sm:$0xff] 0.0
        %189 = vst [vmem:[#allocation2 + $0x8] sm:$0xff] 0.0
        %190 = vst [vmem:[#allocation2 + $0x10] sm:$0xff] 0.0
        %191 = vst [vmem:[#allocation2 + $0x18] sm:$0xff] 0.0
        %192 = vst [vmem:[#allocation2 + $0x20] sm:$0xff] 0.0
        %193 = vst [vmem:[#allocation2 + $0x28] sm:$0xff] 0.0
        %194 = vst [vmem:[#allocation2 + $0x30] sm:$0xff] 0.0
        %195 = vst [vmem:[#allocation2 + $0x38] sm:$0xff] 0.0
        %196 = vst [vmem:[#allocation2 + $0x40] sm:$0xff] 0.0
        %197 = vst [vmem:[#allocation2 + $0x48] sm:$0xff] 0.0
        %198 = vst [vmem:[#allocation2 + $0x50] sm:$0xff] 0.0
        %199 = vst [vmem:[#allocation2 + $0x58] sm:$0xff] 0.0
        %200 = vst [vmem:[#allocation2 + $0x60] sm:$0xff] 0.0
        %201 = vst [vmem:[#allocation2 + $0x68] sm:$0xff] 0.0
        %202 = vst [vmem:[#allocation2 + $0x70] sm:$0xff] 0.0
        %203 = vst [vmem:[#allocation2 + $0x78] sm:$0xff] 0.0
        %204 = vst [vmem:[#allocation2 + $0x80] sm:$0xff] 0.0
        %205 = vst [vmem:[#allocation2 + $0x88] sm:$0xff] 0.0
        %206 = vst [vmem:[#allocation2 + $0x90] sm:$0xff] 0.0
        %207 = vst [vmem:[#allocation2 + $0x98] sm:$0xff] 0.0
        %208 = vst [vmem:[#allocation2 + $0xa0] sm:$0xff] 0.0
        %209 = vst [vmem:[#allocation2 + $0xa8] sm:$0xff] 0.0
        %210 = vst [vmem:[#allocation2 + $0xb0] sm:$0xff] 0.0
        %211 = vst [vmem:[#allocation2 + $0xb8] sm:$0xff] 0.0
        %212 = vst [vmem:[#allocation2 + $0xc0] sm:$0xff] 0.0
      $region36: #{spectra_forward.5} parent=31 // pred_fallthru
        _
      %v213 = vld [vmem:[#allocation2] sm:$0xff]
      %v214 = vld [vmem:[#allocation2 + $0x8] sm:$0xff]
      %v215 = vld [vmem:[#allocation2 + $0x10] sm:$0xff]
      %v216 = vld [vmem:[#allocation2 + $0x18] sm:$0xff]
      %v217 = vld [vmem:[#allocation2 + $0x20] sm:$0xff]
      %v218 = vld [vmem:[#allocation2 + $0x28] sm:$0xff]
      %v219 = vld [vmem:[#allocation2 + $0x30] sm:$0xff]
      %v220 = vld [vmem:[#allocation2 + $0x38] sm:$0xff]
      %v221 = vld [vmem:[#allocation2 + $0x40] sm:$0xff]
      %v222 = vld [vmem:[#allocation2 + $0x48] sm:$0xff]
      %v223 = vld [vmem:[#allocation2 + $0x50] sm:$0xff]
      %v224 = vld [vmem:[#allocation2 + $0x58] sm:$0xff]
      %v225 = vld [vmem:[#allocation2 + $0x60] sm:$0xff]
      %v226 = vld [vmem:[#allocation2 + $0x68] sm:$0xff]
      %v227 = vld [vmem:[#allocation2 + $0x70] sm:$0xff]
      %v228 = vld [vmem:[#allocation2 + $0x78] sm:$0xff]
      %v229 = vld [vmem:[#allocation2 + $0x80] sm:$0xff]
      %v230 = vld [vmem:[#allocation2 + $0x88] sm:$0xff]
      %v231 = vld [vmem:[#allocation2 + $0x90] sm:$0xff]
      %v232 = vld [vmem:[#allocation2 + $0x98] sm:$0xff]
      %v233 = vld [vmem:[#allocation2 + $0xa0] sm:$0xff]
      %v234 = vld [vmem:[#allocation2 + $0xa8] sm:$0xff]
      %v235 = vld [vmem:[#allocation2 + $0xb0] sm:$0xff]
      %v236 = vld [vmem:[#allocation2 + $0xb8] sm:$0xff]
      %v237 = vld [vmem:[#allocation2 + $0xc0] sm:$0xff]
      %v238 = vld [vmem:[%s174] sm:$0xff]
      %v239 = vld [vmem:[%s174 + $0x8] sm:$0xff]
      %v240 = vld [vmem:[%s174 + $0x10] sm:$0xf]
      %v241 = vld [vmem:[%s181] sm:$0xff]
      %v242 = vld [vmem:[%s181 + $0x8] sm:$0xff]
      %v243 = vld [vmem:[%s181 + $0x10] sm:$0xff]
      %v244 = vld [vmem:[%s181 + $0x18] sm:$0xff]
      %v245 = vld [vmem:[%s181 + $0x20] sm:$0xff]
      %v246 = vld [vmem:[%s181 + $0x28] sm:$0xff]
      %v247 = vld [vmem:[%s181 + $0x30] sm:$0xff]
      %v248 = vld [vmem:[%s181 + $0x38] sm:$0xff]
      %v249 = vld [vmem:[%s181 + $0x40] sm:$0xff]
      %v250 = vld [vmem:[%s181 + $0x48] sm:$0xff]
      %v251 = vld [vmem:[%s181 + $0x50] sm:$0xff]
      %v252 = vld [vmem:[%s181 + $0x58] sm:$0xff]
      %v253 = vld [vmem:[%s181 + $0x60] sm:$0xf]
      %v254 = vld [vmem:[%s181 + $0x64] sm:$0xff]
      %v255 = vld [vmem:[%s181 + $0x6c] sm:$0xff]
      %v256 = vld [vmem:[%s181 + $0x74] sm:$0xff]
      %v257 = vld [vmem:[%s181 + $0x7c] sm:$0xff]
      %v258 = vld [vmem:[%s181 + $0x84] sm:$0xff]
      %v259 = vld [vmem:[%s181 + $0x8c] sm:$0xff]
      %v260 = vld [vmem:[%s181 + $0x94] sm:$0xff]
      %v261 = vld [vmem:[%s181 + $0x9c] sm:$0xff]
      %v262 = vld [vmem:[%s181 + $0xa4] sm:$0xff]
      %v263 = vld [vmem:[%s181 + $0xac] sm:$0xff]
      %v264 = vld [vmem:[%s181 + $0xb4] sm:$0xff]
      %v265 = vld [vmem:[%s181 + $0xbc] sm:$0xff]
      %v266 = vld [vmem:[%s181 + $0xc4] sm:$0xf]
      %v267 = vld [vmem:[%s181 + $0xc8] sm:$0xff]
      %v268 = vld [vmem:[%s181 + $0xd0] sm:$0xff]
      %v269 = vld [vmem:[%s181 + $0xd8] sm:$0xff]
      %v270 = vld [vmem:[%s181 + $0xe0] sm:$0xff]
      %v271 = vld [vmem:[%s181 + $0xe8] sm:$0xff]
      %v272 = vld [vmem:[%s181 + $0xf0] sm:$0xff]
      %v273 = vld [vmem:[%s181 + $0xf8] sm:$0xff]
      %v274 = vld [vmem:[%s181 + $0x100] sm:$0xff]
      %v275 = vld [vmem:[%s181 + $0x108] sm:$0xff]
      %v276 = vld [vmem:[%s181 + $0x110] sm:$0xff]
      %v277 = vld [vmem:[%s181 + $0x118] sm:$0xff]
      %v278 = vld [vmem:[%s181 + $0x120] sm:$0xff]
      %v279 = vld [vmem:[%s181 + $0x128] sm:$0xf]
      %v280 = vld [vmem:[%s181 + $0x12c] sm:$0xff]
      %v281 = vld [vmem:[%s181 + $0x134] sm:$0xff]
      %v282 = vld [vmem:[%s181 + $0x13c] sm:$0xff]
      %v283 = vld [vmem:[%s181 + $0x144] sm:$0xff]
      %v284 = vld [vmem:[%s181 + $0x14c] sm:$0xff]
      %v285 = vld [vmem:[%s181 + $0x154] sm:$0xff]
      %v286 = vld [vmem:[%s181 + $0x15c] sm:$0xff]
      %v287 = vld [vmem:[%s181 + $0x164] sm:$0xff]
      %v288 = vld [vmem:[%s181 + $0x16c] sm:$0xff]
      %v289 = vld [vmem:[%s181 + $0x174] sm:$0xff]
      %v290 = vld [vmem:[%s181 + $0x17c] sm:$0xff]
      %v291 = vld [vmem:[%s181 + $0x184] sm:$0xff]
      %v292 = vld [vmem:[%s181 + $0x18c] sm:$0xf]
      %v293 = vld [vmem:[%s181 + $0x190] sm:$0xff]
      %v294 = vld [vmem:[%s181 + $0x198] sm:$0xff]
      %v295 = vld [vmem:[%s181 + $0x1a0] sm:$0xff]
      %v296 = vld [vmem:[%s181 + $0x1a8] sm:$0xff]
      %v297 = vld [vmem:[%s181 + $0x1b0] sm:$0xff]
      %v298 = vld [vmem:[%s181 + $0x1b8] sm:$0xff]
      %v299 = vld [vmem:[%s181 + $0x1c0] sm:$0xff]
      %v300 = vld [vmem:[%s181 + $0x1c8] sm:$0xff]
      %v301 = vld [vmem:[%s181 + $0x1d0] sm:$0xff]
      %v302 = vld [vmem:[%s181 + $0x1d8] sm:$0xff]
      %v303 = vld [vmem:[%s181 + $0x1e0] sm:$0xff]
      %v304 = vld [vmem:[%s181 + $0x1e8] sm:$0xff]
      %v305 = vld [vmem:[%s181 + $0x1f0] sm:$0xf]
      %v306 = vld [vmem:[%s181 + $0x1f4] sm:$0xff]
      %v307 = vld [vmem:[%s181 + $0x1fc] sm:$0xff]
      %v308 = vld [vmem:[%s181 + $0x204] sm:$0xff]
      %v309 = vld [vmem:[%s181 + $0x20c] sm:$0xff]
      %v310 = vld [vmem:[%s181 + $0x214] sm:$0xff]
      %v311 = vld [vmem:[%s181 + $0x21c] sm:$0xff]
      %v312 = vld [vmem:[%s181 + $0x224] sm:$0xff]
      %v313 = vld [vmem:[%s181 + $0x22c] sm:$0xff]
      %v314 = vld [vmem:[%s181 + $0x234] sm:$0xff]
      %v315 = vld [vmem:[%s181 + $0x23c] sm:$0xff]
      %v316 = vld [vmem:[%s181 + $0x244] sm:$0xff]
      %v317 = vld [vmem:[%s181 + $0x24c] sm:$0xff]
      %v318 = vld [vmem:[%s181 + $0x254] sm:$0xf]
      %v319 = vld [vmem:[%s181 + $0x258] sm:$0xff]
      %v320 = vld [vmem:[%s181 + $0x260] sm:$0xff]
      %v321 = vld [vmem:[%s181 + $0x268] sm:$0xff]
      %v322 = vld [vmem:[%s181 + $0x270] sm:$0xff]
      %v323 = vld [vmem:[%s181 + $0x278] sm:$0xff]
      %v324 = vld [vmem:[%s181 + $0x280] sm:$0xff]
      %v325 = vld [vmem:[%s181 + $0x288] sm:$0xff]
      %v326 = vld [vmem:[%s181 + $0x290] sm:$0xff]
      %v327 = vld [vmem:[%s181 + $0x298] sm:$0xff]
      %v328 = vld [vmem:[%s181 + $0x2a0] sm:$0xff]
      %v329 = vld [vmem:[%s181 + $0x2a8] sm:$0xff]
      %v330 = vld [vmem:[%s181 + $0x2b0] sm:$0xff]
      %v331 = vld [vmem:[%s181 + $0x2b8] sm:$0xf]
      %v332 = vld [vmem:[%s181 + $0x2bc] sm:$0xff]
      %v333 = vld [vmem:[%s181 + $0x2c4] sm:$0xff]
      %v334 = vld [vmem:[%s181 + $0x2cc] sm:$0xff]
      %v335 = vld [vmem:[%s181 + $0x2d4] sm:$0xff]
      %v336 = vld [vmem:[%s181 + $0x2dc] sm:$0xff]
      %v337 = vld [vmem:[%s181 + $0x2e4] sm:$0xff]
      %v338 = vld [vmem:[%s181 + $0x2ec] sm:$0xff]
      %v339 = vld [vmem:[%s181 + $0x2f4] sm:$0xff]
      %v340 = vld [vmem:[%s181 + $0x2fc] sm:$0xff]
      %v341 = vld [vmem:[%s181 + $0x304] sm:$0xff]
      %v342 = vld [vmem:[%s181 + $0x30c] sm:$0xff]
      %v343 = vld [vmem:[%s181 + $0x314] sm:$0xff]
      %v344 = vld [vmem:[%s181 + $0x31c] sm:$0xf]
      %v345 = vld [vmem:[%s181 + $0x320] sm:$0xff]
      %v346 = vld [vmem:[%s181 + $0x328] sm:$0xff]
      %v347 = vld [vmem:[%s181 + $0x330] sm:$0xff]
      %v348 = vld [vmem:[%s181 + $0x338] sm:$0xff]
      %v349 = vld [vmem:[%s181 + $0x340] sm:$0xff]
      %v350 = vld [vmem:[%s181 + $0x348] sm:$0xff]
      %v351 = vld [vmem:[%s181 + $0x350] sm:$0xff]
      %v352 = vld [vmem:[%s181 + $0x358] sm:$0xff]
      %v353 = vld [vmem:[%s181 + $0x360] sm:$0xff]
      %v354 = vld [vmem:[%s181 + $0x368] sm:$0xff]
      %v355 = vld [vmem:[%s181 + $0x370] sm:$0xff]
      %v356 = vld [vmem:[%s181 + $0x378] sm:$0xff]
      %v357 = vld [vmem:[%s181 + $0x380] sm:$0xf]
      %v358 = vld [vmem:[%s181 + $0x384] sm:$0xff]
      %v359 = vld [vmem:[%s181 + $0x38c] sm:$0xff]
      %v360 = vld [vmem:[%s181 + $0x394] sm:$0xff]
      %v361 = vld [vmem:[%s181 + $0x39c] sm:$0xff]
      %v362 = vld [vmem:[%s181 + $0x3a4] sm:$0xff]
      %v363 = vld [vmem:[%s181 + $0x3ac] sm:$0xff]
      %v364 = vld [vmem:[%s181 + $0x3b4] sm:$0xff]
      %v365 = vld [vmem:[%s181 + $0x3bc] sm:$0xff]
      %v366 = vld [vmem:[%s181 + $0x3c4] sm:$0xff]
      %v367 = vld [vmem:[%s181 + $0x3cc] sm:$0xff]
      %v368 = vld [vmem:[%s181 + $0x3d4] sm:$0xff]
      %v369 = vld [vmem:[%s181 + $0x3dc] sm:$0xff]
      %v370 = vld [vmem:[%s181 + $0x3e4] sm:$0xf]
      %v371 = vld [vmem:[%s181 + $0x3e8] sm:$0xff]
      %v372 = vld [vmem:[%s181 + $0x3f0] sm:$0xff]
      %v373 = vld [vmem:[%s181 + $0x3f8] sm:$0xff]
      %v374 = vld [vmem:[%s181 + $0x400] sm:$0xff]
      %v375 = vld [vmem:[%s181 + $0x408] sm:$0xff]
      %v376 = vld [vmem:[%s181 + $0x410] sm:$0xff]
      %v377 = vld [vmem:[%s181 + $0x418] sm:$0xff]
      %v378 = vld [vmem:[%s181 + $0x420] sm:$0xff]
      %v379 = vld [vmem:[%s181 + $0x428] sm:$0xff]
      %v380 = vld [vmem:[%s181 + $0x430] sm:$0xff]
      %v381 = vld [vmem:[%s181 + $0x438] sm:$0xff]
      %v382 = vld [vmem:[%s181 + $0x440] sm:$0xff]
      %v383 = vld [vmem:[%s181 + $0x448] sm:$0xf]
      %v384 = vld [vmem:[%s181 + $0x44c] sm:$0xff]
      %v385 = vld [vmem:[%s181 + $0x454] sm:$0xff]
      %v386 = vld [vmem:[%s181 + $0x45c] sm:$0xff]
      %v387 = vld [vmem:[%s181 + $0x464] sm:$0xff]
      %v388 = vld [vmem:[%s181 + $0x46c] sm:$0xff]
      %v389 = vld [vmem:[%s181 + $0x474] sm:$0xff]
      %v390 = vld [vmem:[%s181 + $0x47c] sm:$0xff]
      %v391 = vld [vmem:[%s181 + $0x484] sm:$0xff]
      %v392 = vld [vmem:[%s181 + $0x48c] sm:$0xff]
      %v393 = vld [vmem:[%s181 + $0x494] sm:$0xff]
      %v394 = vld [vmem:[%s181 + $0x49c] sm:$0xff]
      %v395 = vld [vmem:[%s181 + $0x4a4] sm:$0xff]
      %v396 = vld [vmem:[%s181 + $0x4ac] sm:$0xf]
      %v397 = vld [vmem:[%s181 + $0x4b0] sm:$0xff]
      %v398 = vld [vmem:[%s181 + $0x4b8] sm:$0xff]
      %v399 = vld [vmem:[%s181 + $0x4c0] sm:$0xff]
      %v400 = vld [vmem:[%s181 + $0x4c8] sm:$0xff]
      %v401 = vld [vmem:[%s181 + $0x4d0] sm:$0xff]
      %v402 = vld [vmem:[%s181 + $0x4d8] sm:$0xff]
      %v403 = vld [vmem:[%s181 + $0x4e0] sm:$0xff]
      %v404 = vld [vmem:[%s181 + $0x4e8] sm:$0xff]
      %v405 = vld [vmem:[%s181 + $0x4f0] sm:$0xff]
      %v406 = vld [vmem:[%s181 + $0x4f8] sm:$0xff]
      %v407 = vld [vmem:[%s181 + $0x500] sm:$0xff]
      %v408 = vld [vmem:[%s181 + $0x508] sm:$0xff]
      %v409 = vld [vmem:[%s181 + $0x510] sm:$0xf]
      %v410 = vld [vmem:[%s181 + $0x514] sm:$0xff]
      %v411 = vld [vmem:[%s181 + $0x51c] sm:$0xff]
      %v412 = vld [vmem:[%s181 + $0x524] sm:$0xff]
      %v413 = vld [vmem:[%s181 + $0x52c] sm:$0xff]
      %v414 = vld [vmem:[%s181 + $0x534] sm:$0xff]
      %v415 = vld [vmem:[%s181 + $0x53c] sm:$0xff]
      %v416 = vld [vmem:[%s181 + $0x544] sm:$0xff]
      %v417 = vld [vmem:[%s181 + $0x54c] sm:$0xff]
      %v418 = vld [vmem:[%s181 + $0x554] sm:$0xff]
      %v419 = vld [vmem:[%s181 + $0x55c] sm:$0xff]
      %v420 = vld [vmem:[%s181 + $0x564] sm:$0xff]
      %v421 = vld [vmem:[%s181 + $0x56c] sm:$0xff]
      %v422 = vld [vmem:[%s181 + $0x574] sm:$0xf]
      %v423 = vld [vmem:[%s181 + $0x578] sm:$0xff]
      %v424 = vld [vmem:[%s181 + $0x580] sm:$0xff]
      %v425 = vld [vmem:[%s181 + $0x588] sm:$0xff]
      %v426 = vld [vmem:[%s181 + $0x590] sm:$0xff]
      %v427 = vld [vmem:[%s181 + $0x598] sm:$0xff]
      %v428 = vld [vmem:[%s181 + $0x5a0] sm:$0xff]
      %v429 = vld [vmem:[%s181 + $0x5a8] sm:$0xff]
      %v430 = vld [vmem:[%s181 + $0x5b0] sm:$0xff]
      %v431 = vld [vmem:[%s181 + $0x5b8] sm:$0xff]
      %v432 = vld [vmem:[%s181 + $0x5c0] sm:$0xff]
      %v433 = vld [vmem:[%s181 + $0x5c8] sm:$0xff]
      %v434 = vld [vmem:[%s181 + $0x5d0] sm:$0xff]
      %v435 = vld [vmem:[%s181 + $0x5d8] sm:$0xf]
      %v436 = vld [vmem:[%s181 + $0x5dc] sm:$0xff]
      %v437 = vld [vmem:[%s181 + $0x5e4] sm:$0xff]
      %v438 = vld [vmem:[%s181 + $0x5ec] sm:$0xff]
      %v439 = vld [vmem:[%s181 + $0x5f4] sm:$0xff]
      %v440 = vld [vmem:[%s181 + $0x5fc] sm:$0xff]
      %v441 = vld [vmem:[%s181 + $0x604] sm:$0xff]
      %v442 = vld [vmem:[%s181 + $0x60c] sm:$0xff]
      %v443 = vld [vmem:[%s181 + $0x614] sm:$0xff]
      %v444 = vld [vmem:[%s181 + $0x61c] sm:$0xff]
      %v445 = vld [vmem:[%s181 + $0x624] sm:$0xff]
      %v446 = vld [vmem:[%s181 + $0x62c] sm:$0xff]
      %v447 = vld [vmem:[%s181 + $0x634] sm:$0xff]
      %v448 = vld [vmem:[%s181 + $0x63c] sm:$0xf]
      %v449 = vld [vmem:[%s181 + $0x640] sm:$0xff]
      %v450 = vld [vmem:[%s181 + $0x648] sm:$0xff]
      %v451 = vld [vmem:[%s181 + $0x650] sm:$0xff]
      %v452 = vld [vmem:[%s181 + $0x658] sm:$0xff]
      %v453 = vld [vmem:[%s181 + $0x660] sm:$0xff]
      %v454 = vld [vmem:[%s181 + $0x668] sm:$0xff]
      %v455 = vld [vmem:[%s181 + $0x670] sm:$0xff]
      %v456 = vld [vmem:[%s181 + $0x678] sm:$0xff]
      %v457 = vld [vmem:[%s181 + $0x680] sm:$0xff]
      %v458 = vld [vmem:[%s181 + $0x688] sm:$0xff]
      %v459 = vld [vmem:[%s181 + $0x690] sm:$0xff]
      %v460 = vld [vmem:[%s181 + $0x698] sm:$0xff]
      %v461 = vld [vmem:[%s181 + $0x6a0] sm:$0xf]
      %v462 = vld [vmem:[%s181 + $0x6a4] sm:$0xff]
      %v463 = vld [vmem:[%s181 + $0x6ac] sm:$0xff]
      %v464 = vld [vmem:[%s181 + $0x6b4] sm:$0xff]
      %v465 = vld [vmem:[%s181 + $0x6bc] sm:$0xff]
      %v466 = vld [vmem:[%s181 + $0x6c4] sm:$0xff]
      %v467 = vld [vmem:[%s181 + $0x6cc] sm:$0xff]
      %v468 = vld [vmem:[%s181 + $0x6d4] sm:$0xff]
      %v469 = vld [vmem:[%s181 + $0x6dc] sm:$0xff]
      %v470 = vld [vmem:[%s181 + $0x6e4] sm:$0xff]
      %v471 = vld [vmem:[%s181 + $0x6ec] sm:$0xff]
      %v472 = vld [vmem:[%s181 + $0x6f4] sm:$0xff]
      %v473 = vld [vmem:[%s181 + $0x6fc] sm:$0xff]
      %v474 = vld [vmem:[%s181 + $0x704] sm:$0xf]
      %v475 = vld [vmem:[%s181 + $0x708] sm:$0xff]
      %v476 = vld [vmem:[%s181 + $0x710] sm:$0xff]
      %v477 = vld [vmem:[%s181 + $0x718] sm:$0xff]
      %v478 = vld [vmem:[%s181 + $0x720] sm:$0xff]
      %v479 = vld [vmem:[%s181 + $0x728] sm:$0xff]
      %v480 = vld [vmem:[%s181 + $0x730] sm:$0xff]
      %v481 = vld [vmem:[%s181 + $0x738] sm:$0xff]
      %v482 = vld [vmem:[%s181 + $0x740] sm:$0xff]
      %v483 = vld [vmem:[%s181 + $0x748] sm:$0xff]
      %v484 = vld [vmem:[%s181 + $0x750] sm:$0xff]
      %v485 = vld [vmem:[%s181 + $0x758] sm:$0xff]
      %v486 = vld [vmem:[%s181 + $0x760] sm:$0xff]
      %v487 = vld [vmem:[%s181 + $0x768] sm:$0xf]
      %v488 = vld [vmem:[%s181 + $0x76c] sm:$0xff]
      %v489 = vld [vmem:[%s181 + $0x774] sm:$0xff]
      %v490 = vld [vmem:[%s181 + $0x77c] sm:$0xff]
      %v491 = vld [vmem:[%s181 + $0x784] sm:$0xff]
      %v492 = vld [vmem:[%s181 + $0x78c] sm:$0xff]
      %v493 = vld [vmem:[%s181 + $0x794] sm:$0xff]
      %v494 = vld [vmem:[%s181 + $0x79c] sm:$0xff]
      %v495 = vld [vmem:[%s181 + $0x7a4] sm:$0xff]
      %v496 = vld [vmem:[%s181 + $0x7ac] sm:$0xff]
      %v497 = vld [vmem:[%s181 + $0x7b4] sm:$0xff]
      %v498 = vld [vmem:[%s181 + $0x7bc] sm:$0xff]
      %v499 = vld [vmem:[%s181 + $0x7c4] sm:$0xff]
      %v500 = vld [vmem:[%s181 + $0x7cc] sm:$0xf]
      %v501 = vld [vmem:[%s181 + $0x7d0] sm:$0xff]
      %v502 = vld [vmem:[%s181 + $0x7d8] sm:$0xff]
      %v503 = vld [vmem:[%s181 + $0x7e0] sm:$0xff]
      %v504 = vld [vmem:[%s181 + $0x7e8] sm:$0xff]
      %v505 = vld [vmem:[%s181 + $0x7f0] sm:$0xff]
      %v506 = vld [vmem:[%s181 + $0x7f8] sm:$0xff]
      %v507 = vld [vmem:[%s181 + $0x800] sm:$0xff]
      %v508 = vld [vmem:[%s181 + $0x808] sm:$0xff]
      %v509 = vld [vmem:[%s181 + $0x810] sm:$0xff]
      %v510 = vld [vmem:[%s181 + $0x818] sm:$0xff]
      %v511 = vld [vmem:[%s181 + $0x820] sm:$0xff]
      %v512 = vld [vmem:[%s181 + $0x828] sm:$0xff]
      %v513 = vld [vmem:[%s181 + $0x830] sm:$0xf]
      %v514 = vld [vmem:[%s181 + $0x834] sm:$0xff]
      %v515 = vld [vmem:[%s181 + $0x83c] sm:$0xff]
      %v516 = vld [vmem:[%s181 + $0x844] sm:$0xff]
      %v517 = vld [vmem:[%s181 + $0x84c] sm:$0xff]
      %v518 = vld [vmem:[%s181 + $0x854] sm:$0xff]
      %v519 = vld [vmem:[%s181 + $0x85c] sm:$0xff]
      %v520 = vld [vmem:[%s181 + $0x864] sm:$0xff]
      %v521 = vld [vmem:[%s181 + $0x86c] sm:$0xff]
      %v522 = vld [vmem:[%s181 + $0x874] sm:$0xff]
      %v523 = vld [vmem:[%s181 + $0x87c] sm:$0xff]
      %v524 = vld [vmem:[%s181 + $0x884] sm:$0xff]
      %v525 = vld [vmem:[%s181 + $0x88c] sm:$0xff]
      %v526 = vld [vmem:[%s181 + $0x894] sm:$0xf]
      %v527 = vld [vmem:[%s181 + $0x898] sm:$0xff]
      %v528 = vld [vmem:[%s181 + $0x8a0] sm:$0xff]
      %v529 = vld [vmem:[%s181 + $0x8a8] sm:$0xff]
      %v530 = vld [vmem:[%s181 + $0x8b0] sm:$0xff]
      %v531 = vld [vmem:[%s181 + $0x8b8] sm:$0xff]
      %v532 = vld [vmem:[%s181 + $0x8c0] sm:$0xff]
      %v533 = vld [vmem:[%s181 + $0x8c8] sm:$0xff]
      %v534 = vld [vmem:[%s181 + $0x8d0] sm:$0xff]
      %v535 = vld [vmem:[%s181 + $0x8d8] sm:$0xff]
      %v536 = vld [vmem:[%s181 + $0x8e0] sm:$0xff]
      %v537 = vld [vmem:[%s181 + $0x8e8] sm:$0xff]
      %v538 = vld [vmem:[%s181 + $0x8f0] sm:$0xff]
      %v539 = vld [vmem:[%s181 + $0x8f8] sm:$0xf]
      %v540 = vld [vmem:[%s181 + $0x8fc] sm:$0xff]
      %v541 = vld [vmem:[%s181 + $0x904] sm:$0xff]
      %v542 = vld [vmem:[%s181 + $0x90c] sm:$0xff]
      %v543 = vld [vmem:[%s181 + $0x914] sm:$0xff]
      %v544 = vld [vmem:[%s181 + $0x91c] sm:$0xff]
      %v545 = vld [vmem:[%s181 + $0x924] sm:$0xff]
      %v546 = vld [vmem:[%s181 + $0x92c] sm:$0xff]
      %v547 = vld [vmem:[%s181 + $0x934] sm:$0xff]
      %v548 = vld [vmem:[%s181 + $0x93c] sm:$0xff]
      %v549 = vld [vmem:[%s181 + $0x944] sm:$0xff]
      %v550 = vld [vmem:[%s181 + $0x94c] sm:$0xff]
      %v551 = vld [vmem:[%s181 + $0x954] sm:$0xff]
      %v552 = vld [vmem:[%s181 + $0x95c] sm:$0xf]
      %v553 = vld [vmem:[%s181 + $0x960] sm:$0xff]
      %v554 = vld [vmem:[%s181 + $0x968] sm:$0xff]
      %v555 = vld [vmem:[%s181 + $0x970] sm:$0xff]
      %v556 = vld [vmem:[%s181 + $0x978] sm:$0xff]
      %v557 = vld [vmem:[%s181 + $0x980] sm:$0xff]
      %v558 = vld [vmem:[%s181 + $0x988] sm:$0xff]
      %v559 = vld [vmem:[%s181 + $0x990] sm:$0xff]
      %v560 = vld [vmem:[%s181 + $0x998] sm:$0xff]
      %v561 = vld [vmem:[%s181 + $0x9a0] sm:$0xff]
      %v562 = vld [vmem:[%s181 + $0x9a8] sm:$0xff]
      %v563 = vld [vmem:[%s181 + $0x9b0] sm:$0xff]
      %v564 = vld [vmem:[%s181 + $0x9b8] sm:$0xff]
      %v565 = vld [vmem:[%s181 + $0x9c0] sm:$0xf]
      %v566 = vld [vmem:[%s181 + $0x9c4] sm:$0xff]
      %v567 = vld [vmem:[%s181 + $0x9cc] sm:$0xff]
      %v568 = vld [vmem:[%s181 + $0x9d4] sm:$0xff]
      %v569 = vld [vmem:[%s181 + $0x9dc] sm:$0xff]
      %v570 = vld [vmem:[%s181 + $0x9e4] sm:$0xff]
      %v571 = vld [vmem:[%s181 + $0x9ec] sm:$0xff]
      %v572 = vld [vmem:[%s181 + $0x9f4] sm:$0xff]
      %v573 = vld [vmem:[%s181 + $0x9fc] sm:$0xff]
      %v574 = vld [vmem:[%s181 + $0xa04] sm:$0xff]
      %v575 = vld [vmem:[%s181 + $0xa0c] sm:$0xff]
      %v576 = vld [vmem:[%s181 + $0xa14] sm:$0xff]
      %v577 = vld [vmem:[%s181 + $0xa1c] sm:$0xff]
      %v578 = vld [vmem:[%s181 + $0xa24] sm:$0xf]
      %v579 = vld [vmem:[%s181 + $0xa28] sm:$0xff]
      %v580 = vld [vmem:[%s181 + $0xa30] sm:$0xff]
      %v581 = vld [vmem:[%s181 + $0xa38] sm:$0xff]
      %v582 = vld [vmem:[%s181 + $0xa40] sm:$0xff]
      %v583 = vld [vmem:[%s181 + $0xa48] sm:$0xff]
      %v584 = vld [vmem:[%s181 + $0xa50] sm:$0xff]
      %v585 = vld [vmem:[%s181 + $0xa58] sm:$0xff]
      %v586 = vld [vmem:[%s181 + $0xa60] sm:$0xff]
      %v587 = vld [vmem:[%s181 + $0xa68] sm:$0xff]
      %v588 = vld [vmem:[%s181 + $0xa70] sm:$0xff]
      %v589 = vld [vmem:[%s181 + $0xa78] sm:$0xff]
      %v590 = vld [vmem:[%s181 + $0xa80] sm:$0xff]
      %v591 = vld [vmem:[%s181 + $0xa88] sm:$0xf]
      %v592 = vld [vmem:[%s181 + $0xa8c] sm:$0xff]
      %v593 = vld [vmem:[%s181 + $0xa94] sm:$0xff]
      %v594 = vld [vmem:[%s181 + $0xa9c] sm:$0xff]
      %v595 = vld [vmem:[%s181 + $0xaa4] sm:$0xff]
      %v596 = vld [vmem:[%s181 + $0xaac] sm:$0xff]
      %v597 = vld [vmem:[%s181 + $0xab4] sm:$0xff]
      %v598 = vld [vmem:[%s181 + $0xabc] sm:$0xff]
      %v599 = vld [vmem:[%s181 + $0xac4] sm:$0xff]
      %v600 = vld [vmem:[%s181 + $0xacc] sm:$0xff]
      %v601 = vld [vmem:[%s181 + $0xad4] sm:$0xff]
      %v602 = vld [vmem:[%s181 + $0xadc] sm:$0xff]
      %v603 = vld [vmem:[%s181 + $0xae4] sm:$0xff]
      %v604 = vld [vmem:[%s181 + $0xaec] sm:$0xf]
      %v605 = vld [vmem:[%s181 + $0xaf0] sm:$0xff]
      %v606 = vld [vmem:[%s181 + $0xaf8] sm:$0xff]
      %v607 = vld [vmem:[%s181 + $0xb00] sm:$0xff]
      %v608 = vld [vmem:[%s181 + $0xb08] sm:$0xff]
      %v609 = vld [vmem:[%s181 + $0xb10] sm:$0xff]
      %v610 = vld [vmem:[%s181 + $0xb18] sm:$0xff]
      %v611 = vld [vmem:[%s181 + $0xb20] sm:$0xff]
      %v612 = vld [vmem:[%s181 + $0xb28] sm:$0xff]
      %v613 = vld [vmem:[%s181 + $0xb30] sm:$0xff]
      %v614 = vld [vmem:[%s181 + $0xb38] sm:$0xff]
      %v615 = vld [vmem:[%s181 + $0xb40] sm:$0xff]
      %v616 = vld [vmem:[%s181 + $0xb48] sm:$0xff]
      %v617 = vld [vmem:[%s181 + $0xb50] sm:$0xf]
      %v618 = vld [vmem:[%s181 + $0xb54] sm:$0xff]
      %v619 = vld [vmem:[%s181 + $0xb5c] sm:$0xff]
      %v620 = vld [vmem:[%s181 + $0xb64] sm:$0xff]
      %v621 = vld [vmem:[%s181 + $0xb6c] sm:$0xff]
      %v622 = vld [vmem:[%s181 + $0xb74] sm:$0xff]
      %v623 = vld [vmem:[%s181 + $0xb7c] sm:$0xff]
      %v624 = vld [vmem:[%s181 + $0xb84] sm:$0xff]
      %v625 = vld [vmem:[%s181 + $0xb8c] sm:$0xff]
      %v626 = vld [vmem:[%s181 + $0xb94] sm:$0xff]
      %v627 = vld [vmem:[%s181 + $0xb9c] sm:$0xff]
      %v628 = vld [vmem:[%s181 + $0xba4] sm:$0xff]
      %v629 = vld [vmem:[%s181 + $0xbac] sm:$0xff]
      %v630 = vld [vmem:[%s181 + $0xbb4] sm:$0xf]
      %v631 = vld [vmem:[%s181 + $0xbb8] sm:$0xff]
      %v632 = vld [vmem:[%s181 + $0xbc0] sm:$0xff]
      %v633 = vld [vmem:[%s181 + $0xbc8] sm:$0xff]
      %v634 = vld [vmem:[%s181 + $0xbd0] sm:$0xff]
      %v635 = vld [vmem:[%s181 + $0xbd8] sm:$0xff]
      %v636 = vld [vmem:[%s181 + $0xbe0] sm:$0xff]
      %v637 = vld [vmem:[%s181 + $0xbe8] sm:$0xff]
      %v638 = vld [vmem:[%s181 + $0xbf0] sm:$0xff]
      %v639 = vld [vmem:[%s181 + $0xbf8] sm:$0xff]
      %v640 = vld [vmem:[%s181 + $0xc00] sm:$0xff]
      %v641 = vld [vmem:[%s181 + $0xc08] sm:$0xff]
      %v642 = vld [vmem:[%s181 + $0xc10] sm:$0xff]
      %v643 = vld [vmem:[%s181 + $0xc18] sm:$0xf]
      %v644 = vld [vmem:[%s181 + $0xc1c] sm:$0xff]
      %v645 = vld [vmem:[%s181 + $0xc24] sm:$0xff]
      %v646 = vld [vmem:[%s181 + $0xc2c] sm:$0xff]
      %v647 = vld [vmem:[%s181 + $0xc34] sm:$0xff]
      %v648 = vld [vmem:[%s181 + $0xc3c] sm:$0xff]
      %v649 = vld [vmem:[%s181 + $0xc44] sm:$0xff]
      %v650 = vld [vmem:[%s181 + $0xc4c] sm:$0xff]
      %v651 = vld [vmem:[%s181 + $0xc54] sm:$0xff]
      %v652 = vld [vmem:[%s181 + $0xc5c] sm:$0xff]
      %v653 = vld [vmem:[%s181 + $0xc64] sm:$0xff]
      %v654 = vld [vmem:[%s181 + $0xc6c] sm:$0xff]
      %v655 = vld [vmem:[%s181 + $0xc74] sm:$0xff]
      %v656 = vld [vmem:[%s181 + $0xc7c] sm:$0xf]
      %v657 = vld [vmem:[%s181 + $0xc80] sm:$0xff]
      %v658 = vld [vmem:[%s181 + $0xc88] sm:$0xff]
      %v659 = vld [vmem:[%s181 + $0xc90] sm:$0xff]
      %v660 = vld [vmem:[%s181 + $0xc98] sm:$0xff]
      %v661 = vld [vmem:[%s181 + $0xca0] sm:$0xff]
      %v662 = vld [vmem:[%s181 + $0xca8] sm:$0xff]
      %v663 = vld [vmem:[%s181 + $0xcb0] sm:$0xff]
      %v664 = vld [vmem:[%s181 + $0xcb8] sm:$0xff]
      %v665 = vld [vmem:[%s181 + $0xcc0] sm:$0xff]
      %v666 = vld [vmem:[%s181 + $0xcc8] sm:$0xff]
      %v667 = vld [vmem:[%s181 + $0xcd0] sm:$0xff]
      %v668 = vld [vmem:[%s181 + $0xcd8] sm:$0xff]
      %v669 = vld [vmem:[%s181 + $0xce0] sm:$0xf]
      %v670 = vld [vmem:[%s181 + $0xce4] sm:$0xff]
      %v671 = vld [vmem:[%s181 + $0xcec] sm:$0xff]
      %v672 = vld [vmem:[%s181 + $0xcf4] sm:$0xff]
      %v673 = vld [vmem:[%s181 + $0xcfc] sm:$0xff]
      %v674 = vld [vmem:[%s181 + $0xd04] sm:$0xff]
      %v675 = vld [vmem:[%s181 + $0xd0c] sm:$0xff]
      %v676 = vld [vmem:[%s181 + $0xd14] sm:$0xff]
      %v677 = vld [vmem:[%s181 + $0xd1c] sm:$0xff]
      %v678 = vld [vmem:[%s181 + $0xd24] sm:$0xff]
      %v679 = vld [vmem:[%s181 + $0xd2c] sm:$0xff]
      %v680 = vld [vmem:[%s181 + $0xd34] sm:$0xff]
      %v681 = vld [vmem:[%s181 + $0xd3c] sm:$0xff]
      %v682 = vld [vmem:[%s181 + $0xd44] sm:$0xf]
      %v683 = vld [vmem:[%s181 + $0xd48] sm:$0xff]
      %v684 = vld [vmem:[%s181 + $0xd50] sm:$0xff]
      %v685 = vld [vmem:[%s181 + $0xd58] sm:$0xff]
      %v686 = vld [vmem:[%s181 + $0xd60] sm:$0xff]
      %v687 = vld [vmem:[%s181 + $0xd68] sm:$0xff]
      %v688 = vld [vmem:[%s181 + $0xd70] sm:$0xff]
      %v689 = vld [vmem:[%s181 + $0xd78] sm:$0xff]
      %v690 = vld [vmem:[%s181 + $0xd80] sm:$0xff]
      %v691 = vld [vmem:[%s181 + $0xd88] sm:$0xff]
      %v692 = vld [vmem:[%s181 + $0xd90] sm:$0xff]
      %v693 = vld [vmem:[%s181 + $0xd98] sm:$0xff]
      %v694 = vld [vmem:[%s181 + $0xda0] sm:$0xff]
      %v695 = vld [vmem:[%s181 + $0xda8] sm:$0xf]
      %v696 = vld [vmem:[%s181 + $0xdac] sm:$0xff]
      %v697 = vld [vmem:[%s181 + $0xdb4] sm:$0xff]
      %v698 = vld [vmem:[%s181 + $0xdbc] sm:$0xff]
      %v699 = vld [vmem:[%s181 + $0xdc4] sm:$0xff]
      %v700 = vld [vmem:[%s181 + $0xdcc] sm:$0xff]
      %v701 = vld [vmem:[%s181 + $0xdd4] sm:$0xff]
      %v702 = vld [vmem:[%s181 + $0xddc] sm:$0xff]
      %v703 = vld [vmem:[%s181 + $0xde4] sm:$0xff]
      %v704 = vld [vmem:[%s181 + $0xdec] sm:$0xff]
      %v705 = vld [vmem:[%s181 + $0xdf4] sm:$0xff]
      %v706 = vld [vmem:[%s181 + $0xdfc] sm:$0xff]
      %v707 = vld [vmem:[%s181 + $0xe04] sm:$0xff]
      %v708 = vld [vmem:[%s181 + $0xe0c] sm:$0xf]
      %v709 = vld [vmem:[%s181 + $0xe10] sm:$0xff]
      %v710 = vld [vmem:[%s181 + $0xe18] sm:$0xff]
      %v711 = vld [vmem:[%s181 + $0xe20] sm:$0xff]
      %v712 = vld [vmem:[%s181 + $0xe28] sm:$0xff]
      %v713 = vld [vmem:[%s181 + $0xe30] sm:$0xff]
      %v714 = vld [vmem:[%s181 + $0xe38] sm:$0xff]
      %v715 = vld [vmem:[%s181 + $0xe40] sm:$0xff]
      %v716 = vld [vmem:[%s181 + $0xe48] sm:$0xff]
      %v717 = vld [vmem:[%s181 + $0xe50] sm:$0xff]
      %v718 = vld [vmem:[%s181 + $0xe58] sm:$0xff]
      %v719 = vld [vmem:[%s181 + $0xe60] sm:$0xff]
      %v720 = vld [vmem:[%s181 + $0xe68] sm:$0xff]
      %v721 = vld [vmem:[%s181 + $0xe70] sm:$0xf]
      %v722 = vld [vmem:[%s181 + $0xe74] sm:$0xff]
      %v723 = vld [vmem:[%s181 + $0xe7c] sm:$0xff]
      %v724 = vld [vmem:[%s181 + $0xe84] sm:$0xff]
      %v725 = vld [vmem:[%s181 + $0xe8c] sm:$0xff]
      %v726 = vld [vmem:[%s181 + $0xe94] sm:$0xff]
      %v727 = vld [vmem:[%s181 + $0xe9c] sm:$0xff]
      %v728 = vld [vmem:[%s181 + $0xea4] sm:$0xff]
      %v729 = vld [vmem:[%s181 + $0xeac] sm:$0xff]
      %v730 = vld [vmem:[%s181 + $0xeb4] sm:$0xff]
      %v731 = vld [vmem:[%s181 + $0xebc] sm:$0xff]
      %v732 = vld [vmem:[%s181 + $0xec4] sm:$0xff]
      %v733 = vld [vmem:[%s181 + $0xecc] sm:$0xff]
      %v734 = vld [vmem:[%s181 + $0xed4] sm:$0xf]
      %v735 = vld [vmem:[%s181 + $0xed8] sm:$0xff]
      %v736 = vld [vmem:[%s181 + $0xee0] sm:$0xff]
      %v737 = vld [vmem:[%s181 + $0xee8] sm:$0xff]
      %v738 = vld [vmem:[%s181 + $0xef0] sm:$0xff]
      %v739 = vld [vmem:[%s181 + $0xef8] sm:$0xff]
      %v740 = vld [vmem:[%s181 + $0xf00] sm:$0xff]
      %v741 = vld [vmem:[%s181 + $0xf08] sm:$0xff]
      %v742 = vld [vmem:[%s181 + $0xf10] sm:$0xff]
      %v743 = vld [vmem:[%s181 + $0xf18] sm:$0xff]
      %v744 = vld [vmem:[%s181 + $0xf20] sm:$0xff]
      %v745 = vld [vmem:[%s181 + $0xf28] sm:$0xff]
      %v746 = vld [vmem:[%s181 + $0xf30] sm:$0xff]
      %v747 = vld [vmem:[%s181 + $0xf38] sm:$0xf]
      %v748 = vld [vmem:[%s181 + $0xf3c] sm:$0xff]
      %v749 = vld [vmem:[%s181 + $0xf44] sm:$0xff]
      %v750 = vld [vmem:[%s181 + $0xf4c] sm:$0xff]
      %v751 = vld [vmem:[%s181 + $0xf54] sm:$0xff]
      %v752 = vld [vmem:[%s181 + $0xf5c] sm:$0xff]
      %v753 = vld [vmem:[%s181 + $0xf64] sm:$0xff]
      %v754 = vld [vmem:[%s181 + $0xf6c] sm:$0xff]
      %v755 = vld [vmem:[%s181 + $0xf74] sm:$0xff]
      %v756 = vld [vmem:[%s181 + $0xf7c] sm:$0xff]
      %v757 = vld [vmem:[%s181 + $0xf84] sm:$0xff]
      %v758 = vld [vmem:[%s181 + $0xf8c] sm:$0xff]
      %v759 = vld [vmem:[%s181 + $0xf94] sm:$0xff]
      %v760 = vld [vmem:[%s181 + $0xf9c] sm:$0xf]
      %v761 = vld [vmem:[%s181 + $0xfa0] sm:$0xff]
      %v762 = vld [vmem:[%s181 + $0xfa8] sm:$0xff]
      %v763 = vld [vmem:[%s181 + $0xfb0] sm:$0xff]
      %v764 = vld [vmem:[%s181 + $0xfb8] sm:$0xff]
      %v765 = vld [vmem:[%s181 + $0xfc0] sm:$0xff]
      %v766 = vld [vmem:[%s181 + $0xfc8] sm:$0xff]
      %v767 = vld [vmem:[%s181 + $0xfd0] sm:$0xff]
      %v768 = vld [vmem:[%s181 + $0xfd8] sm:$0xff]
      %v769 = vld [vmem:[%s181 + $0xfe0] sm:$0xff]
      %v770 = vld [vmem:[%s181 + $0xfe8] sm:$0xff]
      %v771 = vld [vmem:[%s181 + $0xff0] sm:$0xff]
      %v772 = vld [vmem:[%s181 + $0xff8] sm:$0xff]
      %v773 = vld [vmem:[%s181 + $0x1000] sm:$0xf]
      %v774 = vld [vmem:[%s181 + $0x1004] sm:$0xff]
      %v775 = vld [vmem:[%s181 + $0x100c] sm:$0xff]
      %v776 = vld [vmem:[%s181 + $0x1014] sm:$0xff]
      %v777 = vld [vmem:[%s181 + $0x101c] sm:$0xff]
      %v778 = vld [vmem:[%s181 + $0x1024] sm:$0xff]
      %v779 = vld [vmem:[%s181 + $0x102c] sm:$0xff]
      %v780 = vld [vmem:[%s181 + $0x1034] sm:$0xff]
      %v781 = vld [vmem:[%s181 + $0x103c] sm:$0xff]
      %v782 = vld [vmem:[%s181 + $0x1044] sm:$0xff]
      %v783 = vld [vmem:[%s181 + $0x104c] sm:$0xff]
      %v784 = vld [vmem:[%s181 + $0x1054] sm:$0xff]
      %v785 = vld [vmem:[%s181 + $0x105c] sm:$0xff]
      %v786 = vld [vmem:[%s181 + $0x1064] sm:$0xf]
      %v787 = vld [vmem:[%s181 + $0x1068] sm:$0xff]
      %v788 = vld [vmem:[%s181 + $0x1070] sm:$0xff]
      %v789 = vld [vmem:[%s181 + $0x1078] sm:$0xff]
      %v790 = vld [vmem:[%s181 + $0x1080] sm:$0xff]
      %v791 = vld [vmem:[%s181 + $0x1088] sm:$0xff]
      %v792 = vld [vmem:[%s181 + $0x1090] sm:$0xff]
      %v793 = vld [vmem:[%s181 + $0x1098] sm:$0xff]
      %v794 = vld [vmem:[%s181 + $0x10a0] sm:$0xff]
      %v795 = vld [vmem:[%s181 + $0x10a8] sm:$0xff]
      %v796 = vld [vmem:[%s181 + $0x10b0] sm:$0xff]
      %v797 = vld [vmem:[%s181 + $0x10b8] sm:$0xff]
      %v798 = vld [vmem:[%s181 + $0x10c0] sm:$0xff]
      %v799 = vld [vmem:[%s181 + $0x10c8] sm:$0xf]
      %v800 = vld [vmem:[%s181 + $0x10cc] sm:$0xff]
      %v801 = vld [vmem:[%s181 + $0x10d4] sm:$0xff]
      %v802 = vld [vmem:[%s181 + $0x10dc] sm:$0xff]
      %v803 = vld [vmem:[%s181 + $0x10e4] sm:$0xff]
      %v804 = vld [vmem:[%s181 + $0x10ec] sm:$0xff]
      %v805 = vld [vmem:[%s181 + $0x10f4] sm:$0xff]
      %v806 = vld [vmem:[%s181 + $0x10fc] sm:$0xff]
      %v807 = vld [vmem:[%s181 + $0x1104] sm:$0xff]
      %v808 = vld [vmem:[%s181 + $0x110c] sm:$0xff]
      %v809 = vld [vmem:[%s181 + $0x1114] sm:$0xff]
      %v810 = vld [vmem:[%s181 + $0x111c] sm:$0xff]
      %v811 = vld [vmem:[%s181 + $0x1124] sm:$0xff]
      %v812 = vld [vmem:[%s181 + $0x112c] sm:$0xf]
      %v813 = vld [vmem:[%s181 + $0x1130] sm:$0xff]
      %v814 = vld [vmem:[%s181 + $0x1138] sm:$0xff]
      %v815 = vld [vmem:[%s181 + $0x1140] sm:$0xff]
      %v816 = vld [vmem:[%s181 + $0x1148] sm:$0xff]
      %v817 = vld [vmem:[%s181 + $0x1150] sm:$0xff]
      %v818 = vld [vmem:[%s181 + $0x1158] sm:$0xff]
      %v819 = vld [vmem:[%s181 + $0x1160] sm:$0xff]
      %v820 = vld [vmem:[%s181 + $0x1168] sm:$0xff]
      %v821 = vld [vmem:[%s181 + $0x1170] sm:$0xff]
      %v822 = vld [vmem:[%s181 + $0x1178] sm:$0xff]
      %v823 = vld [vmem:[%s181 + $0x1180] sm:$0xff]
      %v824 = vld [vmem:[%s181 + $0x1188] sm:$0xff]
      %v825 = vld [vmem:[%s181 + $0x1190] sm:$0xf]
      %v826 = vld [vmem:[%s181 + $0x1194] sm:$0xff]
      %v827 = vld [vmem:[%s181 + $0x119c] sm:$0xff]
      %v828 = vld [vmem:[%s181 + $0x11a4] sm:$0xff]
      %v829 = vld [vmem:[%s181 + $0x11ac] sm:$0xff]
      %v830 = vld [vmem:[%s181 + $0x11b4] sm:$0xff]
      %v831 = vld [vmem:[%s181 + $0x11bc] sm:$0xff]
      %v832 = vld [vmem:[%s181 + $0x11c4] sm:$0xff]
      %v833 = vld [vmem:[%s181 + $0x11cc] sm:$0xff]
      %v834 = vld [vmem:[%s181 + $0x11d4] sm:$0xff]
      %v835 = vld [vmem:[%s181 + $0x11dc] sm:$0xff]
      %v836 = vld [vmem:[%s181 + $0x11e4] sm:$0xff]
      %v837 = vld [vmem:[%s181 + $0x11ec] sm:$0xff]
      %v838 = vld [vmem:[%s181 + $0x11f4] sm:$0xf]
      %v839 = vld [vmem:[%s181 + $0x11f8] sm:$0xff]
      %v840 = vld [vmem:[%s181 + $0x1200] sm:$0xff]
      %v841 = vld [vmem:[%s181 + $0x1208] sm:$0xff]
      %v842 = vld [vmem:[%s181 + $0x1210] sm:$0xff]
      %v843 = vld [vmem:[%s181 + $0x1218] sm:$0xff]
      %v844 = vld [vmem:[%s181 + $0x1220] sm:$0xff]
      %v845 = vld [vmem:[%s181 + $0x1228] sm:$0xff]
      %v846 = vld [vmem:[%s181 + $0x1230] sm:$0xff]
      %v847 = vld [vmem:[%s181 + $0x1238] sm:$0xff]
      %v848 = vld [vmem:[%s181 + $0x1240] sm:$0xff]
      %v849 = vld [vmem:[%s181 + $0x1248] sm:$0xff]
      %v850 = vld [vmem:[%s181 + $0x1250] sm:$0xff]
      %v851 = vld [vmem:[%s181 + $0x1258] sm:$0xf]
      %v852 = vld [vmem:[%s181 + $0x125c] sm:$0xff]
      %v853 = vld [vmem:[%s181 + $0x1264] sm:$0xff]
      %v854 = vld [vmem:[%s181 + $0x126c] sm:$0xff]
      %v855 = vld [vmem:[%s181 + $0x1274] sm:$0xff]
      %v856 = vld [vmem:[%s181 + $0x127c] sm:$0xff]
      %v857 = vld [vmem:[%s181 + $0x1284] sm:$0xff]
      %v858 = vld [vmem:[%s181 + $0x128c] sm:$0xff]
      %v859 = vld [vmem:[%s181 + $0x1294] sm:$0xff]
      %v860 = vld [vmem:[%s181 + $0x129c] sm:$0xff]
      %v861 = vld [vmem:[%s181 + $0x12a4] sm:$0xff]
      %v862 = vld [vmem:[%s181 + $0x12ac] sm:$0xff]
      %v863 = vld [vmem:[%s181 + $0x12b4] sm:$0xff]
      %v864 = vld [vmem:[%s181 + $0x12bc] sm:$0xf]
      %v865 = vld [vmem:[%s181 + $0x12c0] sm:$0xff]
      %v866 = vld [vmem:[%s181 + $0x12c8] sm:$0xff]
      %v867 = vld [vmem:[%s181 + $0x12d0] sm:$0xff]
      %v868 = vld [vmem:[%s181 + $0x12d8] sm:$0xff]
      %v869 = vld [vmem:[%s181 + $0x12e0] sm:$0xff]
      %v870 = vld [vmem:[%s181 + $0x12e8] sm:$0xff]
      %v871 = vld [vmem:[%s181 + $0x12f0] sm:$0xff]
      %v872 = vld [vmem:[%s181 + $0x12f8] sm:$0xff]
      %v873 = vld [vmem:[%s181 + $0x1300] sm:$0xff]
      %v874 = vld [vmem:[%s181 + $0x1308] sm:$0xff]
      %v875 = vld [vmem:[%s181 + $0x1310] sm:$0xff]
      %v876 = vld [vmem:[%s181 + $0x1318] sm:$0xff]
      %v877 = vld [vmem:[%s181 + $0x1320] sm:$0xf]
      %v878 = vld [vmem:[%s181 + $0x1324] sm:$0xff]
      %v879 = vld [vmem:[%s181 + $0x132c] sm:$0xff]
      %v880 = vld [vmem:[%s181 + $0x1334] sm:$0xff]
      %v881 = vld [vmem:[%s181 + $0x133c] sm:$0xff]
      %v882 = vld [vmem:[%s181 + $0x1344] sm:$0xff]
      %v883 = vld [vmem:[%s181 + $0x134c] sm:$0xff]
      %v884 = vld [vmem:[%s181 + $0x1354] sm:$0xff]
      %v885 = vld [vmem:[%s181 + $0x135c] sm:$0xff]
      %v886 = vld [vmem:[%s181 + $0x1364] sm:$0xff]
      %v887 = vld [vmem:[%s181 + $0x136c] sm:$0xff]
      %v888 = vld [vmem:[%s181 + $0x1374] sm:$0xff]
      %v889 = vld [vmem:[%s181 + $0x137c] sm:$0xff]
      %v890 = vld [vmem:[%s181 + $0x1384] sm:$0xf]
      %v891 = vld [vmem:[%s181 + $0x1388] sm:$0xff]
      %v892 = vld [vmem:[%s181 + $0x1390] sm:$0xff]
      %v893 = vld [vmem:[%s181 + $0x1398] sm:$0xff]
      %v894 = vld [vmem:[%s181 + $0x13a0] sm:$0xff]
      %v895 = vld [vmem:[%s181 + $0x13a8] sm:$0xff]
      %v896 = vld [vmem:[%s181 + $0x13b0] sm:$0xff]
      %v897 = vld [vmem:[%s181 + $0x13b8] sm:$0xff]
      %v898 = vld [vmem:[%s181 + $0x13c0] sm:$0xff]
      %v899 = vld [vmem:[%s181 + $0x13c8] sm:$0xff]
      %v900 = vld [vmem:[%s181 + $0x13d0] sm:$0xff]
      %v901 = vld [vmem:[%s181 + $0x13d8] sm:$0xff]
      %v902 = vld [vmem:[%s181 + $0x13e0] sm:$0xff]
      %v903 = vld [vmem:[%s181 + $0x13e8] sm:$0xf]
      %v904 = vld [vmem:[%s181 + $0x13ec] sm:$0xff]
      %v905 = vld [vmem:[%s181 + $0x13f4] sm:$0xff]
      %v906 = vld [vmem:[%s181 + $0x13fc] sm:$0xff]
      %v907 = vld [vmem:[%s181 + $0x1404] sm:$0xff]
      %v908 = vld [vmem:[%s181 + $0x140c] sm:$0xff]
      %v909 = vld [vmem:[%s181 + $0x1414] sm:$0xff]
      %v910 = vld [vmem:[%s181 + $0x141c] sm:$0xff]
      %v911 = vld [vmem:[%s181 + $0x1424] sm:$0xff]
      %v912 = vld [vmem:[%s181 + $0x142c] sm:$0xff]
      %v913 = vld [vmem:[%s181 + $0x1434] sm:$0xff]
      %v914 = vld [vmem:[%s181 + $0x143c] sm:$0xff]
      %v915 = vld [vmem:[%s181 + $0x1444] sm:$0xff]
      %v916 = vld [vmem:[%s181 + $0x144c] sm:$0xf]
      %v917 = vld [vmem:[%s181 + $0x1450] sm:$0xff]
      %v918 = vld [vmem:[%s181 + $0x1458] sm:$0xff]
      %v919 = vld [vmem:[%s181 + $0x1460] sm:$0xff]
      %v920 = vld [vmem:[%s181 + $0x1468] sm:$0xff]
      %v921 = vld [vmem:[%s181 + $0x1470] sm:$0xff]
      %v922 = vld [vmem:[%s181 + $0x1478] sm:$0xff]
      %v923 = vld [vmem:[%s181 + $0x1480] sm:$0xff]
      %v924 = vld [vmem:[%s181 + $0x1488] sm:$0xff]
      %v925 = vld [vmem:[%s181 + $0x1490] sm:$0xff]
      %v926 = vld [vmem:[%s181 + $0x1498] sm:$0xff]
      %v927 = vld [vmem:[%s181 + $0x14a0] sm:$0xff]
      %v928 = vld [vmem:[%s181 + $0x14a8] sm:$0xff]
      %v929 = vld [vmem:[%s181 + $0x14b0] sm:$0xf]
      %v930 = vld [vmem:[%s181 + $0x14b4] sm:$0xff]
      %v931 = vld [vmem:[%s181 + $0x14bc] sm:$0xff]
      %v932 = vld [vmem:[%s181 + $0x14c4] sm:$0xff]
      %v933 = vld [vmem:[%s181 + $0x14cc] sm:$0xff]
      %v934 = vld [vmem:[%s181 + $0x14d4] sm:$0xff]
      %v935 = vld [vmem:[%s181 + $0x14dc] sm:$0xff]
      %v936 = vld [vmem:[%s181 + $0x14e4] sm:$0xff]
      %v937 = vld [vmem:[%s181 + $0x14ec] sm:$0xff]
      %v938 = vld [vmem:[%s181 + $0x14f4] sm:$0xff]
      %v939 = vld [vmem:[%s181 + $0x14fc] sm:$0xff]
      %v940 = vld [vmem:[%s181 + $0x1504] sm:$0xff]
      %v941 = vld [vmem:[%s181 + $0x150c] sm:$0xff]
      %v942 = vld [vmem:[%s181 + $0x1514] sm:$0xf]
      %v943 = vld [vmem:[%s181 + $0x1518] sm:$0xff]
      %v944 = vld [vmem:[%s181 + $0x1520] sm:$0xff]
      %v945 = vld [vmem:[%s181 + $0x1528] sm:$0xff]
      %v946 = vld [vmem:[%s181 + $0x1530] sm:$0xff]
      %v947 = vld [vmem:[%s181 + $0x1538] sm:$0xff]
      %v948 = vld [vmem:[%s181 + $0x1540] sm:$0xff]
      %v949 = vld [vmem:[%s181 + $0x1548] sm:$0xff]
      %v950 = vld [vmem:[%s181 + $0x1550] sm:$0xff]
      %v951 = vld [vmem:[%s181 + $0x1558] sm:$0xff]
      %v952 = vld [vmem:[%s181 + $0x1560] sm:$0xff]
      %v953 = vld [vmem:[%s181 + $0x1568] sm:$0xff]
      %v954 = vld [vmem:[%s181 + $0x1570] sm:$0xff]
      %v955 = vld [vmem:[%s181 + $0x1578] sm:$0xf]
      %v956 = vld [vmem:[%s181 + $0x157c] sm:$0xff]
      %v957 = vld [vmem:[%s181 + $0x1584] sm:$0xff]
      %v958 = vld [vmem:[%s181 + $0x158c] sm:$0xff]
      %v959 = vld [vmem:[%s181 + $0x1594] sm:$0xff]
      %v960 = vld [vmem:[%s181 + $0x159c] sm:$0xff]
      %v961 = vld [vmem:[%s181 + $0x15a4] sm:$0xff]
      %v962 = vld [vmem:[%s181 + $0x15ac] sm:$0xff]
      %v963 = vld [vmem:[%s181 + $0x15b4] sm:$0xff]
      %v964 = vld [vmem:[%s181 + $0x15bc] sm:$0xff]
      %v965 = vld [vmem:[%s181 + $0x15c4] sm:$0xff]
      %v966 = vld [vmem:[%s181 + $0x15cc] sm:$0xff]
      %v967 = vld [vmem:[%s181 + $0x15d4] sm:$0xff]
      %v968 = vld [vmem:[%s181 + $0x15dc] sm:$0xf]
      %v969 = vld [vmem:[%s181 + $0x15e0] sm:$0xff]
      %v970 = vld [vmem:[%s181 + $0x15e8] sm:$0xff]
      %v971 = vld [vmem:[%s181 + $0x15f0] sm:$0xff]
      %v972 = vld [vmem:[%s181 + $0x15f8] sm:$0xff]
      %v973 = vld [vmem:[%s181 + $0x1600] sm:$0xff]
      %v974 = vld [vmem:[%s181 + $0x1608] sm:$0xff]
      %v975 = vld [vmem:[%s181 + $0x1610] sm:$0xff]
      %v976 = vld [vmem:[%s181 + $0x1618] sm:$0xff]
      %v977 = vld [vmem:[%s181 + $0x1620] sm:$0xff]
      %v978 = vld [vmem:[%s181 + $0x1628] sm:$0xff]
      %v979 = vld [vmem:[%s181 + $0x1630] sm:$0xff]
      %v980 = vld [vmem:[%s181 + $0x1638] sm:$0xff]
      %v981 = vld [vmem:[%s181 + $0x1640] sm:$0xf]
      %v982 = vld [vmem:[%s181 + $0x1644] sm:$0xff]
      %v983 = vld [vmem:[%s181 + $0x164c] sm:$0xff]
      %v984 = vld [vmem:[%s181 + $0x1654] sm:$0xff]
      %v985 = vld [vmem:[%s181 + $0x165c] sm:$0xff]
      %v986 = vld [vmem:[%s181 + $0x1664] sm:$0xff]
      %v987 = vld [vmem:[%s181 + $0x166c] sm:$0xff]
      %v988 = vld [vmem:[%s181 + $0x1674] sm:$0xff]
      %v989 = vld [vmem:[%s181 + $0x167c] sm:$0xff]
      %v990 = vld [vmem:[%s181 + $0x1684] sm:$0xff]
      %v991 = vld [vmem:[%s181 + $0x168c] sm:$0xff]
      %v992 = vld [vmem:[%s181 + $0x1694] sm:$0xff]
      %v993 = vld [vmem:[%s181 + $0x169c] sm:$0xff]
      %v994 = vld [vmem:[%s181 + $0x16a4] sm:$0xf]
      %v995 = vld [vmem:[%s181 + $0x16a8] sm:$0xff]
      %v996 = vld [vmem:[%s181 + $0x16b0] sm:$0xff]
      %v997 = vld [vmem:[%s181 + $0x16b8] sm:$0xff]
      %v998 = vld [vmem:[%s181 + $0x16c0] sm:$0xff]
      %v999 = vld [vmem:[%s181 + $0x16c8] sm:$0xff]
      %v1000 = vld [vmem:[%s181 + $0x16d0] sm:$0xff]
      %v1001 = vld [vmem:[%s181 + $0x16d8] sm:$0xff]
      %v1002 = vld [vmem:[%s181 + $0x16e0] sm:$0xff]
      %v1003 = vld [vmem:[%s181 + $0x16e8] sm:$0xff]
      %v1004 = vld [vmem:[%s181 + $0x16f0] sm:$0xff]
      %v1005 = vld [vmem:[%s181 + $0x16f8] sm:$0xff]
      %v1006 = vld [vmem:[%s181 + $0x1700] sm:$0xff]
      %v1007 = vld [vmem:[%s181 + $0x1708] sm:$0xf]
      %v1008 = vld [vmem:[%s181 + $0x170c] sm:$0xff]
      %v1009 = vld [vmem:[%s181 + $0x1714] sm:$0xff]
      %v1010 = vld [vmem:[%s181 + $0x171c] sm:$0xff]
      %v1011 = vld [vmem:[%s181 + $0x1724] sm:$0xff]
      %v1012 = vld [vmem:[%s181 + $0x172c] sm:$0xff]
      %v1013 = vld [vmem:[%s181 + $0x1734] sm:$0xff]
      %v1014 = vld [vmem:[%s181 + $0x173c] sm:$0xff]
      %v1015 = vld [vmem:[%s181 + $0x1744] sm:$0xff]
      %v1016 = vld [vmem:[%s181 + $0x174c] sm:$0xff]
      %v1017 = vld [vmem:[%s181 + $0x1754] sm:$0xff]
      %v1018 = vld [vmem:[%s181 + $0x175c] sm:$0xff]
      %v1019 = vld [vmem:[%s181 + $0x1764] sm:$0xff]
      %v1020 = vld [vmem:[%s181 + $0x176c] sm:$0xf]
      %v1021 = vld [vmem:[%s181 + $0x1770] sm:$0xff]
      %v1022 = vld [vmem:[%s181 + $0x1778] sm:$0xff]
      %v1023 = vld [vmem:[%s181 + $0x1780] sm:$0xff]
      %v1024 = vld [vmem:[%s181 + $0x1788] sm:$0xff]
      %v1025 = vld [vmem:[%s181 + $0x1790] sm:$0xff]
      %v1026 = vld [vmem:[%s181 + $0x1798] sm:$0xff]
      %v1027 = vld [vmem:[%s181 + $0x17a0] sm:$0xff]
      %v1028 = vld [vmem:[%s181 + $0x17a8] sm:$0xff]
      %v1029 = vld [vmem:[%s181 + $0x17b0] sm:$0xff]
      %v1030 = vld [vmem:[%s181 + $0x17b8] sm:$0xff]
      %v1031 = vld [vmem:[%s181 + $0x17c0] sm:$0xff]
      %v1032 = vld [vmem:[%s181 + $0x17c8] sm:$0xff]
      %v1033 = vld [vmem:[%s181 + $0x17d0] sm:$0xf]
      %v1034 = vld [vmem:[%s181 + $0x17d4] sm:$0xff]
      %v1035 = vld [vmem:[%s181 + $0x17dc] sm:$0xff]
      %v1036 = vld [vmem:[%s181 + $0x17e4] sm:$0xff]
      %v1037 = vld [vmem:[%s181 + $0x17ec] sm:$0xff]
      %v1038 = vld [vmem:[%s181 + $0x17f4] sm:$0xff]
      %v1039 = vld [vmem:[%s181 + $0x17fc] sm:$0xff]
      %v1040 = vld [vmem:[%s181 + $0x1804] sm:$0xff]
      %v1041 = vld [vmem:[%s181 + $0x180c] sm:$0xff]
      %v1042 = vld [vmem:[%s181 + $0x1814] sm:$0xff]
      %v1043 = vld [vmem:[%s181 + $0x181c] sm:$0xff]
      %v1044 = vld [vmem:[%s181 + $0x1824] sm:$0xff]
      %v1045 = vld [vmem:[%s181 + $0x182c] sm:$0xff]
      %v1046 = vld [vmem:[%s181 + $0x1834] sm:$0xf]
      %v1047 = vld [vmem:[%s181 + $0x1838] sm:$0xff]
      %v1048 = vld [vmem:[%s181 + $0x1840] sm:$0xff]
      %v1049 = vld [vmem:[%s181 + $0x1848] sm:$0xff]
      %v1050 = vld [vmem:[%s181 + $0x1850] sm:$0xff]
      %v1051 = vld [vmem:[%s181 + $0x1858] sm:$0xff]
      %v1052 = vld [vmem:[%s181 + $0x1860] sm:$0xff]
      %v1053 = vld [vmem:[%s181 + $0x1868] sm:$0xff]
      %v1054 = vld [vmem:[%s181 + $0x1870] sm:$0xff]
      %v1055 = vld [vmem:[%s181 + $0x1878] sm:$0xff]
      %v1056 = vld [vmem:[%s181 + $0x1880] sm:$0xff]
      %v1057 = vld [vmem:[%s181 + $0x1888] sm:$0xff]
      %v1058 = vld [vmem:[%s181 + $0x1890] sm:$0xff]
      %v1059 = vld [vmem:[%s181 + $0x1898] sm:$0xf]
      %v1060 = vld [vmem:[%s181 + $0x189c] sm:$0xff]
      %v1061 = vld [vmem:[%s181 + $0x18a4] sm:$0xff]
      %v1062 = vld [vmem:[%s181 + $0x18ac] sm:$0xff]
      %v1063 = vld [vmem:[%s181 + $0x18b4] sm:$0xff]
      %v1064 = vld [vmem:[%s181 + $0x18bc] sm:$0xff]
      %v1065 = vld [vmem:[%s181 + $0x18c4] sm:$0xff]
      %v1066 = vld [vmem:[%s181 + $0x18cc] sm:$0xff]
      %v1067 = vld [vmem:[%s181 + $0x18d4] sm:$0xff]
      %v1068 = vld [vmem:[%s181 + $0x18dc] sm:$0xff]
      %v1069 = vld [vmem:[%s181 + $0x18e4] sm:$0xff]
      %v1070 = vld [vmem:[%s181 + $0x18ec] sm:$0xff]
      %v1071 = vld [vmem:[%s181 + $0x18f4] sm:$0xff]
      %v1072 = vld [vmem:[%s181 + $0x18fc] sm:$0xf]
      %v1073 = vld [vmem:[%s181 + $0x1900] sm:$0xff]
      %v1074 = vld [vmem:[%s181 + $0x1908] sm:$0xff]
      %v1075 = vld [vmem:[%s181 + $0x1910] sm:$0xff]
      %v1076 = vld [vmem:[%s181 + $0x1918] sm:$0xff]
      %v1077 = vld [vmem:[%s181 + $0x1920] sm:$0xff]
      %v1078 = vld [vmem:[%s181 + $0x1928] sm:$0xff]
      %v1079 = vld [vmem:[%s181 + $0x1930] sm:$0xff]
      %v1080 = vld [vmem:[%s181 + $0x1938] sm:$0xff]
      %v1081 = vld [vmem:[%s181 + $0x1940] sm:$0xff]
      %v1082 = vld [vmem:[%s181 + $0x1948] sm:$0xff]
      %v1083 = vld [vmem:[%s181 + $0x1950] sm:$0xff]
      %v1084 = vld [vmem:[%s181 + $0x1958] sm:$0xff]
      %v1085 = vld [vmem:[%s181 + $0x1960] sm:$0xf]
      %v1086 = vld [vmem:[%s181 + $0x1964] sm:$0xff]
      %v1087 = vld [vmem:[%s181 + $0x196c] sm:$0xff]
      %v1088 = vld [vmem:[%s181 + $0x1974] sm:$0xff]
      %v1089 = vld [vmem:[%s181 + $0x197c] sm:$0xff]
      %v1090 = vld [vmem:[%s181 + $0x1984] sm:$0xff]
      %v1091 = vld [vmem:[%s181 + $0x198c] sm:$0xff]
      %v1092 = vld [vmem:[%s181 + $0x1994] sm:$0xff]
      %v1093 = vld [vmem:[%s181 + $0x199c] sm:$0xff]
      %v1094 = vld [vmem:[%s181 + $0x19a4] sm:$0xff]
      %v1095 = vld [vmem:[%s181 + $0x19ac] sm:$0xff]
      %v1096 = vld [vmem:[%s181 + $0x19b4] sm:$0xff]
      %v1097 = vld [vmem:[%s181 + $0x19bc] sm:$0xff]
      %v1098 = vld [vmem:[%s181 + $0x19c4] sm:$0xf]
      %v1099 = vld [vmem:[%s181 + $0x19c8] sm:$0xff]
      %v1100 = vld [vmem:[%s181 + $0x19d0] sm:$0xff]
      %v1101 = vld [vmem:[%s181 + $0x19d8] sm:$0xff]
      %v1102 = vld [vmem:[%s181 + $0x19e0] sm:$0xff]
      %v1103 = vld [vmem:[%s181 + $0x19e8] sm:$0xff]
      %v1104 = vld [vmem:[%s181 + $0x19f0] sm:$0xff]
      %v1105 = vld [vmem:[%s181 + $0x19f8] sm:$0xff]
      %v1106 = vld [vmem:[%s181 + $0x1a00] sm:$0xff]
      %v1107 = vld [vmem:[%s181 + $0x1a08] sm:$0xff]
      %v1108 = vld [vmem:[%s181 + $0x1a10] sm:$0xff]
      %v1109 = vld [vmem:[%s181 + $0x1a18] sm:$0xff]
      %v1110 = vld [vmem:[%s181 + $0x1a20] sm:$0xff]
      %v1111 = vld [vmem:[%s181 + $0x1a28] sm:$0xf]
      %v1112 = vld [vmem:[%s181 + $0x1a2c] sm:$0xff]
      %v1113 = vld [vmem:[%s181 + $0x1a34] sm:$0xff]
      %v1114 = vld [vmem:[%s181 + $0x1a3c] sm:$0xff]
      %v1115 = vld [vmem:[%s181 + $0x1a44] sm:$0xff]
      %v1116 = vld [vmem:[%s181 + $0x1a4c] sm:$0xff]
      %v1117 = vld [vmem:[%s181 + $0x1a54] sm:$0xff]
      %v1118 = vld [vmem:[%s181 + $0x1a5c] sm:$0xff]
      %v1119 = vld [vmem:[%s181 + $0x1a64] sm:$0xff]
      %v1120 = vld [vmem:[%s181 + $0x1a6c] sm:$0xff]
      %v1121 = vld [vmem:[%s181 + $0x1a74] sm:$0xff]
      %v1122 = vld [vmem:[%s181 + $0x1a7c] sm:$0xff]
      %v1123 = vld [vmem:[%s181 + $0x1a84] sm:$0xff]
      %v1124 = vld [vmem:[%s181 + $0x1a8c] sm:$0xf]
      %v1125 = vld [vmem:[%s181 + $0x1a90] sm:$0xff]
      %v1126 = vld [vmem:[%s181 + $0x1a98] sm:$0xff]
      %v1127 = vld [vmem:[%s181 + $0x1aa0] sm:$0xff]
      %v1128 = vld [vmem:[%s181 + $0x1aa8] sm:$0xff]
      %v1129 = vld [vmem:[%s181 + $0x1ab0] sm:$0xff]
      %v1130 = vld [vmem:[%s181 + $0x1ab8] sm:$0xff]
      %v1131 = vld [vmem:[%s181 + $0x1ac0] sm:$0xff]
      %v1132 = vld [vmem:[%s181 + $0x1ac8] sm:$0xff]
      %v1133 = vld [vmem:[%s181 + $0x1ad0] sm:$0xff]
      %v1134 = vld [vmem:[%s181 + $0x1ad8] sm:$0xff]
      %v1135 = vld [vmem:[%s181 + $0x1ae0] sm:$0xff]
      %v1136 = vld [vmem:[%s181 + $0x1ae8] sm:$0xff]
      %v1137 = vld [vmem:[%s181 + $0x1af0] sm:$0xf]
      %v1138 = vld [vmem:[%s181 + $0x1af4] sm:$0xff]
      %v1139 = vld [vmem:[%s181 + $0x1afc] sm:$0xff]
      %v1140 = vld [vmem:[%s181 + $0x1b04] sm:$0xff]
      %v1141 = vld [vmem:[%s181 + $0x1b0c] sm:$0xff]
      %v1142 = vld [vmem:[%s181 + $0x1b14] sm:$0xff]
      %v1143 = vld [vmem:[%s181 + $0x1b1c] sm:$0xff]
      %v1144 = vld [vmem:[%s181 + $0x1b24] sm:$0xff]
      %v1145 = vld [vmem:[%s181 + $0x1b2c] sm:$0xff]
      %v1146 = vld [vmem:[%s181 + $0x1b34] sm:$0xff]
      %v1147 = vld [vmem:[%s181 + $0x1b3c] sm:$0xff]
      %v1148 = vld [vmem:[%s181 + $0x1b44] sm:$0xff]
      %v1149 = vld [vmem:[%s181 + $0x1b4c] sm:$0xff]
      %v1150 = vld [vmem:[%s181 + $0x1b54] sm:$0xf]
      %v1151 = vld [vmem:[%s181 + $0x1b58] sm:$0xff]
      %v1152 = vld [vmem:[%s181 + $0x1b60] sm:$0xff]
      %v1153 = vld [vmem:[%s181 + $0x1b68] sm:$0xff]
      %v1154 = vld [vmem:[%s181 + $0x1b70] sm:$0xff]
      %v1155 = vld [vmem:[%s181 + $0x1b78] sm:$0xff]
      %v1156 = vld [vmem:[%s181 + $0x1b80] sm:$0xff]
      %v1157 = vld [vmem:[%s181 + $0x1b88] sm:$0xff]
      %v1158 = vld [vmem:[%s181 + $0x1b90] sm:$0xff]
      %v1159 = vld [vmem:[%s181 + $0x1b98] sm:$0xff]
      %v1160 = vld [vmem:[%s181 + $0x1ba0] sm:$0xff]
      %v1161 = vld [vmem:[%s181 + $0x1ba8] sm:$0xff]
      %v1162 = vld [vmem:[%s181 + $0x1bb0] sm:$0xff]
      %v1163 = vld [vmem:[%s181 + $0x1bb8] sm:$0xf]
      %v1164 = vld [vmem:[%s181 + $0x1bbc] sm:$0xff]
      %v1165 = vld [vmem:[%s181 + $0x1bc4] sm:$0xff]
      %v1166 = vld [vmem:[%s181 + $0x1bcc] sm:$0xff]
      %v1167 = vld [vmem:[%s181 + $0x1bd4] sm:$0xff]
      %v1168 = vld [vmem:[%s181 + $0x1bdc] sm:$0xff]
      %v1169 = vld [vmem:[%s181 + $0x1be4] sm:$0xff]
      %v1170 = vld [vmem:[%s181 + $0x1bec] sm:$0xff]
      %v1171 = vld [vmem:[%s181 + $0x1bf4] sm:$0xff]
      %v1172 = vld [vmem:[%s181 + $0x1bfc] sm:$0xff]
      %v1173 = vld [vmem:[%s181 + $0x1c04] sm:$0xff]
      %v1174 = vld [vmem:[%s181 + $0x1c0c] sm:$0xff]
      %v1175 = vld [vmem:[%s181 + $0x1c14] sm:$0xff]
      %v1176 = vld [vmem:[%s181 + $0x1c1c] sm:$0xf]
      %v1177 = vld [vmem:[%s181 + $0x1c20] sm:$0xff]
      %v1178 = vld [vmem:[%s181 + $0x1c28] sm:$0xff]
      %v1179 = vld [vmem:[%s181 + $0x1c30] sm:$0xff]
      %v1180 = vld [vmem:[%s181 + $0x1c38] sm:$0xff]
      %v1181 = vld [vmem:[%s181 + $0x1c40] sm:$0xff]
      %v1182 = vld [vmem:[%s181 + $0x1c48] sm:$0xff]
      %v1183 = vld [vmem:[%s181 + $0x1c50] sm:$0xff]
      %v1184 = vld [vmem:[%s181 + $0x1c58] sm:$0xff]
      %v1185 = vld [vmem:[%s181 + $0x1c60] sm:$0xff]
      %v1186 = vld [vmem:[%s181 + $0x1c68] sm:$0xff]
      %v1187 = vld [vmem:[%s181 + $0x1c70] sm:$0xff]
      %v1188 = vld [vmem:[%s181 + $0x1c78] sm:$0xff]
      %v1189 = vld [vmem:[%s181 + $0x1c80] sm:$0xf]
      %v1190 = vld [vmem:[%s181 + $0x1c84] sm:$0xff]
      %v1191 = vld [vmem:[%s181 + $0x1c8c] sm:$0xff]
      %v1192 = vld [vmem:[%s181 + $0x1c94] sm:$0xff]
      %v1193 = vld [vmem:[%s181 + $0x1c9c] sm:$0xff]
      %v1194 = vld [vmem:[%s181 + $0x1ca4] sm:$0xff]
      %v1195 = vld [vmem:[%s181 + $0x1cac] sm:$0xff]
      %v1196 = vld [vmem:[%s181 + $0x1cb4] sm:$0xff]
      %v1197 = vld [vmem:[%s181 + $0x1cbc] sm:$0xff]
      %v1198 = vld [vmem:[%s181 + $0x1cc4] sm:$0xff]
      %v1199 = vld [vmem:[%s181 + $0x1ccc] sm:$0xff]
      %v1200 = vld [vmem:[%s181 + $0x1cd4] sm:$0xff]
      %v1201 = vld [vmem:[%s181 + $0x1cdc] sm:$0xff]
      %v1202 = vld [vmem:[%s181 + $0x1ce4] sm:$0xf]
      %v1203 = vld [vmem:[%s181 + $0x1ce8] sm:$0xff]
      %v1204 = vld [vmem:[%s181 + $0x1cf0] sm:$0xff]
      %v1205 = vld [vmem:[%s181 + $0x1cf8] sm:$0xff]
      %v1206 = vld [vmem:[%s181 + $0x1d00] sm:$0xff]
      %v1207 = vld [vmem:[%s181 + $0x1d08] sm:$0xff]
      %v1208 = vld [vmem:[%s181 + $0x1d10] sm:$0xff]
      %v1209 = vld [vmem:[%s181 + $0x1d18] sm:$0xff]
      %v1210 = vld [vmem:[%s181 + $0x1d20] sm:$0xff]
      %v1211 = vld [vmem:[%s181 + $0x1d28] sm:$0xff]
      %v1212 = vld [vmem:[%s181 + $0x1d30] sm:$0xff]
      %v1213 = vld [vmem:[%s181 + $0x1d38] sm:$0xff]
      %v1214 = vld [vmem:[%s181 + $0x1d40] sm:$0xff]
      %v1215 = vld [vmem:[%s181 + $0x1d48] sm:$0xf]
      %v1216 = vld [vmem:[%s181 + $0x1d4c] sm:$0xff]
      %v1217 = vld [vmem:[%s181 + $0x1d54] sm:$0xff]
      %v1218 = vld [vmem:[%s181 + $0x1d5c] sm:$0xff]
      %v1219 = vld [vmem:[%s181 + $0x1d64] sm:$0xff]
      %v1220 = vld [vmem:[%s181 + $0x1d6c] sm:$0xff]
      %v1221 = vld [vmem:[%s181 + $0x1d74] sm:$0xff]
      %v1222 = vld [vmem:[%s181 + $0x1d7c] sm:$0xff]
      %v1223 = vld [vmem:[%s181 + $0x1d84] sm:$0xff]
      %v1224 = vld [vmem:[%s181 + $0x1d8c] sm:$0xff]
      %v1225 = vld [vmem:[%s181 + $0x1d94] sm:$0xff]
      %v1226 = vld [vmem:[%s181 + $0x1d9c] sm:$0xff]
      %v1227 = vld [vmem:[%s181 + $0x1da4] sm:$0xff]
      %v1228 = vld [vmem:[%s181 + $0x1dac] sm:$0xf]
      %v1229 = vld [vmem:[%s181 + $0x1db0] sm:$0xff]
      %v1230 = vld [vmem:[%s181 + $0x1db8] sm:$0xff]
      %v1231 = vld [vmem:[%s181 + $0x1dc0] sm:$0xff]
      %v1232 = vld [vmem:[%s181 + $0x1dc8] sm:$0xff]
      %v1233 = vld [vmem:[%s181 + $0x1dd0] sm:$0xff]
      %v1234 = vld [vmem:[%s181 + $0x1dd8] sm:$0xff]
      %v1235 = vld [vmem:[%s181 + $0x1de0] sm:$0xff]
      %v1236 = vld [vmem:[%s181 + $0x1de8] sm:$0xff]
      %v1237 = vld [vmem:[%s181 + $0x1df0] sm:$0xff]
      %v1238 = vld [vmem:[%s181 + $0x1df8] sm:$0xff]
      %v1239 = vld [vmem:[%s181 + $0x1e00] sm:$0xff]
      %v1240 = vld [vmem:[%s181 + $0x1e08] sm:$0xff]
      %v1241 = vld [vmem:[%s181 + $0x1e10] sm:$0xf]
      %v1242 = vld [vmem:[%s181 + $0x1e14] sm:$0xff]
      %v1243 = vld [vmem:[%s181 + $0x1e1c] sm:$0xff]
      %v1244 = vld [vmem:[%s181 + $0x1e24] sm:$0xff]
      %v1245 = vld [vmem:[%s181 + $0x1e2c] sm:$0xff]
      %v1246 = vld [vmem:[%s181 + $0x1e34] sm:$0xff]
      %v1247 = vld [vmem:[%s181 + $0x1e3c] sm:$0xff]
      %v1248 = vld [vmem:[%s181 + $0x1e44] sm:$0xff]
      %v1249 = vld [vmem:[%s181 + $0x1e4c] sm:$0xff]
      %v1250 = vld [vmem:[%s181 + $0x1e54] sm:$0xff]
      %v1251 = vld [vmem:[%s181 + $0x1e5c] sm:$0xff]
      %v1252 = vld [vmem:[%s181 + $0x1e64] sm:$0xff]
      %v1253 = vld [vmem:[%s181 + $0x1e6c] sm:$0xff]
      %v1254 = vld [vmem:[%s181 + $0x1e74] sm:$0xf]
      %v1255 = vld [vmem:[%s181 + $0x1e78] sm:$0xff]
      %v1256 = vld [vmem:[%s181 + $0x1e80] sm:$0xff]
      %v1257 = vld [vmem:[%s181 + $0x1e88] sm:$0xff]
      %v1258 = vld [vmem:[%s181 + $0x1e90] sm:$0xff]
      %v1259 = vld [vmem:[%s181 + $0x1e98] sm:$0xff]
      %v1260 = vld [vmem:[%s181 + $0x1ea0] sm:$0xff]
      %v1261 = vld [vmem:[%s181 + $0x1ea8] sm:$0xff]
      %v1262 = vld [vmem:[%s181 + $0x1eb0] sm:$0xff]
      %v1263 = vld [vmem:[%s181 + $0x1eb8] sm:$0xff]
      %v1264 = vld [vmem:[%s181 + $0x1ec0] sm:$0xff]
      %v1265 = vld [vmem:[%s181 + $0x1ec8] sm:$0xff]
      %v1266 = vld [vmem:[%s181 + $0x1ed0] sm:$0xff]
      %v1267 = vld [vmem:[%s181 + $0x1ed8] sm:$0xf]
      %v1268 = vld [vmem:[%s181 + $0x1edc] sm:$0xff]
      %v1269 = vld [vmem:[%s181 + $0x1ee4] sm:$0xff]
      %v1270 = vld [vmem:[%s181 + $0x1eec] sm:$0xff]
      %v1271 = vld [vmem:[%s181 + $0x1ef4] sm:$0xff]
      %v1272 = vld [vmem:[%s181 + $0x1efc] sm:$0xff]
      %v1273 = vld [vmem:[%s181 + $0x1f04] sm:$0xff]
      %v1274 = vld [vmem:[%s181 + $0x1f0c] sm:$0xff]
      %v1275 = vld [vmem:[%s181 + $0x1f14] sm:$0xff]
      %v1276 = vld [vmem:[%s181 + $0x1f1c] sm:$0xff]
      %v1277 = vld [vmem:[%s181 + $0x1f24] sm:$0xff]
      %v1278 = vld [vmem:[%s181 + $0x1f2c] sm:$0xff]
      %v1279 = vld [vmem:[%s181 + $0x1f34] sm:$0xff]
      %v1280 = vld [vmem:[%s181 + $0x1f3c] sm:$0xf]
      %v1284 = vunpack.c.l.b16 %v238
      %v1285 = vunpack.c.h.b16 %v238
      %v1286 = vunpack.c.l.b16 %v239
      %v1287 = vunpack.c.h.b16 %v239
      %v1288 = vunpack.c.l.b16 %v240
      %v1289 = vpack.c.b16 %v1284, %v1284
      %v1290 = vpack.c.b16 %v1285, %v1285
      %v1291 = vpack.c.b16 %v1286, %v1286
      %v1292 = vpack.c.b16 %v1287, %v1287
      %v1293 = vpack.c.b16 %v1288, %v1288
      %v2339 = vunpack.c.l.b16 %v241
      %v2340 = vunpack.c.h.b16 %v241
      %v2341 = vunpack.c.l.b16 %v242
      %v2342 = vunpack.c.h.b16 %v242
      %v2343 = vunpack.c.l.b16 %v243
      %v2344 = vunpack.c.h.b16 %v243
      %v2345 = vunpack.c.l.b16 %v244
      %v2346 = vunpack.c.h.b16 %v244
      %v2347 = vunpack.c.l.b16 %v245
      %v2348 = vunpack.c.h.b16 %v245
      %v2349 = vunpack.c.l.b16 %v246
      %v2350 = vunpack.c.h.b16 %v246
      %v2351 = vunpack.c.l.b16 %v247
      %v2352 = vunpack.c.h.b16 %v247
      %v2353 = vunpack.c.l.b16 %v248
      %v2354 = vunpack.c.h.b16 %v248
      %v2355 = vunpack.c.l.b16 %v249
      %v2356 = vunpack.c.h.b16 %v249
      %v2357 = vunpack.c.l.b16 %v250
      %v2358 = vunpack.c.h.b16 %v250
      %v2359 = vunpack.c.l.b16 %v251
      %v2360 = vunpack.c.h.b16 %v251
      %v2361 = vunpack.c.l.b16 %v252
      %v2362 = vunpack.c.h.b16 %v252
      %v2363 = vunpack.c.l.b16 %v253
      %v2364 = vunpack.c.l.b16 %v254
      %v2365 = vunpack.c.h.b16 %v254
      %v2366 = vunpack.c.l.b16 %v255
      %v2367 = vunpack.c.h.b16 %v255
      %v2368 = vunpack.c.l.b16 %v256
      %v2369 = vunpack.c.h.b16 %v256
      %v2370 = vunpack.c.l.b16 %v257
      %v2371 = vunpack.c.h.b16 %v257
      %v2372 = vunpack.c.l.b16 %v258
      %v2373 = vunpack.c.h.b16 %v258
      %v2374 = vunpack.c.l.b16 %v259
      %v2375 = vunpack.c.h.b16 %v259
      %v2376 = vunpack.c.l.b16 %v260
      %v2377 = vunpack.c.h.b16 %v260
      %v2378 = vunpack.c.l.b16 %v261
      %v2379 = vunpack.c.h.b16 %v261
      %v2380 = vunpack.c.l.b16 %v262
      %v2381 = vunpack.c.h.b16 %v262
      %v2382 = vunpack.c.l.b16 %v263
      %v2383 = vunpack.c.h.b16 %v263
      %v2384 = vunpack.c.l.b16 %v264
      %v2385 = vunpack.c.h.b16 %v264
      %v2386 = vunpack.c.l.b16 %v265
      %v2387 = vunpack.c.h.b16 %v265
      %v2388 = vunpack.c.l.b16 %v266
      %v2389 = vunpack.c.l.b16 %v267
      %v2390 = vunpack.c.h.b16 %v267
      %v2391 = vunpack.c.l.b16 %v268
      %v2392 = vunpack.c.h.b16 %v268
      %v2393 = vunpack.c.l.b16 %v269
      %v2394 = vunpack.c.h.b16 %v269
      %v2395 = vunpack.c.l.b16 %v270
      %v2396 = vunpack.c.h.b16 %v270
      %v2397 = vunpack.c.l.b16 %v271
      %v2398 = vunpack.c.h.b16 %v271
      %v2399 = vunpack.c.l.b16 %v272
      %v2400 = vunpack.c.h.b16 %v272
      %v2401 = vunpack.c.l.b16 %v273
      %v2402 = vunpack.c.h.b16 %v273
      %v2403 = vunpack.c.l.b16 %v274
      %v2404 = vunpack.c.h.b16 %v274
      %v2405 = vunpack.c.l.b16 %v275
      %v2406 = vunpack.c.h.b16 %v275
      %v2407 = vunpack.c.l.b16 %v276
      %v2408 = vunpack.c.h.b16 %v276
      %v2409 = vunpack.c.l.b16 %v277
      %v2410 = vunpack.c.h.b16 %v277
      %v2411 = vunpack.c.l.b16 %v278
      %v2412 = vunpack.c.h.b16 %v278
      %v2413 = vunpack.c.l.b16 %v279
      %v2414 = vunpack.c.l.b16 %v280
      %v2415 = vunpack.c.h.b16 %v280
      %v2416 = vunpack.c.l.b16 %v281
      %v2417 = vunpack.c.h.b16 %v281
      %v2418 = vunpack.c.l.b16 %v282
      %v2419 = vunpack.c.h.b16 %v282
      %v2420 = vunpack.c.l.b16 %v283
      %v2421 = vunpack.c.h.b16 %v283
      %v2422 = vunpack.c.l.b16 %v284
      %v2423 = vunpack.c.h.b16 %v284
      %v2424 = vunpack.c.l.b16 %v285
      %v2425 = vunpack.c.h.b16 %v285
      %v2426 = vunpack.c.l.b16 %v286
      %v2427 = vunpack.c.h.b16 %v286
      %v2428 = vunpack.c.l.b16 %v287
      %v2429 = vunpack.c.h.b16 %v287
      %v2430 = vunpack.c.l.b16 %v288
      %v2431 = vunpack.c.h.b16 %v288
      %v2432 = vunpack.c.l.b16 %v289
      %v2433 = vunpack.c.h.b16 %v289
      %v2434 = vunpack.c.l.b16 %v290
      %v2435 = vunpack.c.h.b16 %v290
      %v2436 = vunpack.c.l.b16 %v291
      %v2437 = vunpack.c.h.b16 %v291
      %v2438 = vunpack.c.l.b16 %v292
      %v2439 = vunpack.c.l.b16 %v293
      %v2440 = vunpack.c.h.b16 %v293
      %v2441 = vunpack.c.l.b16 %v294
      %v2442 = vunpack.c.h.b16 %v294
      %v2443 = vunpack.c.l.b16 %v295
      %v2444 = vunpack.c.h.b16 %v295
      %v2445 = vunpack.c.l.b16 %v296
      %v2446 = vunpack.c.h.b16 %v296
      %v2447 = vunpack.c.l.b16 %v297
      %v2448 = vunpack.c.h.b16 %v297
      %v2449 = vunpack.c.l.b16 %v298
      %v2450 = vunpack.c.h.b16 %v298
      %v2451 = vunpack.c.l.b16 %v299
      %v2452 = vunpack.c.h.b16 %v299
      %v2453 = vunpack.c.l.b16 %v300
      %v2454 = vunpack.c.h.b16 %v300
      %v2455 = vunpack.c.l.b16 %v301
      %v2456 = vunpack.c.h.b16 %v301
      %v2457 = vunpack.c.l.b16 %v302
      %v2458 = vunpack.c.h.b16 %v302
      %v2459 = vunpack.c.l.b16 %v303
      %v2460 = vunpack.c.h.b16 %v303
      %v2461 = vunpack.c.l.b16 %v304
      %v2462 = vunpack.c.h.b16 %v304
      %v2463 = vunpack.c.l.b16 %v305
      %v2464 = vunpack.c.l.b16 %v306
      %v2465 = vunpack.c.h.b16 %v306
      %v2466 = vunpack.c.l.b16 %v307
      %v2467 = vunpack.c.h.b16 %v307
      %v2468 = vunpack.c.l.b16 %v308
      %v2469 = vunpack.c.h.b16 %v308
      %v2470 = vunpack.c.l.b16 %v309
      %v2471 = vunpack.c.h.b16 %v309
      %v2472 = vunpack.c.l.b16 %v310
      %v2473 = vunpack.c.h.b16 %v310
      %v2474 = vunpack.c.l.b16 %v311
      %v2475 = vunpack.c.h.b16 %v311
      %v2476 = vunpack.c.l.b16 %v312
      %v2477 = vunpack.c.h.b16 %v312
      %v2478 = vunpack.c.l.b16 %v313
      %v2479 = vunpack.c.h.b16 %v313
      %v2480 = vunpack.c.l.b16 %v314
      %v2481 = vunpack.c.h.b16 %v314
      %v2482 = vunpack.c.l.b16 %v315
      %v2483 = vunpack.c.h.b16 %v315
      %v2484 = vunpack.c.l.b16 %v316
      %v2485 = vunpack.c.h.b16 %v316
      %v2486 = vunpack.c.l.b16 %v317
      %v2487 = vunpack.c.h.b16 %v317
      %v2488 = vunpack.c.l.b16 %v318
      %v2489 = vunpack.c.l.b16 %v319
      %v2490 = vunpack.c.h.b16 %v319
      %v2491 = vunpack.c.l.b16 %v320
      %v2492 = vunpack.c.h.b16 %v320
      %v2493 = vunpack.c.l.b16 %v321
      %v2494 = vunpack.c.h.b16 %v321
      %v2495 = vunpack.c.l.b16 %v322
      %v2496 = vunpack.c.h.b16 %v322
      %v2497 = vunpack.c.l.b16 %v323
      %v2498 = vunpack.c.h.b16 %v323
      %v2499 = vunpack.c.l.b16 %v324
      %v2500 = vunpack.c.h.b16 %v324
      %v2501 = vunpack.c.l.b16 %v325
      %v2502 = vunpack.c.h.b16 %v325
      %v2503 = vunpack.c.l.b16 %v326
      %v2504 = vunpack.c.h.b16 %v326
      %v2505 = vunpack.c.l.b16 %v327
      %v2506 = vunpack.c.h.b16 %v327
      %v2507 = vunpack.c.l.b16 %v328
      %v2508 = vunpack.c.h.b16 %v328
      %v2509 = vunpack.c.l.b16 %v329
      %v2510 = vunpack.c.h.b16 %v329
      %v2511 = vunpack.c.l.b16 %v330
      %v2512 = vunpack.c.h.b16 %v330
      %v2513 = vunpack.c.l.b16 %v331
      %v2514 = vunpack.c.l.b16 %v332
      %v2515 = vunpack.c.h.b16 %v332
      %v2516 = vunpack.c.l.b16 %v333
      %v2517 = vunpack.c.h.b16 %v333
      %v2518 = vunpack.c.l.b16 %v334
      %v2519 = vunpack.c.h.b16 %v334
      %v2520 = vunpack.c.l.b16 %v335
      %v2521 = vunpack.c.h.b16 %v335
      %v2522 = vunpack.c.l.b16 %v336
      %v2523 = vunpack.c.h.b16 %v336
      %v2524 = vunpack.c.l.b16 %v337
      %v2525 = vunpack.c.h.b16 %v337
      %v2526 = vunpack.c.l.b16 %v338
      %v2527 = vunpack.c.h.b16 %v338
      %v2528 = vunpack.c.l.b16 %v339
      %v2529 = vunpack.c.h.b16 %v339
      %v2530 = vunpack.c.l.b16 %v340
      %v2531 = vunpack.c.h.b16 %v340
      %v2532 = vunpack.c.l.b16 %v341
      %v2533 = vunpack.c.h.b16 %v341
      %v2534 = vunpack.c.l.b16 %v342
      %v2535 = vunpack.c.h.b16 %v342
      %v2536 = vunpack.c.l.b16 %v343
      %v2537 = vunpack.c.h.b16 %v343
      %v2538 = vunpack.c.l.b16 %v344
      %v2539 = vunpack.c.l.b16 %v345
      %v2540 = vunpack.c.h.b16 %v345
      %v2541 = vunpack.c.l.b16 %v346
      %v2542 = vunpack.c.h.b16 %v346
      %v2543 = vunpack.c.l.b16 %v347
      %v2544 = vunpack.c.h.b16 %v347
      %v2545 = vunpack.c.l.b16 %v348
      %v2546 = vunpack.c.h.b16 %v348
      %v2547 = vunpack.c.l.b16 %v349
      %v2548 = vunpack.c.h.b16 %v349
      %v2549 = vunpack.c.l.b16 %v350
      %v2550 = vunpack.c.h.b16 %v350
      %v2551 = vunpack.c.l.b16 %v351
      %v2552 = vunpack.c.h.b16 %v351
      %v2553 = vunpack.c.l.b16 %v352
      %v2554 = vunpack.c.h.b16 %v352
      %v2555 = vunpack.c.l.b16 %v353
      %v2556 = vunpack.c.h.b16 %v353
      %v2557 = vunpack.c.l.b16 %v354
      %v2558 = vunpack.c.h.b16 %v354
      %v2559 = vunpack.c.l.b16 %v355
      %v2560 = vunpack.c.h.b16 %v355
      %v2561 = vunpack.c.l.b16 %v356
      %v2562 = vunpack.c.h.b16 %v356
      %v2563 = vunpack.c.l.b16 %v357
      %v2564 = vunpack.c.l.b16 %v358
      %v2565 = vunpack.c.h.b16 %v358
      %v2566 = vunpack.c.l.b16 %v359
      %v2567 = vunpack.c.h.b16 %v359
      %v2568 = vunpack.c.l.b16 %v360
      %v2569 = vunpack.c.h.b16 %v360
      %v2570 = vunpack.c.l.b16 %v361
      %v2571 = vunpack.c.h.b16 %v361
      %v2572 = vunpack.c.l.b16 %v362
      %v2573 = vunpack.c.h.b16 %v362
      %v2574 = vunpack.c.l.b16 %v363
      %v2575 = vunpack.c.h.b16 %v363
      %v2576 = vunpack.c.l.b16 %v364
      %v2577 = vunpack.c.h.b16 %v364
      %v2578 = vunpack.c.l.b16 %v365
      %v2579 = vunpack.c.h.b16 %v365
      %v2580 = vunpack.c.l.b16 %v366
      %v2581 = vunpack.c.h.b16 %v366
      %v2582 = vunpack.c.l.b16 %v367
      %v2583 = vunpack.c.h.b16 %v367
      %v2584 = vunpack.c.l.b16 %v368
      %v2585 = vunpack.c.h.b16 %v368
      %v2586 = vunpack.c.l.b16 %v369
      %v2587 = vunpack.c.h.b16 %v369
      %v2588 = vunpack.c.l.b16 %v370
      %v2589 = vunpack.c.l.b16 %v371
      %v2590 = vunpack.c.h.b16 %v371
      %v2591 = vunpack.c.l.b16 %v372
      %v2592 = vunpack.c.h.b16 %v372
      %v2593 = vunpack.c.l.b16 %v373
      %v2594 = vunpack.c.h.b16 %v373
      %v2595 = vunpack.c.l.b16 %v374
      %v2596 = vunpack.c.h.b16 %v374
      %v2597 = vunpack.c.l.b16 %v375
      %v2598 = vunpack.c.h.b16 %v375
      %v2599 = vunpack.c.l.b16 %v376
      %v2600 = vunpack.c.h.b16 %v376
      %v2601 = vunpack.c.l.b16 %v377
      %v2602 = vunpack.c.h.b16 %v377
      %v2603 = vunpack.c.l.b16 %v378
      %v2604 = vunpack.c.h.b16 %v378
      %v2605 = vunpack.c.l.b16 %v379
      %v2606 = vunpack.c.h.b16 %v379
      %v2607 = vunpack.c.l.b16 %v380
      %v2608 = vunpack.c.h.b16 %v380
      %v2609 = vunpack.c.l.b16 %v381
      %v2610 = vunpack.c.h.b16 %v381
      %v2611 = vunpack.c.l.b16 %v382
      %v2612 = vunpack.c.h.b16 %v382
      %v2613 = vunpack.c.l.b16 %v383
      %v2614 = vunpack.c.l.b16 %v384
      %v2615 = vunpack.c.h.b16 %v384
      %v2616 = vunpack.c.l.b16 %v385
      %v2617 = vunpack.c.h.b16 %v385
      %v2618 = vunpack.c.l.b16 %v386
      %v2619 = vunpack.c.h.b16 %v386
      %v2620 = vunpack.c.l.b16 %v387
      %v2621 = vunpack.c.h.b16 %v387
      %v2622 = vunpack.c.l.b16 %v388
      %v2623 = vunpack.c.h.b16 %v388
      %v2624 = vunpack.c.l.b16 %v389
      %v2625 = vunpack.c.h.b16 %v389
      %v2626 = vunpack.c.l.b16 %v390
      %v2627 = vunpack.c.h.b16 %v390
      %v2628 = vunpack.c.l.b16 %v391
      %v2629 = vunpack.c.h.b16 %v391
      %v2630 = vunpack.c.l.b16 %v392
      %v2631 = vunpack.c.h.b16 %v392
      %v2632 = vunpack.c.l.b16 %v393
      %v2633 = vunpack.c.h.b16 %v393
      %v2634 = vunpack.c.l.b16 %v394
      %v2635 = vunpack.c.h.b16 %v394
      %v2636 = vunpack.c.l.b16 %v395
      %v2637 = vunpack.c.h.b16 %v395
      %v2638 = vunpack.c.l.b16 %v396
      %v2639 = vunpack.c.l.b16 %v397
      %v2640 = vunpack.c.h.b16 %v397
      %v2641 = vunpack.c.l.b16 %v398
      %v2642 = vunpack.c.h.b16 %v398
      %v2643 = vunpack.c.l.b16 %v399
      %v2644 = vunpack.c.h.b16 %v399
      %v2645 = vunpack.c.l.b16 %v400
      %v2646 = vunpack.c.h.b16 %v400
      %v2647 = vunpack.c.l.b16 %v401
      %v2648 = vunpack.c.h.b16 %v401
      %v2649 = vunpack.c.l.b16 %v402
      %v2650 = vunpack.c.h.b16 %v402
      %v2651 = vunpack.c.l.b16 %v403
      %v2652 = vunpack.c.h.b16 %v403
      %v2653 = vunpack.c.l.b16 %v404
      %v2654 = vunpack.c.h.b16 %v404
      %v2655 = vunpack.c.l.b16 %v405
      %v2656 = vunpack.c.h.b16 %v405
      %v2657 = vunpack.c.l.b16 %v406
      %v2658 = vunpack.c.h.b16 %v406
      %v2659 = vunpack.c.l.b16 %v407
      %v2660 = vunpack.c.h.b16 %v407
      %v2661 = vunpack.c.l.b16 %v408
      %v2662 = vunpack.c.h.b16 %v408
      %v2663 = vunpack.c.l.b16 %v409
      %v2664 = vunpack.c.l.b16 %v410
      %v2665 = vunpack.c.h.b16 %v410
      %v2666 = vunpack.c.l.b16 %v411
      %v2667 = vunpack.c.h.b16 %v411
      %v2668 = vunpack.c.l.b16 %v412
      %v2669 = vunpack.c.h.b16 %v412
      %v2670 = vunpack.c.l.b16 %v413
      %v2671 = vunpack.c.h.b16 %v413
      %v2672 = vunpack.c.l.b16 %v414
      %v2673 = vunpack.c.h.b16 %v414
      %v2674 = vunpack.c.l.b16 %v415
      %v2675 = vunpack.c.h.b16 %v415
      %v2676 = vunpack.c.l.b16 %v416
      %v2677 = vunpack.c.h.b16 %v416
      %v2678 = vunpack.c.l.b16 %v417
      %v2679 = vunpack.c.h.b16 %v417
      %v2680 = vunpack.c.l.b16 %v418
      %v2681 = vunpack.c.h.b16 %v418
      %v2682 = vunpack.c.l.b16 %v419
      %v2683 = vunpack.c.h.b16 %v419
      %v2684 = vunpack.c.l.b16 %v420
      %v2685 = vunpack.c.h.b16 %v420
      %v2686 = vunpack.c.l.b16 %v421
      %v2687 = vunpack.c.h.b16 %v421
      %v2688 = vunpack.c.l.b16 %v422
      %v2689 = vunpack.c.l.b16 %v423
      %v2690 = vunpack.c.h.b16 %v423
      %v2691 = vunpack.c.l.b16 %v424
      %v2692 = vunpack.c.h.b16 %v424
      %v2693 = vunpack.c.l.b16 %v425
      %v2694 = vunpack.c.h.b16 %v425
      %v2695 = vunpack.c.l.b16 %v426
      %v2696 = vunpack.c.h.b16 %v426
      %v2697 = vunpack.c.l.b16 %v427
      %v2698 = vunpack.c.h.b16 %v427
      %v2699 = vunpack.c.l.b16 %v428
      %v2700 = vunpack.c.h.b16 %v428
      %v2701 = vunpack.c.l.b16 %v429
      %v2702 = vunpack.c.h.b16 %v429
      %v2703 = vunpack.c.l.b16 %v430
      %v2704 = vunpack.c.h.b16 %v430
      %v2705 = vunpack.c.l.b16 %v431
      %v2706 = vunpack.c.h.b16 %v431
      %v2707 = vunpack.c.l.b16 %v432
      %v2708 = vunpack.c.h.b16 %v432
      %v2709 = vunpack.c.l.b16 %v433
      %v2710 = vunpack.c.h.b16 %v433
      %v2711 = vunpack.c.l.b16 %v434
      %v2712 = vunpack.c.h.b16 %v434
      %v2713 = vunpack.c.l.b16 %v435
      %v2714 = vunpack.c.l.b16 %v436
      %v2715 = vunpack.c.h.b16 %v436
      %v2716 = vunpack.c.l.b16 %v437
      %v2717 = vunpack.c.h.b16 %v437
      %v2718 = vunpack.c.l.b16 %v438
      %v2719 = vunpack.c.h.b16 %v438
      %v2720 = vunpack.c.l.b16 %v439
      %v2721 = vunpack.c.h.b16 %v439
      %v2722 = vunpack.c.l.b16 %v440
      %v2723 = vunpack.c.h.b16 %v440
      %v2724 = vunpack.c.l.b16 %v441
      %v2725 = vunpack.c.h.b16 %v441
      %v2726 = vunpack.c.l.b16 %v442
      %v2727 = vunpack.c.h.b16 %v442
      %v2728 = vunpack.c.l.b16 %v443
      %v2729 = vunpack.c.h.b16 %v443
      %v2730 = vunpack.c.l.b16 %v444
      %v2731 = vunpack.c.h.b16 %v444
      %v2732 = vunpack.c.l.b16 %v445
      %v2733 = vunpack.c.h.b16 %v445
      %v2734 = vunpack.c.l.b16 %v446
      %v2735 = vunpack.c.h.b16 %v446
      %v2736 = vunpack.c.l.b16 %v447
      %v2737 = vunpack.c.h.b16 %v447
      %v2738 = vunpack.c.l.b16 %v448
      %v2739 = vunpack.c.l.b16 %v449
      %v2740 = vunpack.c.h.b16 %v449
      %v2741 = vunpack.c.l.b16 %v450
      %v2742 = vunpack.c.h.b16 %v450
      %v2743 = vunpack.c.l.b16 %v451
      %v2744 = vunpack.c.h.b16 %v451
      %v2745 = vunpack.c.l.b16 %v452
      %v2746 = vunpack.c.h.b16 %v452
      %v2747 = vunpack.c.l.b16 %v453
      %v2748 = vunpack.c.h.b16 %v453
      %v2749 = vunpack.c.l.b16 %v454
      %v2750 = vunpack.c.h.b16 %v454
      %v2751 = vunpack.c.l.b16 %v455
      %v2752 = vunpack.c.h.b16 %v455
      %v2753 = vunpack.c.l.b16 %v456
      %v2754 = vunpack.c.h.b16 %v456
      %v2755 = vunpack.c.l.b16 %v457
      %v2756 = vunpack.c.h.b16 %v457
      %v2757 = vunpack.c.l.b16 %v458
      %v2758 = vunpack.c.h.b16 %v458
      %v2759 = vunpack.c.l.b16 %v459
      %v2760 = vunpack.c.h.b16 %v459
      %v2761 = vunpack.c.l.b16 %v460
      %v2762 = vunpack.c.h.b16 %v460
      %v2763 = vunpack.c.l.b16 %v461
      %v2764 = vunpack.c.l.b16 %v462
      %v2765 = vunpack.c.h.b16 %v462
      %v2766 = vunpack.c.l.b16 %v463
      %v2767 = vunpack.c.h.b16 %v463
      %v2768 = vunpack.c.l.b16 %v464
      %v2769 = vunpack.c.h.b16 %v464
      %v2770 = vunpack.c.l.b16 %v465
      %v2771 = vunpack.c.h.b16 %v465
      %v2772 = vunpack.c.l.b16 %v466
      %v2773 = vunpack.c.h.b16 %v466
      %v2774 = vunpack.c.l.b16 %v467
      %v2775 = vunpack.c.h.b16 %v467
      %v2776 = vunpack.c.l.b16 %v468
      %v2777 = vunpack.c.h.b16 %v468
      %v2778 = vunpack.c.l.b16 %v469
      %v2779 = vunpack.c.h.b16 %v469
      %v2780 = vunpack.c.l.b16 %v470
      %v2781 = vunpack.c.h.b16 %v470
      %v2782 = vunpack.c.l.b16 %v471
      %v2783 = vunpack.c.h.b16 %v471
      %v2784 = vunpack.c.l.b16 %v472
      %v2785 = vunpack.c.h.b16 %v472
      %v2786 = vunpack.c.l.b16 %v473
      %v2787 = vunpack.c.h.b16 %v473
      %v2788 = vunpack.c.l.b16 %v474
      %v2789 = vunpack.c.l.b16 %v475
      %v2790 = vunpack.c.h.b16 %v475
      %v2791 = vunpack.c.l.b16 %v476
      %v2792 = vunpack.c.h.b16 %v476
      %v2793 = vunpack.c.l.b16 %v477
      %v2794 = vunpack.c.h.b16 %v477
      %v2795 = vunpack.c.l.b16 %v478
      %v2796 = vunpack.c.h.b16 %v478
      %v2797 = vunpack.c.l.b16 %v479
      %v2798 = vunpack.c.h.b16 %v479
      %v2799 = vunpack.c.l.b16 %v480
      %v2800 = vunpack.c.h.b16 %v480
      %v2801 = vunpack.c.l.b16 %v481
      %v2802 = vunpack.c.h.b16 %v481
      %v2803 = vunpack.c.l.b16 %v482
      %v2804 = vunpack.c.h.b16 %v482
      %v2805 = vunpack.c.l.b16 %v483
      %v2806 = vunpack.c.h.b16 %v483
      %v2807 = vunpack.c.l.b16 %v484
      %v2808 = vunpack.c.h.b16 %v484
      %v2809 = vunpack.c.l.b16 %v485
      %v2810 = vunpack.c.h.b16 %v485
      %v2811 = vunpack.c.l.b16 %v486
      %v2812 = vunpack.c.h.b16 %v486
      %v2813 = vunpack.c.l.b16 %v487
      %v2814 = vunpack.c.l.b16 %v488
      %v2815 = vunpack.c.h.b16 %v488
      %v2816 = vunpack.c.l.b16 %v489
      %v2817 = vunpack.c.h.b16 %v489
      %v2818 = vunpack.c.l.b16 %v490
      %v2819 = vunpack.c.h.b16 %v490
      %v2820 = vunpack.c.l.b16 %v491
      %v2821 = vunpack.c.h.b16 %v491
      %v2822 = vunpack.c.l.b16 %v492
      %v2823 = vunpack.c.h.b16 %v492
      %v2824 = vunpack.c.l.b16 %v493
      %v2825 = vunpack.c.h.b16 %v493
      %v2826 = vunpack.c.l.b16 %v494
      %v2827 = vunpack.c.h.b16 %v494
      %v2828 = vunpack.c.l.b16 %v495
      %v2829 = vunpack.c.h.b16 %v495
      %v2830 = vunpack.c.l.b16 %v496
      %v2831 = vunpack.c.h.b16 %v496
      %v2832 = vunpack.c.l.b16 %v497
      %v2833 = vunpack.c.h.b16 %v497
      %v2834 = vunpack.c.l.b16 %v498
      %v2835 = vunpack.c.h.b16 %v498
      %v2836 = vunpack.c.l.b16 %v499
      %v2837 = vunpack.c.h.b16 %v499
      %v2838 = vunpack.c.l.b16 %v500
      %v2839 = vunpack.c.l.b16 %v501
      %v2840 = vunpack.c.h.b16 %v501
      %v2841 = vunpack.c.l.b16 %v502
      %v2842 = vunpack.c.h.b16 %v502
      %v2843 = vunpack.c.l.b16 %v503
      %v2844 = vunpack.c.h.b16 %v503
      %v2845 = vunpack.c.l.b16 %v504
      %v2846 = vunpack.c.h.b16 %v504
      %v2847 = vunpack.c.l.b16 %v505
      %v2848 = vunpack.c.h.b16 %v505
      %v2849 = vunpack.c.l.b16 %v506
      %v2850 = vunpack.c.h.b16 %v506
      %v2851 = vunpack.c.l.b16 %v507
      %v2852 = vunpack.c.h.b16 %v507
      %v2853 = vunpack.c.l.b16 %v508
      %v2854 = vunpack.c.h.b16 %v508
      %v2855 = vunpack.c.l.b16 %v509
      %v2856 = vunpack.c.h.b16 %v509
      %v2857 = vunpack.c.l.b16 %v510
      %v2858 = vunpack.c.h.b16 %v510
      %v2859 = vunpack.c.l.b16 %v511
      %v2860 = vunpack.c.h.b16 %v511
      %v2861 = vunpack.c.l.b16 %v512
      %v2862 = vunpack.c.h.b16 %v512
      %v2863 = vunpack.c.l.b16 %v513
      %v2864 = vunpack.c.l.b16 %v514
      %v2865 = vunpack.c.h.b16 %v514
      %v2866 = vunpack.c.l.b16 %v515
      %v2867 = vunpack.c.h.b16 %v515
      %v2868 = vunpack.c.l.b16 %v516
      %v2869 = vunpack.c.h.b16 %v516
      %v2870 = vunpack.c.l.b16 %v517
      %v2871 = vunpack.c.h.b16 %v517
      %v2872 = vunpack.c.l.b16 %v518
      %v2873 = vunpack.c.h.b16 %v518
      %v2874 = vunpack.c.l.b16 %v519
      %v2875 = vunpack.c.h.b16 %v519
      %v2876 = vunpack.c.l.b16 %v520
      %v2877 = vunpack.c.h.b16 %v520
      %v2878 = vunpack.c.l.b16 %v521
      %v2879 = vunpack.c.h.b16 %v521
      %v2880 = vunpack.c.l.b16 %v522
      %v2881 = vunpack.c.h.b16 %v522
      %v2882 = vunpack.c.l.b16 %v523
      %v2883 = vunpack.c.h.b16 %v523
      %v2884 = vunpack.c.l.b16 %v524
      %v2885 = vunpack.c.h.b16 %v524
      %v2886 = vunpack.c.l.b16 %v525
      %v2887 = vunpack.c.h.b16 %v525
      %v2888 = vunpack.c.l.b16 %v526
      %v2889 = vunpack.c.l.b16 %v527
      %v2890 = vunpack.c.h.b16 %v527
      %v2891 = vunpack.c.l.b16 %v528
      %v2892 = vunpack.c.h.b16 %v528
      %v2893 = vunpack.c.l.b16 %v529
      %v2894 = vunpack.c.h.b16 %v529
      %v2895 = vunpack.c.l.b16 %v530
      %v2896 = vunpack.c.h.b16 %v530
      %v2897 = vunpack.c.l.b16 %v531
      %v2898 = vunpack.c.h.b16 %v531
      %v2899 = vunpack.c.l.b16 %v532
      %v2900 = vunpack.c.h.b16 %v532
      %v2901 = vunpack.c.l.b16 %v533
      %v2902 = vunpack.c.h.b16 %v533
      %v2903 = vunpack.c.l.b16 %v534
      %v2904 = vunpack.c.h.b16 %v534
      %v2905 = vunpack.c.l.b16 %v535
      %v2906 = vunpack.c.h.b16 %v535
      %v2907 = vunpack.c.l.b16 %v536
      %v2908 = vunpack.c.h.b16 %v536
      %v2909 = vunpack.c.l.b16 %v537
      %v2910 = vunpack.c.h.b16 %v537
      %v2911 = vunpack.c.l.b16 %v538
      %v2912 = vunpack.c.h.b16 %v538
      %v2913 = vunpack.c.l.b16 %v539
      %v2914 = vunpack.c.l.b16 %v540
      %v2915 = vunpack.c.h.b16 %v540
      %v2916 = vunpack.c.l.b16 %v541
      %v2917 = vunpack.c.h.b16 %v541
      %v2918 = vunpack.c.l.b16 %v542
      %v2919 = vunpack.c.h.b16 %v542
      %v2920 = vunpack.c.l.b16 %v543
      %v2921 = vunpack.c.h.b16 %v543
      %v2922 = vunpack.c.l.b16 %v544
      %v2923 = vunpack.c.h.b16 %v544
      %v2924 = vunpack.c.l.b16 %v545
      %v2925 = vunpack.c.h.b16 %v545
      %v2926 = vunpack.c.l.b16 %v546
      %v2927 = vunpack.c.h.b16 %v546
      %v2928 = vunpack.c.l.b16 %v547
      %v2929 = vunpack.c.h.b16 %v547
      %v2930 = vunpack.c.l.b16 %v548
      %v2931 = vunpack.c.h.b16 %v548
      %v2932 = vunpack.c.l.b16 %v549
      %v2933 = vunpack.c.h.b16 %v549
      %v2934 = vunpack.c.l.b16 %v550
      %v2935 = vunpack.c.h.b16 %v550
      %v2936 = vunpack.c.l.b16 %v551
      %v2937 = vunpack.c.h.b16 %v551
      %v2938 = vunpack.c.l.b16 %v552
      %v2939 = vunpack.c.l.b16 %v553
      %v2940 = vunpack.c.h.b16 %v553
      %v2941 = vunpack.c.l.b16 %v554
      %v2942 = vunpack.c.h.b16 %v554
      %v2943 = vunpack.c.l.b16 %v555
      %v2944 = vunpack.c.h.b16 %v555
      %v2945 = vunpack.c.l.b16 %v556
      %v2946 = vunpack.c.h.b16 %v556
      %v2947 = vunpack.c.l.b16 %v557
      %v2948 = vunpack.c.h.b16 %v557
      %v2949 = vunpack.c.l.b16 %v558
      %v2950 = vunpack.c.h.b16 %v558
      %v2951 = vunpack.c.l.b16 %v559
      %v2952 = vunpack.c.h.b16 %v559
      %v2953 = vunpack.c.l.b16 %v560
      %v2954 = vunpack.c.h.b16 %v560
      %v2955 = vunpack.c.l.b16 %v561
      %v2956 = vunpack.c.h.b16 %v561
      %v2957 = vunpack.c.l.b16 %v562
      %v2958 = vunpack.c.h.b16 %v562
      %v2959 = vunpack.c.l.b16 %v563
      %v2960 = vunpack.c.h.b16 %v563
      %v2961 = vunpack.c.l.b16 %v564
      %v2962 = vunpack.c.h.b16 %v564
      %v2963 = vunpack.c.l.b16 %v565
      %v2964 = vunpack.c.l.b16 %v566
      %v2965 = vunpack.c.h.b16 %v566
      %v2966 = vunpack.c.l.b16 %v567
      %v2967 = vunpack.c.h.b16 %v567
      %v2968 = vunpack.c.l.b16 %v568
      %v2969 = vunpack.c.h.b16 %v568
      %v2970 = vunpack.c.l.b16 %v569
      %v2971 = vunpack.c.h.b16 %v569
      %v2972 = vunpack.c.l.b16 %v570
      %v2973 = vunpack.c.h.b16 %v570
      %v2974 = vunpack.c.l.b16 %v571
      %v2975 = vunpack.c.h.b16 %v571
      %v2976 = vunpack.c.l.b16 %v572
      %v2977 = vunpack.c.h.b16 %v572
      %v2978 = vunpack.c.l.b16 %v573
      %v2979 = vunpack.c.h.b16 %v573
      %v2980 = vunpack.c.l.b16 %v574
      %v2981 = vunpack.c.h.b16 %v574
      %v2982 = vunpack.c.l.b16 %v575
      %v2983 = vunpack.c.h.b16 %v575
      %v2984 = vunpack.c.l.b16 %v576
      %v2985 = vunpack.c.h.b16 %v576
      %v2986 = vunpack.c.l.b16 %v577
      %v2987 = vunpack.c.h.b16 %v577
      %v2988 = vunpack.c.l.b16 %v578
      %v2989 = vunpack.c.l.b16 %v579
      %v2990 = vunpack.c.h.b16 %v579
      %v2991 = vunpack.c.l.b16 %v580
      %v2992 = vunpack.c.h.b16 %v580
      %v2993 = vunpack.c.l.b16 %v581
      %v2994 = vunpack.c.h.b16 %v581
      %v2995 = vunpack.c.l.b16 %v582
      %v2996 = vunpack.c.h.b16 %v582
      %v2997 = vunpack.c.l.b16 %v583
      %v2998 = vunpack.c.h.b16 %v583
      %v2999 = vunpack.c.l.b16 %v584
      %v3000 = vunpack.c.h.b16 %v584
      %v3001 = vunpack.c.l.b16 %v585
      %v3002 = vunpack.c.h.b16 %v585
      %v3003 = vunpack.c.l.b16 %v586
      %v3004 = vunpack.c.h.b16 %v586
      %v3005 = vunpack.c.l.b16 %v587
      %v3006 = vunpack.c.h.b16 %v587
      %v3007 = vunpack.c.l.b16 %v588
      %v3008 = vunpack.c.h.b16 %v588
      %v3009 = vunpack.c.l.b16 %v589
      %v3010 = vunpack.c.h.b16 %v589
      %v3011 = vunpack.c.l.b16 %v590
      %v3012 = vunpack.c.h.b16 %v590
      %v3013 = vunpack.c.l.b16 %v591
      %v3014 = vunpack.c.l.b16 %v592
      %v3015 = vunpack.c.h.b16 %v592
      %v3016 = vunpack.c.l.b16 %v593
      %v3017 = vunpack.c.h.b16 %v593
      %v3018 = vunpack.c.l.b16 %v594
      %v3019 = vunpack.c.h.b16 %v594
      %v3020 = vunpack.c.l.b16 %v595
      %v3021 = vunpack.c.h.b16 %v595
      %v3022 = vunpack.c.l.b16 %v596
      %v3023 = vunpack.c.h.b16 %v596
      %v3024 = vunpack.c.l.b16 %v597
      %v3025 = vunpack.c.h.b16 %v597
      %v3026 = vunpack.c.l.b16 %v598
      %v3027 = vunpack.c.h.b16 %v598
      %v3028 = vunpack.c.l.b16 %v599
      %v3029 = vunpack.c.h.b16 %v599
      %v3030 = vunpack.c.l.b16 %v600
      %v3031 = vunpack.c.h.b16 %v600
      %v3032 = vunpack.c.l.b16 %v601
      %v3033 = vunpack.c.h.b16 %v601
      %v3034 = vunpack.c.l.b16 %v602
      %v3035 = vunpack.c.h.b16 %v602
      %v3036 = vunpack.c.l.b16 %v603
      %v3037 = vunpack.c.h.b16 %v603
      %v3038 = vunpack.c.l.b16 %v604
      %v3039 = vunpack.c.l.b16 %v605
      %v3040 = vunpack.c.h.b16 %v605
      %v3041 = vunpack.c.l.b16 %v606
      %v3042 = vunpack.c.h.b16 %v606
      %v3043 = vunpack.c.l.b16 %v607
      %v3044 = vunpack.c.h.b16 %v607
      %v3045 = vunpack.c.l.b16 %v608
      %v3046 = vunpack.c.h.b16 %v608
      %v3047 = vunpack.c.l.b16 %v609
      %v3048 = vunpack.c.h.b16 %v609
      %v3049 = vunpack.c.l.b16 %v610
      %v3050 = vunpack.c.h.b16 %v610
      %v3051 = vunpack.c.l.b16 %v611
      %v3052 = vunpack.c.h.b16 %v611
      %v3053 = vunpack.c.l.b16 %v612
      %v3054 = vunpack.c.h.b16 %v612
      %v3055 = vunpack.c.l.b16 %v613
      %v3056 = vunpack.c.h.b16 %v613
      %v3057 = vunpack.c.l.b16 %v614
      %v3058 = vunpack.c.h.b16 %v614
      %v3059 = vunpack.c.l.b16 %v615
      %v3060 = vunpack.c.h.b16 %v615
      %v3061 = vunpack.c.l.b16 %v616
      %v3062 = vunpack.c.h.b16 %v616
      %v3063 = vunpack.c.l.b16 %v617
      %v3064 = vunpack.c.l.b16 %v618
      %v3065 = vunpack.c.h.b16 %v618
      %v3066 = vunpack.c.l.b16 %v619
      %v3067 = vunpack.c.h.b16 %v619
      %v3068 = vunpack.c.l.b16 %v620
      %v3069 = vunpack.c.h.b16 %v620
      %v3070 = vunpack.c.l.b16 %v621
      %v3071 = vunpack.c.h.b16 %v621
      %v3072 = vunpack.c.l.b16 %v622
      %v3073 = vunpack.c.h.b16 %v622
      %v3074 = vunpack.c.l.b16 %v623
      %v3075 = vunpack.c.h.b16 %v623
      %v3076 = vunpack.c.l.b16 %v624
      %v3077 = vunpack.c.h.b16 %v624
      %v3078 = vunpack.c.l.b16 %v625
      %v3079 = vunpack.c.h.b16 %v625
      %v3080 = vunpack.c.l.b16 %v626
      %v3081 = vunpack.c.h.b16 %v626
      %v3082 = vunpack.c.l.b16 %v627
      %v3083 = vunpack.c.h.b16 %v627
      %v3084 = vunpack.c.l.b16 %v628
      %v3085 = vunpack.c.h.b16 %v628
      %v3086 = vunpack.c.l.b16 %v629
      %v3087 = vunpack.c.h.b16 %v629
      %v3088 = vunpack.c.l.b16 %v630
      %v3089 = vunpack.c.l.b16 %v631
      %v3090 = vunpack.c.h.b16 %v631
      %v3091 = vunpack.c.l.b16 %v632
      %v3092 = vunpack.c.h.b16 %v632
      %v3093 = vunpack.c.l.b16 %v633
      %v3094 = vunpack.c.h.b16 %v633
      %v3095 = vunpack.c.l.b16 %v634
      %v3096 = vunpack.c.h.b16 %v634
      %v3097 = vunpack.c.l.b16 %v635
      %v3098 = vunpack.c.h.b16 %v635
      %v3099 = vunpack.c.l.b16 %v636
      %v3100 = vunpack.c.h.b16 %v636
      %v3101 = vunpack.c.l.b16 %v637
      %v3102 = vunpack.c.h.b16 %v637
      %v3103 = vunpack.c.l.b16 %v638
      %v3104 = vunpack.c.h.b16 %v638
      %v3105 = vunpack.c.l.b16 %v639
      %v3106 = vunpack.c.h.b16 %v639
      %v3107 = vunpack.c.l.b16 %v640
      %v3108 = vunpack.c.h.b16 %v640
      %v3109 = vunpack.c.l.b16 %v641
      %v3110 = vunpack.c.h.b16 %v641
      %v3111 = vunpack.c.l.b16 %v642
      %v3112 = vunpack.c.h.b16 %v642
      %v3113 = vunpack.c.l.b16 %v643
      %v3114 = vunpack.c.l.b16 %v644
      %v3115 = vunpack.c.h.b16 %v644
      %v3116 = vunpack.c.l.b16 %v645
      %v3117 = vunpack.c.h.b16 %v645
      %v3118 = vunpack.c.l.b16 %v646
      %v3119 = vunpack.c.h.b16 %v646
      %v3120 = vunpack.c.l.b16 %v647
      %v3121 = vunpack.c.h.b16 %v647
      %v3122 = vunpack.c.l.b16 %v648
      %v3123 = vunpack.c.h.b16 %v648
      %v3124 = vunpack.c.l.b16 %v649
      %v3125 = vunpack.c.h.b16 %v649
      %v3126 = vunpack.c.l.b16 %v650
      %v3127 = vunpack.c.h.b16 %v650
      %v3128 = vunpack.c.l.b16 %v651
      %v3129 = vunpack.c.h.b16 %v651
      %v3130 = vunpack.c.l.b16 %v652
      %v3131 = vunpack.c.h.b16 %v652
      %v3132 = vunpack.c.l.b16 %v653
      %v3133 = vunpack.c.h.b16 %v653
      %v3134 = vunpack.c.l.b16 %v654
      %v3135 = vunpack.c.h.b16 %v654
      %v3136 = vunpack.c.l.b16 %v655
      %v3137 = vunpack.c.h.b16 %v655
      %v3138 = vunpack.c.l.b16 %v656
      %v3139 = vunpack.c.l.b16 %v657
      %v3140 = vunpack.c.h.b16 %v657
      %v3141 = vunpack.c.l.b16 %v658
      %v3142 = vunpack.c.h.b16 %v658
      %v3143 = vunpack.c.l.b16 %v659
      %v3144 = vunpack.c.h.b16 %v659
      %v3145 = vunpack.c.l.b16 %v660
      %v3146 = vunpack.c.h.b16 %v660
      %v3147 = vunpack.c.l.b16 %v661
      %v3148 = vunpack.c.h.b16 %v661
      %v3149 = vunpack.c.l.b16 %v662
      %v3150 = vunpack.c.h.b16 %v662
      %v3151 = vunpack.c.l.b16 %v663
      %v3152 = vunpack.c.h.b16 %v663
      %v3153 = vunpack.c.l.b16 %v664
      %v3154 = vunpack.c.h.b16 %v664
      %v3155 = vunpack.c.l.b16 %v665
      %v3156 = vunpack.c.h.b16 %v665
      %v3157 = vunpack.c.l.b16 %v666
      %v3158 = vunpack.c.h.b16 %v666
      %v3159 = vunpack.c.l.b16 %v667
      %v3160 = vunpack.c.h.b16 %v667
      %v3161 = vunpack.c.l.b16 %v668
      %v3162 = vunpack.c.h.b16 %v668
      %v3163 = vunpack.c.l.b16 %v669
      %v3164 = vunpack.c.l.b16 %v670
      %v3165 = vunpack.c.h.b16 %v670
      %v3166 = vunpack.c.l.b16 %v671
      %v3167 = vunpack.c.h.b16 %v671
      %v3168 = vunpack.c.l.b16 %v672
      %v3169 = vunpack.c.h.b16 %v672
      %v3170 = vunpack.c.l.b16 %v673
      %v3171 = vunpack.c.h.b16 %v673
      %v3172 = vunpack.c.l.b16 %v674
      %v3173 = vunpack.c.h.b16 %v674
      %v3174 = vunpack.c.l.b16 %v675
      %v3175 = vunpack.c.h.b16 %v675
      %v3176 = vunpack.c.l.b16 %v676
      %v3177 = vunpack.c.h.b16 %v676
      %v3178 = vunpack.c.l.b16 %v677
      %v3179 = vunpack.c.h.b16 %v677
      %v3180 = vunpack.c.l.b16 %v678
      %v3181 = vunpack.c.h.b16 %v678
      %v3182 = vunpack.c.l.b16 %v679
      %v3183 = vunpack.c.h.b16 %v679
      %v3184 = vunpack.c.l.b16 %v680
      %v3185 = vunpack.c.h.b16 %v680
      %v3186 = vunpack.c.l.b16 %v681
      %v3187 = vunpack.c.h.b16 %v681
      %v3188 = vunpack.c.l.b16 %v682
      %v3189 = vunpack.c.l.b16 %v683
      %v3190 = vunpack.c.h.b16 %v683
      %v3191 = vunpack.c.l.b16 %v684
      %v3192 = vunpack.c.h.b16 %v684
      %v3193 = vunpack.c.l.b16 %v685
      %v3194 = vunpack.c.h.b16 %v685
      %v3195 = vunpack.c.l.b16 %v686
      %v3196 = vunpack.c.h.b16 %v686
      %v3197 = vunpack.c.l.b16 %v687
      %v3198 = vunpack.c.h.b16 %v687
      %v3199 = vunpack.c.l.b16 %v688
      %v3200 = vunpack.c.h.b16 %v688
      %v3201 = vunpack.c.l.b16 %v689
      %v3202 = vunpack.c.h.b16 %v689
      %v3203 = vunpack.c.l.b16 %v690
      %v3204 = vunpack.c.h.b16 %v690
      %v3205 = vunpack.c.l.b16 %v691
      %v3206 = vunpack.c.h.b16 %v691
      %v3207 = vunpack.c.l.b16 %v692
      %v3208 = vunpack.c.h.b16 %v692
      %v3209 = vunpack.c.l.b16 %v693
      %v3210 = vunpack.c.h.b16 %v693
      %v3211 = vunpack.c.l.b16 %v694
      %v3212 = vunpack.c.h.b16 %v694
      %v3213 = vunpack.c.l.b16 %v695
      %v3214 = vunpack.c.l.b16 %v696
      %v3215 = vunpack.c.h.b16 %v696
      %v3216 = vunpack.c.l.b16 %v697
      %v3217 = vunpack.c.h.b16 %v697
      %v3218 = vunpack.c.l.b16 %v698
      %v3219 = vunpack.c.h.b16 %v698
      %v3220 = vunpack.c.l.b16 %v699
      %v3221 = vunpack.c.h.b16 %v699
      %v3222 = vunpack.c.l.b16 %v700
      %v3223 = vunpack.c.h.b16 %v700
      %v3224 = vunpack.c.l.b16 %v701
      %v3225 = vunpack.c.h.b16 %v701
      %v3226 = vunpack.c.l.b16 %v702
      %v3227 = vunpack.c.h.b16 %v702
      %v3228 = vunpack.c.l.b16 %v703
      %v3229 = vunpack.c.h.b16 %v703
      %v3230 = vunpack.c.l.b16 %v704
      %v3231 = vunpack.c.h.b16 %v704
      %v3232 = vunpack.c.l.b16 %v705
      %v3233 = vunpack.c.h.b16 %v705
      %v3234 = vunpack.c.l.b16 %v706
      %v3235 = vunpack.c.h.b16 %v706
      %v3236 = vunpack.c.l.b16 %v707
      %v3237 = vunpack.c.h.b16 %v707
      %v3238 = vunpack.c.l.b16 %v708
      %v3239 = vunpack.c.l.b16 %v709
      %v3240 = vunpack.c.h.b16 %v709
      %v3241 = vunpack.c.l.b16 %v710
      %v3242 = vunpack.c.h.b16 %v710
      %v3243 = vunpack.c.l.b16 %v711
      %v3244 = vunpack.c.h.b16 %v711
      %v3245 = vunpack.c.l.b16 %v712
      %v3246 = vunpack.c.h.b16 %v712
      %v3247 = vunpack.c.l.b16 %v713
      %v3248 = vunpack.c.h.b16 %v713
      %v3249 = vunpack.c.l.b16 %v714
      %v3250 = vunpack.c.h.b16 %v714
      %v3251 = vunpack.c.l.b16 %v715
      %v3252 = vunpack.c.h.b16 %v715
      %v3253 = vunpack.c.l.b16 %v716
      %v3254 = vunpack.c.h.b16 %v716
      %v3255 = vunpack.c.l.b16 %v717
      %v3256 = vunpack.c.h.b16 %v717
      %v3257 = vunpack.c.l.b16 %v718
      %v3258 = vunpack.c.h.b16 %v718
      %v3259 = vunpack.c.l.b16 %v719
      %v3260 = vunpack.c.h.b16 %v719
      %v3261 = vunpack.c.l.b16 %v720
      %v3262 = vunpack.c.h.b16 %v720
      %v3263 = vunpack.c.l.b16 %v721
      %v3264 = vunpack.c.l.b16 %v722
      %v3265 = vunpack.c.h.b16 %v722
      %v3266 = vunpack.c.l.b16 %v723
      %v3267 = vunpack.c.h.b16 %v723
      %v3268 = vunpack.c.l.b16 %v724
      %v3269 = vunpack.c.h.b16 %v724
      %v3270 = vunpack.c.l.b16 %v725
      %v3271 = vunpack.c.h.b16 %v725
      %v3272 = vunpack.c.l.b16 %v726
      %v3273 = vunpack.c.h.b16 %v726
      %v3274 = vunpack.c.l.b16 %v727
      %v3275 = vunpack.c.h.b16 %v727
      %v3276 = vunpack.c.l.b16 %v728
      %v3277 = vunpack.c.h.b16 %v728
      %v3278 = vunpack.c.l.b16 %v729
      %v3279 = vunpack.c.h.b16 %v729
      %v3280 = vunpack.c.l.b16 %v730
      %v3281 = vunpack.c.h.b16 %v730
      %v3282 = vunpack.c.l.b16 %v731
      %v3283 = vunpack.c.h.b16 %v731
      %v3284 = vunpack.c.l.b16 %v732
      %v3285 = vunpack.c.h.b16 %v732
      %v3286 = vunpack.c.l.b16 %v733
      %v3287 = vunpack.c.h.b16 %v733
      %v3288 = vunpack.c.l.b16 %v734
      %v3289 = vunpack.c.l.b16 %v735
      %v3290 = vunpack.c.h.b16 %v735
      %v3291 = vunpack.c.l.b16 %v736
      %v3292 = vunpack.c.h.b16 %v736
      %v3293 = vunpack.c.l.b16 %v737
      %v3294 = vunpack.c.h.b16 %v737
      %v3295 = vunpack.c.l.b16 %v738
      %v3296 = vunpack.c.h.b16 %v738
      %v3297 = vunpack.c.l.b16 %v739
      %v3298 = vunpack.c.h.b16 %v739
      %v3299 = vunpack.c.l.b16 %v740
      %v3300 = vunpack.c.h.b16 %v740
      %v3301 = vunpack.c.l.b16 %v741
      %v3302 = vunpack.c.h.b16 %v741
      %v3303 = vunpack.c.l.b16 %v742
      %v3304 = vunpack.c.h.b16 %v742
      %v3305 = vunpack.c.l.b16 %v743
      %v3306 = vunpack.c.h.b16 %v743
      %v3307 = vunpack.c.l.b16 %v744
      %v3308 = vunpack.c.h.b16 %v744
      %v3309 = vunpack.c.l.b16 %v745
      %v3310 = vunpack.c.h.b16 %v745
      %v3311 = vunpack.c.l.b16 %v746
      %v3312 = vunpack.c.h.b16 %v746
      %v3313 = vunpack.c.l.b16 %v747
      %v3314 = vunpack.c.l.b16 %v748
      %v3315 = vunpack.c.h.b16 %v748
      %v3316 = vunpack.c.l.b16 %v749
      %v3317 = vunpack.c.h.b16 %v749
      %v3318 = vunpack.c.l.b16 %v750
      %v3319 = vunpack.c.h.b16 %v750
      %v3320 = vunpack.c.l.b16 %v751
      %v3321 = vunpack.c.h.b16 %v751
      %v3322 = vunpack.c.l.b16 %v752
      %v3323 = vunpack.c.h.b16 %v752
      %v3324 = vunpack.c.l.b16 %v753
      %v3325 = vunpack.c.h.b16 %v753
      %v3326 = vunpack.c.l.b16 %v754
      %v3327 = vunpack.c.h.b16 %v754
      %v3328 = vunpack.c.l.b16 %v755
      %v3329 = vunpack.c.h.b16 %v755
      %v3330 = vunpack.c.l.b16 %v756
      %v3331 = vunpack.c.h.b16 %v756
      %v3332 = vunpack.c.l.b16 %v757
      %v3333 = vunpack.c.h.b16 %v757
      %v3334 = vunpack.c.l.b16 %v758
      %v3335 = vunpack.c.h.b16 %v758
      %v3336 = vunpack.c.l.b16 %v759
      %v3337 = vunpack.c.h.b16 %v759
      %v3338 = vunpack.c.l.b16 %v760
      %v3339 = vunpack.c.l.b16 %v761
      %v3340 = vunpack.c.h.b16 %v761
      %v3341 = vunpack.c.l.b16 %v762
      %v3342 = vunpack.c.h.b16 %v762
      %v3343 = vunpack.c.l.b16 %v763
      %v3344 = vunpack.c.h.b16 %v763
      %v3345 = vunpack.c.l.b16 %v764
      %v3346 = vunpack.c.h.b16 %v764
      %v3347 = vunpack.c.l.b16 %v765
      %v3348 = vunpack.c.h.b16 %v765
      %v3349 = vunpack.c.l.b16 %v766
      %v3350 = vunpack.c.h.b16 %v766
      %v3351 = vunpack.c.l.b16 %v767
      %v3352 = vunpack.c.h.b16 %v767
      %v3353 = vunpack.c.l.b16 %v768
      %v3354 = vunpack.c.h.b16 %v768
      %v3355 = vunpack.c.l.b16 %v769
      %v3356 = vunpack.c.h.b16 %v769
      %v3357 = vunpack.c.l.b16 %v770
      %v3358 = vunpack.c.h.b16 %v770
      %v3359 = vunpack.c.l.b16 %v771
      %v3360 = vunpack.c.h.b16 %v771
      %v3361 = vunpack.c.l.b16 %v772
      %v3362 = vunpack.c.h.b16 %v772
      %v3363 = vunpack.c.l.b16 %v773
      %v3364 = vunpack.c.l.b16 %v774
      %v3365 = vunpack.c.h.b16 %v774
      %v3366 = vunpack.c.l.b16 %v775
      %v3367 = vunpack.c.h.b16 %v775
      %v3368 = vunpack.c.l.b16 %v776
      %v3369 = vunpack.c.h.b16 %v776
      %v3370 = vunpack.c.l.b16 %v777
      %v3371 = vunpack.c.h.b16 %v777
      %v3372 = vunpack.c.l.b16 %v778
      %v3373 = vunpack.c.h.b16 %v778
      %v3374 = vunpack.c.l.b16 %v779
      %v3375 = vunpack.c.h.b16 %v779
      %v3376 = vunpack.c.l.b16 %v780
      %v3377 = vunpack.c.h.b16 %v780
      %v3378 = vunpack.c.l.b16 %v781
      %v3379 = vunpack.c.h.b16 %v781
      %v3380 = vunpack.c.l.b16 %v782
      %v3381 = vunpack.c.h.b16 %v782
      %v3382 = vunpack.c.l.b16 %v783
      %v3383 = vunpack.c.h.b16 %v783
      %v3384 = vunpack.c.l.b16 %v784
      %v3385 = vunpack.c.h.b16 %v784
      %v3386 = vunpack.c.l.b16 %v785
      %v3387 = vunpack.c.h.b16 %v785
      %v3388 = vunpack.c.l.b16 %v786
      %v3389 = vunpack.c.l.b16 %v787
      %v3390 = vunpack.c.h.b16 %v787
      %v3391 = vunpack.c.l.b16 %v788
      %v3392 = vunpack.c.h.b16 %v788
      %v3393 = vunpack.c.l.b16 %v789
      %v3394 = vunpack.c.h.b16 %v789
      %v3395 = vunpack.c.l.b16 %v790
      %v3396 = vunpack.c.h.b16 %v790
      %v3397 = vunpack.c.l.b16 %v791
      %v3398 = vunpack.c.h.b16 %v791
      %v3399 = vunpack.c.l.b16 %v792
      %v3400 = vunpack.c.h.b16 %v792
      %v3401 = vunpack.c.l.b16 %v793
      %v3402 = vunpack.c.h.b16 %v793
      %v3403 = vunpack.c.l.b16 %v794
      %v3404 = vunpack.c.h.b16 %v794
      %v3405 = vunpack.c.l.b16 %v795
      %v3406 = vunpack.c.h.b16 %v795
      %v3407 = vunpack.c.l.b16 %v796
      %v3408 = vunpack.c.h.b16 %v796
      %v3409 = vunpack.c.l.b16 %v797
      %v3410 = vunpack.c.h.b16 %v797
      %v3411 = vunpack.c.l.b16 %v798
      %v3412 = vunpack.c.h.b16 %v798
      %v3413 = vunpack.c.l.b16 %v799
      %v3414 = vunpack.c.l.b16 %v800
      %v3415 = vunpack.c.h.b16 %v800
      %v3416 = vunpack.c.l.b16 %v801
      %v3417 = vunpack.c.h.b16 %v801
      %v3418 = vunpack.c.l.b16 %v802
      %v3419 = vunpack.c.h.b16 %v802
      %v3420 = vunpack.c.l.b16 %v803
      %v3421 = vunpack.c.h.b16 %v803
      %v3422 = vunpack.c.l.b16 %v804
      %v3423 = vunpack.c.h.b16 %v804
      %v3424 = vunpack.c.l.b16 %v805
      %v3425 = vunpack.c.h.b16 %v805
      %v3426 = vunpack.c.l.b16 %v806
      %v3427 = vunpack.c.h.b16 %v806
      %v3428 = vunpack.c.l.b16 %v807
      %v3429 = vunpack.c.h.b16 %v807
      %v3430 = vunpack.c.l.b16 %v808
      %v3431 = vunpack.c.h.b16 %v808
      %v3432 = vunpack.c.l.b16 %v809
      %v3433 = vunpack.c.h.b16 %v809
      %v3434 = vunpack.c.l.b16 %v810
      %v3435 = vunpack.c.h.b16 %v810
      %v3436 = vunpack.c.l.b16 %v811
      %v3437 = vunpack.c.h.b16 %v811
      %v3438 = vunpack.c.l.b16 %v812
      %v3439 = vunpack.c.l.b16 %v813
      %v3440 = vunpack.c.h.b16 %v813
      %v3441 = vunpack.c.l.b16 %v814
      %v3442 = vunpack.c.h.b16 %v814
      %v3443 = vunpack.c.l.b16 %v815
      %v3444 = vunpack.c.h.b16 %v815
      %v3445 = vunpack.c.l.b16 %v816
      %v3446 = vunpack.c.h.b16 %v816
      %v3447 = vunpack.c.l.b16 %v817
      %v3448 = vunpack.c.h.b16 %v817
      %v3449 = vunpack.c.l.b16 %v818
      %v3450 = vunpack.c.h.b16 %v818
      %v3451 = vunpack.c.l.b16 %v819
      %v3452 = vunpack.c.h.b16 %v819
      %v3453 = vunpack.c.l.b16 %v820
      %v3454 = vunpack.c.h.b16 %v820
      %v3455 = vunpack.c.l.b16 %v821
      %v3456 = vunpack.c.h.b16 %v821
      %v3457 = vunpack.c.l.b16 %v822
      %v3458 = vunpack.c.h.b16 %v822
      %v3459 = vunpack.c.l.b16 %v823
      %v3460 = vunpack.c.h.b16 %v823
      %v3461 = vunpack.c.l.b16 %v824
      %v3462 = vunpack.c.h.b16 %v824
      %v3463 = vunpack.c.l.b16 %v825
      %v3464 = vunpack.c.l.b16 %v826
      %v3465 = vunpack.c.h.b16 %v826
      %v3466 = vunpack.c.l.b16 %v827
      %v3467 = vunpack.c.h.b16 %v827
      %v3468 = vunpack.c.l.b16 %v828
      %v3469 = vunpack.c.h.b16 %v828
      %v3470 = vunpack.c.l.b16 %v829
      %v3471 = vunpack.c.h.b16 %v829
      %v3472 = vunpack.c.l.b16 %v830
      %v3473 = vunpack.c.h.b16 %v830
      %v3474 = vunpack.c.l.b16 %v831
      %v3475 = vunpack.c.h.b16 %v831
      %v3476 = vunpack.c.l.b16 %v832
      %v3477 = vunpack.c.h.b16 %v832
      %v3478 = vunpack.c.l.b16 %v833
      %v3479 = vunpack.c.h.b16 %v833
      %v3480 = vunpack.c.l.b16 %v834
      %v3481 = vunpack.c.h.b16 %v834
      %v3482 = vunpack.c.l.b16 %v835
      %v3483 = vunpack.c.h.b16 %v835
      %v3484 = vunpack.c.l.b16 %v836
      %v3485 = vunpack.c.h.b16 %v836
      %v3486 = vunpack.c.l.b16 %v837
      %v3487 = vunpack.c.h.b16 %v837
      %v3488 = vunpack.c.l.b16 %v838
      %v3489 = vunpack.c.l.b16 %v839
      %v3490 = vunpack.c.h.b16 %v839
      %v3491 = vunpack.c.l.b16 %v840
      %v3492 = vunpack.c.h.b16 %v840
      %v3493 = vunpack.c.l.b16 %v841
      %v3494 = vunpack.c.h.b16 %v841
      %v3495 = vunpack.c.l.b16 %v842
      %v3496 = vunpack.c.h.b16 %v842
      %v3497 = vunpack.c.l.b16 %v843
      %v3498 = vunpack.c.h.b16 %v843
      %v3499 = vunpack.c.l.b16 %v844
      %v3500 = vunpack.c.h.b16 %v844
      %v3501 = vunpack.c.l.b16 %v845
      %v3502 = vunpack.c.h.b16 %v845
      %v3503 = vunpack.c.l.b16 %v846
      %v3504 = vunpack.c.h.b16 %v846
      %v3505 = vunpack.c.l.b16 %v847
      %v3506 = vunpack.c.h.b16 %v847
      %v3507 = vunpack.c.l.b16 %v848
      %v3508 = vunpack.c.h.b16 %v848
      %v3509 = vunpack.c.l.b16 %v849
      %v3510 = vunpack.c.h.b16 %v849
      %v3511 = vunpack.c.l.b16 %v850
      %v3512 = vunpack.c.h.b16 %v850
      %v3513 = vunpack.c.l.b16 %v851
      %v3514 = vunpack.c.l.b16 %v852
      %v3515 = vunpack.c.h.b16 %v852
      %v3516 = vunpack.c.l.b16 %v853
      %v3517 = vunpack.c.h.b16 %v853
      %v3518 = vunpack.c.l.b16 %v854
      %v3519 = vunpack.c.h.b16 %v854
      %v3520 = vunpack.c.l.b16 %v855
      %v3521 = vunpack.c.h.b16 %v855
      %v3522 = vunpack.c.l.b16 %v856
      %v3523 = vunpack.c.h.b16 %v856
      %v3524 = vunpack.c.l.b16 %v857
      %v3525 = vunpack.c.h.b16 %v857
      %v3526 = vunpack.c.l.b16 %v858
      %v3527 = vunpack.c.h.b16 %v858
      %v3528 = vunpack.c.l.b16 %v859
      %v3529 = vunpack.c.h.b16 %v859
      %v3530 = vunpack.c.l.b16 %v860
      %v3531 = vunpack.c.h.b16 %v860
      %v3532 = vunpack.c.l.b16 %v861
      %v3533 = vunpack.c.h.b16 %v861
      %v3534 = vunpack.c.l.b16 %v862
      %v3535 = vunpack.c.h.b16 %v862
      %v3536 = vunpack.c.l.b16 %v863
      %v3537 = vunpack.c.h.b16 %v863
      %v3538 = vunpack.c.l.b16 %v864
      %v3539 = vunpack.c.l.b16 %v865
      %v3540 = vunpack.c.h.b16 %v865
      %v3541 = vunpack.c.l.b16 %v866
      %v3542 = vunpack.c.h.b16 %v866
      %v3543 = vunpack.c.l.b16 %v867
      %v3544 = vunpack.c.h.b16 %v867
      %v3545 = vunpack.c.l.b16 %v868
      %v3546 = vunpack.c.h.b16 %v868
      %v3547 = vunpack.c.l.b16 %v869
      %v3548 = vunpack.c.h.b16 %v869
      %v3549 = vunpack.c.l.b16 %v870
      %v3550 = vunpack.c.h.b16 %v870
      %v3551 = vunpack.c.l.b16 %v871
      %v3552 = vunpack.c.h.b16 %v871
      %v3553 = vunpack.c.l.b16 %v872
      %v3554 = vunpack.c.h.b16 %v872
      %v3555 = vunpack.c.l.b16 %v873
      %v3556 = vunpack.c.h.b16 %v873
      %v3557 = vunpack.c.l.b16 %v874
      %v3558 = vunpack.c.h.b16 %v874
      %v3559 = vunpack.c.l.b16 %v875
      %v3560 = vunpack.c.h.b16 %v875
      %v3561 = vunpack.c.l.b16 %v876
      %v3562 = vunpack.c.h.b16 %v876
      %v3563 = vunpack.c.l.b16 %v877
      %v3564 = vunpack.c.l.b16 %v878
      %v3565 = vunpack.c.h.b16 %v878
      %v3566 = vunpack.c.l.b16 %v879
      %v3567 = vunpack.c.h.b16 %v879
      %v3568 = vunpack.c.l.b16 %v880
      %v3569 = vunpack.c.h.b16 %v880
      %v3570 = vunpack.c.l.b16 %v881
      %v3571 = vunpack.c.h.b16 %v881
      %v3572 = vunpack.c.l.b16 %v882
      %v3573 = vunpack.c.h.b16 %v882
      %v3574 = vunpack.c.l.b16 %v883
      %v3575 = vunpack.c.h.b16 %v883
      %v3576 = vunpack.c.l.b16 %v884
      %v3577 = vunpack.c.h.b16 %v884
      %v3578 = vunpack.c.l.b16 %v885
      %v3579 = vunpack.c.h.b16 %v885
      %v3580 = vunpack.c.l.b16 %v886
      %v3581 = vunpack.c.h.b16 %v886
      %v3582 = vunpack.c.l.b16 %v887
      %v3583 = vunpack.c.h.b16 %v887
      %v3584 = vunpack.c.l.b16 %v888
      %v3585 = vunpack.c.h.b16 %v888
      %v3586 = vunpack.c.l.b16 %v889
      %v3587 = vunpack.c.h.b16 %v889
      %v3588 = vunpack.c.l.b16 %v890
      %v3589 = vunpack.c.l.b16 %v891
      %v3590 = vunpack.c.h.b16 %v891
      %v3591 = vunpack.c.l.b16 %v892
      %v3592 = vunpack.c.h.b16 %v892
      %v3593 = vunpack.c.l.b16 %v893
      %v3594 = vunpack.c.h.b16 %v893
      %v3595 = vunpack.c.l.b16 %v894
      %v3596 = vunpack.c.h.b16 %v894
      %v3597 = vunpack.c.l.b16 %v895
      %v3598 = vunpack.c.h.b16 %v895
      %v3599 = vunpack.c.l.b16 %v896
      %v3600 = vunpack.c.h.b16 %v896
      %v3601 = vunpack.c.l.b16 %v897
      %v3602 = vunpack.c.h.b16 %v897
      %v3603 = vunpack.c.l.b16 %v898
      %v3604 = vunpack.c.h.b16 %v898
      %v3605 = vunpack.c.l.b16 %v899
      %v3606 = vunpack.c.h.b16 %v899
      %v3607 = vunpack.c.l.b16 %v900
      %v3608 = vunpack.c.h.b16 %v900
      %v3609 = vunpack.c.l.b16 %v901
      %v3610 = vunpack.c.h.b16 %v901
      %v3611 = vunpack.c.l.b16 %v902
      %v3612 = vunpack.c.h.b16 %v902
      %v3613 = vunpack.c.l.b16 %v903
      %v3614 = vunpack.c.l.b16 %v904
      %v3615 = vunpack.c.h.b16 %v904
      %v3616 = vunpack.c.l.b16 %v905
      %v3617 = vunpack.c.h.b16 %v905
      %v3618 = vunpack.c.l.b16 %v906
      %v3619 = vunpack.c.h.b16 %v906
      %v3620 = vunpack.c.l.b16 %v907
      %v3621 = vunpack.c.h.b16 %v907
      %v3622 = vunpack.c.l.b16 %v908
      %v3623 = vunpack.c.h.b16 %v908
      %v3624 = vunpack.c.l.b16 %v909
      %v3625 = vunpack.c.h.b16 %v909
      %v3626 = vunpack.c.l.b16 %v910
      %v3627 = vunpack.c.h.b16 %v910
      %v3628 = vunpack.c.l.b16 %v911
      %v3629 = vunpack.c.h.b16 %v911
      %v3630 = vunpack.c.l.b16 %v912
      %v3631 = vunpack.c.h.b16 %v912
      %v3632 = vunpack.c.l.b16 %v913
      %v3633 = vunpack.c.h.b16 %v913
      %v3634 = vunpack.c.l.b16 %v914
      %v3635 = vunpack.c.h.b16 %v914
      %v3636 = vunpack.c.l.b16 %v915
      %v3637 = vunpack.c.h.b16 %v915
      %v3638 = vunpack.c.l.b16 %v916
      %v3639 = vunpack.c.l.b16 %v917
      %v3640 = vunpack.c.h.b16 %v917
      %v3641 = vunpack.c.l.b16 %v918
      %v3642 = vunpack.c.h.b16 %v918
      %v3643 = vunpack.c.l.b16 %v919
      %v3644 = vunpack.c.h.b16 %v919
      %v3645 = vunpack.c.l.b16 %v920
      %v3646 = vunpack.c.h.b16 %v920
      %v3647 = vunpack.c.l.b16 %v921
      %v3648 = vunpack.c.h.b16 %v921
      %v3649 = vunpack.c.l.b16 %v922
      %v3650 = vunpack.c.h.b16 %v922
      %v3651 = vunpack.c.l.b16 %v923
      %v3652 = vunpack.c.h.b16 %v923
      %v3653 = vunpack.c.l.b16 %v924
      %v3654 = vunpack.c.h.b16 %v924
      %v3655 = vunpack.c.l.b16 %v925
      %v3656 = vunpack.c.h.b16 %v925
      %v3657 = vunpack.c.l.b16 %v926
      %v3658 = vunpack.c.h.b16 %v926
      %v3659 = vunpack.c.l.b16 %v927
      %v3660 = vunpack.c.h.b16 %v927
      %v3661 = vunpack.c.l.b16 %v928
      %v3662 = vunpack.c.h.b16 %v928
      %v3663 = vunpack.c.l.b16 %v929
      %v3664 = vunpack.c.l.b16 %v930
      %v3665 = vunpack.c.h.b16 %v930
      %v3666 = vunpack.c.l.b16 %v931
      %v3667 = vunpack.c.h.b16 %v931
      %v3668 = vunpack.c.l.b16 %v932
      %v3669 = vunpack.c.h.b16 %v932
      %v3670 = vunpack.c.l.b16 %v933
      %v3671 = vunpack.c.h.b16 %v933
      %v3672 = vunpack.c.l.b16 %v934
      %v3673 = vunpack.c.h.b16 %v934
      %v3674 = vunpack.c.l.b16 %v935
      %v3675 = vunpack.c.h.b16 %v935
      %v3676 = vunpack.c.l.b16 %v936
      %v3677 = vunpack.c.h.b16 %v936
      %v3678 = vunpack.c.l.b16 %v937
      %v3679 = vunpack.c.h.b16 %v937
      %v3680 = vunpack.c.l.b16 %v938
      %v3681 = vunpack.c.h.b16 %v938
      %v3682 = vunpack.c.l.b16 %v939
      %v3683 = vunpack.c.h.b16 %v939
      %v3684 = vunpack.c.l.b16 %v940
      %v3685 = vunpack.c.h.b16 %v940
      %v3686 = vunpack.c.l.b16 %v941
      %v3687 = vunpack.c.h.b16 %v941
      %v3688 = vunpack.c.l.b16 %v942
      %v3689 = vunpack.c.l.b16 %v943
      %v3690 = vunpack.c.h.b16 %v943
      %v3691 = vunpack.c.l.b16 %v944
      %v3692 = vunpack.c.h.b16 %v944
      %v3693 = vunpack.c.l.b16 %v945
      %v3694 = vunpack.c.h.b16 %v945
      %v3695 = vunpack.c.l.b16 %v946
      %v3696 = vunpack.c.h.b16 %v946
      %v3697 = vunpack.c.l.b16 %v947
      %v3698 = vunpack.c.h.b16 %v947
      %v3699 = vunpack.c.l.b16 %v948
      %v3700 = vunpack.c.h.b16 %v948
      %v3701 = vunpack.c.l.b16 %v949
      %v3702 = vunpack.c.h.b16 %v949
      %v3703 = vunpack.c.l.b16 %v950
      %v3704 = vunpack.c.h.b16 %v950
      %v3705 = vunpack.c.l.b16 %v951
      %v3706 = vunpack.c.h.b16 %v951
      %v3707 = vunpack.c.l.b16 %v952
      %v3708 = vunpack.c.h.b16 %v952
      %v3709 = vunpack.c.l.b16 %v953
      %v3710 = vunpack.c.h.b16 %v953
      %v3711 = vunpack.c.l.b16 %v954
      %v3712 = vunpack.c.h.b16 %v954
      %v3713 = vunpack.c.l.b16 %v955
      %v3714 = vunpack.c.l.b16 %v956
      %v3715 = vunpack.c.h.b16 %v956
      %v3716 = vunpack.c.l.b16 %v957
      %v3717 = vunpack.c.h.b16 %v957
      %v3718 = vunpack.c.l.b16 %v958
      %v3719 = vunpack.c.h.b16 %v958
      %v3720 = vunpack.c.l.b16 %v959
      %v3721 = vunpack.c.h.b16 %v959
      %v3722 = vunpack.c.l.b16 %v960
      %v3723 = vunpack.c.h.b16 %v960
      %v3724 = vunpack.c.l.b16 %v961
      %v3725 = vunpack.c.h.b16 %v961
      %v3726 = vunpack.c.l.b16 %v962
      %v3727 = vunpack.c.h.b16 %v962
      %v3728 = vunpack.c.l.b16 %v963
      %v3729 = vunpack.c.h.b16 %v963
      %v3730 = vunpack.c.l.b16 %v964
      %v3731 = vunpack.c.h.b16 %v964
      %v3732 = vunpack.c.l.b16 %v965
      %v3733 = vunpack.c.h.b16 %v965
      %v3734 = vunpack.c.l.b16 %v966
      %v3735 = vunpack.c.h.b16 %v966
      %v3736 = vunpack.c.l.b16 %v967
      %v3737 = vunpack.c.h.b16 %v967
      %v3738 = vunpack.c.l.b16 %v968
      %v3739 = vunpack.c.l.b16 %v969
      %v3740 = vunpack.c.h.b16 %v969
      %v3741 = vunpack.c.l.b16 %v970
      %v3742 = vunpack.c.h.b16 %v970
      %v3743 = vunpack.c.l.b16 %v971
      %v3744 = vunpack.c.h.b16 %v971
      %v3745 = vunpack.c.l.b16 %v972
      %v3746 = vunpack.c.h.b16 %v972
      %v3747 = vunpack.c.l.b16 %v973
      %v3748 = vunpack.c.h.b16 %v973
      %v3749 = vunpack.c.l.b16 %v974
      %v3750 = vunpack.c.h.b16 %v974
      %v3751 = vunpack.c.l.b16 %v975
      %v3752 = vunpack.c.h.b16 %v975
      %v3753 = vunpack.c.l.b16 %v976
      %v3754 = vunpack.c.h.b16 %v976
      %v3755 = vunpack.c.l.b16 %v977
      %v3756 = vunpack.c.h.b16 %v977
      %v3757 = vunpack.c.l.b16 %v978
      %v3758 = vunpack.c.h.b16 %v978
      %v3759 = vunpack.c.l.b16 %v979
      %v3760 = vunpack.c.h.b16 %v979
      %v3761 = vunpack.c.l.b16 %v980
      %v3762 = vunpack.c.h.b16 %v980
      %v3763 = vunpack.c.l.b16 %v981
      %v3764 = vunpack.c.l.b16 %v982
      %v3765 = vunpack.c.h.b16 %v982
      %v3766 = vunpack.c.l.b16 %v983
      %v3767 = vunpack.c.h.b16 %v983
      %v3768 = vunpack.c.l.b16 %v984
      %v3769 = vunpack.c.h.b16 %v984
      %v3770 = vunpack.c.l.b16 %v985
      %v3771 = vunpack.c.h.b16 %v985
      %v3772 = vunpack.c.l.b16 %v986
      %v3773 = vunpack.c.h.b16 %v986
      %v3774 = vunpack.c.l.b16 %v987
      %v3775 = vunpack.c.h.b16 %v987
      %v3776 = vunpack.c.l.b16 %v988
      %v3777 = vunpack.c.h.b16 %v988
      %v3778 = vunpack.c.l.b16 %v989
      %v3779 = vunpack.c.h.b16 %v989
      %v3780 = vunpack.c.l.b16 %v990
      %v3781 = vunpack.c.h.b16 %v990
      %v3782 = vunpack.c.l.b16 %v991
      %v3783 = vunpack.c.h.b16 %v991
      %v3784 = vunpack.c.l.b16 %v992
      %v3785 = vunpack.c.h.b16 %v992
      %v3786 = vunpack.c.l.b16 %v993
      %v3787 = vunpack.c.h.b16 %v993
      %v3788 = vunpack.c.l.b16 %v994
      %v3789 = vunpack.c.l.b16 %v995
      %v3790 = vunpack.c.h.b16 %v995
      %v3791 = vunpack.c.l.b16 %v996
      %v3792 = vunpack.c.h.b16 %v996
      %v3793 = vunpack.c.l.b16 %v997
      %v3794 = vunpack.c.h.b16 %v997
      %v3795 = vunpack.c.l.b16 %v998
      %v3796 = vunpack.c.h.b16 %v998
      %v3797 = vunpack.c.l.b16 %v999
      %v3798 = vunpack.c.h.b16 %v999
      %v3799 = vunpack.c.l.b16 %v1000
      %v3800 = vunpack.c.h.b16 %v1000
      %v3801 = vunpack.c.l.b16 %v1001
      %v3802 = vunpack.c.h.b16 %v1001
      %v3803 = vunpack.c.l.b16 %v1002
      %v3804 = vunpack.c.h.b16 %v1002
      %v3805 = vunpack.c.l.b16 %v1003
      %v3806 = vunpack.c.h.b16 %v1003
      %v3807 = vunpack.c.l.b16 %v1004
      %v3808 = vunpack.c.h.b16 %v1004
      %v3809 = vunpack.c.l.b16 %v1005
      %v3810 = vunpack.c.h.b16 %v1005
      %v3811 = vunpack.c.l.b16 %v1006
      %v3812 = vunpack.c.h.b16 %v1006
      %v3813 = vunpack.c.l.b16 %v1007
      %v3814 = vunpack.c.l.b16 %v1008
      %v3815 = vunpack.c.h.b16 %v1008
      %v3816 = vunpack.c.l.b16 %v1009
      %v3817 = vunpack.c.h.b16 %v1009
      %v3818 = vunpack.c.l.b16 %v1010
      %v3819 = vunpack.c.h.b16 %v1010
      %v3820 = vunpack.c.l.b16 %v1011
      %v3821 = vunpack.c.h.b16 %v1011
      %v3822 = vunpack.c.l.b16 %v1012
      %v3823 = vunpack.c.h.b16 %v1012
      %v3824 = vunpack.c.l.b16 %v1013
      %v3825 = vunpack.c.h.b16 %v1013
      %v3826 = vunpack.c.l.b16 %v1014
      %v3827 = vunpack.c.h.b16 %v1014
      %v3828 = vunpack.c.l.b16 %v1015
      %v3829 = vunpack.c.h.b16 %v1015
      %v3830 = vunpack.c.l.b16 %v1016
      %v3831 = vunpack.c.h.b16 %v1016
      %v3832 = vunpack.c.l.b16 %v1017
      %v3833 = vunpack.c.h.b16 %v1017
      %v3834 = vunpack.c.l.b16 %v1018
      %v3835 = vunpack.c.h.b16 %v1018
      %v3836 = vunpack.c.l.b16 %v1019
      %v3837 = vunpack.c.h.b16 %v1019
      %v3838 = vunpack.c.l.b16 %v1020
      %v3839 = vunpack.c.l.b16 %v1021
      %v3840 = vunpack.c.h.b16 %v1021
      %v3841 = vunpack.c.l.b16 %v1022
      %v3842 = vunpack.c.h.b16 %v1022
      %v3843 = vunpack.c.l.b16 %v1023
      %v3844 = vunpack.c.h.b16 %v1023
      %v3845 = vunpack.c.l.b16 %v1024
      %v3846 = vunpack.c.h.b16 %v1024
      %v3847 = vunpack.c.l.b16 %v1025
      %v3848 = vunpack.c.h.b16 %v1025
      %v3849 = vunpack.c.l.b16 %v1026
      %v3850 = vunpack.c.h.b16 %v1026
      %v3851 = vunpack.c.l.b16 %v1027
      %v3852 = vunpack.c.h.b16 %v1027
      %v3853 = vunpack.c.l.b16 %v1028
      %v3854 = vunpack.c.h.b16 %v1028
      %v3855 = vunpack.c.l.b16 %v1029
      %v3856 = vunpack.c.h.b16 %v1029
      %v3857 = vunpack.c.l.b16 %v1030
      %v3858 = vunpack.c.h.b16 %v1030
      %v3859 = vunpack.c.l.b16 %v1031
      %v3860 = vunpack.c.h.b16 %v1031
      %v3861 = vunpack.c.l.b16 %v1032
      %v3862 = vunpack.c.h.b16 %v1032
      %v3863 = vunpack.c.l.b16 %v1033
      %v3864 = vunpack.c.l.b16 %v1034
      %v3865 = vunpack.c.h.b16 %v1034
      %v3866 = vunpack.c.l.b16 %v1035
      %v3867 = vunpack.c.h.b16 %v1035
      %v3868 = vunpack.c.l.b16 %v1036
      %v3869 = vunpack.c.h.b16 %v1036
      %v3870 = vunpack.c.l.b16 %v1037
      %v3871 = vunpack.c.h.b16 %v1037
      %v3872 = vunpack.c.l.b16 %v1038
      %v3873 = vunpack.c.h.b16 %v1038
      %v3874 = vunpack.c.l.b16 %v1039
      %v3875 = vunpack.c.h.b16 %v1039
      %v3876 = vunpack.c.l.b16 %v1040
      %v3877 = vunpack.c.h.b16 %v1040
      %v3878 = vunpack.c.l.b16 %v1041
      %v3879 = vunpack.c.h.b16 %v1041
      %v3880 = vunpack.c.l.b16 %v1042
      %v3881 = vunpack.c.h.b16 %v1042
      %v3882 = vunpack.c.l.b16 %v1043
      %v3883 = vunpack.c.h.b16 %v1043
      %v3884 = vunpack.c.l.b16 %v1044
      %v3885 = vunpack.c.h.b16 %v1044
      %v3886 = vunpack.c.l.b16 %v1045
      %v3887 = vunpack.c.h.b16 %v1045
      %v3888 = vunpack.c.l.b16 %v1046
      %v3889 = vunpack.c.l.b16 %v1047
      %v3890 = vunpack.c.h.b16 %v1047
      %v3891 = vunpack.c.l.b16 %v1048
      %v3892 = vunpack.c.h.b16 %v1048
      %v3893 = vunpack.c.l.b16 %v1049
      %v3894 = vunpack.c.h.b16 %v1049
      %v3895 = vunpack.c.l.b16 %v1050
      %v3896 = vunpack.c.h.b16 %v1050
      %v3897 = vunpack.c.l.b16 %v1051
      %v3898 = vunpack.c.h.b16 %v1051
      %v3899 = vunpack.c.l.b16 %v1052
      %v3900 = vunpack.c.h.b16 %v1052
      %v3901 = vunpack.c.l.b16 %v1053
      %v3902 = vunpack.c.h.b16 %v1053
      %v3903 = vunpack.c.l.b16 %v1054
      %v3904 = vunpack.c.h.b16 %v1054
      %v3905 = vunpack.c.l.b16 %v1055
      %v3906 = vunpack.c.h.b16 %v1055
      %v3907 = vunpack.c.l.b16 %v1056
      %v3908 = vunpack.c.h.b16 %v1056
      %v3909 = vunpack.c.l.b16 %v1057
      %v3910 = vunpack.c.h.b16 %v1057
      %v3911 = vunpack.c.l.b16 %v1058
      %v3912 = vunpack.c.h.b16 %v1058
      %v3913 = vunpack.c.l.b16 %v1059
      %v3914 = vunpack.c.l.b16 %v1060
      %v3915 = vunpack.c.h.b16 %v1060
      %v3916 = vunpack.c.l.b16 %v1061
      %v3917 = vunpack.c.h.b16 %v1061
      %v3918 = vunpack.c.l.b16 %v1062
      %v3919 = vunpack.c.h.b16 %v1062
      %v3920 = vunpack.c.l.b16 %v1063
      %v3921 = vunpack.c.h.b16 %v1063
      %v3922 = vunpack.c.l.b16 %v1064
      %v3923 = vunpack.c.h.b16 %v1064
      %v3924 = vunpack.c.l.b16 %v1065
      %v3925 = vunpack.c.h.b16 %v1065
      %v3926 = vunpack.c.l.b16 %v1066
      %v3927 = vunpack.c.h.b16 %v1066
      %v3928 = vunpack.c.l.b16 %v1067
      %v3929 = vunpack.c.h.b16 %v1067
      %v3930 = vunpack.c.l.b16 %v1068
      %v3931 = vunpack.c.h.b16 %v1068
      %v3932 = vunpack.c.l.b16 %v1069
      %v3933 = vunpack.c.h.b16 %v1069
      %v3934 = vunpack.c.l.b16 %v1070
      %v3935 = vunpack.c.h.b16 %v1070
      %v3936 = vunpack.c.l.b16 %v1071
      %v3937 = vunpack.c.h.b16 %v1071
      %v3938 = vunpack.c.l.b16 %v1072
      %v3939 = vunpack.c.l.b16 %v1073
      %v3940 = vunpack.c.h.b16 %v1073
      %v3941 = vunpack.c.l.b16 %v1074
      %v3942 = vunpack.c.h.b16 %v1074
      %v3943 = vunpack.c.l.b16 %v1075
      %v3944 = vunpack.c.h.b16 %v1075
      %v3945 = vunpack.c.l.b16 %v1076
      %v3946 = vunpack.c.h.b16 %v1076
      %v3947 = vunpack.c.l.b16 %v1077
      %v3948 = vunpack.c.h.b16 %v1077
      %v3949 = vunpack.c.l.b16 %v1078
      %v3950 = vunpack.c.h.b16 %v1078
      %v3951 = vunpack.c.l.b16 %v1079
      %v3952 = vunpack.c.h.b16 %v1079
      %v3953 = vunpack.c.l.b16 %v1080
      %v3954 = vunpack.c.h.b16 %v1080
      %v3955 = vunpack.c.l.b16 %v1081
      %v3956 = vunpack.c.h.b16 %v1081
      %v3957 = vunpack.c.l.b16 %v1082
      %v3958 = vunpack.c.h.b16 %v1082
      %v3959 = vunpack.c.l.b16 %v1083
      %v3960 = vunpack.c.h.b16 %v1083
      %v3961 = vunpack.c.l.b16 %v1084
      %v3962 = vunpack.c.h.b16 %v1084
      %v3963 = vunpack.c.l.b16 %v1085
      %v3964 = vunpack.c.l.b16 %v1086
      %v3965 = vunpack.c.h.b16 %v1086
      %v3966 = vunpack.c.l.b16 %v1087
      %v3967 = vunpack.c.h.b16 %v1087
      %v3968 = vunpack.c.l.b16 %v1088
      %v3969 = vunpack.c.h.b16 %v1088
      %v3970 = vunpack.c.l.b16 %v1089
      %v3971 = vunpack.c.h.b16 %v1089
      %v3972 = vunpack.c.l.b16 %v1090
      %v3973 = vunpack.c.h.b16 %v1090
      %v3974 = vunpack.c.l.b16 %v1091
      %v3975 = vunpack.c.h.b16 %v1091
      %v3976 = vunpack.c.l.b16 %v1092
      %v3977 = vunpack.c.h.b16 %v1092
      %v3978 = vunpack.c.l.b16 %v1093
      %v3979 = vunpack.c.h.b16 %v1093
      %v3980 = vunpack.c.l.b16 %v1094
      %v3981 = vunpack.c.h.b16 %v1094
      %v3982 = vunpack.c.l.b16 %v1095
      %v3983 = vunpack.c.h.b16 %v1095
      %v3984 = vunpack.c.l.b16 %v1096
      %v3985 = vunpack.c.h.b16 %v1096
      %v3986 = vunpack.c.l.b16 %v1097
      %v3987 = vunpack.c.h.b16 %v1097
      %v3988 = vunpack.c.l.b16 %v1098
      %v3989 = vunpack.c.l.b16 %v1099
      %v3990 = vunpack.c.h.b16 %v1099
      %v3991 = vunpack.c.l.b16 %v1100
      %v3992 = vunpack.c.h.b16 %v1100
      %v3993 = vunpack.c.l.b16 %v1101
      %v3994 = vunpack.c.h.b16 %v1101
      %v3995 = vunpack.c.l.b16 %v1102
      %v3996 = vunpack.c.h.b16 %v1102
      %v3997 = vunpack.c.l.b16 %v1103
      %v3998 = vunpack.c.h.b16 %v1103
      %v3999 = vunpack.c.l.b16 %v1104
      %v4000 = vunpack.c.h.b16 %v1104
      %v4001 = vunpack.c.l.b16 %v1105
      %v4002 = vunpack.c.h.b16 %v1105
      %v4003 = vunpack.c.l.b16 %v1106
      %v4004 = vunpack.c.h.b16 %v1106
      %v4005 = vunpack.c.l.b16 %v1107
      %v4006 = vunpack.c.h.b16 %v1107
      %v4007 = vunpack.c.l.b16 %v1108
      %v4008 = vunpack.c.h.b16 %v1108
      %v4009 = vunpack.c.l.b16 %v1109
      %v4010 = vunpack.c.h.b16 %v1109
      %v4011 = vunpack.c.l.b16 %v1110
      %v4012 = vunpack.c.h.b16 %v1110
      %v4013 = vunpack.c.l.b16 %v1111
      %v4014 = vunpack.c.l.b16 %v1112
      %v4015 = vunpack.c.h.b16 %v1112
      %v4016 = vunpack.c.l.b16 %v1113
      %v4017 = vunpack.c.h.b16 %v1113
      %v4018 = vunpack.c.l.b16 %v1114
      %v4019 = vunpack.c.h.b16 %v1114
      %v4020 = vunpack.c.l.b16 %v1115
      %v4021 = vunpack.c.h.b16 %v1115
      %v4022 = vunpack.c.l.b16 %v1116
      %v4023 = vunpack.c.h.b16 %v1116
      %v4024 = vunpack.c.l.b16 %v1117
      %v4025 = vunpack.c.h.b16 %v1117
      %v4026 = vunpack.c.l.b16 %v1118
      %v4027 = vunpack.c.h.b16 %v1118
      %v4028 = vunpack.c.l.b16 %v1119
      %v4029 = vunpack.c.h.b16 %v1119
      %v4030 = vunpack.c.l.b16 %v1120
      %v4031 = vunpack.c.h.b16 %v1120
      %v4032 = vunpack.c.l.b16 %v1121
      %v4033 = vunpack.c.h.b16 %v1121
      %v4034 = vunpack.c.l.b16 %v1122
      %v4035 = vunpack.c.h.b16 %v1122
      %v4036 = vunpack.c.l.b16 %v1123
      %v4037 = vunpack.c.h.b16 %v1123
      %v4038 = vunpack.c.l.b16 %v1124
      %v4039 = vunpack.c.l.b16 %v1125
      %v4040 = vunpack.c.h.b16 %v1125
      %v4041 = vunpack.c.l.b16 %v1126
      %v4042 = vunpack.c.h.b16 %v1126
      %v4043 = vunpack.c.l.b16 %v1127
      %v4044 = vunpack.c.h.b16 %v1127
      %v4045 = vunpack.c.l.b16 %v1128
      %v4046 = vunpack.c.h.b16 %v1128
      %v4047 = vunpack.c.l.b16 %v1129
      %v4048 = vunpack.c.h.b16 %v1129
      %v4049 = vunpack.c.l.b16 %v1130
      %v4050 = vunpack.c.h.b16 %v1130
      %v4051 = vunpack.c.l.b16 %v1131
      %v4052 = vunpack.c.h.b16 %v1131
      %v4053 = vunpack.c.l.b16 %v1132
      %v4054 = vunpack.c.h.b16 %v1132
      %v4055 = vunpack.c.l.b16 %v1133
      %v4056 = vunpack.c.h.b16 %v1133
      %v4057 = vunpack.c.l.b16 %v1134
      %v4058 = vunpack.c.h.b16 %v1134
      %v4059 = vunpack.c.l.b16 %v1135
      %v4060 = vunpack.c.h.b16 %v1135
      %v4061 = vunpack.c.l.b16 %v1136
      %v4062 = vunpack.c.h.b16 %v1136
      %v4063 = vunpack.c.l.b16 %v1137
      %v4064 = vunpack.c.l.b16 %v1138
      %v4065 = vunpack.c.h.b16 %v1138
      %v4066 = vunpack.c.l.b16 %v1139
      %v4067 = vunpack.c.h.b16 %v1139
      %v4068 = vunpack.c.l.b16 %v1140
      %v4069 = vunpack.c.h.b16 %v1140
      %v4070 = vunpack.c.l.b16 %v1141
      %v4071 = vunpack.c.h.b16 %v1141
      %v4072 = vunpack.c.l.b16 %v1142
      %v4073 = vunpack.c.h.b16 %v1142
      %v4074 = vunpack.c.l.b16 %v1143
      %v4075 = vunpack.c.h.b16 %v1143
      %v4076 = vunpack.c.l.b16 %v1144
      %v4077 = vunpack.c.h.b16 %v1144
      %v4078 = vunpack.c.l.b16 %v1145
      %v4079 = vunpack.c.h.b16 %v1145
      %v4080 = vunpack.c.l.b16 %v1146
      %v4081 = vunpack.c.h.b16 %v1146
      %v4082 = vunpack.c.l.b16 %v1147
      %v4083 = vunpack.c.h.b16 %v1147
      %v4084 = vunpack.c.l.b16 %v1148
      %v4085 = vunpack.c.h.b16 %v1148
      %v4086 = vunpack.c.l.b16 %v1149
      %v4087 = vunpack.c.h.b16 %v1149
      %v4088 = vunpack.c.l.b16 %v1150
      %v4089 = vunpack.c.l.b16 %v1151
      %v4090 = vunpack.c.h.b16 %v1151
      %v4091 = vunpack.c.l.b16 %v1152
      %v4092 = vunpack.c.h.b16 %v1152
      %v4093 = vunpack.c.l.b16 %v1153
      %v4094 = vunpack.c.h.b16 %v1153
      %v4095 = vunpack.c.l.b16 %v1154
      %v4096 = vunpack.c.h.b16 %v1154
      %v4097 = vunpack.c.l.b16 %v1155
      %v4098 = vunpack.c.h.b16 %v1155
      %v4099 = vunpack.c.l.b16 %v1156
      %v4100 = vunpack.c.h.b16 %v1156
      %v4101 = vunpack.c.l.b16 %v1157
      %v4102 = vunpack.c.h.b16 %v1157
      %v4103 = vunpack.c.l.b16 %v1158
      %v4104 = vunpack.c.h.b16 %v1158
      %v4105 = vunpack.c.l.b16 %v1159
      %v4106 = vunpack.c.h.b16 %v1159
      %v4107 = vunpack.c.l.b16 %v1160
      %v4108 = vunpack.c.h.b16 %v1160
      %v4109 = vunpack.c.l.b16 %v1161
      %v4110 = vunpack.c.h.b16 %v1161
      %v4111 = vunpack.c.l.b16 %v1162
      %v4112 = vunpack.c.h.b16 %v1162
      %v4113 = vunpack.c.l.b16 %v1163
      %v4114 = vunpack.c.l.b16 %v1164
      %v4115 = vunpack.c.h.b16 %v1164
      %v4116 = vunpack.c.l.b16 %v1165
      %v4117 = vunpack.c.h.b16 %v1165
      %v4118 = vunpack.c.l.b16 %v1166
      %v4119 = vunpack.c.h.b16 %v1166
      %v4120 = vunpack.c.l.b16 %v1167
      %v4121 = vunpack.c.h.b16 %v1167
      %v4122 = vunpack.c.l.b16 %v1168
      %v4123 = vunpack.c.h.b16 %v1168
      %v4124 = vunpack.c.l.b16 %v1169
      %v4125 = vunpack.c.h.b16 %v1169
      %v4126 = vunpack.c.l.b16 %v1170
      %v4127 = vunpack.c.h.b16 %v1170
      %v4128 = vunpack.c.l.b16 %v1171
      %v4129 = vunpack.c.h.b16 %v1171
      %v4130 = vunpack.c.l.b16 %v1172
      %v4131 = vunpack.c.h.b16 %v1172
      %v4132 = vunpack.c.l.b16 %v1173
      %v4133 = vunpack.c.h.b16 %v1173
      %v4134 = vunpack.c.l.b16 %v1174
      %v4135 = vunpack.c.h.b16 %v1174
      %v4136 = vunpack.c.l.b16 %v1175
      %v4137 = vunpack.c.h.b16 %v1175
      %v4138 = vunpack.c.l.b16 %v1176
      %v4139 = vunpack.c.l.b16 %v1177
      %v4140 = vunpack.c.h.b16 %v1177
      %v4141 = vunpack.c.l.b16 %v1178
      %v4142 = vunpack.c.h.b16 %v1178
      %v4143 = vunpack.c.l.b16 %v1179
      %v4144 = vunpack.c.h.b16 %v1179
      %v4145 = vunpack.c.l.b16 %v1180
      %v4146 = vunpack.c.h.b16 %v1180
      %v4147 = vunpack.c.l.b16 %v1181
      %v4148 = vunpack.c.h.b16 %v1181
      %v4149 = vunpack.c.l.b16 %v1182
      %v4150 = vunpack.c.h.b16 %v1182
      %v4151 = vunpack.c.l.b16 %v1183
      %v4152 = vunpack.c.h.b16 %v1183
      %v4153 = vunpack.c.l.b16 %v1184
      %v4154 = vunpack.c.h.b16 %v1184
      %v4155 = vunpack.c.l.b16 %v1185
      %v4156 = vunpack.c.h.b16 %v1185
      %v4157 = vunpack.c.l.b16 %v1186
      %v4158 = vunpack.c.h.b16 %v1186
      %v4159 = vunpack.c.l.b16 %v1187
      %v4160 = vunpack.c.h.b16 %v1187
      %v4161 = vunpack.c.l.b16 %v1188
      %v4162 = vunpack.c.h.b16 %v1188
      %v4163 = vunpack.c.l.b16 %v1189
      %v4164 = vunpack.c.l.b16 %v1190
      %v4165 = vunpack.c.h.b16 %v1190
      %v4166 = vunpack.c.l.b16 %v1191
      %v4167 = vunpack.c.h.b16 %v1191
      %v4168 = vunpack.c.l.b16 %v1192
      %v4169 = vunpack.c.h.b16 %v1192
      %v4170 = vunpack.c.l.b16 %v1193
      %v4171 = vunpack.c.h.b16 %v1193
      %v4172 = vunpack.c.l.b16 %v1194
      %v4173 = vunpack.c.h.b16 %v1194
      %v4174 = vunpack.c.l.b16 %v1195
      %v4175 = vunpack.c.h.b16 %v1195
      %v4176 = vunpack.c.l.b16 %v1196
      %v4177 = vunpack.c.h.b16 %v1196
      %v4178 = vunpack.c.l.b16 %v1197
      %v4179 = vunpack.c.h.b16 %v1197
      %v4180 = vunpack.c.l.b16 %v1198
      %v4181 = vunpack.c.h.b16 %v1198
      %v4182 = vunpack.c.l.b16 %v1199
      %v4183 = vunpack.c.h.b16 %v1199
      %v4184 = vunpack.c.l.b16 %v1200
      %v4185 = vunpack.c.h.b16 %v1200
      %v4186 = vunpack.c.l.b16 %v1201
      %v4187 = vunpack.c.h.b16 %v1201
      %v4188 = vunpack.c.l.b16 %v1202
      %v4189 = vunpack.c.l.b16 %v1203
      %v4190 = vunpack.c.h.b16 %v1203
      %v4191 = vunpack.c.l.b16 %v1204
      %v4192 = vunpack.c.h.b16 %v1204
      %v4193 = vunpack.c.l.b16 %v1205
      %v4194 = vunpack.c.h.b16 %v1205
      %v4195 = vunpack.c.l.b16 %v1206
      %v4196 = vunpack.c.h.b16 %v1206
      %v4197 = vunpack.c.l.b16 %v1207
      %v4198 = vunpack.c.h.b16 %v1207
      %v4199 = vunpack.c.l.b16 %v1208
      %v4200 = vunpack.c.h.b16 %v1208
      %v4201 = vunpack.c.l.b16 %v1209
      %v4202 = vunpack.c.h.b16 %v1209
      %v4203 = vunpack.c.l.b16 %v1210
      %v4204 = vunpack.c.h.b16 %v1210
      %v4205 = vunpack.c.l.b16 %v1211
      %v4206 = vunpack.c.h.b16 %v1211
      %v4207 = vunpack.c.l.b16 %v1212
      %v4208 = vunpack.c.h.b16 %v1212
      %v4209 = vunpack.c.l.b16 %v1213
      %v4210 = vunpack.c.h.b16 %v1213
      %v4211 = vunpack.c.l.b16 %v1214
      %v4212 = vunpack.c.h.b16 %v1214
      %v4213 = vunpack.c.l.b16 %v1215
      %v4214 = vunpack.c.l.b16 %v1216
      %v4215 = vunpack.c.h.b16 %v1216
      %v4216 = vunpack.c.l.b16 %v1217
      %v4217 = vunpack.c.h.b16 %v1217
      %v4218 = vunpack.c.l.b16 %v1218
      %v4219 = vunpack.c.h.b16 %v1218
      %v4220 = vunpack.c.l.b16 %v1219
      %v4221 = vunpack.c.h.b16 %v1219
      %v4222 = vunpack.c.l.b16 %v1220
      %v4223 = vunpack.c.h.b16 %v1220
      %v4224 = vunpack.c.l.b16 %v1221
      %v4225 = vunpack.c.h.b16 %v1221
      %v4226 = vunpack.c.l.b16 %v1222
      %v4227 = vunpack.c.h.b16 %v1222
      %v4228 = vunpack.c.l.b16 %v1223
      %v4229 = vunpack.c.h.b16 %v1223
      %v4230 = vunpack.c.l.b16 %v1224
      %v4231 = vunpack.c.h.b16 %v1224
      %v4232 = vunpack.c.l.b16 %v1225
      %v4233 = vunpack.c.h.b16 %v1225
      %v4234 = vunpack.c.l.b16 %v1226
      %v4235 = vunpack.c.h.b16 %v1226
      %v4236 = vunpack.c.l.b16 %v1227
      %v4237 = vunpack.c.h.b16 %v1227
      %v4238 = vunpack.c.l.b16 %v1228
      %v4239 = vunpack.c.l.b16 %v1229
      %v4240 = vunpack.c.h.b16 %v1229
      %v4241 = vunpack.c.l.b16 %v1230
      %v4242 = vunpack.c.h.b16 %v1230
      %v4243 = vunpack.c.l.b16 %v1231
      %v4244 = vunpack.c.h.b16 %v1231
      %v4245 = vunpack.c.l.b16 %v1232
      %v4246 = vunpack.c.h.b16 %v1232
      %v4247 = vunpack.c.l.b16 %v1233
      %v4248 = vunpack.c.h.b16 %v1233
      %v4249 = vunpack.c.l.b16 %v1234
      %v4250 = vunpack.c.h.b16 %v1234
      %v4251 = vunpack.c.l.b16 %v1235
      %v4252 = vunpack.c.h.b16 %v1235
      %v4253 = vunpack.c.l.b16 %v1236
      %v4254 = vunpack.c.h.b16 %v1236
      %v4255 = vunpack.c.l.b16 %v1237
      %v4256 = vunpack.c.h.b16 %v1237
      %v4257 = vunpack.c.l.b16 %v1238
      %v4258 = vunpack.c.h.b16 %v1238
      %v4259 = vunpack.c.l.b16 %v1239
      %v4260 = vunpack.c.h.b16 %v1239
      %v4261 = vunpack.c.l.b16 %v1240
      %v4262 = vunpack.c.h.b16 %v1240
      %v4263 = vunpack.c.l.b16 %v1241
      %v4264 = vunpack.c.l.b16 %v1242
      %v4265 = vunpack.c.h.b16 %v1242
      %v4266 = vunpack.c.l.b16 %v1243
      %v4267 = vunpack.c.h.b16 %v1243
      %v4268 = vunpack.c.l.b16 %v1244
      %v4269 = vunpack.c.h.b16 %v1244
      %v4270 = vunpack.c.l.b16 %v1245
      %v4271 = vunpack.c.h.b16 %v1245
      %v4272 = vunpack.c.l.b16 %v1246
      %v4273 = vunpack.c.h.b16 %v1246
      %v4274 = vunpack.c.l.b16 %v1247
      %v4275 = vunpack.c.h.b16 %v1247
      %v4276 = vunpack.c.l.b16 %v1248
      %v4277 = vunpack.c.h.b16 %v1248
      %v4278 = vunpack.c.l.b16 %v1249
      %v4279 = vunpack.c.h.b16 %v1249
      %v4280 = vunpack.c.l.b16 %v1250
      %v4281 = vunpack.c.h.b16 %v1250
      %v4282 = vunpack.c.l.b16 %v1251
      %v4283 = vunpack.c.h.b16 %v1251
      %v4284 = vunpack.c.l.b16 %v1252
      %v4285 = vunpack.c.h.b16 %v1252
      %v4286 = vunpack.c.l.b16 %v1253
      %v4287 = vunpack.c.h.b16 %v1253
      %v4288 = vunpack.c.l.b16 %v1254
      %v4289 = vunpack.c.l.b16 %v1255
      %v4290 = vunpack.c.h.b16 %v1255
      %v4291 = vunpack.c.l.b16 %v1256
      %v4292 = vunpack.c.h.b16 %v1256
      %v4293 = vunpack.c.l.b16 %v1257
      %v4294 = vunpack.c.h.b16 %v1257
      %v4295 = vunpack.c.l.b16 %v1258
      %v4296 = vunpack.c.h.b16 %v1258
      %v4297 = vunpack.c.l.b16 %v1259
      %v4298 = vunpack.c.h.b16 %v1259
      %v4299 = vunpack.c.l.b16 %v1260
      %v4300 = vunpack.c.h.b16 %v1260
      %v4301 = vunpack.c.l.b16 %v1261
      %v4302 = vunpack.c.h.b16 %v1261
      %v4303 = vunpack.c.l.b16 %v1262
      %v4304 = vunpack.c.h.b16 %v1262
      %v4305 = vunpack.c.l.b16 %v1263
      %v4306 = vunpack.c.h.b16 %v1263
      %v4307 = vunpack.c.l.b16 %v1264
      %v4308 = vunpack.c.h.b16 %v1264
      %v4309 = vunpack.c.l.b16 %v1265
      %v4310 = vunpack.c.h.b16 %v1265
      %v4311 = vunpack.c.l.b16 %v1266
      %v4312 = vunpack.c.h.b16 %v1266
      %v4313 = vunpack.c.l.b16 %v1267
      %v4314 = vunpack.c.l.b16 %v1268
      %v4315 = vunpack.c.h.b16 %v1268
      %v4316 = vunpack.c.l.b16 %v1269
      %v4317 = vunpack.c.h.b16 %v1269
      %v4318 = vunpack.c.l.b16 %v1270
      %v4319 = vunpack.c.h.b16 %v1270
      %v4320 = vunpack.c.l.b16 %v1271
      %v4321 = vunpack.c.h.b16 %v1271
      %v4322 = vunpack.c.l.b16 %v1272
      %v4323 = vunpack.c.h.b16 %v1272
      %v4324 = vunpack.c.l.b16 %v1273
      %v4325 = vunpack.c.h.b16 %v1273
      %v4326 = vunpack.c.l.b16 %v1274
      %v4327 = vunpack.c.h.b16 %v1274
      %v4328 = vunpack.c.l.b16 %v1275
      %v4329 = vunpack.c.h.b16 %v1275
      %v4330 = vunpack.c.l.b16 %v1276
      %v4331 = vunpack.c.h.b16 %v1276
      %v4332 = vunpack.c.l.b16 %v1277
      %v4333 = vunpack.c.h.b16 %v1277
      %v4334 = vunpack.c.l.b16 %v1278
      %v4335 = vunpack.c.h.b16 %v1278
      %v4336 = vunpack.c.l.b16 %v1279
      %v4337 = vunpack.c.h.b16 %v1279
      %v4338 = vunpack.c.l.b16 %v1280
      %v4339 = vpack.c.b16 %v2364, %v2339
      %v4340 = vpack.c.b16 %v2365, %v2340
      %v4341 = vpack.c.b16 %v2366, %v2341
      %v4342 = vpack.c.b16 %v2367, %v2342
      %v4343 = vpack.c.b16 %v2368, %v2343
      %v4344 = vpack.c.b16 %v2369, %v2344
      %v4345 = vpack.c.b16 %v2370, %v2345
      %v4346 = vpack.c.b16 %v2371, %v2346
      %v4347 = vpack.c.b16 %v2372, %v2347
      %v4348 = vpack.c.b16 %v2373, %v2348
      %v4349 = vpack.c.b16 %v2374, %v2349
      %v4350 = vpack.c.b16 %v2375, %v2350
      %v4351 = vpack.c.b16 %v2376, %v2351
      %v4352 = vpack.c.b16 %v2377, %v2352
      %v4353 = vpack.c.b16 %v2378, %v2353
      %v4354 = vpack.c.b16 %v2379, %v2354
      %v4355 = vpack.c.b16 %v2380, %v2355
      %v4356 = vpack.c.b16 %v2381, %v2356
      %v4357 = vpack.c.b16 %v2382, %v2357
      %v4358 = vpack.c.b16 %v2383, %v2358
      %v4359 = vpack.c.b16 %v2384, %v2359
      %v4360 = vpack.c.b16 %v2385, %v2360
      %v4361 = vpack.c.b16 %v2386, %v2361
      %v4362 = vpack.c.b16 %v2387, %v2362
      %v4363 = vpack.c.b16 %v2388, %v2363
      %v4364 = vpack.c.b16 %v2414, %v2389
      %v4365 = vpack.c.b16 %v2415, %v2390
      %v4366 = vpack.c.b16 %v2416, %v2391
      %v4367 = vpack.c.b16 %v2417, %v2392
      %v4368 = vpack.c.b16 %v2418, %v2393
      %v4369 = vpack.c.b16 %v2419, %v2394
      %v4370 = vpack.c.b16 %v2420, %v2395
      %v4371 = vpack.c.b16 %v2421, %v2396
      %v4372 = vpack.c.b16 %v2422, %v2397
      %v4373 = vpack.c.b16 %v2423, %v2398
      %v4374 = vpack.c.b16 %v2424, %v2399
      %v4375 = vpack.c.b16 %v2425, %v2400
      %v4376 = vpack.c.b16 %v2426, %v2401
      %v4377 = vpack.c.b16 %v2427, %v2402
      %v4378 = vpack.c.b16 %v2428, %v2403
      %v4379 = vpack.c.b16 %v2429, %v2404
      %v4380 = vpack.c.b16 %v2430, %v2405
      %v4381 = vpack.c.b16 %v2431, %v2406
      %v4382 = vpack.c.b16 %v2432, %v2407
      %v4383 = vpack.c.b16 %v2433, %v2408
      %v4384 = vpack.c.b16 %v2434, %v2409
      %v4385 = vpack.c.b16 %v2435, %v2410
      %v4386 = vpack.c.b16 %v2436, %v2411
      %v4387 = vpack.c.b16 %v2437, %v2412
      %v4388 = vpack.c.b16 %v2438, %v2413
      %v4389 = vpack.c.b16 %v2464, %v2439
      %v4390 = vpack.c.b16 %v2465, %v2440
      %v4391 = vpack.c.b16 %v2466, %v2441
      %v4392 = vpack.c.b16 %v2467, %v2442
      %v4393 = vpack.c.b16 %v2468, %v2443
      %v4394 = vpack.c.b16 %v2469, %v2444
      %v4395 = vpack.c.b16 %v2470, %v2445
      %v4396 = vpack.c.b16 %v2471, %v2446
      %v4397 = vpack.c.b16 %v2472, %v2447
      %v4398 = vpack.c.b16 %v2473, %v2448
      %v4399 = vpack.c.b16 %v2474, %v2449
      %v4400 = vpack.c.b16 %v2475, %v2450
      %v4401 = vpack.c.b16 %v2476, %v2451
      %v4402 = vpack.c.b16 %v2477, %v2452
      %v4403 = vpack.c.b16 %v2478, %v2453
      %v4404 = vpack.c.b16 %v2479, %v2454
      %v4405 = vpack.c.b16 %v2480, %v2455
      %v4406 = vpack.c.b16 %v2481, %v2456
      %v4407 = vpack.c.b16 %v2482, %v2457
      %v4408 = vpack.c.b16 %v2483, %v2458
      %v4409 = vpack.c.b16 %v2484, %v2459
      %v4410 = vpack.c.b16 %v2485, %v2460
      %v4411 = vpack.c.b16 %v2486, %v2461
      %v4412 = vpack.c.b16 %v2487, %v2462
      %v4413 = vpack.c.b16 %v2488, %v2463
      %v4414 = vpack.c.b16 %v2514, %v2489
      %v4415 = vpack.c.b16 %v2515, %v2490
      %v4416 = vpack.c.b16 %v2516, %v2491
      %v4417 = vpack.c.b16 %v2517, %v2492
      %v4418 = vpack.c.b16 %v2518, %v2493
      %v4419 = vpack.c.b16 %v2519, %v2494
      %v4420 = vpack.c.b16 %v2520, %v2495
      %v4421 = vpack.c.b16 %v2521, %v2496
      %v4422 = vpack.c.b16 %v2522, %v2497
      %v4423 = vpack.c.b16 %v2523, %v2498
      %v4424 = vpack.c.b16 %v2524, %v2499
      %v4425 = vpack.c.b16 %v2525, %v2500
      %v4426 = vpack.c.b16 %v2526, %v2501
      %v4427 = vpack.c.b16 %v2527, %v2502
      %v4428 = vpack.c.b16 %v2528, %v2503
      %v4429 = vpack.c.b16 %v2529, %v2504
      %v4430 = vpack.c.b16 %v2530, %v2505
      %v4431 = vpack.c.b16 %v2531, %v2506
      %v4432 = vpack.c.b16 %v2532, %v2507
      %v4433 = vpack.c.b16 %v2533, %v2508
      %v4434 = vpack.c.b16 %v2534, %v2509
      %v4435 = vpack.c.b16 %v2535, %v2510
      %v4436 = vpack.c.b16 %v2536, %v2511
      %v4437 = vpack.c.b16 %v2537, %v2512
      %v4438 = vpack.c.b16 %v2538, %v2513
      %v4439 = vpack.c.b16 %v2564, %v2539
      %v4440 = vpack.c.b16 %v2565, %v2540
      %v4441 = vpack.c.b16 %v2566, %v2541
      %v4442 = vpack.c.b16 %v2567, %v2542
      %v4443 = vpack.c.b16 %v2568, %v2543
      %v4444 = vpack.c.b16 %v2569, %v2544
      %v4445 = vpack.c.b16 %v2570, %v2545
      %v4446 = vpack.c.b16 %v2571, %v2546
      %v4447 = vpack.c.b16 %v2572, %v2547
      %v4448 = vpack.c.b16 %v2573, %v2548
      %v4449 = vpack.c.b16 %v2574, %v2549
      %v4450 = vpack.c.b16 %v2575, %v2550
      %v4451 = vpack.c.b16 %v2576, %v2551
      %v4452 = vpack.c.b16 %v2577, %v2552
      %v4453 = vpack.c.b16 %v2578, %v2553
      %v4454 = vpack.c.b16 %v2579, %v2554
      %v4455 = vpack.c.b16 %v2580, %v2555
      %v4456 = vpack.c.b16 %v2581, %v2556
      %v4457 = vpack.c.b16 %v2582, %v2557
      %v4458 = vpack.c.b16 %v2583, %v2558
      %v4459 = vpack.c.b16 %v2584, %v2559
      %v4460 = vpack.c.b16 %v2585, %v2560
      %v4461 = vpack.c.b16 %v2586, %v2561
      %v4462 = vpack.c.b16 %v2587, %v2562
      %v4463 = vpack.c.b16 %v2588, %v2563
      %v4464 = vpack.c.b16 %v2614, %v2589
      %v4465 = vpack.c.b16 %v2615, %v2590
      %v4466 = vpack.c.b16 %v2616, %v2591
      %v4467 = vpack.c.b16 %v2617, %v2592
      %v4468 = vpack.c.b16 %v2618, %v2593
      %v4469 = vpack.c.b16 %v2619, %v2594
      %v4470 = vpack.c.b16 %v2620, %v2595
      %v4471 = vpack.c.b16 %v2621, %v2596
      %v4472 = vpack.c.b16 %v2622, %v2597
      %v4473 = vpack.c.b16 %v2623, %v2598
      %v4474 = vpack.c.b16 %v2624, %v2599
      %v4475 = vpack.c.b16 %v2625, %v2600
      %v4476 = vpack.c.b16 %v2626, %v2601
      %v4477 = vpack.c.b16 %v2627, %v2602
      %v4478 = vpack.c.b16 %v2628, %v2603
      %v4479 = vpack.c.b16 %v2629, %v2604
      %v4480 = vpack.c.b16 %v2630, %v2605
      %v4481 = vpack.c.b16 %v2631, %v2606
      %v4482 = vpack.c.b16 %v2632, %v2607
      %v4483 = vpack.c.b16 %v2633, %v2608
      %v4484 = vpack.c.b16 %v2634, %v2609
      %v4485 = vpack.c.b16 %v2635, %v2610
      %v4486 = vpack.c.b16 %v2636, %v2611
      %v4487 = vpack.c.b16 %v2637, %v2612
      %v4488 = vpack.c.b16 %v2638, %v2613
      %v4489 = vpack.c.b16 %v2664, %v2639
      %v4490 = vpack.c.b16 %v2665, %v2640
      %v4491 = vpack.c.b16 %v2666, %v2641
      %v4492 = vpack.c.b16 %v2667, %v2642
      %v4493 = vpack.c.b16 %v2668, %v2643
      %v4494 = vpack.c.b16 %v2669, %v2644
      %v4495 = vpack.c.b16 %v2670, %v2645
      %v4496 = vpack.c.b16 %v2671, %v2646
      %v4497 = vpack.c.b16 %v2672, %v2647
      %v4498 = vpack.c.b16 %v2673, %v2648
      %v4499 = vpack.c.b16 %v2674, %v2649
      %v4500 = vpack.c.b16 %v2675, %v2650
      %v4501 = vpack.c.b16 %v2676, %v2651
      %v4502 = vpack.c.b16 %v2677, %v2652
      %v4503 = vpack.c.b16 %v2678, %v2653
      %v4504 = vpack.c.b16 %v2679, %v2654
      %v4505 = vpack.c.b16 %v2680, %v2655
      %v4506 = vpack.c.b16 %v2681, %v2656
      %v4507 = vpack.c.b16 %v2682, %v2657
      %v4508 = vpack.c.b16 %v2683, %v2658
      %v4509 = vpack.c.b16 %v2684, %v2659
      %v4510 = vpack.c.b16 %v2685, %v2660
      %v4511 = vpack.c.b16 %v2686, %v2661
      %v4512 = vpack.c.b16 %v2687, %v2662
      %v4513 = vpack.c.b16 %v2688, %v2663
      %v4514 = vpack.c.b16 %v2714, %v2689
      %v4515 = vpack.c.b16 %v2715, %v2690
      %v4516 = vpack.c.b16 %v2716, %v2691
      %v4517 = vpack.c.b16 %v2717, %v2692
      %v4518 = vpack.c.b16 %v2718, %v2693
      %v4519 = vpack.c.b16 %v2719, %v2694
      %v4520 = vpack.c.b16 %v2720, %v2695
      %v4521 = vpack.c.b16 %v2721, %v2696
      %v4522 = vpack.c.b16 %v2722, %v2697
      %v4523 = vpack.c.b16 %v2723, %v2698
      %v4524 = vpack.c.b16 %v2724, %v2699
      %v4525 = vpack.c.b16 %v2725, %v2700
      %v4526 = vpack.c.b16 %v2726, %v2701
      %v4527 = vpack.c.b16 %v2727, %v2702
      %v4528 = vpack.c.b16 %v2728, %v2703
      %v4529 = vpack.c.b16 %v2729, %v2704
      %v4530 = vpack.c.b16 %v2730, %v2705
      %v4531 = vpack.c.b16 %v2731, %v2706
      %v4532 = vpack.c.b16 %v2732, %v2707
      %v4533 = vpack.c.b16 %v2733, %v2708
      %v4534 = vpack.c.b16 %v2734, %v2709
      %v4535 = vpack.c.b16 %v2735, %v2710
      %v4536 = vpack.c.b16 %v2736, %v2711
      %v4537 = vpack.c.b16 %v2737, %v2712
      %v4538 = vpack.c.b16 %v2738, %v2713
      %v4539 = vpack.c.b16 %v2764, %v2739
      %v4540 = vpack.c.b16 %v2765, %v2740
      %v4541 = vpack.c.b16 %v2766, %v2741
      %v4542 = vpack.c.b16 %v2767, %v2742
      %v4543 = vpack.c.b16 %v2768, %v2743
      %v4544 = vpack.c.b16 %v2769, %v2744
      %v4545 = vpack.c.b16 %v2770, %v2745
      %v4546 = vpack.c.b16 %v2771, %v2746
      %v4547 = vpack.c.b16 %v2772, %v2747
      %v4548 = vpack.c.b16 %v2773, %v2748
      %v4549 = vpack.c.b16 %v2774, %v2749
      %v4550 = vpack.c.b16 %v2775, %v2750
      %v4551 = vpack.c.b16 %v2776, %v2751
      %v4552 = vpack.c.b16 %v2777, %v2752
      %v4553 = vpack.c.b16 %v2778, %v2753
      %v4554 = vpack.c.b16 %v2779, %v2754
      %v4555 = vpack.c.b16 %v2780, %v2755
      %v4556 = vpack.c.b16 %v2781, %v2756
      %v4557 = vpack.c.b16 %v2782, %v2757
      %v4558 = vpack.c.b16 %v2783, %v2758
      %v4559 = vpack.c.b16 %v2784, %v2759
      %v4560 = vpack.c.b16 %v2785, %v2760
      %v4561 = vpack.c.b16 %v2786, %v2761
      %v4562 = vpack.c.b16 %v2787, %v2762
      %v4563 = vpack.c.b16 %v2788, %v2763
      %v4564 = vpack.c.b16 %v2814, %v2789
      %v4565 = vpack.c.b16 %v2815, %v2790
      %v4566 = vpack.c.b16 %v2816, %v2791
      %v4567 = vpack.c.b16 %v2817, %v2792
      %v4568 = vpack.c.b16 %v2818, %v2793
      %v4569 = vpack.c.b16 %v2819, %v2794
      %v4570 = vpack.c.b16 %v2820, %v2795
      %v4571 = vpack.c.b16 %v2821, %v2796
      %v4572 = vpack.c.b16 %v2822, %v2797
      %v4573 = vpack.c.b16 %v2823, %v2798
      %v4574 = vpack.c.b16 %v2824, %v2799
      %v4575 = vpack.c.b16 %v2825, %v2800
      %v4576 = vpack.c.b16 %v2826, %v2801
      %v4577 = vpack.c.b16 %v2827, %v2802
      %v4578 = vpack.c.b16 %v2828, %v2803
      %v4579 = vpack.c.b16 %v2829, %v2804
      %v4580 = vpack.c.b16 %v2830, %v2805
      %v4581 = vpack.c.b16 %v2831, %v2806
      %v4582 = vpack.c.b16 %v2832, %v2807
      %v4583 = vpack.c.b16 %v2833, %v2808
      %v4584 = vpack.c.b16 %v2834, %v2809
      %v4585 = vpack.c.b16 %v2835, %v2810
      %v4586 = vpack.c.b16 %v2836, %v2811
      %v4587 = vpack.c.b16 %v2837, %v2812
      %v4588 = vpack.c.b16 %v2838, %v2813
      %v4589 = vpack.c.b16 %v2864, %v2839
      %v4590 = vpack.c.b16 %v2865, %v2840
      %v4591 = vpack.c.b16 %v2866, %v2841
      %v4592 = vpack.c.b16 %v2867, %v2842
      %v4593 = vpack.c.b16 %v2868, %v2843
      %v4594 = vpack.c.b16 %v2869, %v2844
      %v4595 = vpack.c.b16 %v2870, %v2845
      %v4596 = vpack.c.b16 %v2871, %v2846
      %v4597 = vpack.c.b16 %v2872, %v2847
      %v4598 = vpack.c.b16 %v2873, %v2848
      %v4599 = vpack.c.b16 %v2874, %v2849
      %v4600 = vpack.c.b16 %v2875, %v2850
      %v4601 = vpack.c.b16 %v2876, %v2851
      %v4602 = vpack.c.b16 %v2877, %v2852
      %v4603 = vpack.c.b16 %v2878, %v2853
      %v4604 = vpack.c.b16 %v2879, %v2854
      %v4605 = vpack.c.b16 %v2880, %v2855
      %v4606 = vpack.c.b16 %v2881, %v2856
      %v4607 = vpack.c.b16 %v2882, %v2857
      %v4608 = vpack.c.b16 %v2883, %v2858
      %v4609 = vpack.c.b16 %v2884, %v2859
      %v4610 = vpack.c.b16 %v2885, %v2860
      %v4611 = vpack.c.b16 %v2886, %v2861
      %v4612 = vpack.c.b16 %v2887, %v2862
      %v4613 = vpack.c.b16 %v2888, %v2863
      %v4614 = vpack.c.b16 %v2914, %v2889
      %v4615 = vpack.c.b16 %v2915, %v2890
      %v4616 = vpack.c.b16 %v2916, %v2891
      %v4617 = vpack.c.b16 %v2917, %v2892
      %v4618 = vpack.c.b16 %v2918, %v2893
      %v4619 = vpack.c.b16 %v2919, %v2894
      %v4620 = vpack.c.b16 %v2920, %v2895
      %v4621 = vpack.c.b16 %v2921, %v2896
      %v4622 = vpack.c.b16 %v2922, %v2897
      %v4623 = vpack.c.b16 %v2923, %v2898
      %v4624 = vpack.c.b16 %v2924, %v2899
      %v4625 = vpack.c.b16 %v2925, %v2900
      %v4626 = vpack.c.b16 %v2926, %v2901
      %v4627 = vpack.c.b16 %v2927, %v2902
      %v4628 = vpack.c.b16 %v2928, %v2903
      %v4629 = vpack.c.b16 %v2929, %v2904
      %v4630 = vpack.c.b16 %v2930, %v2905
      %v4631 = vpack.c.b16 %v2931, %v2906
      %v4632 = vpack.c.b16 %v2932, %v2907
      %v4633 = vpack.c.b16 %v2933, %v2908
      %v4634 = vpack.c.b16 %v2934, %v2909
      %v4635 = vpack.c.b16 %v2935, %v2910
      %v4636 = vpack.c.b16 %v2936, %v2911
      %v4637 = vpack.c.b16 %v2937, %v2912
      %v4638 = vpack.c.b16 %v2938, %v2913
      %v4639 = vpack.c.b16 %v2964, %v2939
      %v4640 = vpack.c.b16 %v2965, %v2940
      %v4641 = vpack.c.b16 %v2966, %v2941
      %v4642 = vpack.c.b16 %v2967, %v2942
      %v4643 = vpack.c.b16 %v2968, %v2943
      %v4644 = vpack.c.b16 %v2969, %v2944
      %v4645 = vpack.c.b16 %v2970, %v2945
      %v4646 = vpack.c.b16 %v2971, %v2946
      %v4647 = vpack.c.b16 %v2972, %v2947
      %v4648 = vpack.c.b16 %v2973, %v2948
      %v4649 = vpack.c.b16 %v2974, %v2949
      %v4650 = vpack.c.b16 %v2975, %v2950
      %v4651 = vpack.c.b16 %v2976, %v2951
      %v4652 = vpack.c.b16 %v2977, %v2952
      %v4653 = vpack.c.b16 %v2978, %v2953
      %v4654 = vpack.c.b16 %v2979, %v2954
      %v4655 = vpack.c.b16 %v2980, %v2955
      %v4656 = vpack.c.b16 %v2981, %v2956
      %v4657 = vpack.c.b16 %v2982, %v2957
      %v4658 = vpack.c.b16 %v2983, %v2958
      %v4659 = vpack.c.b16 %v2984, %v2959
      %v4660 = vpack.c.b16 %v2985, %v2960
      %v4661 = vpack.c.b16 %v2986, %v2961
      %v4662 = vpack.c.b16 %v2987, %v2962
      %v4663 = vpack.c.b16 %v2988, %v2963
      %v4664 = vpack.c.b16 %v3014, %v2989
      %v4665 = vpack.c.b16 %v3015, %v2990
      %v4666 = vpack.c.b16 %v3016, %v2991
      %v4667 = vpack.c.b16 %v3017, %v2992
      %v4668 = vpack.c.b16 %v3018, %v2993
      %v4669 = vpack.c.b16 %v3019, %v2994
      %v4670 = vpack.c.b16 %v3020, %v2995
      %v4671 = vpack.c.b16 %v3021, %v2996
      %v4672 = vpack.c.b16 %v3022, %v2997
      %v4673 = vpack.c.b16 %v3023, %v2998
      %v4674 = vpack.c.b16 %v3024, %v2999
      %v4675 = vpack.c.b16 %v3025, %v3000
      %v4676 = vpack.c.b16 %v3026, %v3001
      %v4677 = vpack.c.b16 %v3027, %v3002
      %v4678 = vpack.c.b16 %v3028, %v3003
      %v4679 = vpack.c.b16 %v3029, %v3004
      %v4680 = vpack.c.b16 %v3030, %v3005
      %v4681 = vpack.c.b16 %v3031, %v3006
      %v4682 = vpack.c.b16 %v3032, %v3007
      %v4683 = vpack.c.b16 %v3033, %v3008
      %v4684 = vpack.c.b16 %v3034, %v3009
      %v4685 = vpack.c.b16 %v3035, %v3010
      %v4686 = vpack.c.b16 %v3036, %v3011
      %v4687 = vpack.c.b16 %v3037, %v3012
      %v4688 = vpack.c.b16 %v3038, %v3013
      %v4689 = vpack.c.b16 %v3064, %v3039
      %v4690 = vpack.c.b16 %v3065, %v3040
      %v4691 = vpack.c.b16 %v3066, %v3041
      %v4692 = vpack.c.b16 %v3067, %v3042
      %v4693 = vpack.c.b16 %v3068, %v3043
      %v4694 = vpack.c.b16 %v3069, %v3044
      %v4695 = vpack.c.b16 %v3070, %v3045
      %v4696 = vpack.c.b16 %v3071, %v3046
      %v4697 = vpack.c.b16 %v3072, %v3047
      %v4698 = vpack.c.b16 %v3073, %v3048
      %v4699 = vpack.c.b16 %v3074, %v3049
      %v4700 = vpack.c.b16 %v3075, %v3050
      %v4701 = vpack.c.b16 %v3076, %v3051
      %v4702 = vpack.c.b16 %v3077, %v3052
      %v4703 = vpack.c.b16 %v3078, %v3053
      %v4704 = vpack.c.b16 %v3079, %v3054
      %v4705 = vpack.c.b16 %v3080, %v3055
      %v4706 = vpack.c.b16 %v3081, %v3056
      %v4707 = vpack.c.b16 %v3082, %v3057
      %v4708 = vpack.c.b16 %v3083, %v3058
      %v4709 = vpack.c.b16 %v3084, %v3059
      %v4710 = vpack.c.b16 %v3085, %v3060
      %v4711 = vpack.c.b16 %v3086, %v3061
      %v4712 = vpack.c.b16 %v3087, %v3062
      %v4713 = vpack.c.b16 %v3088, %v3063
      %v4714 = vpack.c.b16 %v3114, %v3089
      %v4715 = vpack.c.b16 %v3115, %v3090
      %v4716 = vpack.c.b16 %v3116, %v3091
      %v4717 = vpack.c.b16 %v3117, %v3092
      %v4718 = vpack.c.b16 %v3118, %v3093
      %v4719 = vpack.c.b16 %v3119, %v3094
      %v4720 = vpack.c.b16 %v3120, %v3095
      %v4721 = vpack.c.b16 %v3121, %v3096
      %v4722 = vpack.c.b16 %v3122, %v3097
      %v4723 = vpack.c.b16 %v3123, %v3098
      %v4724 = vpack.c.b16 %v3124, %v3099
      %v4725 = vpack.c.b16 %v3125, %v3100
      %v4726 = vpack.c.b16 %v3126, %v3101
      %v4727 = vpack.c.b16 %v3127, %v3102
      %v4728 = vpack.c.b16 %v3128, %v3103
      %v4729 = vpack.c.b16 %v3129, %v3104
      %v4730 = vpack.c.b16 %v3130, %v3105
      %v4731 = vpack.c.b16 %v3131, %v3106
      %v4732 = vpack.c.b16 %v3132, %v3107
      %v4733 = vpack.c.b16 %v3133, %v3108
      %v4734 = vpack.c.b16 %v3134, %v3109
      %v4735 = vpack.c.b16 %v3135, %v3110
      %v4736 = vpack.c.b16 %v3136, %v3111
      %v4737 = vpack.c.b16 %v3137, %v3112
      %v4738 = vpack.c.b16 %v3138, %v3113
      %v4739 = vpack.c.b16 %v3164, %v3139
      %v4740 = vpack.c.b16 %v3165, %v3140
      %v4741 = vpack.c.b16 %v3166, %v3141
      %v4742 = vpack.c.b16 %v3167, %v3142
      %v4743 = vpack.c.b16 %v3168, %v3143
      %v4744 = vpack.c.b16 %v3169, %v3144
      %v4745 = vpack.c.b16 %v3170, %v3145
      %v4746 = vpack.c.b16 %v3171, %v3146
      %v4747 = vpack.c.b16 %v3172, %v3147
      %v4748 = vpack.c.b16 %v3173, %v3148
      %v4749 = vpack.c.b16 %v3174, %v3149
      %v4750 = vpack.c.b16 %v3175, %v3150
      %v4751 = vpack.c.b16 %v3176, %v3151
      %v4752 = vpack.c.b16 %v3177, %v3152
      %v4753 = vpack.c.b16 %v3178, %v3153
      %v4754 = vpack.c.b16 %v3179, %v3154
      %v4755 = vpack.c.b16 %v3180, %v3155
      %v4756 = vpack.c.b16 %v3181, %v3156
      %v4757 = vpack.c.b16 %v3182, %v3157
      %v4758 = vpack.c.b16 %v3183, %v3158
      %v4759 = vpack.c.b16 %v3184, %v3159
      %v4760 = vpack.c.b16 %v3185, %v3160
      %v4761 = vpack.c.b16 %v3186, %v3161
      %v4762 = vpack.c.b16 %v3187, %v3162
      %v4763 = vpack.c.b16 %v3188, %v3163
      %v4764 = vpack.c.b16 %v3214, %v3189
      %v4765 = vpack.c.b16 %v3215, %v3190
      %v4766 = vpack.c.b16 %v3216, %v3191
      %v4767 = vpack.c.b16 %v3217, %v3192
      %v4768 = vpack.c.b16 %v3218, %v3193
      %v4769 = vpack.c.b16 %v3219, %v3194
      %v4770 = vpack.c.b16 %v3220, %v3195
      %v4771 = vpack.c.b16 %v3221, %v3196
      %v4772 = vpack.c.b16 %v3222, %v3197
      %v4773 = vpack.c.b16 %v3223, %v3198
      %v4774 = vpack.c.b16 %v3224, %v3199
      %v4775 = vpack.c.b16 %v3225, %v3200
      %v4776 = vpack.c.b16 %v3226, %v3201
      %v4777 = vpack.c.b16 %v3227, %v3202
      %v4778 = vpack.c.b16 %v3228, %v3203
      %v4779 = vpack.c.b16 %v3229, %v3204
      %v4780 = vpack.c.b16 %v3230, %v3205
      %v4781 = vpack.c.b16 %v3231, %v3206
      %v4782 = vpack.c.b16 %v3232, %v3207
      %v4783 = vpack.c.b16 %v3233, %v3208
      %v4784 = vpack.c.b16 %v3234, %v3209
      %v4785 = vpack.c.b16 %v3235, %v3210
      %v4786 = vpack.c.b16 %v3236, %v3211
      %v4787 = vpack.c.b16 %v3237, %v3212
      %v4788 = vpack.c.b16 %v3238, %v3213
      %v4789 = vpack.c.b16 %v3264, %v3239
      %v4790 = vpack.c.b16 %v3265, %v3240
      %v4791 = vpack.c.b16 %v3266, %v3241
      %v4792 = vpack.c.b16 %v3267, %v3242
      %v4793 = vpack.c.b16 %v3268, %v3243
      %v4794 = vpack.c.b16 %v3269, %v3244
      %v4795 = vpack.c.b16 %v3270, %v3245
      %v4796 = vpack.c.b16 %v3271, %v3246
      %v4797 = vpack.c.b16 %v3272, %v3247
      %v4798 = vpack.c.b16 %v3273, %v3248
      %v4799 = vpack.c.b16 %v3274, %v3249
      %v4800 = vpack.c.b16 %v3275, %v3250
      %v4801 = vpack.c.b16 %v3276, %v3251
      %v4802 = vpack.c.b16 %v3277, %v3252
      %v4803 = vpack.c.b16 %v3278, %v3253
      %v4804 = vpack.c.b16 %v3279, %v3254
      %v4805 = vpack.c.b16 %v3280, %v3255
      %v4806 = vpack.c.b16 %v3281, %v3256
      %v4807 = vpack.c.b16 %v3282, %v3257
      %v4808 = vpack.c.b16 %v3283, %v3258
      %v4809 = vpack.c.b16 %v3284, %v3259
      %v4810 = vpack.c.b16 %v3285, %v3260
      %v4811 = vpack.c.b16 %v3286, %v3261
      %v4812 = vpack.c.b16 %v3287, %v3262
      %v4813 = vpack.c.b16 %v3288, %v3263
      %v4814 = vpack.c.b16 %v3314, %v3289
      %v4815 = vpack.c.b16 %v3315, %v3290
      %v4816 = vpack.c.b16 %v3316, %v3291
      %v4817 = vpack.c.b16 %v3317, %v3292
      %v4818 = vpack.c.b16 %v3318, %v3293
      %v4819 = vpack.c.b16 %v3319, %v3294
      %v4820 = vpack.c.b16 %v3320, %v3295
      %v4821 = vpack.c.b16 %v3321, %v3296
      %v4822 = vpack.c.b16 %v3322, %v3297
      %v4823 = vpack.c.b16 %v3323, %v3298
      %v4824 = vpack.c.b16 %v3324, %v3299
      %v4825 = vpack.c.b16 %v3325, %v3300
      %v4826 = vpack.c.b16 %v3326, %v3301
      %v4827 = vpack.c.b16 %v3327, %v3302
      %v4828 = vpack.c.b16 %v3328, %v3303
      %v4829 = vpack.c.b16 %v3329, %v3304
      %v4830 = vpack.c.b16 %v3330, %v3305
      %v4831 = vpack.c.b16 %v3331, %v3306
      %v4832 = vpack.c.b16 %v3332, %v3307
      %v4833 = vpack.c.b16 %v3333, %v3308
      %v4834 = vpack.c.b16 %v3334, %v3309
      %v4835 = vpack.c.b16 %v3335, %v3310
      %v4836 = vpack.c.b16 %v3336, %v3311
      %v4837 = vpack.c.b16 %v3337, %v3312
      %v4838 = vpack.c.b16 %v3338, %v3313
      %v4839 = vpack.c.b16 %v3364, %v3339
      %v4840 = vpack.c.b16 %v3365, %v3340
      %v4841 = vpack.c.b16 %v3366, %v3341
      %v4842 = vpack.c.b16 %v3367, %v3342
      %v4843 = vpack.c.b16 %v3368, %v3343
      %v4844 = vpack.c.b16 %v3369, %v3344
      %v4845 = vpack.c.b16 %v3370, %v3345
      %v4846 = vpack.c.b16 %v3371, %v3346
      %v4847 = vpack.c.b16 %v3372, %v3347
      %v4848 = vpack.c.b16 %v3373, %v3348
      %v4849 = vpack.c.b16 %v3374, %v3349
      %v4850 = vpack.c.b16 %v3375, %v3350
      %v4851 = vpack.c.b16 %v3376, %v3351
      %v4852 = vpack.c.b16 %v3377, %v3352
      %v4853 = vpack.c.b16 %v3378, %v3353
      %v4854 = vpack.c.b16 %v3379, %v3354
      %v4855 = vpack.c.b16 %v3380, %v3355
      %v4856 = vpack.c.b16 %v3381, %v3356
      %v4857 = vpack.c.b16 %v3382, %v3357
      %v4858 = vpack.c.b16 %v3383, %v3358
      %v4859 = vpack.c.b16 %v3384, %v3359
      %v4860 = vpack.c.b16 %v3385, %v3360
      %v4861 = vpack.c.b16 %v3386, %v3361
      %v4862 = vpack.c.b16 %v3387, %v3362
      %v4863 = vpack.c.b16 %v3388, %v3363
      %v4864 = vpack.c.b16 %v3414, %v3389
      %v4865 = vpack.c.b16 %v3415, %v3390
      %v4866 = vpack.c.b16 %v3416, %v3391
      %v4867 = vpack.c.b16 %v3417, %v3392
      %v4868 = vpack.c.b16 %v3418, %v3393
      %v4869 = vpack.c.b16 %v3419, %v3394
      %v4870 = vpack.c.b16 %v3420, %v3395
      %v4871 = vpack.c.b16 %v3421, %v3396
      %v4872 = vpack.c.b16 %v3422, %v3397
      %v4873 = vpack.c.b16 %v3423, %v3398
      %v4874 = vpack.c.b16 %v3424, %v3399
      %v4875 = vpack.c.b16 %v3425, %v3400
      %v4876 = vpack.c.b16 %v3426, %v3401
      %v4877 = vpack.c.b16 %v3427, %v3402
      %v4878 = vpack.c.b16 %v3428, %v3403
      %v4879 = vpack.c.b16 %v3429, %v3404
      %v4880 = vpack.c.b16 %v3430, %v3405
      %v4881 = vpack.c.b16 %v3431, %v3406
      %v4882 = vpack.c.b16 %v3432, %v3407
      %v4883 = vpack.c.b16 %v3433, %v3408
      %v4884 = vpack.c.b16 %v3434, %v3409
      %v4885 = vpack.c.b16 %v3435, %v3410
      %v4886 = vpack.c.b16 %v3436, %v3411
      %v4887 = vpack.c.b16 %v3437, %v3412
      %v4888 = vpack.c.b16 %v3438, %v3413
      %v4889 = vpack.c.b16 %v3464, %v3439
      %v4890 = vpack.c.b16 %v3465, %v3440
      %v4891 = vpack.c.b16 %v3466, %v3441
      %v4892 = vpack.c.b16 %v3467, %v3442
      %v4893 = vpack.c.b16 %v3468, %v3443
      %v4894 = vpack.c.b16 %v3469, %v3444
      %v4895 = vpack.c.b16 %v3470, %v3445
      %v4896 = vpack.c.b16 %v3471, %v3446
      %v4897 = vpack.c.b16 %v3472, %v3447
      %v4898 = vpack.c.b16 %v3473, %v3448
      %v4899 = vpack.c.b16 %v3474, %v3449
      %v4900 = vpack.c.b16 %v3475, %v3450
      %v4901 = vpack.c.b16 %v3476, %v3451
      %v4902 = vpack.c.b16 %v3477, %v3452
      %v4903 = vpack.c.b16 %v3478, %v3453
      %v4904 = vpack.c.b16 %v3479, %v3454
      %v4905 = vpack.c.b16 %v3480, %v3455
      %v4906 = vpack.c.b16 %v3481, %v3456
      %v4907 = vpack.c.b16 %v3482, %v3457
      %v4908 = vpack.c.b16 %v3483, %v3458
      %v4909 = vpack.c.b16 %v3484, %v3459
      %v4910 = vpack.c.b16 %v3485, %v3460
      %v4911 = vpack.c.b16 %v3486, %v3461
      %v4912 = vpack.c.b16 %v3487, %v3462
      %v4913 = vpack.c.b16 %v3488, %v3463
      %v4914 = vpack.c.b16 %v3514, %v3489
      %v4915 = vpack.c.b16 %v3515, %v3490
      %v4916 = vpack.c.b16 %v3516, %v3491
      %v4917 = vpack.c.b16 %v3517, %v3492
      %v4918 = vpack.c.b16 %v3518, %v3493
      %v4919 = vpack.c.b16 %v3519, %v3494
      %v4920 = vpack.c.b16 %v3520, %v3495
      %v4921 = vpack.c.b16 %v3521, %v3496
      %v4922 = vpack.c.b16 %v3522, %v3497
      %v4923 = vpack.c.b16 %v3523, %v3498
      %v4924 = vpack.c.b16 %v3524, %v3499
      %v4925 = vpack.c.b16 %v3525, %v3500
      %v4926 = vpack.c.b16 %v3526, %v3501
      %v4927 = vpack.c.b16 %v3527, %v3502
      %v4928 = vpack.c.b16 %v3528, %v3503
      %v4929 = vpack.c.b16 %v3529, %v3504
      %v4930 = vpack.c.b16 %v3530, %v3505
      %v4931 = vpack.c.b16 %v3531, %v3506
      %v4932 = vpack.c.b16 %v3532, %v3507
      %v4933 = vpack.c.b16 %v3533, %v3508
      %v4934 = vpack.c.b16 %v3534, %v3509
      %v4935 = vpack.c.b16 %v3535, %v3510
      %v4936 = vpack.c.b16 %v3536, %v3511
      %v4937 = vpack.c.b16 %v3537, %v3512
      %v4938 = vpack.c.b16 %v3538, %v3513
      %v4939 = vpack.c.b16 %v3564, %v3539
      %v4940 = vpack.c.b16 %v3565, %v3540
      %v4941 = vpack.c.b16 %v3566, %v3541
      %v4942 = vpack.c.b16 %v3567, %v3542
      %v4943 = vpack.c.b16 %v3568, %v3543
      %v4944 = vpack.c.b16 %v3569, %v3544
      %v4945 = vpack.c.b16 %v3570, %v3545
      %v4946 = vpack.c.b16 %v3571, %v3546
      %v4947 = vpack.c.b16 %v3572, %v3547
      %v4948 = vpack.c.b16 %v3573, %v3548
      %v4949 = vpack.c.b16 %v3574, %v3549
      %v4950 = vpack.c.b16 %v3575, %v3550
      %v4951 = vpack.c.b16 %v3576, %v3551
      %v4952 = vpack.c.b16 %v3577, %v3552
      %v4953 = vpack.c.b16 %v3578, %v3553
      %v4954 = vpack.c.b16 %v3579, %v3554
      %v4955 = vpack.c.b16 %v3580, %v3555
      %v4956 = vpack.c.b16 %v3581, %v3556
      %v4957 = vpack.c.b16 %v3582, %v3557
      %v4958 = vpack.c.b16 %v3583, %v3558
      %v4959 = vpack.c.b16 %v3584, %v3559
      %v4960 = vpack.c.b16 %v3585, %v3560
      %v4961 = vpack.c.b16 %v3586, %v3561
      %v4962 = vpack.c.b16 %v3587, %v3562
      %v4963 = vpack.c.b16 %v3588, %v3563
      %v4964 = vpack.c.b16 %v3614, %v3589
      %v4965 = vpack.c.b16 %v3615, %v3590
      %v4966 = vpack.c.b16 %v3616, %v3591
      %v4967 = vpack.c.b16 %v3617, %v3592
      %v4968 = vpack.c.b16 %v3618, %v3593
      %v4969 = vpack.c.b16 %v3619, %v3594
      %v4970 = vpack.c.b16 %v3620, %v3595
      %v4971 = vpack.c.b16 %v3621, %v3596
      %v4972 = vpack.c.b16 %v3622, %v3597
      %v4973 = vpack.c.b16 %v3623, %v3598
      %v4974 = vpack.c.b16 %v3624, %v3599
      %v4975 = vpack.c.b16 %v3625, %v3600
      %v4976 = vpack.c.b16 %v3626, %v3601
      %v4977 = vpack.c.b16 %v3627, %v3602
      %v4978 = vpack.c.b16 %v3628, %v3603
      %v4979 = vpack.c.b16 %v3629, %v3604
      %v4980 = vpack.c.b16 %v3630, %v3605
      %v4981 = vpack.c.b16 %v3631, %v3606
      %v4982 = vpack.c.b16 %v3632, %v3607
      %v4983 = vpack.c.b16 %v3633, %v3608
      %v4984 = vpack.c.b16 %v3634, %v3609
      %v4985 = vpack.c.b16 %v3635, %v3610
      %v4986 = vpack.c.b16 %v3636, %v3611
      %v4987 = vpack.c.b16 %v3637, %v3612
      %v4988 = vpack.c.b16 %v3638, %v3613
      %v4989 = vpack.c.b16 %v3664, %v3639
      %v4990 = vpack.c.b16 %v3665, %v3640
      %v4991 = vpack.c.b16 %v3666, %v3641
      %v4992 = vpack.c.b16 %v3667, %v3642
      %v4993 = vpack.c.b16 %v3668, %v3643
      %v4994 = vpack.c.b16 %v3669, %v3644
      %v4995 = vpack.c.b16 %v3670, %v3645
      %v4996 = vpack.c.b16 %v3671, %v3646
      %v4997 = vpack.c.b16 %v3672, %v3647
      %v4998 = vpack.c.b16 %v3673, %v3648
      %v4999 = vpack.c.b16 %v3674, %v3649
      %v5000 = vpack.c.b16 %v3675, %v3650
      %v5001 = vpack.c.b16 %v3676, %v3651
      %v5002 = vpack.c.b16 %v3677, %v3652
      %v5003 = vpack.c.b16 %v3678, %v3653
      %v5004 = vpack.c.b16 %v3679, %v3654
      %v5005 = vpack.c.b16 %v3680, %v3655
      %v5006 = vpack.c.b16 %v3681, %v3656
      %v5007 = vpack.c.b16 %v3682, %v3657
      %v5008 = vpack.c.b16 %v3683, %v3658
      %v5009 = vpack.c.b16 %v3684, %v3659
      %v5010 = vpack.c.b16 %v3685, %v3660
      %v5011 = vpack.c.b16 %v3686, %v3661
      %v5012 = vpack.c.b16 %v3687, %v3662
      %v5013 = vpack.c.b16 %v3688, %v3663
      %v5014 = vpack.c.b16 %v3714, %v3689
      %v5015 = vpack.c.b16 %v3715, %v3690
      %v5016 = vpack.c.b16 %v3716, %v3691
      %v5017 = vpack.c.b16 %v3717, %v3692
      %v5018 = vpack.c.b16 %v3718, %v3693
      %v5019 = vpack.c.b16 %v3719, %v3694
      %v5020 = vpack.c.b16 %v3720, %v3695
      %v5021 = vpack.c.b16 %v3721, %v3696
      %v5022 = vpack.c.b16 %v3722, %v3697
      %v5023 = vpack.c.b16 %v3723, %v3698
      %v5024 = vpack.c.b16 %v3724, %v3699
      %v5025 = vpack.c.b16 %v3725, %v3700
      %v5026 = vpack.c.b16 %v3726, %v3701
      %v5027 = vpack.c.b16 %v3727, %v3702
      %v5028 = vpack.c.b16 %v3728, %v3703
      %v5029 = vpack.c.b16 %v3729, %v3704
      %v5030 = vpack.c.b16 %v3730, %v3705
      %v5031 = vpack.c.b16 %v3731, %v3706
      %v5032 = vpack.c.b16 %v3732, %v3707
      %v5033 = vpack.c.b16 %v3733, %v3708
      %v5034 = vpack.c.b16 %v3734, %v3709
      %v5035 = vpack.c.b16 %v3735, %v3710
      %v5036 = vpack.c.b16 %v3736, %v3711
      %v5037 = vpack.c.b16 %v3737, %v3712
      %v5038 = vpack.c.b16 %v3738, %v3713
      %v5039 = vpack.c.b16 %v3764, %v3739
      %v5040 = vpack.c.b16 %v3765, %v3740
      %v5041 = vpack.c.b16 %v3766, %v3741
      %v5042 = vpack.c.b16 %v3767, %v3742
      %v5043 = vpack.c.b16 %v3768, %v3743
      %v5044 = vpack.c.b16 %v3769, %v3744
      %v5045 = vpack.c.b16 %v3770, %v3745
      %v5046 = vpack.c.b16 %v3771, %v3746
      %v5047 = vpack.c.b16 %v3772, %v3747
      %v5048 = vpack.c.b16 %v3773, %v3748
      %v5049 = vpack.c.b16 %v3774, %v3749
      %v5050 = vpack.c.b16 %v3775, %v3750
      %v5051 = vpack.c.b16 %v3776, %v3751
      %v5052 = vpack.c.b16 %v3777, %v3752
      %v5053 = vpack.c.b16 %v3778, %v3753
      %v5054 = vpack.c.b16 %v3779, %v3754
      %v5055 = vpack.c.b16 %v3780, %v3755
      %v5056 = vpack.c.b16 %v3781, %v3756
      %v5057 = vpack.c.b16 %v3782, %v3757
      %v5058 = vpack.c.b16 %v3783, %v3758
      %v5059 = vpack.c.b16 %v3784, %v3759
      %v5060 = vpack.c.b16 %v3785, %v3760
      %v5061 = vpack.c.b16 %v3786, %v3761
      %v5062 = vpack.c.b16 %v3787, %v3762
      %v5063 = vpack.c.b16 %v3788, %v3763
      %v5064 = vpack.c.b16 %v3814, %v3789
      %v5065 = vpack.c.b16 %v3815, %v3790
      %v5066 = vpack.c.b16 %v3816, %v3791
      %v5067 = vpack.c.b16 %v3817, %v3792
      %v5068 = vpack.c.b16 %v3818, %v3793
      %v5069 = vpack.c.b16 %v3819, %v3794
      %v5070 = vpack.c.b16 %v3820, %v3795
      %v5071 = vpack.c.b16 %v3821, %v3796
      %v5072 = vpack.c.b16 %v3822, %v3797
      %v5073 = vpack.c.b16 %v3823, %v3798
      %v5074 = vpack.c.b16 %v3824, %v3799
      %v5075 = vpack.c.b16 %v3825, %v3800
      %v5076 = vpack.c.b16 %v3826, %v3801
      %v5077 = vpack.c.b16 %v3827, %v3802
      %v5078 = vpack.c.b16 %v3828, %v3803
      %v5079 = vpack.c.b16 %v3829, %v3804
      %v5080 = vpack.c.b16 %v3830, %v3805
      %v5081 = vpack.c.b16 %v3831, %v3806
      %v5082 = vpack.c.b16 %v3832, %v3807
      %v5083 = vpack.c.b16 %v3833, %v3808
      %v5084 = vpack.c.b16 %v3834, %v3809
      %v5085 = vpack.c.b16 %v3835, %v3810
      %v5086 = vpack.c.b16 %v3836, %v3811
      %v5087 = vpack.c.b16 %v3837, %v3812
      %v5088 = vpack.c.b16 %v3838, %v3813
      %v5089 = vpack.c.b16 %v3864, %v3839
      %v5090 = vpack.c.b16 %v3865, %v3840
      %v5091 = vpack.c.b16 %v3866, %v3841
      %v5092 = vpack.c.b16 %v3867, %v3842
      %v5093 = vpack.c.b16 %v3868, %v3843
      %v5094 = vpack.c.b16 %v3869, %v3844
      %v5095 = vpack.c.b16 %v3870, %v3845
      %v5096 = vpack.c.b16 %v3871, %v3846
      %v5097 = vpack.c.b16 %v3872, %v3847
      %v5098 = vpack.c.b16 %v3873, %v3848
      %v5099 = vpack.c.b16 %v3874, %v3849
      %v5100 = vpack.c.b16 %v3875, %v3850
      %v5101 = vpack.c.b16 %v3876, %v3851
      %v5102 = vpack.c.b16 %v3877, %v3852
      %v5103 = vpack.c.b16 %v3878, %v3853
      %v5104 = vpack.c.b16 %v3879, %v3854
      %v5105 = vpack.c.b16 %v3880, %v3855
      %v5106 = vpack.c.b16 %v3881, %v3856
      %v5107 = vpack.c.b16 %v3882, %v3857
      %v5108 = vpack.c.b16 %v3883, %v3858
      %v5109 = vpack.c.b16 %v3884, %v3859
      %v5110 = vpack.c.b16 %v3885, %v3860
      %v5111 = vpack.c.b16 %v3886, %v3861
      %v5112 = vpack.c.b16 %v3887, %v3862
      %v5113 = vpack.c.b16 %v3888, %v3863
      %v5114 = vpack.c.b16 %v3914, %v3889
      %v5115 = vpack.c.b16 %v3915, %v3890
      %v5116 = vpack.c.b16 %v3916, %v3891
      %v5117 = vpack.c.b16 %v3917, %v3892
      %v5118 = vpack.c.b16 %v3918, %v3893
      %v5119 = vpack.c.b16 %v3919, %v3894
      %v5120 = vpack.c.b16 %v3920, %v3895
      %v5121 = vpack.c.b16 %v3921, %v3896
      %v5122 = vpack.c.b16 %v3922, %v3897
      %v5123 = vpack.c.b16 %v3923, %v3898
      %v5124 = vpack.c.b16 %v3924, %v3899
      %v5125 = vpack.c.b16 %v3925, %v3900
      %v5126 = vpack.c.b16 %v3926, %v3901
      %v5127 = vpack.c.b16 %v3927, %v3902
      %v5128 = vpack.c.b16 %v3928, %v3903
      %v5129 = vpack.c.b16 %v3929, %v3904
      %v5130 = vpack.c.b16 %v3930, %v3905
      %v5131 = vpack.c.b16 %v3931, %v3906
      %v5132 = vpack.c.b16 %v3932, %v3907
      %v5133 = vpack.c.b16 %v3933, %v3908
      %v5134 = vpack.c.b16 %v3934, %v3909
      %v5135 = vpack.c.b16 %v3935, %v3910
      %v5136 = vpack.c.b16 %v3936, %v3911
      %v5137 = vpack.c.b16 %v3937, %v3912
      %v5138 = vpack.c.b16 %v3938, %v3913
      %v5139 = vpack.c.b16 %v3964, %v3939
      %v5140 = vpack.c.b16 %v3965, %v3940
      %v5141 = vpack.c.b16 %v3966, %v3941
      %v5142 = vpack.c.b16 %v3967, %v3942
      %v5143 = vpack.c.b16 %v3968, %v3943
      %v5144 = vpack.c.b16 %v3969, %v3944
      %v5145 = vpack.c.b16 %v3970, %v3945
      %v5146 = vpack.c.b16 %v3971, %v3946
      %v5147 = vpack.c.b16 %v3972, %v3947
      %v5148 = vpack.c.b16 %v3973, %v3948
      %v5149 = vpack.c.b16 %v3974, %v3949
      %v5150 = vpack.c.b16 %v3975, %v3950
      %v5151 = vpack.c.b16 %v3976, %v3951
      %v5152 = vpack.c.b16 %v3977, %v3952
      %v5153 = vpack.c.b16 %v3978, %v3953
      %v5154 = vpack.c.b16 %v3979, %v3954
      %v5155 = vpack.c.b16 %v3980, %v3955
      %v5156 = vpack.c.b16 %v3981, %v3956
      %v5157 = vpack.c.b16 %v3982, %v3957
      %v5158 = vpack.c.b16 %v3983, %v3958
      %v5159 = vpack.c.b16 %v3984, %v3959
      %v5160 = vpack.c.b16 %v3985, %v3960
      %v5161 = vpack.c.b16 %v3986, %v3961
      %v5162 = vpack.c.b16 %v3987, %v3962
      %v5163 = vpack.c.b16 %v3988, %v3963
      %v5164 = vpack.c.b16 %v4014, %v3989
      %v5165 = vpack.c.b16 %v4015, %v3990
      %v5166 = vpack.c.b16 %v4016, %v3991
      %v5167 = vpack.c.b16 %v4017, %v3992
      %v5168 = vpack.c.b16 %v4018, %v3993
      %v5169 = vpack.c.b16 %v4019, %v3994
      %v5170 = vpack.c.b16 %v4020, %v3995
      %v5171 = vpack.c.b16 %v4021, %v3996
      %v5172 = vpack.c.b16 %v4022, %v3997
      %v5173 = vpack.c.b16 %v4023, %v3998
      %v5174 = vpack.c.b16 %v4024, %v3999
      %v5175 = vpack.c.b16 %v4025, %v4000
      %v5176 = vpack.c.b16 %v4026, %v4001
      %v5177 = vpack.c.b16 %v4027, %v4002
      %v5178 = vpack.c.b16 %v4028, %v4003
      %v5179 = vpack.c.b16 %v4029, %v4004
      %v5180 = vpack.c.b16 %v4030, %v4005
      %v5181 = vpack.c.b16 %v4031, %v4006
      %v5182 = vpack.c.b16 %v4032, %v4007
      %v5183 = vpack.c.b16 %v4033, %v4008
      %v5184 = vpack.c.b16 %v4034, %v4009
      %v5185 = vpack.c.b16 %v4035, %v4010
      %v5186 = vpack.c.b16 %v4036, %v4011
      %v5187 = vpack.c.b16 %v4037, %v4012
      %v5188 = vpack.c.b16 %v4038, %v4013
      %v5189 = vpack.c.b16 %v4064, %v4039
      %v5190 = vpack.c.b16 %v4065, %v4040
      %v5191 = vpack.c.b16 %v4066, %v4041
      %v5192 = vpack.c.b16 %v4067, %v4042
      %v5193 = vpack.c.b16 %v4068, %v4043
      %v5194 = vpack.c.b16 %v4069, %v4044
      %v5195 = vpack.c.b16 %v4070, %v4045
      %v5196 = vpack.c.b16 %v4071, %v4046
      %v5197 = vpack.c.b16 %v4072, %v4047
      %v5198 = vpack.c.b16 %v4073, %v4048
      %v5199 = vpack.c.b16 %v4074, %v4049
      %v5200 = vpack.c.b16 %v4075, %v4050
      %v5201 = vpack.c.b16 %v4076, %v4051
      %v5202 = vpack.c.b16 %v4077, %v4052
      %v5203 = vpack.c.b16 %v4078, %v4053
      %v5204 = vpack.c.b16 %v4079, %v4054
      %v5205 = vpack.c.b16 %v4080, %v4055
      %v5206 = vpack.c.b16 %v4081, %v4056
      %v5207 = vpack.c.b16 %v4082, %v4057
      %v5208 = vpack.c.b16 %v4083, %v4058
      %v5209 = vpack.c.b16 %v4084, %v4059
      %v5210 = vpack.c.b16 %v4085, %v4060
      %v5211 = vpack.c.b16 %v4086, %v4061
      %v5212 = vpack.c.b16 %v4087, %v4062
      %v5213 = vpack.c.b16 %v4088, %v4063
      %v5214 = vpack.c.b16 %v4114, %v4089
      %v5215 = vpack.c.b16 %v4115, %v4090
      %v5216 = vpack.c.b16 %v4116, %v4091
      %v5217 = vpack.c.b16 %v4117, %v4092
      %v5218 = vpack.c.b16 %v4118, %v4093
      %v5219 = vpack.c.b16 %v4119, %v4094
      %v5220 = vpack.c.b16 %v4120, %v4095
      %v5221 = vpack.c.b16 %v4121, %v4096
      %v5222 = vpack.c.b16 %v4122, %v4097
      %v5223 = vpack.c.b16 %v4123, %v4098
      %v5224 = vpack.c.b16 %v4124, %v4099
      %v5225 = vpack.c.b16 %v4125, %v4100
      %v5226 = vpack.c.b16 %v4126, %v4101
      %v5227 = vpack.c.b16 %v4127, %v4102
      %v5228 = vpack.c.b16 %v4128, %v4103
      %v5229 = vpack.c.b16 %v4129, %v4104
      %v5230 = vpack.c.b16 %v4130, %v4105
      %v5231 = vpack.c.b16 %v4131, %v4106
      %v5232 = vpack.c.b16 %v4132, %v4107
      %v5233 = vpack.c.b16 %v4133, %v4108
      %v5234 = vpack.c.b16 %v4134, %v4109
      %v5235 = vpack.c.b16 %v4135, %v4110
      %v5236 = vpack.c.b16 %v4136, %v4111
      %v5237 = vpack.c.b16 %v4137, %v4112
      %v5238 = vpack.c.b16 %v4138, %v4113
      %v5239 = vpack.c.b16 %v4164, %v4139
      %v5240 = vpack.c.b16 %v4165, %v4140
      %v5241 = vpack.c.b16 %v4166, %v4141
      %v5242 = vpack.c.b16 %v4167, %v4142
      %v5243 = vpack.c.b16 %v4168, %v4143
      %v5244 = vpack.c.b16 %v4169, %v4144
      %v5245 = vpack.c.b16 %v4170, %v4145
      %v5246 = vpack.c.b16 %v4171, %v4146
      %v5247 = vpack.c.b16 %v4172, %v4147
      %v5248 = vpack.c.b16 %v4173, %v4148
      %v5249 = vpack.c.b16 %v4174, %v4149
      %v5250 = vpack.c.b16 %v4175, %v4150
      %v5251 = vpack.c.b16 %v4176, %v4151
      %v5252 = vpack.c.b16 %v4177, %v4152
      %v5253 = vpack.c.b16 %v4178, %v4153
      %v5254 = vpack.c.b16 %v4179, %v4154
      %v5255 = vpack.c.b16 %v4180, %v4155
      %v5256 = vpack.c.b16 %v4181, %v4156
      %v5257 = vpack.c.b16 %v4182, %v4157
      %v5258 = vpack.c.b16 %v4183, %v4158
      %v5259 = vpack.c.b16 %v4184, %v4159
      %v5260 = vpack.c.b16 %v4185, %v4160
      %v5261 = vpack.c.b16 %v4186, %v4161
      %v5262 = vpack.c.b16 %v4187, %v4162
      %v5263 = vpack.c.b16 %v4188, %v4163
      %v5264 = vpack.c.b16 %v4214, %v4189
      %v5265 = vpack.c.b16 %v4215, %v4190
      %v5266 = vpack.c.b16 %v4216, %v4191
      %v5267 = vpack.c.b16 %v4217, %v4192
      %v5268 = vpack.c.b16 %v4218, %v4193
      %v5269 = vpack.c.b16 %v4219, %v4194
      %v5270 = vpack.c.b16 %v4220, %v4195
      %v5271 = vpack.c.b16 %v4221, %v4196
      %v5272 = vpack.c.b16 %v4222, %v4197
      %v5273 = vpack.c.b16 %v4223, %v4198
      %v5274 = vpack.c.b16 %v4224, %v4199
      %v5275 = vpack.c.b16 %v4225, %v4200
      %v5276 = vpack.c.b16 %v4226, %v4201
      %v5277 = vpack.c.b16 %v4227, %v4202
      %v5278 = vpack.c.b16 %v4228, %v4203
      %v5279 = vpack.c.b16 %v4229, %v4204
      %v5280 = vpack.c.b16 %v4230, %v4205
      %v5281 = vpack.c.b16 %v4231, %v4206
      %v5282 = vpack.c.b16 %v4232, %v4207
      %v5283 = vpack.c.b16 %v4233, %v4208
      %v5284 = vpack.c.b16 %v4234, %v4209
      %v5285 = vpack.c.b16 %v4235, %v4210
      %v5286 = vpack.c.b16 %v4236, %v4211
      %v5287 = vpack.c.b16 %v4237, %v4212
      %v5288 = vpack.c.b16 %v4238, %v4213
      %v5289 = vpack.c.b16 %v4264, %v4239
      %v5290 = vpack.c.b16 %v4265, %v4240
      %v5291 = vpack.c.b16 %v4266, %v4241
      %v5292 = vpack.c.b16 %v4267, %v4242
      %v5293 = vpack.c.b16 %v4268, %v4243
      %v5294 = vpack.c.b16 %v4269, %v4244
      %v5295 = vpack.c.b16 %v4270, %v4245
      %v5296 = vpack.c.b16 %v4271, %v4246
      %v5297 = vpack.c.b16 %v4272, %v4247
      %v5298 = vpack.c.b16 %v4273, %v4248
      %v5299 = vpack.c.b16 %v4274, %v4249
      %v5300 = vpack.c.b16 %v4275, %v4250
      %v5301 = vpack.c.b16 %v4276, %v4251
      %v5302 = vpack.c.b16 %v4277, %v4252
      %v5303 = vpack.c.b16 %v4278, %v4253
      %v5304 = vpack.c.b16 %v4279, %v4254
      %v5305 = vpack.c.b16 %v4280, %v4255
      %v5306 = vpack.c.b16 %v4281, %v4256
      %v5307 = vpack.c.b16 %v4282, %v4257
      %v5308 = vpack.c.b16 %v4283, %v4258
      %v5309 = vpack.c.b16 %v4284, %v4259
      %v5310 = vpack.c.b16 %v4285, %v4260
      %v5311 = vpack.c.b16 %v4286, %v4261
      %v5312 = vpack.c.b16 %v4287, %v4262
      %v5313 = vpack.c.b16 %v4288, %v4263
      %v5314 = vpack.c.b16 %v4314, %v4289
      %v5315 = vpack.c.b16 %v4315, %v4290
      %v5316 = vpack.c.b16 %v4316, %v4291
      %v5317 = vpack.c.b16 %v4317, %v4292
      %v5318 = vpack.c.b16 %v4318, %v4293
      %v5319 = vpack.c.b16 %v4319, %v4294
      %v5320 = vpack.c.b16 %v4320, %v4295
      %v5321 = vpack.c.b16 %v4321, %v4296
      %v5322 = vpack.c.b16 %v4322, %v4297
      %v5323 = vpack.c.b16 %v4323, %v4298
      %v5324 = vpack.c.b16 %v4324, %v4299
      %v5325 = vpack.c.b16 %v4325, %v4300
      %v5326 = vpack.c.b16 %v4326, %v4301
      %v5327 = vpack.c.b16 %v4327, %v4302
      %v5328 = vpack.c.b16 %v4328, %v4303
      %v5329 = vpack.c.b16 %v4329, %v4304
      %v5330 = vpack.c.b16 %v4330, %v4305
      %v5331 = vpack.c.b16 %v4331, %v4306
      %v5332 = vpack.c.b16 %v4332, %v4307
      %v5333 = vpack.c.b16 %v4333, %v4308
      %v5334 = vpack.c.b16 %v4334, %v4309
      %v5335 = vpack.c.b16 %v4335, %v4310
      %v5336 = vpack.c.b16 %v4336, %v4311
      %v5337 = vpack.c.b16 %v4337, %v4312
      %v5338 = vpack.c.b16 %v4338, %v4313
      %6339 = vmatprep.subr.bf16.mxu0 %v4340
      %6340 = vmatpush1.bf16.msra.mxu0 %v4339
      %6341 = vmatprep.subr.bf16.mxu0 %v4365
      %6342 = vmatpush1.bf16.msra.mxu0 %v4364
      %6343 = vmatprep.subr.bf16.mxu0 %v4390
      %6344 = vmatpush1.bf16.msra.mxu0 %v4389
      %6345 = vmatprep.subr.bf16.mxu0 %v4415
      %6346 = vmatpush1.bf16.msra.mxu0 %v4414
      %6347 = vmatprep.subr.bf16.mxu0 %v4440
      %6348 = vmatpush1.bf16.msra.mxu0 %v4439
      %6349 = vmatprep.subr.bf16.mxu0 %v4465
      %6350 = vmatpush1.bf16.msra.mxu0 %v4464
      %6351 = vmatprep.subr.bf16.mxu0 %v4490
      %6352 = vmatpush1.bf16.msra.mxu0 %v4489
      %6353 = vmatprep.subr.bf16.mxu0 %v4515
      %6354 = vmatpush1.bf16.msra.mxu0 %v4514
      %6355 = vmatprep.subr.bf16.mxu0 %v4540
      %6356 = vmatpush1.bf16.msra.mxu0 %v4539
      %6357 = vmatprep.subr.bf16.mxu0 %v4565
      %6358 = vmatpush1.bf16.msra.mxu0 %v4564
      %6359 = vmatprep.subr.bf16.mxu0 %v4590
      %6360 = vmatpush1.bf16.msra.mxu0 %v4589
      %6361 = vmatprep.subr.bf16.mxu0 %v4615
      %6362 = vmatpush1.bf16.msra.mxu0 %v4614
      %6363 = vmatprep.subr.bf16.mxu0 %v4640
      %6364 = vmatpush1.bf16.msra.mxu0 %v4639
      %6365 = vmatprep.subr.bf16.mxu0 %v4665
      %6366 = vmatpush1.bf16.msra.mxu0 %v4664
      %6367 = vmatprep.subr.bf16.mxu0 %v4690
      %6368 = vmatpush1.bf16.msra.mxu0 %v4689
      %6369 = vmatprep.subr.bf16.mxu0 %v4715
      %6370 = vmatpush1.bf16.msra.mxu0 %v4714
      %6371 = vmatprep.mubr.bf16.mxu0 %v1290
      %6372 = vmatmul.mubr.bf16.gmra.mrb[0].mxu0 %v1289
      %v6373 = vpop.f32.mrb[0].mxu0
      %v6374 = vadd.f32 0.0, %v6373
      %v6375 = vpop.f32.mrb[0].mxu0
      %v6376 = vadd.f32 0.0, %v6375
      %v6377 = vpop.f32.mrb[0].mxu0
      %v6378 = vpop.f32.mrb[0].mxu0
      %6379 = vdwg.mxu0
      %6380 = vmatprep.subr.bf16.mxu0 %v4740
      %6381 = vmatpush1.bf16.msra.mxu0 %v4739
      %6382 = vmatprep.subr.bf16.mxu0 %v4765
      %6383 = vmatpush1.bf16.msra.mxu0 %v4764
      %6384 = vmatprep.subr.bf16.mxu0 %v4790
      %6385 = vmatpush1.bf16.msra.mxu0 %v4789
      %6386 = vmatprep.subr.bf16.mxu0 %v4815
      %6387 = vmatpush1.bf16.msra.mxu0 %v4814
      %6388 = vmatprep.subr.bf16.mxu0 %v4840
      %6389 = vmatpush1.bf16.msra.mxu0 %v4839
      %6390 = vmatprep.subr.bf16.mxu0 %v4865
      %6391 = vmatpush1.bf16.msra.mxu0 %v4864
      %6392 = vmatprep.subr.bf16.mxu0 %v4890
      %6393 = vmatpush1.bf16.msra.mxu0 %v4889
      %6394 = vmatprep.subr.bf16.mxu0 %v4915
      %6395 = vmatpush1.bf16.msra.mxu0 %v4914
      %6396 = vmatprep.subr.bf16.mxu0 %v4940
      %6397 = vmatpush1.bf16.msra.mxu0 %v4939
      %6398 = vmatprep.subr.bf16.mxu0 %v4965
      %6399 = vmatpush1.bf16.msra.mxu0 %v4964
      %6400 = vmatprep.subr.bf16.mxu0 %v4990
      %6401 = vmatpush1.bf16.msra.mxu0 %v4989
      %6402 = vmatprep.subr.bf16.mxu0 %v5015
      %6403 = vmatpush1.bf16.msra.mxu0 %v5014
      %6404 = vmatprep.subr.bf16.mxu0 %v5040
      %6405 = vmatpush1.bf16.msra.mxu0 %v5039
      %6406 = vmatprep.subr.bf16.mxu0 %v5065
      %6407 = vmatpush1.bf16.msra.mxu0 %v5064
      %6408 = vmatprep.subr.bf16.mxu0 %v5090
      %6409 = vmatpush1.bf16.msra.mxu0 %v5089
      %6410 = vmatprep.subr.bf16.mxu0 %v5115
      %6411 = vmatpush1.bf16.msra.mxu0 %v5114
      %6412 = vmatprep.mubr.bf16.mxu0 %v1292
      %6413 = vmatmul.mubr.bf16.gmra.mrb[0].mxu0 %v1291
      %v6414 = vpop.f32.mrb[0].mxu0
      %v6415 = vadd.f32 %v6374, %v6414
      %v6416 = vpop.f32.mrb[0].mxu0
      %v6417 = vadd.f32 %v6376, %v6416
      %v6418 = vpop.f32.mrb[0].mxu0
      %v6419 = vpop.f32.mrb[0].mxu0
      %6420 = vdwg.mxu0
      %6421 = vmatprep.subr.bf16.mxu0 %v5140
      %6422 = vmatpush1.bf16.msra.mxu0 %v5139
      %6423 = vmatprep.subr.bf16.mxu0 %v5165
      %6424 = vmatpush1.bf16.msra.mxu0 %v5164
      %6425 = vmatprep.subr.bf16.mxu0 %v5190
      %6426 = vmatpush1.bf16.msra.mxu0 %v5189
      %6427 = vmatprep.subr.bf16.mxu0 %v5215
      %6428 = vmatpush1.bf16.msra.mxu0 %v5214
      %6429 = vmatprep.subr.bf16.mxu0 %v5240
      %6430 = vmatpush1.bf16.msra.mxu0 %v5239
      %6431 = vmatprep.subr.bf16.mxu0 %v5265
      %6432 = vmatpush1.bf16.msra.mxu0 %v5264
      %6433 = vmatprep.subr.bf16.mxu0 %v5290
      %6434 = vmatpush1.bf16.msra.mxu0 %v5289
      %6435 = vmatprep.subr.bf16.mxu0 %v5315
      %6436 = vmatpush1.bf16.msra.mxu0 %v5314
      %6437 = vmatprep.subr.bf16.mxu0 0
      %6438 = vmatpush1.bf16.msra.mxu0 0
      %6439 = vmatprep.subr.bf16.mxu0 0
      %6440 = vmatpush1.bf16.msra.mxu0 0
      %6441 = vmatprep.subr.bf16.mxu0 0
      %6442 = vmatpush1.bf16.msra.mxu0 0
      %6443 = vmatprep.subr.bf16.mxu0 0
      %6444 = vmatpush1.bf16.msra.mxu0 0
      %6445 = vmatprep.subr.bf16.mxu0 0
      %6446 = vmatpush1.bf16.msra.mxu0 0
      %6447 = vmatprep.subr.bf16.mxu0 0
      %6448 = vmatpush1.bf16.msra.mxu0 0
      %6449 = vmatprep.subr.bf16.mxu0 0
      %6450 = vmatpush1.bf16.msra.mxu0 0
      %6451 = vmatprep.subr.bf16.mxu0 0
      %6452 = vmatpush1.bf16.msra.mxu0 0
      %6453 = vmatprep.mubr.bf16.mxu0 0
      %6454 = vmatmul.mubr.bf16.gmra.mrb[0].mxu0 %v1293
      %v6455 = vpop.f32.mrb[0].mxu0
      %v6456 = vadd.f32 %v6415, %v6455
      %v6457 = vpop.f32.mrb[0].mxu0
      %v6458 = vadd.f32 %v6417, %v6457
      %v6459 = vpop.f32.mrb[0].mxu0
      %v6460 = vpop.f32.mrb[0].mxu0
      %6461 = vdwg.mxu0
      %6462 = vmatprep.subr.bf16.mxu0 %v4342
      %6463 = vmatpush1.bf16.msra.mxu0 %v4341
      %6464 = vmatprep.subr.bf16.mxu0 %v4367
      %6465 = vmatpush1.bf16.msra.mxu0 %v4366
      %6466 = vmatprep.subr.bf16.mxu0 %v4392
      %6467 = vmatpush1.bf16.msra.mxu0 %v4391
      %6468 = vmatprep.subr.bf16.mxu0 %v4417
      %6469 = vmatpush1.bf16.msra.mxu0 %v4416
      %6470 = vmatprep.subr.bf16.mxu0 %v4442
      %6471 = vmatpush1.bf16.msra.mxu0 %v4441
      %6472 = vmatprep.subr.bf16.mxu0 %v4467
      %6473 = vmatpush1.bf16.msra.mxu0 %v4466
      %6474 = vmatprep.subr.bf16.mxu0 %v4492
      %6475 = vmatpush1.bf16.msra.mxu0 %v4491
      %6476 = vmatprep.subr.bf16.mxu0 %v4517
      %6477 = vmatpush1.bf16.msra.mxu0 %v4516
      %6478 = vmatprep.subr.bf16.mxu0 %v4542
      %6479 = vmatpush1.bf16.msra.mxu0 %v4541
      %6480 = vmatprep.subr.bf16.mxu0 %v4567
      %6481 = vmatpush1.bf16.msra.mxu0 %v4566
      %6482 = vmatprep.subr.bf16.mxu0 %v4592
      %6483 = vmatpush1.bf16.msra.mxu0 %v4591
      %6484 = vmatprep.subr.bf16.mxu0 %v4617
      %6485 = vmatpush1.bf16.msra.mxu0 %v4616
      %6486 = vmatprep.subr.bf16.mxu0 %v4642
      %6487 = vmatpush1.bf16.msra.mxu0 %v4641
      %6488 = vmatprep.subr.bf16.mxu0 %v4667
      %6489 = vmatpush1.bf16.msra.mxu0 %v4666
      %6490 = vmatprep.subr.bf16.mxu0 %v4692
      %6491 = vmatpush1.bf16.msra.mxu0 %v4691
      %6492 = vmatprep.subr.bf16.mxu0 %v4717
      %6493 = vmatpush1.bf16.msra.mxu0 %v4716
      %6494 = vmatprep.mubr.bf16.mxu0 %v1290
      %6495 = vmatmul.mubr.bf16.gmra.mrb[0].mxu0 %v1289
      %v6496 = vpop.f32.mrb[0].mxu0
      %v6497 = vadd.f32 0.0, %v6496
      %v6498 = vpop.f32.mrb[0].mxu0
      %v6499 = vadd.f32 0.0, %v6498
      %v6500 = vpop.f32.mrb[0].mxu0
      %v6501 = vpop.f32.mrb[0].mxu0
      %6502 = vdwg.mxu0
      %6503 = vmatprep.subr.bf16.mxu0 %v4742
      %6504 = vmatpush1.bf16.msra.mxu0 %v4741
      %6505 = vmatprep.subr.bf16.mxu0 %v4767
      %6506 = vmatpush1.bf16.msra.mxu0 %v4766
      %6507 = vmatprep.subr.bf16.mxu0 %v4792
      %6508 = vmatpush1.bf16.msra.mxu0 %v4791
      %6509 = vmatprep.subr.bf16.mxu0 %v4817
      %6510 = vmatpush1.bf16.msra.mxu0 %v4816
      %6511 = vmatprep.subr.bf16.mxu0 %v4842
      %6512 = vmatpush1.bf16.msra.mxu0 %v4841
      %6513 = vmatprep.subr.bf16.mxu0 %v4867
      %6514 = vmatpush1.bf16.msra.mxu0 %v4866
      %6515 = vmatprep.subr.bf16.mxu0 %v4892
      %6516 = vmatpush1.bf16.msra.mxu0 %v4891
      %6517 = vmatprep.subr.bf16.mxu0 %v4917
      %6518 = vmatpush1.bf16.msra.mxu0 %v4916
      %6519 = vmatprep.subr.bf16.mxu0 %v4942
      %6520 = vmatpush1.bf16.msra.mxu0 %v4941
      %6521 = vmatprep.subr.bf16.mxu0 %v4967
      %6522 = vmatpush1.bf16.msra.mxu0 %v4966
      %6523 = vmatprep.subr.bf16.mxu0 %v4992
      %6524 = vmatpush1.bf16.msra.mxu0 %v4991
      %6525 = vmatprep.subr.bf16.mxu0 %v5017
      %6526 = vmatpush1.bf16.msra.mxu0 %v5016
      %6527 = vmatprep.subr.bf16.mxu0 %v5042
      %6528 = vmatpush1.bf16.msra.mxu0 %v5041
      %6529 = vmatprep.subr.bf16.mxu0 %v5067
      %6530 = vmatpush1.bf16.msra.mxu0 %v5066
      %6531 = vmatprep.subr.bf16.mxu0 %v5092
      %6532 = vmatpush1.bf16.msra.mxu0 %v5091
      %6533 = vmatprep.subr.bf16.mxu0 %v5117
      %6534 = vmatpush1.bf16.msra.mxu0 %v5116
      %6535 = vmatprep.mubr.bf16.mxu0 %v1292
      %6536 = vmatmul.mubr.bf16.gmra.mrb[0].mxu0 %v1291
      %v6537 = vpop.f32.mrb[0].mxu0
      %v6538 = vadd.f32 %v6497, %v6537
      %v6539 = vpop.f32.mrb[0].mxu0
      %v6540 = vadd.f32 %v6499, %v6539
      %v6541 = vpop.f32.mrb[0].mxu0
      %v6542 = vpop.f32.mrb[0].mxu0
      %6543 = vdwg.mxu0
      %6544 = vmatprep.subr.bf16.mxu0 %v5142
      %6545 = vmatpush1.bf16.msra.mxu0 %v5141
      %6546 = vmatprep.subr.bf16.mxu0 %v5167
      %6547 = vmatpush1.bf16.msra.mxu0 %v5166
      %6548 = vmatprep.subr.bf16.mxu0 %v5192
      %6549 = vmatpush1.bf16.msra.mxu0 %v5191
      %6550 = vmatprep.subr.bf16.mxu0 %v5217
      %6551 = vmatpush1.bf16.msra.mxu0 %v5216
      %6552 = vmatprep.subr.bf16.mxu0 %v5242
      %6553 = vmatpush1.bf16.msra.mxu0 %v5241
      %6554 = vmatprep.subr.bf16.mxu0 %v5267
      %6555 = vmatpush1.bf16.msra.mxu0 %v5266
      %6556 = vmatprep.subr.bf16.mxu0 %v5292
      %6557 = vmatpush1.bf16.msra.mxu0 %v5291
      %6558 = vmatprep.subr.bf16.mxu0 %v5317
      %6559 = vmatpush1.bf16.msra.mxu0 %v5316
      %6560 = vmatprep.subr.bf16.mxu0 0
      %6561 = vmatpush1.bf16.msra.mxu0 0
      %6562 = vmatprep.subr.bf16.mxu0 0
      %6563 = vmatpush1.bf16.msra.mxu0 0
      %6564 = vmatprep.subr.bf16.mxu0 0
      %6565 = vmatpush1.bf16.msra.mxu0 0
      %6566 = vmatprep.subr.bf16.mxu0 0
      %6567 = vmatpush1.bf16.msra.mxu0 0
      %6568 = vmatprep.subr.bf16.mxu0 0
      %6569 = vmatpush1.bf16.msra.mxu0 0
      %6570 = vmatprep.subr.bf16.mxu0 0
      %6571 = vmatpush1.bf16.msra.mxu0 0
      %6572 = vmatprep.subr.bf16.mxu0 0
      %6573 = vmatpush1.bf16.msra.mxu0 0
      %6574 = vmatprep.subr.bf16.mxu0 0
      %6575 = vmatpush1.bf16.msra.mxu0 0
      %6576 = vmatprep.mubr.bf16.mxu0 0
      %6577 = vmatmul.mubr.bf16.gmra.mrb[0].mxu0 %v1293
      %v6578 = vpop.f32.mrb[0].mxu0
      %v6579 = vadd.f32 %v6538, %v6578
      %v6580 = vpop.f32.mrb[0].mxu0
      %v6581 = vadd.f32 %v6540, %v6580
      %v6582 = vpop.f32.mrb[0].mxu0
      %v6583 = vpop.f32.mrb[0].mxu0
      %6584 = vdwg.mxu0
      %6585 = vmatprep.subr.bf16.mxu0 %v4344
      %6586 = vmatpush1.bf16.msra.mxu0 %v4343
      %6587 = vmatprep.subr.bf16.mxu0 %v4369
      %6588 = vmatpush1.bf16.msra.mxu0 %v4368
      %6589 = vmatprep.subr.bf16.mxu0 %v4394
      %6590 = vmatpush1.bf16.msra.mxu0 %v4393
      %6591 = vmatprep.subr.bf16.mxu0 %v4419
      %6592 = vmatpush1.bf16.msra.mxu0 %v4418
      %6593 = vmatprep.subr.bf16.mxu0 %v4444
      %6594 = vmatpush1.bf16.msra.mxu0 %v4443
      %6595 = vmatprep.subr.bf16.mxu0 %v4469
      %6596 = vmatpush1.bf16.msra.mxu0 %v4468
      %6597 = vmatprep.subr.bf16.mxu0 %v4494
      %6598 = vmatpush1.bf16.msra.mxu0 %v4493
      %6599 = vmatprep.subr.bf16.mxu0 %v4519
      %6600 = vmatpush1.bf16.msra.mxu0 %v4518
      %6601 = vmatprep.subr.bf16.mxu0 %v4544
      %6602 = vmatpush1.bf16.msra.mxu0 %v4543
      %6603 = vmatprep.subr.bf16.mxu0 %v4569
      %6604 = vmatpush1.bf16.msra.mxu0 %v4568
      %6605 = vmatprep.subr.bf16.mxu0 %v4594
      %6606 = vmatpush1.bf16.msra.mxu0 %v4593
      %6607 = vmatprep.subr.bf16.mxu0 %v4619
      %6608 = vmatpush1.bf16.msra.mxu0 %v4618
      %6609 = vmatprep.subr.bf16.mxu0 %v4644
      %6610 = vmatpush1.bf16.msra.mxu0 %v4643
      %6611 = vmatprep.subr.bf16.mxu0 %v4669
      %6612 = vmatpush1.bf16.msra.mxu0 %v4668
      %6613 = vmatprep.subr.bf16.mxu0 %v4694
      %6614 = vmatpush1.bf16.msra.mxu0 %v4693
      %6615 = vmatprep.subr.bf16.mxu0 %v4719
      %6616 = vmatpush1.bf16.msra.mxu0 %v4718
      %6617 = vmatprep.mubr.bf16.mxu0 %v1290
      %6618 = vmatmul.mubr.bf16.gmra.mrb[0].mxu0 %v1289
      %v6619 = vpop.f32.mrb[0].mxu0
      %v6620 = vadd.f32 0.0, %v6619
      %v6621 = vpop.f32.mrb[0].mxu0
      %v6622 = vadd.f32 0.0, %v6621
      %v6623 = vpop.f32.mrb[0].mxu0
      %v6624 = vpop.f32.mrb[0].mxu0
      %6625 = vdwg.mxu0
      %6626 = vmatprep.subr.bf16.mxu0 %v4744
      %6627 = vmatpush1.bf16.msra.mxu0 %v4743
      %6628 = vmatprep.subr.bf16.mxu0 %v4769
      %6629 = vmatpush1.bf16.msra.mxu0 %v4768
      %6630 = vmatprep.subr.bf16.mxu0 %v4794
      %6631 = vmatpush1.bf16.msra.mxu0 %v4793
      %6632 = vmatprep.subr.bf16.mxu0 %v4819
      %6633 = vmatpush1.bf16.msra.mxu0 %v4818
      %6634 = vmatprep.subr.bf16.mxu0 %v4844
      %6635 = vmatpush1.bf16.msra.mxu0 %v4843
      %6636 = vmatprep.subr.bf16.mxu0 %v4869
      %6637 = vmatpush1.bf16.msra.mxu0 %v4868
      %6638 = vmatprep.subr.bf16.mxu0 %v4894
      %6639 = vmatpush1.bf16.msra.mxu0 %v4893
      %6640 = vmatprep.subr.bf16.mxu0 %v4919
      %6641 = vmatpush1.bf16.msra.mxu0 %v4918
      %6642 = vmatprep.subr.bf16.mxu0 %v4944
      %6643 = vmatpush1.bf16.msra.mxu0 %v4943
      %6644 = vmatprep.subr.bf16.mxu0 %v4969
      %6645 = vmatpush1.bf16.msra.mxu0 %v4968
      %6646 = vmatprep.subr.bf16.mxu0 %v4994
      %6647 = vmatpush1.bf16.msra.mxu0 %v4993
      %6648 = vmatprep.subr.bf16.mxu0 %v5019
      %6649 = vmatpush1.bf16.msra.mxu0 %v5018
      %6650 = vmatprep.subr.bf16.mxu0 %v5044
      %6651 = vmatpush1.bf16.msra.mxu0 %v5043
      %6652 = vmatprep.subr.bf16.mxu0 %v5069
      %6653 = vmatpush1.bf16.msra.mxu0 %v5068
      %6654 = vmatprep.subr.bf16.mxu0 %v5094
      %6655 = vmatpush1.bf16.msra.mxu0 %v5093
      %6656 = vmatprep.subr.bf16.mxu0 %v5119
      %6657 = vmatpush1.bf16.msra.mxu0 %v5118
      %6658 = vmatprep.mubr.bf16.mxu0 %v1292
      %6659 = vmatmul.mubr.bf16.gmra.mrb[0].mxu0 %v1291
      %v6660 = vpop.f32.mrb[0].mxu0
      %v6661 = vadd.f32 %v6620, %v6660
      %v6662 = vpop.f32.mrb[0].mxu0
      %v6663 = vadd.f32 %v6622, %v6662
      %v6664 = vpop.f32.mrb[0].mxu0
      %v6665 = vpop.f32.mrb[0].mxu0
      %6666 = vdwg.mxu0
      %6667 = vmatprep.subr.bf16.mxu0 %v5144
      %6668 = vmatpush1.bf16.msra.mxu0 %v5143
      %6669 = vmatprep.subr.bf16.mxu0 %v5169
      %6670 = vmatpush1.bf16.msra.mxu0 %v5168
      %6671 = vmatprep.subr.bf16.mxu0 %v5194
      %6672 = vmatpush1.bf16.msra.mxu0 %v5193
      %6673 = vmatprep.subr.bf16.mxu0 %v5219
      %6674 = vmatpush1.bf16.msra.mxu0 %v5218
      %6675 = vmatprep.subr.bf16.mxu0 %v5244
      %6676 = vmatpush1.bf16.msra.mxu0 %v5243
      %6677 = vmatprep.subr.bf16.mxu0 %v5269
      %6678 = vmatpush1.bf16.msra.mxu0 %v5268
      %6679 = vmatprep.subr.bf16.mxu0 %v5294
      %6680 = vmatpush1.bf16.msra.mxu0 %v5293
      %6681 = vmatprep.subr.bf16.mxu0 %v5319
      %6682 = vmatpush1.bf16.msra.mxu0 %v5318
      %6683 = vmatprep.subr.bf16.mxu0 0
      %6684 = vmatpush1.bf16.msra.mxu0 0
      %6685 = vmatprep.subr.bf16.mxu0 0
      %6686 = vmatpush1.bf16.msra.mxu0 0
      %6687 = vmatprep.subr.bf16.mxu0 0
      %6688 = vmatpush1.bf16.msra.mxu0 0
      %6689 = vmatprep.subr.bf16.mxu0 0
      %6690 = vmatpush1.bf16.msra.mxu0 0
      %6691 = vmatprep.subr.bf16.mxu0 0
      %6692 = vmatpush1.bf16.msra.mxu0 0
      %6693 = vmatprep.subr.bf16.mxu0 0
      %6694 = vmatpush1.bf16.msra.mxu0 0
      %6695 = vmatprep.subr.bf16.mxu0 0
      %6696 = vmatpush1.bf16.msra.mxu0 0
      %6697 = vmatprep.subr.bf16.mxu0 0
      %6698 = vmatpush1.bf16.msra.mxu0 0
      %6699 = vmatprep.mubr.bf16.mxu0 0
      %6700 = vmatmul.mubr.bf16.gmra.mrb[0].mxu0 %v1293
      %v6701 = vpop.f32.mrb[0].mxu0
      %v6702 = vadd.f32 %v6661, %v6701
      %v6703 = vpop.f32.mrb[0].mxu0
      %v6704 = vadd.f32 %v6663, %v6703
      %v6705 = vpop.f32.mrb[0].mxu0
      %v6706 = vpop.f32.mrb[0].mxu0
      %6707 = vdwg.mxu0
      %6708 = vmatprep.subr.bf16.mxu0 %v4346
      %6709 = vmatpush1.bf16.msra.mxu0 %v4345
      %6710 = vmatprep.subr.bf16.mxu0 %v4371
      %6711 = vmatpush1.bf16.msra.mxu0 %v4370
      %6712 = vmatprep.subr.bf16.mxu0 %v4396
      %6713 = vmatpush1.bf16.msra.mxu0 %v4395
      %6714 = vmatprep.subr.bf16.mxu0 %v4421
      %6715 = vmatpush1.bf16.msra.mxu0 %v4420
      %6716 = vmatprep.subr.bf16.mxu0 %v4446
      %6717 = vmatpush1.bf16.msra.mxu0 %v4445
      %6718 = vmatprep.subr.bf16.mxu0 %v4471
      %6719 = vmatpush1.bf16.msra.mxu0 %v4470
      %6720 = vmatprep.subr.bf16.mxu0 %v4496
      %6721 = vmatpush1.bf16.msra.mxu0 %v4495
      %6722 = vmatprep.subr.bf16.mxu0 %v4521
      %6723 = vmatpush1.bf16.msra.mxu0 %v4520
      %6724 = vmatprep.subr.bf16.mxu0 %v4546
      %6725 = vmatpush1.bf16.msra.mxu0 %v4545
      %6726 = vmatprep.subr.bf16.mxu0 %v4571
      %6727 = vmatpush1.bf16.msra.mxu0 %v4570
      %6728 = vmatprep.subr.bf16.mxu0 %v4596
      %6729 = vmatpush1.bf16.msra.mxu0 %v4595
      %6730 = vmatprep.subr.bf16.mxu0 %v4621
      %6731 = vmatpush1.bf16.msra.mxu0 %v4620
      %6732 = vmatprep.subr.bf16.mxu0 %v4646
      %6733 = vmatpush1.bf16.msra.mxu0 %v4645
      %6734 = vmatprep.subr.bf16.mxu0 %v4671
      %6735 = vmatpush1.bf16.msra.mxu0 %v4670
      %6736 = vmatprep.subr.bf16.mxu0 %v4696
      %6737 = vmatpush1.bf16.msra.mxu0 %v4695
      %6738 = vmatprep.subr.bf16.mxu0 %v4721
      %6739 = vmatpush1.bf16.msra.mxu0 %v4720
      %6740 = vmatprep.mubr.bf16.mxu0 %v1290
      %6741 = vmatmul.mubr.bf16.gmra.mrb[0].mxu0 %v1289
      %v6742 = vpop.f32.mrb[0].mxu0
      %v6743 = vadd.f32 0.0, %v6742
      %v6744 = vpop.f32.mrb[0].mxu0
      %v6745 = vadd.f32 0.0, %v6744
      %v6746 = vpop.f32.mrb[0].mxu0
      %v6747 = vpop.f32.mrb[0].mxu0
      %6748 = vdwg.mxu0
      %6749 = vmatprep.subr.bf16.mxu0 %v4746
      %6750 = vmatpush1.bf16.msra.mxu0 %v4745
      %6751 = vmatprep.subr.bf16.mxu0 %v4771
      %6752 = vmatpush1.bf16.msra.mxu0 %v4770
      %6753 = vmatprep.subr.bf16.mxu0 %v4796
      %6754 = vmatpush1.bf16.msra.mxu0 %v4795
      %6755 = vmatprep.subr.bf16.mxu0 %v4821
      %6756 = vmatpush1.bf16.msra.mxu0 %v4820
      %6757 = vmatprep.subr.bf16.mxu0 %v4846
      %6758 = vmatpush1.bf16.msra.mxu0 %v4845
      %6759 = vmatprep.subr.bf16.mxu0 %v4871
      %6760 = vmatpush1.bf16.msra.mxu0 %v4870
      %6761 = vmatprep.subr.bf16.mxu0 %v4896
      %6762 = vmatpush1.bf16.msra.mxu0 %v4895
      %6763 = vmatprep.subr.bf16.mxu0 %v4921
      %6764 = vmatpush1.bf16.msra.mxu0 %v4920
      %6765 = vmatprep.subr.bf16.mxu0 %v4946
      %6766 = vmatpush1.bf16.msra.mxu0 %v4945
      %6767 = vmatprep.subr.bf16.mxu0 %v4971
      %6768 = vmatpush1.bf16.msra.mxu0 %v4970
      %6769 = vmatprep.subr.bf16.mxu0 %v4996
      %6770 = vmatpush1.bf16.msra.mxu0 %v4995
      %6771 = vmatprep.subr.bf16.mxu0 %v5021
      %6772 = vmatpush1.bf16.msra.mxu0 %v5020
      %6773 = vmatprep.subr.bf16.mxu0 %v5046
      %6774 = vmatpush1.bf16.msra.mxu0 %v5045
      %6775 = vmatprep.subr.bf16.mxu0 %v5071
      %6776 = vmatpush1.bf16.msra.mxu0 %v5070
      %6777 = vmatprep.subr.bf16.mxu0 %v5096
      %6778 = vmatpush1.bf16.msra.mxu0 %v5095
      %6779 = vmatprep.subr.bf16.mxu0 %v5121
      %6780 = vmatpush1.bf16.msra.mxu0 %v5120
      %6781 = vmatprep.mubr.bf16.mxu0 %v1292
      %6782 = vmatmul.mubr.bf16.gmra.mrb[0].mxu0 %v1291
      %v6783 = vpop.f32.mrb[0].mxu0
      %v6784 = vadd.f32 %v6743, %v6783
      %v6785 = vpop.f32.mrb[0].mxu0
      %v6786 = vadd.f32 %v6745, %v6785
      %v6787 = vpop.f32.mrb[0].mxu0
      %v6788 = vpop.f32.mrb[0].mxu0
      %6789 = vdwg.mxu0
      %6790 = vmatprep.subr.bf16.mxu0 %v5146
      %6791 = vmatpush1.bf16.msra.mxu0 %v5145
      %6792 = vmatprep.subr.bf16.mxu0 %v5171
      %6793 = vmatpush1.bf16.msra.mxu0 %v5170
      %6794 = vmatprep.subr.bf16.mxu0 %v5196
      %6795 = vmatpush1.bf16.msra.mxu0 %v5195
      %6796 = vmatprep.subr.bf16.mxu0 %v5221
      %6797 = vmatpush1.bf16.msra.mxu0 %v5220
      %6798 = vmatprep.subr.bf16.mxu0 %v5246
      %6799 = vmatpush1.bf16.msra.mxu0 %v5245
      %6800 = vmatprep.subr.bf16.mxu0 %v5271
      %6801 = vmatpush1.bf16.msra.mxu0 %v5270
      %6802 = vmatprep.subr.bf16.mxu0 %v5296
      %6803 = vmatpush1.bf16.msra.mxu0 %v5295
      %6804 = vmatprep.subr.bf16.mxu0 %v5321
      %6805 = vmatpush1.bf16.msra.mxu0 %v5320
      %6806 = vmatprep.subr.bf16.mxu0 0
      %6807 = vmatpush1.bf16.msra.mxu0 0
      %6808 = vmatprep.subr.bf16.mxu0 0
      %6809 = vmatpush1.bf16.msra.mxu0 0
      %6810 = vmatprep.subr.bf16.mxu0 0
      %6811 = vmatpush1.bf16.msra.mxu0 0
      %6812 = vmatprep.subr.bf16.mxu0 0
      %6813 = vmatpush1.bf16.msra.mxu0 0
      %6814 = vmatprep.subr.bf16.mxu0 0
      %6815 = vmatpush1.bf16.msra.mxu0 0
      %6816 = vmatprep.subr.bf16.mxu0 0
      %6817 = vmatpush1.bf16.msra.mxu0 0
      %6818 = vmatprep.subr.bf16.mxu0 0
      %6819 = vmatpush1.bf16.msra.mxu0 0
      %6820 = vmatprep.subr.bf16.mxu0 0
      %6821 = vmatpush1.bf16.msra.mxu0 0
      %6822 = vmatprep.mubr.bf16.mxu0 0
      %6823 = vmatmul.mubr.bf16.gmra.mrb[0].mxu0 %v1293
      %v6824 = vpop.f32.mrb[0].mxu0
      %v6825 = vadd.f32 %v6784, %v6824
      %v6826 = vpop.f32.mrb[0].mxu0
      %v6827 = vadd.f32 %v6786, %v6826
      %v6828 = vpop.f32.mrb[0].mxu0
      %v6829 = vpop.f32.mrb[0].mxu0
      %6830 = vdwg.mxu0
      %6831 = vmatprep.subr.bf16.mxu0 %v4348
      %6832 = vmatpush1.bf16.msra.mxu0 %v4347
      %6833 = vmatprep.subr.bf16.mxu0 %v4373
      %6834 = vmatpush1.bf16.msra.mxu0 %v4372
      %6835 = vmatprep.subr.bf16.mxu0 %v4398
      %6836 = vmatpush1.bf16.msra.mxu0 %v4397
      %6837 = vmatprep.subr.bf16.mxu0 %v4423
      %6838 = vmatpush1.bf16.msra.mxu0 %v4422
      %6839 = vmatprep.subr.bf16.mxu0 %v4448
      %6840 = vmatpush1.bf16.msra.mxu0 %v4447
      %6841 = vmatprep.subr.bf16.mxu0 %v4473
      %6842 = vmatpush1.bf16.msra.mxu0 %v4472
      %6843 = vmatprep.subr.bf16.mxu0 %v4498
      %6844 = vmatpush1.bf16.msra.mxu0 %v4497
      %6845 = vmatprep.subr.bf16.mxu0 %v4523
      %6846 = vmatpush1.bf16.msra.mxu0 %v4522
      %6847 = vmatprep.subr.bf16.mxu0 %v4548
      %6848 = vmatpush1.bf16.msra.mxu0 %v4547
      %6849 = vmatprep.subr.bf16.mxu0 %v4573
      %6850 = vmatpush1.bf16.msra.mxu0 %v4572
      %6851 = vmatprep.subr.bf16.mxu0 %v4598
      %6852 = vmatpush1.bf16.msra.mxu0 %v4597
      %6853 = vmatprep.subr.bf16.mxu0 %v4623
      %6854 = vmatpush1.bf16.msra.mxu0 %v4622
      %6855 = vmatprep.subr.bf16.mxu0 %v4648
      %6856 = vmatpush1.bf16.msra.mxu0 %v4647
      %6857 = vmatprep.subr.bf16.mxu0 %v4673
      %6858 = vmatpush1.bf16.msra.mxu0 %v4672
      %6859 = vmatprep.subr.bf16.mxu0 %v4698
      %6860 = vmatpush1.bf16.msra.mxu0 %v4697
      %6861 = vmatprep.subr.bf16.mxu0 %v4723
      %6862 = vmatpush1.bf16.msra.mxu0 %v4722
      %6863 = vmatprep.mubr.bf16.mxu0 %v1290
      %6864 = vmatmul.mubr.bf16.gmra.mrb[0].mxu0 %v1289
      %v6865 = vpop.f32.mrb[0].mxu0
      %v6866 = vadd.f32 0.0, %v6865
      %v6867 = vpop.f32.mrb[0].mxu0
      %v6868 = vadd.f32 0.0, %v6867
      %v6869 = vpop.f32.mrb[0].mxu0
      %v6870 = vpop.f32.mrb[0].mxu0
      %6871 = vdwg.mxu0
      %6872 = vmatprep.subr.bf16.mxu0 %v4748
      %6873 = vmatpush1.bf16.msra.mxu0 %v4747
      %6874 = vmatprep.subr.bf16.mxu0 %v4773
      %6875 = vmatpush1.bf16.msra.mxu0 %v4772
      %6876 = vmatprep.subr.bf16.mxu0 %v4798
      %6877 = vmatpush1.bf16.msra.mxu0 %v4797
      %6878 = vmatprep.subr.bf16.mxu0 %v4823
      %6879 = vmatpush1.bf16.msra.mxu0 %v4822
      %6880 = vmatprep.subr.bf16.mxu0 %v4848
      %6881 = vmatpush1.bf16.msra.mxu0 %v4847
      %6882 = vmatprep.subr.bf16.mxu0 %v4873
      %6883 = vmatpush1.bf16.msra.mxu0 %v4872
      %6884 = vmatprep.subr.bf16.mxu0 %v4898
      %6885 = vmatpush1.bf16.msra.mxu0 %v4897
      %6886 = vmatprep.subr.bf16.mxu0 %v4923
      %6887 = vmatpush1.bf16.msra.mxu0 %v4922
      %6888 = vmatprep.subr.bf16.mxu0 %v4948
      %6889 = vmatpush1.bf16.msra.mxu0 %v4947
      %6890 = vmatprep.subr.bf16.mxu0 %v4973
      %6891 = vmatpush1.bf16.msra.mxu0 %v4972
      %6892 = vmatprep.subr.bf16.mxu0 %v4998
      %6893 = vmatpush1.bf16.msra.mxu0 %v4997
      %6894 = vmatprep.subr.bf16.mxu0 %v5023
      %6895 = vmatpush1.bf16.msra.mxu0 %v5022
      %6896 = vmatprep.subr.bf16.mxu0 %v5048
      %6897 = vmatpush1.bf16.msra.mxu0 %v5047
      %6898 = vmatprep.subr.bf16.mxu0 %v5073
      %6899 = vmatpush1.bf16.msra.mxu0 %v5072
      %6900 = vmatprep.subr.bf16.mxu0 %v5098
      %6901 = vmatpush1.bf16.msra.mxu0 %v5097
      %6902 = vmatprep.subr.bf16.mxu0 %v5123
      %6903 = vmatpush1.bf16.msra.mxu0 %v5122
      %6904 = vmatprep.mubr.bf16.mxu0 %v1292
      %6905 = vmatmul.mubr.bf16.gmra.mrb[0].mxu0 %v1291
      %v6906 = vpop.f32.mrb[0].mxu0
      %v6907 = vadd.f32 %v6866, %v6906
      %v6908 = vpop.f32.mrb[0].mxu0
      %v6909 = vadd.f32 %v6868, %v6908
      %v6910 = vpop.f32.mrb[0].mxu0
      %v6911 = vpop.f32.mrb[0].mxu0
      %6912 = vdwg.mxu0
      %6913 = vmatprep.subr.bf16.mxu0 %v5148
      %6914 = vmatpush1.bf16.msra.mxu0 %v5147
      %6915 = vmatprep.subr.bf16.mxu0 %v5173
      %6916 = vmatpush1.bf16.msra.mxu0 %v5172
      %6917 = vmatprep.subr.bf16.mxu0 %v5198
      %6918 = vmatpush1.bf16.msra.mxu0 %v5197
      %6919 = vmatprep.subr.bf16.mxu0 %v5223
      %6920 = vmatpush1.bf16.msra.mxu0 %v5222
      %6921 = vmatprep.subr.bf16.mxu0 %v5248
      %6922 = vmatpush1.bf16.msra.mxu0 %v5247
      %6923 = vmatprep.subr.bf16.mxu0 %v5273
      %6924 = vmatpush1.bf16.msra.mxu0 %v5272
      %6925 = vmatprep.subr.bf16.mxu0 %v5298
      %6926 = vmatpush1.bf16.msra.mxu0 %v5297
      %6927 = vmatprep.subr.bf16.mxu0 %v5323
      %6928 = vmatpush1.bf16.msra.mxu0 %v5322
      %6929 = vmatprep.subr.bf16.mxu0 0
      %6930 = vmatpush1.bf16.msra.mxu0 0
      %6931 = vmatprep.subr.bf16.mxu0 0
      %6932 = vmatpush1.bf16.msra.mxu0 0
      %6933 = vmatprep.subr.bf16.mxu0 0
      %6934 = vmatpush1.bf16.msra.mxu0 0
      %6935 = vmatprep.subr.bf16.mxu0 0
      %6936 = vmatpush1.bf16.msra.mxu0 0
      %6937 = vmatprep.subr.bf16.mxu0 0
      %6938 = vmatpush1.bf16.msra.mxu0 0
      %6939 = vmatprep.subr.bf16.mxu0 0
      %6940 = vmatpush1.bf16.msra.mxu0 0
      %6941 = vmatprep.subr.bf16.mxu0 0
      %6942 = vmatpush1.bf16.msra.mxu0 0
      %6943 = vmatprep.subr.bf16.mxu0 0
      %6944 = vmatpush1.bf16.msra.mxu0 0
      %6945 = vmatprep.mubr.bf16.mxu0 0
      %6946 = vmatmul.mubr.bf16.gmra.mrb[0].mxu0 %v1293
      %v6947 = vpop.f32.mrb[0].mxu0
      %v6948 = vadd.f32 %v6907, %v6947
      %v6949 = vpop.f32.mrb[0].mxu0
      %v6950 = vadd.f32 %v6909, %v6949
      %v6951 = vpop.f32.mrb[0].mxu0
      %v6952 = vpop.f32.mrb[0].mxu0
      %6953 = vdwg.mxu0
      %6954 = vmatprep.subr.bf16.mxu0 %v4350
      %6955 = vmatpush1.bf16.msra.mxu0 %v4349
      %6956 = vmatprep.subr.bf16.mxu0 %v4375
      %6957 = vmatpush1.bf16.msra.mxu0 %v4374
      %6958 = vmatprep.subr.bf16.mxu0 %v4400
      %6959 = vmatpush1.bf16.msra.mxu0 %v4399
      %6960 = vmatprep.subr.bf16.mxu0 %v4425
      %6961 = vmatpush1.bf16.msra.mxu0 %v4424
      %6962 = vmatprep.subr.bf16.mxu0 %v4450
      %6963 = vmatpush1.bf16.msra.mxu0 %v4449
      %6964 = vmatprep.subr.bf16.mxu0 %v4475
      %6965 = vmatpush1.bf16.msra.mxu0 %v4474
      %6966 = vmatprep.subr.bf16.mxu0 %v4500
      %6967 = vmatpush1.bf16.msra.mxu0 %v4499
      %6968 = vmatprep.subr.bf16.mxu0 %v4525
      %6969 = vmatpush1.bf16.msra.mxu0 %v4524
      %6970 = vmatprep.subr.bf16.mxu0 %v4550
      %6971 = vmatpush1.bf16.msra.mxu0 %v4549
      %6972 = vmatprep.subr.bf16.mxu0 %v4575
      %6973 = vmatpush1.bf16.msra.mxu0 %v4574
      %6974 = vmatprep.subr.bf16.mxu0 %v4600
      %6975 = vmatpush1.bf16.msra.mxu0 %v4599
      %6976 = vmatprep.subr.bf16.mxu0 %v4625
      %6977 = vmatpush1.bf16.msra.mxu0 %v4624
      %6978 = vmatprep.subr.bf16.mxu0 %v4650
      %6979 = vmatpush1.bf16.msra.mxu0 %v4649
      %6980 = vmatprep.subr.bf16.mxu0 %v4675
      %6981 = vmatpush1.bf16.msra.mxu0 %v4674
      %6982 = vmatprep.subr.bf16.mxu0 %v4700
      %6983 = vmatpush1.bf16.msra.mxu0 %v4699
      %6984 = vmatprep.subr.bf16.mxu0 %v4725
      %6985 = vmatpush1.bf16.msra.mxu0 %v4724
      %6986 = vmatprep.mubr.bf16.mxu0 %v1290
      %6987 = vmatmul.mubr.bf16.gmra.mrb[0].mxu0 %v1289
      %v6988 = vpop.f32.mrb[0].mxu0
      %v6989 = vadd.f32 0.0, %v6988
      %v6990 = vpop.f32.mrb[0].mxu0
      %v6991 = vadd.f32 0.0, %v6990
      %v6992 = vpop.f32.mrb[0].mxu0
      %v6993 = vpop.f32.mrb[0].mxu0
      %6994 = vdwg.mxu0
      %6995 = vmatprep.subr.bf16.mxu0 %v4750
      %6996 = vmatpush1.bf16.msra.mxu0 %v4749
      %6997 = vmatprep.subr.bf16.mxu0 %v4775
      %6998 = vmatpush1.bf16.msra.mxu0 %v4774
      %6999 = vmatprep.subr.bf16.mxu0 %v4800
      %7000 = vmatpush1.bf16.msra.mxu0 %v4799
      %7001 = vmatprep.subr.bf16.mxu0 %v4825
      %7002 = vmatpush1.bf16.msra.mxu0 %v4824
      %7003 = vmatprep.subr.bf16.mxu0 %v4850
      %7004 = vmatpush1.bf16.msra.mxu0 %v4849
      %7005 = vmatprep.subr.bf16.mxu0 %v4875
      %7006 = vmatpush1.bf16.msra.mxu0 %v4874
      %7007 = vmatprep.subr.bf16.mxu0 %v4900
      %7008 = vmatpush1.bf16.msra.mxu0 %v4899
      %7009 = vmatprep.subr.bf16.mxu0 %v4925
      %7010 = vmatpush1.bf16.msra.mxu0 %v4924
      %7011 = vmatprep.subr.bf16.mxu0 %v4950
      %7012 = vmatpush1.bf16.msra.mxu0 %v4949
      %7013 = vmatprep.subr.bf16.mxu0 %v4975
      %7014 = vmatpush1.bf16.msra.mxu0 %v4974
      %7015 = vmatprep.subr.bf16.mxu0 %v5000
      %7016 = vmatpush1.bf16.msra.mxu0 %v4999
      %7017 = vmatprep.subr.bf16.mxu0 %v5025
      %7018 = vmatpush1.bf16.msra.mxu0 %v5024
      %7019 = vmatprep.subr.bf16.mxu0 %v5050
      %7020 = vmatpush1.bf16.msra.mxu0 %v5049
      %7021 = vmatprep.subr.bf16.mxu0 %v5075
      %7022 = vmatpush1.bf16.msra.mxu0 %v5074
      %7023 = vmatprep.subr.bf16.mxu0 %v5100
      %7024 = vmatpush1.bf16.msra.mxu0 %v5099
      %7025 = vmatprep.subr.bf16.mxu0 %v5125
      %7026 = vmatpush1.bf16.msra.mxu0 %v5124
      %7027 = vmatprep.mubr.bf16.mxu0 %v1292
      %7028 = vmatmul.mubr.bf16.gmra.mrb[0].mxu0 %v1291
      %v7029 = vpop.f32.mrb[0].mxu0
      %v7030 = vadd.f32 %v6989, %v7029
      %v7031 = vpop.f32.mrb[0].mxu0
      %v7032 = vadd.f32 %v6991, %v7031
      %v7033 = vpop.f32.mrb[0].mxu0
      %v7034 = vpop.f32.mrb[0].mxu0
      %7035 = vdwg.mxu0
      %7036 = vmatprep.subr.bf16.mxu0 %v5150
      %7037 = vmatpush1.bf16.msra.mxu0 %v5149
      %7038 = vmatprep.subr.bf16.mxu0 %v5175
      %7039 = vmatpush1.bf16.msra.mxu0 %v5174
      %7040 = vmatprep.subr.bf16.mxu0 %v5200
      %7041 = vmatpush1.bf16.msra.mxu0 %v5199
      %7042 = vmatprep.subr.bf16.mxu0 %v5225
      %7043 = vmatpush1.bf16.msra.mxu0 %v5224
      %7044 = vmatprep.subr.bf16.mxu0 %v5250
      %7045 = vmatpush1.bf16.msra.mxu0 %v5249
      %7046 = vmatprep.subr.bf16.mxu0 %v5275
      %7047 = vmatpush1.bf16.msra.mxu0 %v5274
      %7048 = vmatprep.subr.bf16.mxu0 %v5300
      %7049 = vmatpush1.bf16.msra.mxu0 %v5299
      %7050 = vmatprep.subr.bf16.mxu0 %v5325
      %7051 = vmatpush1.bf16.msra.mxu0 %v5324
      %7052 = vmatprep.subr.bf16.mxu0 0
      %7053 = vmatpush1.bf16.msra.mxu0 0
      %7054 = vmatprep.subr.bf16.mxu0 0
      %7055 = vmatpush1.bf16.msra.mxu0 0
      %7056 = vmatprep.subr.bf16.mxu0 0
      %7057 = vmatpush1.bf16.msra.mxu0 0
      %7058 = vmatprep.subr.bf16.mxu0 0
      %7059 = vmatpush1.bf16.msra.mxu0 0
      %7060 = vmatprep.subr.bf16.mxu0 0
      %7061 = vmatpush1.bf16.msra.mxu0 0
      %7062 = vmatprep.subr.bf16.mxu0 0
      %7063 = vmatpush1.bf16.msra.mxu0 0
      %7064 = vmatprep.subr.bf16.mxu0 0
      %7065 = vmatpush1.bf16.msra.mxu0 0
      %7066 = vmatprep.subr.bf16.mxu0 0
      %7067 = vmatpush1.bf16.msra.mxu0 0
      %7068 = vmatprep.mubr.bf16.mxu0 0
      %7069 = vmatmul.mubr.bf16.gmra.mrb[0].mxu0 %v1293
      %v7070 = vpop.f32.mrb[0].mxu0
      %v7071 = vadd.f32 %v7030, %v7070
      %v7072 = vpop.f32.mrb[0].mxu0
      %v7073 = vadd.f32 %v7032, %v7072
      %v7074 = vpop.f32.mrb[0].mxu0
      %v7075 = vpop.f32.mrb[0].mxu0
      %7076 = vdwg.mxu0
      %7077 = vmatprep.subr.bf16.mxu0 %v4352
      %7078 = vmatpush1.bf16.msra.mxu0 %v4351
      %7079 = vmatprep.subr.bf16.mxu0 %v4377
      %7080 = vmatpush1.bf16.msra.mxu0 %v4376
      %7081 = vmatprep.subr.bf16.mxu0 %v4402
      %7082 = vmatpush1.bf16.msra.mxu0 %v4401
      %7083 = vmatprep.subr.bf16.mxu0 %v4427
      %7084 = vmatpush1.bf16.msra.mxu0 %v4426
      %7085 = vmatprep.subr.bf16.mxu0 %v4452
      %7086 = vmatpush1.bf16.msra.mxu0 %v4451
      %7087 = vmatprep.subr.bf16.mxu0 %v4477
      %7088 = vmatpush1.bf16.msra.mxu0 %v4476
      %7089 = vmatprep.subr.bf16.mxu0 %v4502
      %7090 = vmatpush1.bf16.msra.mxu0 %v4501
      %7091 = vmatprep.subr.bf16.mxu0 %v4527
      %7092 = vmatpush1.bf16.msra.mxu0 %v4526
      %7093 = vmatprep.subr.bf16.mxu0 %v4552
      %7094 = vmatpush1.bf16.msra.mxu0 %v4551
      %7095 = vmatprep.subr.bf16.mxu0 %v4577
      %7096 = vmatpush1.bf16.msra.mxu0 %v4576
      %7097 = vmatprep.subr.bf16.mxu0 %v4602
      %7098 = vmatpush1.bf16.msra.mxu0 %v4601
      %7099 = vmatprep.subr.bf16.mxu0 %v4627
      %7100 = vmatpush1.bf16.msra.mxu0 %v4626
      %7101 = vmatprep.subr.bf16.mxu0 %v4652
      %7102 = vmatpush1.bf16.msra.mxu0 %v4651
      %7103 = vmatprep.subr.bf16.mxu0 %v4677
      %7104 = vmatpush1.bf16.msra.mxu0 %v4676
      %7105 = vmatprep.subr.bf16.mxu0 %v4702
      %7106 = vmatpush1.bf16.msra.mxu0 %v4701
      %7107 = vmatprep.subr.bf16.mxu0 %v4727
      %7108 = vmatpush1.bf16.msra.mxu0 %v4726
      %7109 = vmatprep.mubr.bf16.mxu0 %v1290
      %7110 = vmatmul.mubr.bf16.gmra.mrb[0].mxu0 %v1289
      %v7111 = vpop.f32.mrb[0].mxu0
      %v7112 = vadd.f32 0.0, %v7111
      %v7113 = vpop.f32.mrb[0].mxu0
      %v7114 = vadd.f32 0.0, %v7113
      %v7115 = vpop.f32.mrb[0].mxu0
      %v7116 = vpop.f32.mrb[0].mxu0
      %7117 = vdwg.mxu0
      %7118 = vmatprep.subr.bf16.mxu0 %v4752
      %7119 = vmatpush1.bf16.msra.mxu0 %v4751
      %7120 = vmatprep.subr.bf16.mxu0 %v4777
      %7121 = vmatpush1.bf16.msra.mxu0 %v4776
      %7122 = vmatprep.subr.bf16.mxu0 %v4802
      %7123 = vmatpush1.bf16.msra.mxu0 %v4801
      %7124 = vmatprep.subr.bf16.mxu0 %v4827
      %7125 = vmatpush1.bf16.msra.mxu0 %v4826
      %7126 = vmatprep.subr.bf16.mxu0 %v4852
      %7127 = vmatpush1.bf16.msra.mxu0 %v4851
      %7128 = vmatprep.subr.bf16.mxu0 %v4877
      %7129 = vmatpush1.bf16.msra.mxu0 %v4876
      %7130 = vmatprep.subr.bf16.mxu0 %v4902
      %7131 = vmatpush1.bf16.msra.mxu0 %v4901
      %7132 = vmatprep.subr.bf16.mxu0 %v4927
      %7133 = vmatpush1.bf16.msra.mxu0 %v4926
      %7134 = vmatprep.subr.bf16.mxu0 %v4952
      %7135 = vmatpush1.bf16.msra.mxu0 %v4951
      %7136 = vmatprep.subr.bf16.mxu0 %v4977
      %7137 = vmatpush1.bf16.msra.mxu0 %v4976
      %7138 = vmatprep.subr.bf16.mxu0 %v5002
      %7139 = vmatpush1.bf16.msra.mxu0 %v5001
      %7140 = vmatprep.subr.bf16.mxu0 %v5027
      %7141 = vmatpush1.bf16.msra.mxu0 %v5026
      %7142 = vmatprep.subr.bf16.mxu0 %v5052
      %7143 = vmatpush1.bf16.msra.mxu0 %v5051
      %7144 = vmatprep.subr.bf16.mxu0 %v5077
      %7145 = vmatpush1.bf16.msra.mxu0 %v5076
      %7146 = vmatprep.subr.bf16.mxu0 %v5102
      %7147 = vmatpush1.bf16.msra.mxu0 %v5101
      %7148 = vmatprep.subr.bf16.mxu0 %v5127
      %7149 = vmatpush1.bf16.msra.mxu0 %v5126
      %7150 = vmatprep.mubr.bf16.mxu0 %v1292
      %7151 = vmatmul.mubr.bf16.gmra.mrb[0].mxu0 %v1291
      %v7152 = vpop.f32.mrb[0].mxu0
      %v7153 = vadd.f32 %v7112, %v7152
      %v7154 = vpop.f32.mrb[0].mxu0
      %v7155 = vadd.f32 %v7114, %v7154
      %v7156 = vpop.f32.mrb[0].mxu0
      %v7157 = vpop.f32.mrb[0].mxu0
      %7158 = vdwg.mxu0
      %7159 = vmatprep.subr.bf16.mxu0 %v5152
      %7160 = vmatpush1.bf16.msra.mxu0 %v5151
      %7161 = vmatprep.subr.bf16.mxu0 %v5177
      %7162 = vmatpush1.bf16.msra.mxu0 %v5176
      %7163 = vmatprep.subr.bf16.mxu0 %v5202
      %7164 = vmatpush1.bf16.msra.mxu0 %v5201
      %7165 = vmatprep.subr.bf16.mxu0 %v5227
      %7166 = vmatpush1.bf16.msra.mxu0 %v5226
      %7167 = vmatprep.subr.bf16.mxu0 %v5252
      %7168 = vmatpush1.bf16.msra.mxu0 %v5251
      %7169 = vmatprep.subr.bf16.mxu0 %v5277
      %7170 = vmatpush1.bf16.msra.mxu0 %v5276
      %7171 = vmatprep.subr.bf16.mxu0 %v5302
      %7172 = vmatpush1.bf16.msra.mxu0 %v5301
      %7173 = vmatprep.subr.bf16.mxu0 %v5327
      %7174 = vmatpush1.bf16.msra.mxu0 %v5326
      %7175 = vmatprep.subr.bf16.mxu0 0
      %7176 = vmatpush1.bf16.msra.mxu0 0
      %7177 = vmatprep.subr.bf16.mxu0 0
      %7178 = vmatpush1.bf16.msra.mxu0 0
      %7179 = vmatprep.subr.bf16.mxu0 0
      %7180 = vmatpush1.bf16.msra.mxu0 0
      %7181 = vmatprep.subr.bf16.mxu0 0
      %7182 = vmatpush1.bf16.msra.mxu0 0
      %7183 = vmatprep.subr.bf16.mxu0 0
      %7184 = vmatpush1.bf16.msra.mxu0 0
      %7185 = vmatprep.subr.bf16.mxu0 0
      %7186 = vmatpush1.bf16.msra.mxu0 0
      %7187 = vmatprep.subr.bf16.mxu0 0
      %7188 = vmatpush1.bf16.msra.mxu0 0
      %7189 = vmatprep.subr.bf16.mxu0 0
      %7190 = vmatpush1.bf16.msra.mxu0 0
      %7191 = vmatprep.mubr.bf16.mxu0 0
      %7192 = vmatmul.mubr.bf16.gmra.mrb[0].mxu0 %v1293
      %v7193 = vpop.f32.mrb[0].mxu0
      %v7194 = vadd.f32 %v7153, %v7193
      %v7195 = vpop.f32.mrb[0].mxu0
      %v7196 = vadd.f32 %v7155, %v7195
      %v7197 = vpop.f32.mrb[0].mxu0
      %v7198 = vpop.f32.mrb[0].mxu0
      %7199 = vdwg.mxu0
      %7200 = vmatprep.subr.bf16.mxu0 %v4354
      %7201 = vmatpush1.bf16.msra.mxu0 %v4353
      %7202 = vmatprep.subr.bf16.mxu0 %v4379
      %7203 = vmatpush1.bf16.msra.mxu0 %v4378
      %7204 = vmatprep.subr.bf16.mxu0 %v4404
      %7205 = vmatpush1.bf16.msra.mxu0 %v4403
      %7206 = vmatprep.subr.bf16.mxu0 %v4429
      %7207 = vmatpush1.bf16.msra.mxu0 %v4428
      %7208 = vmatprep.subr.bf16.mxu0 %v4454
      %7209 = vmatpush1.bf16.msra.mxu0 %v4453
      %7210 = vmatprep.subr.bf16.mxu0 %v4479
      %7211 = vmatpush1.bf16.msra.mxu0 %v4478
      %7212 = vmatprep.subr.bf16.mxu0 %v4504
      %7213 = vmatpush1.bf16.msra.mxu0 %v4503
      %7214 = vmatprep.subr.bf16.mxu0 %v4529
      %7215 = vmatpush1.bf16.msra.mxu0 %v4528
      %7216 = vmatprep.subr.bf16.mxu0 %v4554
      %7217 = vmatpush1.bf16.msra.mxu0 %v4553
      %7218 = vmatprep.subr.bf16.mxu0 %v4579
      %7219 = vmatpush1.bf16.msra.mxu0 %v4578
      %7220 = vmatprep.subr.bf16.mxu0 %v4604
      %7221 = vmatpush1.bf16.msra.mxu0 %v4603
      %7222 = vmatprep.subr.bf16.mxu0 %v4629
      %7223 = vmatpush1.bf16.msra.mxu0 %v4628
      %7224 = vmatprep.subr.bf16.mxu0 %v4654
      %7225 = vmatpush1.bf16.msra.mxu0 %v4653
      %7226 = vmatprep.subr.bf16.mxu0 %v4679
      %7227 = vmatpush1.bf16.msra.mxu0 %v4678
      %7228 = vmatprep.subr.bf16.mxu0 %v4704
      %7229 = vmatpush1.bf16.msra.mxu0 %v4703
      %7230 = vmatprep.subr.bf16.mxu0 %v4729
      %7231 = vmatpush1.bf16.msra.mxu0 %v4728
      %7232 = vmatprep.mubr.bf16.mxu0 %v1290
      %7233 = vmatmul.mubr.bf16.gmra.mrb[0].mxu0 %v1289
      %v7234 = vpop.f32.mrb[0].mxu0
      %v7235 = vadd.f32 0.0, %v7234
      %v7236 = vpop.f32.mrb[0].mxu0
      %v7237 = vadd.f32 0.0, %v7236
      %v7238 = vpop.f32.mrb[0].mxu0
      %v7239 = vpop.f32.mrb[0].mxu0
      %7240 = vdwg.mxu0
      %7241 = vmatprep.subr.bf16.mxu0 %v4754
      %7242 = vmatpush1.bf16.msra.mxu0 %v4753
      %7243 = vmatprep.subr.bf16.mxu0 %v4779
      %7244 = vmatpush1.bf16.msra.mxu0 %v4778
      %7245 = vmatprep.subr.bf16.mxu0 %v4804
      %7246 = vmatpush1.bf16.msra.mxu0 %v4803
      %7247 = vmatprep.subr.bf16.mxu0 %v4829
      %7248 = vmatpush1.bf16.msra.mxu0 %v4828
      %7249 = vmatprep.subr.bf16.mxu0 %v4854
      %7250 = vmatpush1.bf16.msra.mxu0 %v4853
      %7251 = vmatprep.subr.bf16.mxu0 %v4879
      %7252 = vmatpush1.bf16.msra.mxu0 %v4878
      %7253 = vmatprep.subr.bf16.mxu0 %v4904
      %7254 = vmatpush1.bf16.msra.mxu0 %v4903
      %7255 = vmatprep.subr.bf16.mxu0 %v4929
      %7256 = vmatpush1.bf16.msra.mxu0 %v4928
      %7257 = vmatprep.subr.bf16.mxu0 %v4954
      %7258 = vmatpush1.bf16.msra.mxu0 %v4953
      %7259 = vmatprep.subr.bf16.mxu0 %v4979
      %7260 = vmatpush1.bf16.msra.mxu0 %v4978
      %7261 = vmatprep.subr.bf16.mxu0 %v5004
      %7262 = vmatpush1.bf16.msra.mxu0 %v5003
      %7263 = vmatprep.subr.bf16.mxu0 %v5029
      %7264 = vmatpush1.bf16.msra.mxu0 %v5028
      %7265 = vmatprep.subr.bf16.mxu0 %v5054
      %7266 = vmatpush1.bf16.msra.mxu0 %v5053
      %7267 = vmatprep.subr.bf16.mxu0 %v5079
      %7268 = vmatpush1.bf16.msra.mxu0 %v5078
      %7269 = vmatprep.subr.bf16.mxu0 %v5104
      %7270 = vmatpush1.bf16.msra.mxu0 %v5103
      %7271 = vmatprep.subr.bf16.mxu0 %v5129
      %7272 = vmatpush1.bf16.msra.mxu0 %v5128
      %7273 = vmatprep.mubr.bf16.mxu0 %v1292
      %7274 = vmatmul.mubr.bf16.gmra.mrb[0].mxu0 %v1291
      %v7275 = vpop.f32.mrb[0].mxu0
      %v7276 = vadd.f32 %v7235, %v7275
      %v7277 = vpop.f32.mrb[0].mxu0
      %v7278 = vadd.f32 %v7237, %v7277
      %v7279 = vpop.f32.mrb[0].mxu0
      %v7280 = vpop.f32.mrb[0].mxu0
      %7281 = vdwg.mxu0
      %7282 = vmatprep.subr.bf16.mxu0 %v5154
      %7283 = vmatpush1.bf16.msra.mxu0 %v5153
      %7284 = vmatprep.subr.bf16.mxu0 %v5179
      %7285 = vmatpush1.bf16.msra.mxu0 %v5178
      %7286 = vmatprep.subr.bf16.mxu0 %v5204
      %7287 = vmatpush1.bf16.msra.mxu0 %v5203
      %7288 = vmatprep.subr.bf16.mxu0 %v5229
      %7289 = vmatpush1.bf16.msra.mxu0 %v5228
      %7290 = vmatprep.subr.bf16.mxu0 %v5254
      %7291 = vmatpush1.bf16.msra.mxu0 %v5253
      %7292 = vmatprep.subr.bf16.mxu0 %v5279
      %7293 = vmatpush1.bf16.msra.mxu0 %v5278
      %7294 = vmatprep.subr.bf16.mxu0 %v5304
      %7295 = vmatpush1.bf16.msra.mxu0 %v5303
      %7296 = vmatprep.subr.bf16.mxu0 %v5329
      %7297 = vmatpush1.bf16.msra.mxu0 %v5328
      %7298 = vmatprep.subr.bf16.mxu0 0
      %7299 = vmatpush1.bf16.msra.mxu0 0
      %7300 = vmatprep.subr.bf16.mxu0 0
      %7301 = vmatpush1.bf16.msra.mxu0 0
      %7302 = vmatprep.subr.bf16.mxu0 0
      %7303 = vmatpush1.bf16.msra.mxu0 0
      %7304 = vmatprep.subr.bf16.mxu0 0
      %7305 = vmatpush1.bf16.msra.mxu0 0
      %7306 = vmatprep.subr.bf16.mxu0 0
      %7307 = vmatpush1.bf16.msra.mxu0 0
      %7308 = vmatprep.subr.bf16.mxu0 0
      %7309 = vmatpush1.bf16.msra.mxu0 0
      %7310 = vmatprep.subr.bf16.mxu0 0
      %7311 = vmatpush1.bf16.msra.mxu0 0
      %7312 = vmatprep.subr.bf16.mxu0 0
      %7313 = vmatpush1.bf16.msra.mxu0 0
      %7314 = vmatprep.mubr.bf16.mxu0 0
      %7315 = vmatmul.mubr.bf16.gmra.mrb[0].mxu0 %v1293
      %v7316 = vpop.f32.mrb[0].mxu0
      %v7317 = vadd.f32 %v7276, %v7316
      %v7318 = vpop.f32.mrb[0].mxu0
      %v7319 = vadd.f32 %v7278, %v7318
      %v7320 = vpop.f32.mrb[0].mxu0
      %v7321 = vpop.f32.mrb[0].mxu0
      %7322 = vdwg.mxu0
      %7323 = vmatprep.subr.bf16.mxu0 %v4356
      %7324 = vmatpush1.bf16.msra.mxu0 %v4355
      %7325 = vmatprep.subr.bf16.mxu0 %v4381
      %7326 = vmatpush1.bf16.msra.mxu0 %v4380
      %7327 = vmatprep.subr.bf16.mxu0 %v4406
      %7328 = vmatpush1.bf16.msra.mxu0 %v4405
      %7329 = vmatprep.subr.bf16.mxu0 %v4431
      %7330 = vmatpush1.bf16.msra.mxu0 %v4430
      %7331 = vmatprep.subr.bf16.mxu0 %v4456
      %7332 = vmatpush1.bf16.msra.mxu0 %v4455
      %7333 = vmatprep.subr.bf16.mxu0 %v4481
      %7334 = vmatpush1.bf16.msra.mxu0 %v4480
      %7335 = vmatprep.subr.bf16.mxu0 %v4506
      %7336 = vmatpush1.bf16.msra.mxu0 %v4505
      %7337 = vmatprep.subr.bf16.mxu0 %v4531
      %7338 = vmatpush1.bf16.msra.mxu0 %v4530
      %7339 = vmatprep.subr.bf16.mxu0 %v4556
      %7340 = vmatpush1.bf16.msra.mxu0 %v4555
      %7341 = vmatprep.subr.bf16.mxu0 %v4581
      %7342 = vmatpush1.bf16.msra.mxu0 %v4580
      %7343 = vmatprep.subr.bf16.mxu0 %v4606
      %7344 = vmatpush1.bf16.msra.mxu0 %v4605
      %7345 = vmatprep.subr.bf16.mxu0 %v4631
      %7346 = vmatpush1.bf16.msra.mxu0 %v4630
      %7347 = vmatprep.subr.bf16.mxu0 %v4656
      %7348 = vmatpush1.bf16.msra.mxu0 %v4655
      %7349 = vmatprep.subr.bf16.mxu0 %v4681
      %7350 = vmatpush1.bf16.msra.mxu0 %v4680
      %7351 = vmatprep.subr.bf16.mxu0 %v4706
      %7352 = vmatpush1.bf16.msra.mxu0 %v4705
      %7353 = vmatprep.subr.bf16.mxu0 %v4731
      %7354 = vmatpush1.bf16.msra.mxu0 %v4730
      %7355 = vmatprep.mubr.bf16.mxu0 %v1290
      %7356 = vmatmul.mubr.bf16.gmra.mrb[0].mxu0 %v1289
      %v7357 = vpop.f32.mrb[0].mxu0
      %v7358 = vadd.f32 0.0, %v7357
      %v7359 = vpop.f32.mrb[0].mxu0
      %v7360 = vadd.f32 0.0, %v7359
      %v7361 = vpop.f32.mrb[0].mxu0
      %v7362 = vpop.f32.mrb[0].mxu0
      %7363 = vdwg.mxu0
      %7364 = vmatprep.subr.bf16.mxu0 %v4756
      %7365 = vmatpush1.bf16.msra.mxu0 %v4755
      %7366 = vmatprep.subr.bf16.mxu0 %v4781
      %7367 = vmatpush1.bf16.msra.mxu0 %v4780
      %7368 = vmatprep.subr.bf16.mxu0 %v4806
      %7369 = vmatpush1.bf16.msra.mxu0 %v4805
      %7370 = vmatprep.subr.bf16.mxu0 %v4831
      %7371 = vmatpush1.bf16.msra.mxu0 %v4830
      %7372 = vmatprep.subr.bf16.mxu0 %v4856
      %7373 = vmatpush1.bf16.msra.mxu0 %v4855
      %7374 = vmatprep.subr.bf16.mxu0 %v4881
      %7375 = vmatpush1.bf16.msra.mxu0 %v4880
      %7376 = vmatprep.subr.bf16.mxu0 %v4906
      %7377 = vmatpush1.bf16.msra.mxu0 %v4905
      %7378 = vmatprep.subr.bf16.mxu0 %v4931
      %7379 = vmatpush1.bf16.msra.mxu0 %v4930
      %7380 = vmatprep.subr.bf16.mxu0 %v4956
      %7381 = vmatpush1.bf16.msra.mxu0 %v4955
      %7382 = vmatprep.subr.bf16.mxu0 %v4981
      %7383 = vmatpush1.bf16.msra.mxu0 %v4980
      %7384 = vmatprep.subr.bf16.mxu0 %v5006
      %7385 = vmatpush1.bf16.msra.mxu0 %v5005
      %7386 = vmatprep.subr.bf16.mxu0 %v5031
      %7387 = vmatpush1.bf16.msra.mxu0 %v5030
      %7388 = vmatprep.subr.bf16.mxu0 %v5056
      %7389 = vmatpush1.bf16.msra.mxu0 %v5055
      %7390 = vmatprep.subr.bf16.mxu0 %v5081
      %7391 = vmatpush1.bf16.msra.mxu0 %v5080
      %7392 = vmatprep.subr.bf16.mxu0 %v5106
      %7393 = vmatpush1.bf16.msra.mxu0 %v5105
      %7394 = vmatprep.subr.bf16.mxu0 %v5131
      %7395 = vmatpush1.bf16.msra.mxu0 %v5130
      %7396 = vmatprep.mubr.bf16.mxu0 %v1292
      %7397 = vmatmul.mubr.bf16.gmra.mrb[0].mxu0 %v1291
      %v7398 = vpop.f32.mrb[0].mxu0
      %v7399 = vadd.f32 %v7358, %v7398
      %v7400 = vpop.f32.mrb[0].mxu0
      %v7401 = vadd.f32 %v7360, %v7400
      %v7402 = vpop.f32.mrb[0].mxu0
      %v7403 = vpop.f32.mrb[0].mxu0
      %7404 = vdwg.mxu0
      %7405 = vmatprep.subr.bf16.mxu0 %v5156
      %7406 = vmatpush1.bf16.msra.mxu0 %v5155
      %7407 = vmatprep.subr.bf16.mxu0 %v5181
      %7408 = vmatpush1.bf16.msra.mxu0 %v5180
      %7409 = vmatprep.subr.bf16.mxu0 %v5206
      %7410 = vmatpush1.bf16.msra.mxu0 %v5205
      %7411 = vmatprep.subr.bf16.mxu0 %v5231
      %7412 = vmatpush1.bf16.msra.mxu0 %v5230
      %7413 = vmatprep.subr.bf16.mxu0 %v5256
      %7414 = vmatpush1.bf16.msra.mxu0 %v5255
      %7415 = vmatprep.subr.bf16.mxu0 %v5281
      %7416 = vmatpush1.bf16.msra.mxu0 %v5280
      %7417 = vmatprep.subr.bf16.mxu0 %v5306
      %7418 = vmatpush1.bf16.msra.mxu0 %v5305
      %7419 = vmatprep.subr.bf16.mxu0 %v5331
      %7420 = vmatpush1.bf16.msra.mxu0 %v5330
      %7421 = vmatprep.subr.bf16.mxu0 0
      %7422 = vmatpush1.bf16.msra.mxu0 0
      %7423 = vmatprep.subr.bf16.mxu0 0
      %7424 = vmatpush1.bf16.msra.mxu0 0
      %7425 = vmatprep.subr.bf16.mxu0 0
      %7426 = vmatpush1.bf16.msra.mxu0 0
      %7427 = vmatprep.subr.bf16.mxu0 0
      %7428 = vmatpush1.bf16.msra.mxu0 0
      %7429 = vmatprep.subr.bf16.mxu0 0
      %7430 = vmatpush1.bf16.msra.mxu0 0
      %7431 = vmatprep.subr.bf16.mxu0 0
      %7432 = vmatpush1.bf16.msra.mxu0 0
      %7433 = vmatprep.subr.bf16.mxu0 0
      %7434 = vmatpush1.bf16.msra.mxu0 0
      %7435 = vmatprep.subr.bf16.mxu0 0
      %7436 = vmatpush1.bf16.msra.mxu0 0
      %7437 = vmatprep.mubr.bf16.mxu0 0
      %7438 = vmatmul.mubr.bf16.gmra.mrb[0].mxu0 %v1293
      %v7439 = vpop.f32.mrb[0].mxu0
      %v7440 = vadd.f32 %v7399, %v7439
      %v7441 = vpop.f32.mrb[0].mxu0
      %v7442 = vadd.f32 %v7401, %v7441
      %v7443 = vpop.f32.mrb[0].mxu0
      %v7444 = vpop.f32.mrb[0].mxu0
      %7445 = vdwg.mxu0
      %7446 = vmatprep.subr.bf16.mxu0 %v4358
      %7447 = vmatpush1.bf16.msra.mxu0 %v4357
      %7448 = vmatprep.subr.bf16.mxu0 %v4383
      %7449 = vmatpush1.bf16.msra.mxu0 %v4382
      %7450 = vmatprep.subr.bf16.mxu0 %v4408
      %7451 = vmatpush1.bf16.msra.mxu0 %v4407
      %7452 = vmatprep.subr.bf16.mxu0 %v4433
      %7453 = vmatpush1.bf16.msra.mxu0 %v4432
      %7454 = vmatprep.subr.bf16.mxu0 %v4458
      %7455 = vmatpush1.bf16.msra.mxu0 %v4457
      %7456 = vmatprep.subr.bf16.mxu0 %v4483
      %7457 = vmatpush1.bf16.msra.mxu0 %v4482
      %7458 = vmatprep.subr.bf16.mxu0 %v4508
      %7459 = vmatpush1.bf16.msra.mxu0 %v4507
      %7460 = vmatprep.subr.bf16.mxu0 %v4533
      %7461 = vmatpush1.bf16.msra.mxu0 %v4532
      %7462 = vmatprep.subr.bf16.mxu0 %v4558
      %7463 = vmatpush1.bf16.msra.mxu0 %v4557
      %7464 = vmatprep.subr.bf16.mxu0 %v4583
      %7465 = vmatpush1.bf16.msra.mxu0 %v4582
      %7466 = vmatprep.subr.bf16.mxu0 %v4608
      %7467 = vmatpush1.bf16.msra.mxu0 %v4607
      %7468 = vmatprep.subr.bf16.mxu0 %v4633
      %7469 = vmatpush1.bf16.msra.mxu0 %v4632
      %7470 = vmatprep.subr.bf16.mxu0 %v4658
      %7471 = vmatpush1.bf16.msra.mxu0 %v4657
      %7472 = vmatprep.subr.bf16.mxu0 %v4683
      %7473 = vmatpush1.bf16.msra.mxu0 %v4682
      %7474 = vmatprep.subr.bf16.mxu0 %v4708
      %7475 = vmatpush1.bf16.msra.mxu0 %v4707
      %7476 = vmatprep.subr.bf16.mxu0 %v4733
      %7477 = vmatpush1.bf16.msra.mxu0 %v4732
      %7478 = vmatprep.mubr.bf16.mxu0 %v1290
      %7479 = vmatmul.mubr.bf16.gmra.mrb[0].mxu0 %v1289
      %v7480 = vpop.f32.mrb[0].mxu0
      %v7481 = vadd.f32 0.0, %v7480
      %v7482 = vpop.f32.mrb[0].mxu0
      %v7483 = vadd.f32 0.0, %v7482
      %v7484 = vpop.f32.mrb[0].mxu0
      %v7485 = vpop.f32.mrb[0].mxu0
      %7486 = vdwg.mxu0
      %7487 = vmatprep.subr.bf16.mxu0 %v4758
      %7488 = vmatpush1.bf16.msra.mxu0 %v4757
      %7489 = vmatprep.subr.bf16.mxu0 %v4783
      %7490 = vmatpush1.bf16.msra.mxu0 %v4782
      %7491 = vmatprep.subr.bf16.mxu0 %v4808
      %7492 = vmatpush1.bf16.msra.mxu0 %v4807
      %7493 = vmatprep.subr.bf16.mxu0 %v4833
      %7494 = vmatpush1.bf16.msra.mxu0 %v4832
      %7495 = vmatprep.subr.bf16.mxu0 %v4858
      %7496 = vmatpush1.bf16.msra.mxu0 %v4857
      %7497 = vmatprep.subr.bf16.mxu0 %v4883
      %7498 = vmatpush1.bf16.msra.mxu0 %v4882
      %7499 = vmatprep.subr.bf16.mxu0 %v4908
      %7500 = vmatpush1.bf16.msra.mxu0 %v4907
      %7501 = vmatprep.subr.bf16.mxu0 %v4933
      %7502 = vmatpush1.bf16.msra.mxu0 %v4932
      %7503 = vmatprep.subr.bf16.mxu0 %v4958
      %7504 = vmatpush1.bf16.msra.mxu0 %v4957
      %7505 = vmatprep.subr.bf16.mxu0 %v4983
      %7506 = vmatpush1.bf16.msra.mxu0 %v4982
      %7507 = vmatprep.subr.bf16.mxu0 %v5008
      %7508 = vmatpush1.bf16.msra.mxu0 %v5007
      %7509 = vmatprep.subr.bf16.mxu0 %v5033
      %7510 = vmatpush1.bf16.msra.mxu0 %v5032
      %7511 = vmatprep.subr.bf16.mxu0 %v5058
      %7512 = vmatpush1.bf16.msra.mxu0 %v5057
      %7513 = vmatprep.subr.bf16.mxu0 %v5083
      %7514 = vmatpush1.bf16.msra.mxu0 %v5082
      %7515 = vmatprep.subr.bf16.mxu0 %v5108
      %7516 = vmatpush1.bf16.msra.mxu0 %v5107
      %7517 = vmatprep.subr.bf16.mxu0 %v5133
      %7518 = vmatpush1.bf16.msra.mxu0 %v5132
      %7519 = vmatprep.mubr.bf16.mxu0 %v1292
      %7520 = vmatmul.mubr.bf16.gmra.mrb[0].mxu0 %v1291
      %v7521 = vpop.f32.mrb[0].mxu0
      %v7522 = vadd.f32 %v7481, %v7521
      %v7523 = vpop.f32.mrb[0].mxu0
      %v7524 = vadd.f32 %v7483, %v7523
      %v7525 = vpop.f32.mrb[0].mxu0
      %v7526 = vpop.f32.mrb[0].mxu0
      %7527 = vdwg.mxu0
      %7528 = vmatprep.subr.bf16.mxu0 %v5158
      %7529 = vmatpush1.bf16.msra.mxu0 %v5157
      %7530 = vmatprep.subr.bf16.mxu0 %v5183
      %7531 = vmatpush1.bf16.msra.mxu0 %v5182
      %7532 = vmatprep.subr.bf16.mxu0 %v5208
      %7533 = vmatpush1.bf16.msra.mxu0 %v5207
      %7534 = vmatprep.subr.bf16.mxu0 %v5233
      %7535 = vmatpush1.bf16.msra.mxu0 %v5232
      %7536 = vmatprep.subr.bf16.mxu0 %v5258
      %7537 = vmatpush1.bf16.msra.mxu0 %v5257
      %7538 = vmatprep.subr.bf16.mxu0 %v5283
      %7539 = vmatpush1.bf16.msra.mxu0 %v5282
      %7540 = vmatprep.subr.bf16.mxu0 %v5308
      %7541 = vmatpush1.bf16.msra.mxu0 %v5307
      %7542 = vmatprep.subr.bf16.mxu0 %v5333
      %7543 = vmatpush1.bf16.msra.mxu0 %v5332
      %7544 = vmatprep.subr.bf16.mxu0 0
      %7545 = vmatpush1.bf16.msra.mxu0 0
      %7546 = vmatprep.subr.bf16.mxu0 0
      %7547 = vmatpush1.bf16.msra.mxu0 0
      %7548 = vmatprep.subr.bf16.mxu0 0
      %7549 = vmatpush1.bf16.msra.mxu0 0
      %7550 = vmatprep.subr.bf16.mxu0 0
      %7551 = vmatpush1.bf16.msra.mxu0 0
      %7552 = vmatprep.subr.bf16.mxu0 0
      %7553 = vmatpush1.bf16.msra.mxu0 0
      %7554 = vmatprep.subr.bf16.mxu0 0
      %7555 = vmatpush1.bf16.msra.mxu0 0
      %7556 = vmatprep.subr.bf16.mxu0 0
      %7557 = vmatpush1.bf16.msra.mxu0 0
      %7558 = vmatprep.subr.bf16.mxu0 0
      %7559 = vmatpush1.bf16.msra.mxu0 0
      %7560 = vmatprep.mubr.bf16.mxu0 0
      %7561 = vmatmul.mubr.bf16.gmra.mrb[0].mxu0 %v1293
      %v7562 = vpop.f32.mrb[0].mxu0
      %v7563 = vadd.f32 %v7522, %v7562
      %v7564 = vpop.f32.mrb[0].mxu0
      %v7565 = vadd.f32 %v7524, %v7564
      %v7566 = vpop.f32.mrb[0].mxu0
      %v7567 = vpop.f32.mrb[0].mxu0
      %7568 = vdwg.mxu0
      %7569 = vmatprep.subr.bf16.mxu0 %v4360
      %7570 = vmatpush1.bf16.msra.mxu0 %v4359
      %7571 = vmatprep.subr.bf16.mxu0 %v4385
      %7572 = vmatpush1.bf16.msra.mxu0 %v4384
      %7573 = vmatprep.subr.bf16.mxu0 %v4410
      %7574 = vmatpush1.bf16.msra.mxu0 %v4409
      %7575 = vmatprep.subr.bf16.mxu0 %v4435
      %7576 = vmatpush1.bf16.msra.mxu0 %v4434
      %7577 = vmatprep.subr.bf16.mxu0 %v4460
      %7578 = vmatpush1.bf16.msra.mxu0 %v4459
      %7579 = vmatprep.subr.bf16.mxu0 %v4485
      %7580 = vmatpush1.bf16.msra.mxu0 %v4484
      %7581 = vmatprep.subr.bf16.mxu0 %v4510
      %7582 = vmatpush1.bf16.msra.mxu0 %v4509
      %7583 = vmatprep.subr.bf16.mxu0 %v4535
      %7584 = vmatpush1.bf16.msra.mxu0 %v4534
      %7585 = vmatprep.subr.bf16.mxu0 %v4560
      %7586 = vmatpush1.bf16.msra.mxu0 %v4559
      %7587 = vmatprep.subr.bf16.mxu0 %v4585
      %7588 = vmatpush1.bf16.msra.mxu0 %v4584
      %7589 = vmatprep.subr.bf16.mxu0 %v4610
      %7590 = vmatpush1.bf16.msra.mxu0 %v4609
      %7591 = vmatprep.subr.bf16.mxu0 %v4635
      %7592 = vmatpush1.bf16.msra.mxu0 %v4634
      %7593 = vmatprep.subr.bf16.mxu0 %v4660
      %7594 = vmatpush1.bf16.msra.mxu0 %v4659
      %7595 = vmatprep.subr.bf16.mxu0 %v4685
      %7596 = vmatpush1.bf16.msra.mxu0 %v4684
      %7597 = vmatprep.subr.bf16.mxu0 %v4710
      %7598 = vmatpush1.bf16.msra.mxu0 %v4709
      %7599 = vmatprep.subr.bf16.mxu0 %v4735
      %7600 = vmatpush1.bf16.msra.mxu0 %v4734
      %7601 = vmatprep.mubr.bf16.mxu0 %v1290
      %7602 = vmatmul.mubr.bf16.gmra.mrb[0].mxu0 %v1289
      %v7603 = vpop.f32.mrb[0].mxu0
      %v7604 = vadd.f32 0.0, %v7603
      %v7605 = vpop.f32.mrb[0].mxu0
      %v7606 = vadd.f32 0.0, %v7605
      %v7607 = vpop.f32.mrb[0].mxu0
      %v7608 = vpop.f32.mrb[0].mxu0
      %7609 = vdwg.mxu0
      %7610 = vmatprep.subr.bf16.mxu0 %v4760
      %7611 = vmatpush1.bf16.msra.mxu0 %v4759
      %7612 = vmatprep.subr.bf16.mxu0 %v4785
      %7613 = vmatpush1.bf16.msra.mxu0 %v4784
      %7614 = vmatprep.subr.bf16.mxu0 %v4810
      %7615 = vmatpush1.bf16.msra.mxu0 %v4809
      %7616 = vmatprep.subr.bf16.mxu0 %v4835
      %7617 = vmatpush1.bf16.msra.mxu0 %v4834
      %7618 = vmatprep.subr.bf16.mxu0 %v4860
      %7619 = vmatpush1.bf16.msra.mxu0 %v4859
      %7620 = vmatprep.subr.bf16.mxu0 %v4885
      %7621 = vmatpush1.bf16.msra.mxu0 %v4884
      %7622 = vmatprep.subr.bf16.mxu0 %v4910
      %7623 = vmatpush1.bf16.msra.mxu0 %v4909
      %7624 = vmatprep.subr.bf16.mxu0 %v4935
      %7625 = vmatpush1.bf16.msra.mxu0 %v4934
      %7626 = vmatprep.subr.bf16.mxu0 %v4960
      %7627 = vmatpush1.bf16.msra.mxu0 %v4959
      %7628 = vmatprep.subr.bf16.mxu0 %v4985
      %7629 = vmatpush1.bf16.msra.mxu0 %v4984
      %7630 = vmatprep.subr.bf16.mxu0 %v5010
      %7631 = vmatpush1.bf16.msra.mxu0 %v5009
      %7632 = vmatprep.subr.bf16.mxu0 %v5035
      %7633 = vmatpush1.bf16.msra.mxu0 %v5034
      %7634 = vmatprep.subr.bf16.mxu0 %v5060
      %7635 = vmatpush1.bf16.msra.mxu0 %v5059
      %7636 = vmatprep.subr.bf16.mxu0 %v5085
      %7637 = vmatpush1.bf16.msra.mxu0 %v5084
      %7638 = vmatprep.subr.bf16.mxu0 %v5110
      %7639 = vmatpush1.bf16.msra.mxu0 %v5109
      %7640 = vmatprep.subr.bf16.mxu0 %v5135
      %7641 = vmatpush1.bf16.msra.mxu0 %v5134
      %7642 = vmatprep.mubr.bf16.mxu0 %v1292
      %7643 = vmatmul.mubr.bf16.gmra.mrb[0].mxu0 %v1291
      %v7644 = vpop.f32.mrb[0].mxu0
      %v7645 = vadd.f32 %v7604, %v7644
      %v7646 = vpop.f32.mrb[0].mxu0
      %v7647 = vadd.f32 %v7606, %v7646
      %v7648 = vpop.f32.mrb[0].mxu0
      %v7649 = vpop.f32.mrb[0].mxu0
      %7650 = vdwg.mxu0
      %7651 = vmatprep.subr.bf16.mxu0 %v5160
      %7652 = vmatpush1.bf16.msra.mxu0 %v5159
      %7653 = vmatprep.subr.bf16.mxu0 %v5185
      %7654 = vmatpush1.bf16.msra.mxu0 %v5184
      %7655 = vmatprep.subr.bf16.mxu0 %v5210
      %7656 = vmatpush1.bf16.msra.mxu0 %v5209
      %7657 = vmatprep.subr.bf16.mxu0 %v5235
      %7658 = vmatpush1.bf16.msra.mxu0 %v5234
      %7659 = vmatprep.subr.bf16.mxu0 %v5260
      %7660 = vmatpush1.bf16.msra.mxu0 %v5259
      %7661 = vmatprep.subr.bf16.mxu0 %v5285
      %7662 = vmatpush1.bf16.msra.mxu0 %v5284
      %7663 = vmatprep.subr.bf16.mxu0 %v5310
      %7664 = vmatpush1.bf16.msra.mxu0 %v5309
      %7665 = vmatprep.subr.bf16.mxu0 %v5335
      %7666 = vmatpush1.bf16.msra.mxu0 %v5334
      %7667 = vmatprep.subr.bf16.mxu0 0
      %7668 = vmatpush1.bf16.msra.mxu0 0
      %7669 = vmatprep.subr.bf16.mxu0 0
      %7670 = vmatpush1.bf16.msra.mxu0 0
      %7671 = vmatprep.subr.bf16.mxu0 0
      %7672 = vmatpush1.bf16.msra.mxu0 0
      %7673 = vmatprep.subr.bf16.mxu0 0
      %7674 = vmatpush1.bf16.msra.mxu0 0
      %7675 = vmatprep.subr.bf16.mxu0 0
      %7676 = vmatpush1.bf16.msra.mxu0 0
      %7677 = vmatprep.subr.bf16.mxu0 0
      %7678 = vmatpush1.bf16.msra.mxu0 0
      %7679 = vmatprep.subr.bf16.mxu0 0
      %7680 = vmatpush1.bf16.msra.mxu0 0
      %7681 = vmatprep.subr.bf16.mxu0 0
      %7682 = vmatpush1.bf16.msra.mxu0 0
      %7683 = vmatprep.mubr.bf16.mxu0 0
      %7684 = vmatmul.mubr.bf16.gmra.mrb[0].mxu0 %v1293
      %v7685 = vpop.f32.mrb[0].mxu0
      %v7686 = vadd.f32 %v7645, %v7685
      %v7687 = vpop.f32.mrb[0].mxu0
      %v7688 = vadd.f32 %v7647, %v7687
      %v7689 = vpop.f32.mrb[0].mxu0
      %v7690 = vpop.f32.mrb[0].mxu0
      %7691 = vdwg.mxu0
      %7692 = vmatprep.subr.bf16.mxu0 %v4362
      %7693 = vmatpush1.bf16.msra.mxu0 %v4361
      %7694 = vmatprep.subr.bf16.mxu0 %v4387
      %7695 = vmatpush1.bf16.msra.mxu0 %v4386
      %7696 = vmatprep.subr.bf16.mxu0 %v4412
      %7697 = vmatpush1.bf16.msra.mxu0 %v4411
      %7698 = vmatprep.subr.bf16.mxu0 %v4437
      %7699 = vmatpush1.bf16.msra.mxu0 %v4436
      %7700 = vmatprep.subr.bf16.mxu0 %v4462
      %7701 = vmatpush1.bf16.msra.mxu0 %v4461
      %7702 = vmatprep.subr.bf16.mxu0 %v4487
      %7703 = vmatpush1.bf16.msra.mxu0 %v4486
      %7704 = vmatprep.subr.bf16.mxu0 %v4512
      %7705 = vmatpush1.bf16.msra.mxu0 %v4511
      %7706 = vmatprep.subr.bf16.mxu0 %v4537
      %7707 = vmatpush1.bf16.msra.mxu0 %v4536
      %7708 = vmatprep.subr.bf16.mxu0 %v4562
      %7709 = vmatpush1.bf16.msra.mxu0 %v4561
      %7710 = vmatprep.subr.bf16.mxu0 %v4587
      %7711 = vmatpush1.bf16.msra.mxu0 %v4586
      %7712 = vmatprep.subr.bf16.mxu0 %v4612
      %7713 = vmatpush1.bf16.msra.mxu0 %v4611
      %7714 = vmatprep.subr.bf16.mxu0 %v4637
      %7715 = vmatpush1.bf16.msra.mxu0 %v4636
      %7716 = vmatprep.subr.bf16.mxu0 %v4662
      %7717 = vmatpush1.bf16.msra.mxu0 %v4661
      %7718 = vmatprep.subr.bf16.mxu0 %v4687
      %7719 = vmatpush1.bf16.msra.mxu0 %v4686
      %7720 = vmatprep.subr.bf16.mxu0 %v4712
      %7721 = vmatpush1.bf16.msra.mxu0 %v4711
      %7722 = vmatprep.subr.bf16.mxu0 %v4737
      %7723 = vmatpush1.bf16.msra.mxu0 %v4736
      %7724 = vmatprep.mubr.bf16.mxu0 %v1290
      %7725 = vmatmul.mubr.bf16.gmra.mrb[0].mxu0 %v1289
      %v7726 = vpop.f32.mrb[0].mxu0
      %v7727 = vadd.f32 0.0, %v7726
      %v7728 = vpop.f32.mrb[0].mxu0
      %v7729 = vadd.f32 0.0, %v7728
      %v7730 = vpop.f32.mrb[0].mxu0
      %v7731 = vpop.f32.mrb[0].mxu0
      %7732 = vdwg.mxu0
      %7733 = vmatprep.subr.bf16.mxu0 %v4762
      %7734 = vmatpush1.bf16.msra.mxu0 %v4761
      %7735 = vmatprep.subr.bf16.mxu0 %v4787
      %7736 = vmatpush1.bf16.msra.mxu0 %v4786
      %7737 = vmatprep.subr.bf16.mxu0 %v4812
      %7738 = vmatpush1.bf16.msra.mxu0 %v4811
      %7739 = vmatprep.subr.bf16.mxu0 %v4837
      %7740 = vmatpush1.bf16.msra.mxu0 %v4836
      %7741 = vmatprep.subr.bf16.mxu0 %v4862
      %7742 = vmatpush1.bf16.msra.mxu0 %v4861
      %7743 = vmatprep.subr.bf16.mxu0 %v4887
      %7744 = vmatpush1.bf16.msra.mxu0 %v4886
      %7745 = vmatprep.subr.bf16.mxu0 %v4912
      %7746 = vmatpush1.bf16.msra.mxu0 %v4911
      %7747 = vmatprep.subr.bf16.mxu0 %v4937
      %7748 = vmatpush1.bf16.msra.mxu0 %v4936
      %7749 = vmatprep.subr.bf16.mxu0 %v4962
      %7750 = vmatpush1.bf16.msra.mxu0 %v4961
      %7751 = vmatprep.subr.bf16.mxu0 %v4987
      %7752 = vmatpush1.bf16.msra.mxu0 %v4986
      %7753 = vmatprep.subr.bf16.mxu0 %v5012
      %7754 = vmatpush1.bf16.msra.mxu0 %v5011
      %7755 = vmatprep.subr.bf16.mxu0 %v5037
      %7756 = vmatpush1.bf16.msra.mxu0 %v5036
      %7757 = vmatprep.subr.bf16.mxu0 %v5062
      %7758 = vmatpush1.bf16.msra.mxu0 %v5061
      %7759 = vmatprep.subr.bf16.mxu0 %v5087
      %7760 = vmatpush1.bf16.msra.mxu0 %v5086
      %7761 = vmatprep.subr.bf16.mxu0 %v5112
      %7762 = vmatpush1.bf16.msra.mxu0 %v5111
      %7763 = vmatprep.subr.bf16.mxu0 %v5137
      %7764 = vmatpush1.bf16.msra.mxu0 %v5136
      %7765 = vmatprep.mubr.bf16.mxu0 %v1292
      %7766 = vmatmul.mubr.bf16.gmra.mrb[0].mxu0 %v1291
      %v7767 = vpop.f32.mrb[0].mxu0
      %v7768 = vadd.f32 %v7727, %v7767
      %v7769 = vpop.f32.mrb[0].mxu0
      %v7770 = vadd.f32 %v7729, %v7769
      %v7771 = vpop.f32.mrb[0].mxu0
      %v7772 = vpop.f32.mrb[0].mxu0
      %7773 = vdwg.mxu0
      %7774 = vmatprep.subr.bf16.mxu0 %v5162
      %7775 = vmatpush1.bf16.msra.mxu0 %v5161
      %7776 = vmatprep.subr.bf16.mxu0 %v5187
      %7777 = vmatpush1.bf16.msra.mxu0 %v5186
      %7778 = vmatprep.subr.bf16.mxu0 %v5212
      %7779 = vmatpush1.bf16.msra.mxu0 %v5211
      %7780 = vmatprep.subr.bf16.mxu0 %v5237
      %7781 = vmatpush1.bf16.msra.mxu0 %v5236
      %7782 = vmatprep.subr.bf16.mxu0 %v5262
      %7783 = vmatpush1.bf16.msra.mxu0 %v5261
      %7784 = vmatprep.subr.bf16.mxu0 %v5287
      %7785 = vmatpush1.bf16.msra.mxu0 %v5286
      %7786 = vmatprep.subr.bf16.mxu0 %v5312
      %7787 = vmatpush1.bf16.msra.mxu0 %v5311
      %7788 = vmatprep.subr.bf16.mxu0 %v5337
      %7789 = vmatpush1.bf16.msra.mxu0 %v5336
      %7790 = vmatprep.subr.bf16.mxu0 0
      %7791 = vmatpush1.bf16.msra.mxu0 0
      %7792 = vmatprep.subr.bf16.mxu0 0
      %7793 = vmatpush1.bf16.msra.mxu0 0
      %7794 = vmatprep.subr.bf16.mxu0 0
      %7795 = vmatpush1.bf16.msra.mxu0 0
      %7796 = vmatprep.subr.bf16.mxu0 0
      %7797 = vmatpush1.bf16.msra.mxu0 0
      %7798 = vmatprep.subr.bf16.mxu0 0
      %7799 = vmatpush1.bf16.msra.mxu0 0
      %7800 = vmatprep.subr.bf16.mxu0 0
      %7801 = vmatpush1.bf16.msra.mxu0 0
      %7802 = vmatprep.subr.bf16.mxu0 0
      %7803 = vmatpush1.bf16.msra.mxu0 0
      %7804 = vmatprep.subr.bf16.mxu0 0
      %7805 = vmatpush1.bf16.msra.mxu0 0
      %7806 = vmatprep.mubr.bf16.mxu0 0
      %7807 = vmatmul.mubr.bf16.gmra.mrb[0].mxu0 %v1293
      %v7808 = vpop.f32.mrb[0].mxu0
      %v7809 = vadd.f32 %v7768, %v7808
      %v7810 = vpop.f32.mrb[0].mxu0
      %v7811 = vadd.f32 %v7770, %v7810
      %v7812 = vpop.f32.mrb[0].mxu0
      %v7813 = vpop.f32.mrb[0].mxu0
      %7814 = vdwg.mxu0
      %7815 = vmatprep.subr.bf16.mxu0 0
      %7816 = vmatpush1.bf16.msra.mxu0 %v4363
      %7817 = vmatprep.subr.bf16.mxu0 0
      %7818 = vmatpush1.bf16.msra.mxu0 %v4388
      %7819 = vmatprep.subr.bf16.mxu0 0
      %7820 = vmatpush1.bf16.msra.mxu0 %v4413
      %7821 = vmatprep.subr.bf16.mxu0 0
      %7822 = vmatpush1.bf16.msra.mxu0 %v4438
      %7823 = vmatprep.subr.bf16.mxu0 0
      %7824 = vmatpush1.bf16.msra.mxu0 %v4463
      %7825 = vmatprep.subr.bf16.mxu0 0
      %7826 = vmatpush1.bf16.msra.mxu0 %v4488
      %7827 = vmatprep.subr.bf16.mxu0 0
      %7828 = vmatpush1.bf16.msra.mxu0 %v4513
      %7829 = vmatprep.subr.bf16.mxu0 0
      %7830 = vmatpush1.bf16.msra.mxu0 %v4538
      %7831 = vmatprep.subr.bf16.mxu0 0
      %7832 = vmatpush1.bf16.msra.mxu0 %v4563
      %7833 = vmatprep.subr.bf16.mxu0 0
      %7834 = vmatpush1.bf16.msra.mxu0 %v4588
      %7835 = vmatprep.subr.bf16.mxu0 0
      %7836 = vmatpush1.bf16.msra.mxu0 %v4613
      %7837 = vmatprep.subr.bf16.mxu0 0
      %7838 = vmatpush1.bf16.msra.mxu0 %v4638
      %7839 = vmatprep.subr.bf16.mxu0 0
      %7840 = vmatpush1.bf16.msra.mxu0 %v4663
      %7841 = vmatprep.subr.bf16.mxu0 0
      %7842 = vmatpush1.bf16.msra.mxu0 %v4688
      %7843 = vmatprep.subr.bf16.mxu0 0
      %7844 = vmatpush1.bf16.msra.mxu0 %v4713
      %7845 = vmatprep.subr.bf16.mxu0 0
      %7846 = vmatpush1.bf16.msra.mxu0 %v4738
      %7847 = vmatprep.mubr.bf16.mxu0 %v1290
      %7848 = vmatmul.mubr.bf16.gmra.mrb[0].mxu0 %v1289
      %v7849 = vpop.f32.mrb[0].mxu0
      %v7850 = vadd.f32 0.0, %v7849
      %v7851 = vpop.f32.mrb[0].mxu0
      %v7852 = vpop.f32.mrb[0].mxu0
      %v7853 = vpop.f32.mrb[0].mxu0
      %7854 = vdwg.mxu0
      %7855 = vmatprep.subr.bf16.mxu0 0
      %7856 = vmatpush1.bf16.msra.mxu0 %v4763
      %7857 = vmatprep.subr.bf16.mxu0 0
      %7858 = vmatpush1.bf16.msra.mxu0 %v4788
      %7859 = vmatprep.subr.bf16.mxu0 0
      %7860 = vmatpush1.bf16.msra.mxu0 %v4813
      %7861 = vmatprep.subr.bf16.mxu0 0
      %7862 = vmatpush1.bf16.msra.mxu0 %v4838
      %7863 = vmatprep.subr.bf16.mxu0 0
      %7864 = vmatpush1.bf16.msra.mxu0 %v4863
      %7865 = vmatprep.subr.bf16.mxu0 0
      %7866 = vmatpush1.bf16.msra.mxu0 %v4888
      %7867 = vmatprep.subr.bf16.mxu0 0
      %7868 = vmatpush1.bf16.msra.mxu0 %v4913
      %7869 = vmatprep.subr.bf16.mxu0 0
      %7870 = vmatpush1.bf16.msra.mxu0 %v4938
      %7871 = vmatprep.subr.bf16.mxu0 0
      %7872 = vmatpush1.bf16.msra.mxu0 %v4963
      %7873 = vmatprep.subr.bf16.mxu0 0
      %7874 = vmatpush1.bf16.msra.mxu0 %v4988
      %7875 = vmatprep.subr.bf16.mxu0 0
      %7876 = vmatpush1.bf16.msra.mxu0 %v5013
      %7877 = vmatprep.subr.bf16.mxu0 0
      %7878 = vmatpush1.bf16.msra.mxu0 %v5038
      %7879 = vmatprep.subr.bf16.mxu0 0
      %7880 = vmatpush1.bf16.msra.mxu0 %v5063
      %7881 = vmatprep.subr.bf16.mxu0 0
      %7882 = vmatpush1.bf16.msra.mxu0 %v5088
      %7883 = vmatprep.subr.bf16.mxu0 0
      %7884 = vmatpush1.bf16.msra.mxu0 %v5113
      %7885 = vmatprep.subr.bf16.mxu0 0
      %7886 = vmatpush1.bf16.msra.mxu0 %v5138
      %7887 = vmatprep.mubr.bf16.mxu0 %v1292
      %7888 = vmatmul.mubr.bf16.gmra.mrb[0].mxu0 %v1291
      %v7889 = vpop.f32.mrb[0].mxu0
      %v7890 = vadd.f32 %v7850, %v7889
      %v7891 = vpop.f32.mrb[0].mxu0
      %v7892 = vpop.f32.mrb[0].mxu0
      %v7893 = vpop.f32.mrb[0].mxu0
      %7894 = vdwg.mxu0
      %7895 = vmatprep.subr.bf16.mxu0 0
      %7896 = vmatpush1.bf16.msra.mxu0 %v5163
      %7897 = vmatprep.subr.bf16.mxu0 0
      %7898 = vmatpush1.bf16.msra.mxu0 %v5188
      %7899 = vmatprep.subr.bf16.mxu0 0
      %7900 = vmatpush1.bf16.msra.mxu0 %v5213
      %7901 = vmatprep.subr.bf16.mxu0 0
      %7902 = vmatpush1.bf16.msra.mxu0 %v5238
      %7903 = vmatprep.subr.bf16.mxu0 0
      %7904 = vmatpush1.bf16.msra.mxu0 %v5263
      %7905 = vmatprep.subr.bf16.mxu0 0
      %7906 = vmatpush1.bf16.msra.mxu0 %v5288
      %7907 = vmatprep.subr.bf16.mxu0 0
      %7908 = vmatpush1.bf16.msra.mxu0 %v5313
      %7909 = vmatprep.subr.bf16.mxu0 0
      %7910 = vmatpush1.bf16.msra.mxu0 %v5338
      %7911 = vmatprep.subr.bf16.mxu0 0
      %7912 = vmatpush1.bf16.msra.mxu0 0
      %7913 = vmatprep.subr.bf16.mxu0 0
      %7914 = vmatpush1.bf16.msra.mxu0 0
      %7915 = vmatprep.subr.bf16.mxu0 0
      %7916 = vmatpush1.bf16.msra.mxu0 0
      %7917 = vmatprep.subr.bf16.mxu0 0
      %7918 = vmatpush1.bf16.msra.mxu0 0
      %7919 = vmatprep.subr.bf16.mxu0 0
      %7920 = vmatpush1.bf16.msra.mxu0 0
      %7921 = vmatprep.subr.bf16.mxu0 0
      %7922 = vmatpush1.bf16.msra.mxu0 0
      %7923 = vmatprep.subr.bf16.mxu0 0
      %7924 = vmatpush1.bf16.msra.mxu0 0
      %7925 = vmatprep.subr.bf16.mxu0 0
      %7926 = vmatpush1.bf16.msra.mxu0 0
      %7927 = vmatprep.mubr.bf16.mxu0 0
      %7928 = vmatmul.mubr.bf16.gmra.mrb[0].mxu0 %v1293
      %v7929 = vpop.f32.mrb[0].mxu0
      %v7930 = vadd.f32 %v7890, %v7929
      %v7931 = vpop.f32.mrb[0].mxu0
      %v7932 = vpop.f32.mrb[0].mxu0
      %v7933 = vpop.f32.mrb[0].mxu0
      %7934 = vdwg.mxu0
      %v7935 = vadd.f32 %v213, %v6456
      %v7936 = vadd.f32 %v214, %v6458
      %v7937 = vadd.f32 %v215, %v6579
      %v7938 = vadd.f32 %v216, %v6581
      %v7939 = vadd.f32 %v217, %v6702
      %v7940 = vadd.f32 %v218, %v6704
      %v7941 = vadd.f32 %v219, %v6825
      %v7942 = vadd.f32 %v220, %v6827
      %v7943 = vadd.f32 %v221, %v6948
      %v7944 = vadd.f32 %v222, %v6950
      %v7945 = vadd.f32 %v223, %v7071
      %v7946 = vadd.f32 %v224, %v7073
      %v7947 = vadd.f32 %v225, %v7194
      %v7948 = vadd.f32 %v226, %v7196
      %v7949 = vadd.f32 %v227, %v7317
      %v7950 = vadd.f32 %v228, %v7319
      %v7951 = vadd.f32 %v229, %v7440
      %v7952 = vadd.f32 %v230, %v7442
      %v7953 = vadd.f32 %v231, %v7563
      %v7954 = vadd.f32 %v232, %v7565
      %v7955 = vadd.f32 %v233, %v7686
      %v7956 = vadd.f32 %v234, %v7688
      %v7957 = vadd.f32 %v235, %v7809
      %v7958 = vadd.f32 %v236, %v7811
      %v7959 = vadd.f32 %v237, %v7930
      %7960 = vst [vmem:[#allocation2] sm:$0xff] %v7935
      %7961 = vst [vmem:[#allocation2 + $0x8] sm:$0xff] %v7936
      %7962 = vst [vmem:[#allocation2 + $0x10] sm:$0xff] %v7937
      %7963 = vst [vmem:[#allocation2 + $0x18] sm:$0xff] %v7938
      %7964 = vst [vmem:[#allocation2 + $0x20] sm:$0xff] %v7939
      %7965 = vst [vmem:[#allocation2 + $0x28] sm:$0xff] %v7940
      %7966 = vst [vmem:[#allocation2 + $0x30] sm:$0xff] %v7941
      %7967 = vst [vmem:[#allocation2 + $0x38] sm:$0xff] %v7942
      %7968 = vst [vmem:[#allocation2 + $0x40] sm:$0xff] %v7943
      %7969 = vst [vmem:[#allocation2 + $0x48] sm:$0xff] %v7944
      %7970 = vst [vmem:[#allocation2 + $0x50] sm:$0xff] %v7945
      %7971 = vst [vmem:[#allocation2 + $0x58] sm:$0xff] %v7946
      %7972 = vst [vmem:[#allocation2 + $0x60] sm:$0xff] %v7947
      %7973 = vst [vmem:[#allocation2 + $0x68] sm:$0xff] %v7948
      %7974 = vst [vmem:[#allocation2 + $0x70] sm:$0xff] %v7949
      %7975 = vst [vmem:[#allocation2 + $0x78] sm:$0xff] %v7950
      %7976 = vst [vmem:[#allocation2 + $0x80] sm:$0xff] %v7951
      %7977 = vst [vmem:[#allocation2 + $0x88] sm:$0xff] %v7952
      %7978 = vst [vmem:[#allocation2 + $0x90] sm:$0xff] %v7953
      %7979 = vst [vmem:[#allocation2 + $0x98] sm:$0xff] %v7954
      %7980 = vst [vmem:[#allocation2 + $0xa0] sm:$0xff] %v7955
      %7981 = vst [vmem:[#allocation2 + $0xa8] sm:$0xff] %v7956
      %7982 = vst [vmem:[#allocation2 + $0xb0] sm:$0xff] %v7957
      %7983 = vst [vmem:[#allocation2 + $0xb8] sm:$0xff] %v7958
      %7984 = vst [vmem:[#allocation2 + $0xc0] sm:$0xff] %v7959
      %p7985 = scmp.eq.s32.totalorder %s14, 4
      // Predicated region
      $region37: #{spectra_forward.5} parent=31 // pred_check
        %p7986 = pneg %p7985
      $region38: #{spectra_forward.5} parent=31 // pred_check_branch
        %7988 = sbr.rel (%p7986) target = $region40
      $region39: #{spectra_forward.5} parent=31 // pred_region
        %v7989 = vld [vmem:[#allocation2] sm:$0xff]
        %v7990 = vld [vmem:[#allocation2 + $0x8] sm:$0xff]
        %v7991 = vld [vmem:[#allocation2 + $0x10] sm:$0xff]
        %v7992 = vld [vmem:[#allocation2 + $0x18] sm:$0xff]
        %v7993 = vld [vmem:[#allocation2 + $0x20] sm:$0xff]
        %v7994 = vld [vmem:[#allocation2 + $0x28] sm:$0xff]
        %v7995 = vld [vmem:[#allocation2 + $0x30] sm:$0xff]
        %v7996 = vld [vmem:[#allocation2 + $0x38] sm:$0xff]
        %v7997 = vld [vmem:[#allocation2 + $0x40] sm:$0xff]
        %v7998 = vld [vmem:[#allocation2 + $0x48] sm:$0xff]
        %v7999 = vld [vmem:[#allocation2 + $0x50] sm:$0xff]
        %v8000 = vld [vmem:[#allocation2 + $0x58] sm:$0xff]
        %v8001 = vld [vmem:[#allocation2 + $0x60] sm:$0xff]
        %v8002 = vld [vmem:[#allocation2 + $0x68] sm:$0xff]
        %v8003 = vld [vmem:[#allocation2 + $0x70] sm:$0xff]
        %v8004 = vld [vmem:[#allocation2 + $0x78] sm:$0xff]
        %v8005 = vld [vmem:[#allocation2 + $0x80] sm:$0xff]
        %v8006 = vld [vmem:[#allocation2 + $0x88] sm:$0xff]
        %v8007 = vld [vmem:[#allocation2 + $0x90] sm:$0xff]
        %v8008 = vld [vmem:[#allocation2 + $0x98] sm:$0xff]
        %v8009 = vld [vmem:[#allocation2 + $0xa0] sm:$0xff]
        %v8010 = vld [vmem:[#allocation2 + $0xa8] sm:$0xff]
        %v8011 = vld [vmem:[#allocation2 + $0xb0] sm:$0xff]
        %v8012 = vld [vmem:[#allocation2 + $0xb8] sm:$0xff]
        %v8013 = vld [vmem:[#allocation2 + $0xc0] sm:$0xff]
        %v8014 = vld [vmem:[%s2] sm:$0xff]
        %v8015 = vld [vmem:[%s2 + $0x8] sm:$0xff]
        %v8016 = vld [vmem:[%s2 + $0x10] sm:$0xff]
        %v8017 = vld [vmem:[%s2 + $0x18] sm:$0x1]
        %v8022 = vlaneseq
        %v8023 = vshrl.u32 %v8022, 7
        %v8024 = vsub.s32 0, %v8023
        %v8025 = vrot.slane %v8014, %v8024
        %v8026 = vlaneseq
        %v8027 = vshrl.u32 %v8026, 7
        %v8028 = vsub.s32 1, %v8027
        %v8029 = vrot.slane %v8014, %v8028
        %v8030 = vlaneseq
        %v8031 = vshrl.u32 %v8030, 7
        %v8032 = vsub.s32 2, %v8031
        %v8033 = vrot.slane %v8014, %v8032
        %v8034 = vlaneseq
        %v8035 = vshrl.u32 %v8034, 7
        %v8036 = vsub.s32 3, %v8035
        %v8037 = vrot.slane %v8014, %v8036
        %v8038 = vlaneseq
        %v8039 = vshrl.u32 %v8038, 7
        %v8040 = vsub.s32 4, %v8039
        %v8041 = vrot.slane %v8014, %v8040
        %v8042 = vlaneseq
        %v8043 = vshrl.u32 %v8042, 7
        %v8044 = vsub.s32 5, %v8043
        %v8045 = vrot.slane %v8014, %v8044
        %v8046 = vlaneseq
        %v8047 = vshrl.u32 %v8046, 7
        %v8048 = vsub.s32 6, %v8047
        %v8049 = vrot.slane %v8014, %v8048
        %v8050 = vlaneseq
        %v8051 = vshrl.u32 %v8050, 7
        %v8052 = vsub.s32 7, %v8051
        %v8053 = vrot.slane %v8014, %v8052
        %v8054 = vlaneseq
        %v8055 = vshrl.u32 %v8054, 7
        %v8056 = vsub.s32 0, %v8055
        %v8057 = vrot.slane %v8015, %v8056
        %v8058 = vlaneseq
        %v8059 = vshrl.u32 %v8058, 7
        %v8060 = vsub.s32 1, %v8059
        %v8061 = vrot.slane %v8015, %v8060
        %v8062 = vlaneseq
        %v8063 = vshrl.u32 %v8062, 7
        %v8064 = vsub.s32 2, %v8063
        %v8065 = vrot.slane %v8015, %v8064
        %v8066 = vlaneseq
        %v8067 = vshrl.u32 %v8066, 7
        %v8068 = vsub.s32 3, %v8067
        %v8069 = vrot.slane %v8015, %v8068
        %v8070 = vlaneseq
        %v8071 = vshrl.u32 %v8070, 7
        %v8072 = vsub.s32 4, %v8071
        %v8073 = vrot.slane %v8015, %v8072
        %v8074 = vlaneseq
        %v8075 = vshrl.u32 %v8074, 7
        %v8076 = vsub.s32 5, %v8075
        %v8077 = vrot.slane %v8015, %v8076
        %v8078 = vlaneseq
        %v8079 = vshrl.u32 %v8078, 7
        %v8080 = vsub.s32 6, %v8079
        %v8081 = vrot.slane %v8015, %v8080
        %v8082 = vlaneseq
        %v8083 = vshrl.u32 %v8082, 7
        %v8084 = vsub.s32 7, %v8083
        %v8085 = vrot.slane %v8015, %v8084
        %v8086 = vlaneseq
        %v8087 = vshrl.u32 %v8086, 7
        %v8088 = vsub.s32 0, %v8087
        %v8089 = vrot.slane %v8016, %v8088
        %v8090 = vlaneseq
        %v8091 = vshrl.u32 %v8090, 7
        %v8092 = vsub.s32 1, %v8091
        %v8093 = vrot.slane %v8016, %v8092
        %v8094 = vlaneseq
        %v8095 = vshrl.u32 %v8094, 7
        %v8096 = vsub.s32 2, %v8095
        %v8097 = vrot.slane %v8016, %v8096
        %v8098 = vlaneseq
        %v8099 = vshrl.u32 %v8098, 7
        %v8100 = vsub.s32 3, %v8099
        %v8101 = vrot.slane %v8016, %v8100
        %v8102 = vlaneseq
        %v8103 = vshrl.u32 %v8102, 7
        %v8104 = vsub.s32 4, %v8103
        %v8105 = vrot.slane %v8016, %v8104
        %v8106 = vlaneseq
        %v8107 = vshrl.u32 %v8106, 7
        %v8108 = vsub.s32 5, %v8107
        %v8109 = vrot.slane %v8016, %v8108
        %v8110 = vlaneseq
        %v8111 = vshrl.u32 %v8110, 7
        %v8112 = vsub.s32 6, %v8111
        %v8113 = vrot.slane %v8016, %v8112
        %v8114 = vlaneseq
        %v8115 = vshrl.u32 %v8114, 7
        %v8116 = vsub.s32 7, %v8115
        %v8117 = vrot.slane %v8016, %v8116
        %v8118 = vlaneseq
        %v8119 = vshrl.u32 %v8118, 7
        %v8120 = vsub.s32 0, %v8119
        %v8121 = vrot.slane %v8017, %v8120
        %v8147 = vadd.f32 %v7989, %v8025
        %v8148 = vadd.f32 %v7990, %v8029
        %v8149 = vadd.f32 %v7991, %v8033
        %v8150 = vadd.f32 %v7992, %v8037
        %v8151 = vadd.f32 %v7993, %v8041
        %v8152 = vadd.f32 %v7994, %v8045
        %v8153 = vadd.f32 %v7995, %v8049
        %v8154 = vadd.f32 %v7996, %v8053
        %v8155 = vadd.f32 %v7997, %v8057
        %v8156 = vadd.f32 %v7998, %v8061
        %v8157 = vadd.f32 %v7999, %v8065
        %v8158 = vadd.f32 %v8000, %v8069
        %v8159 = vadd.f32 %v8001, %v8073
        %v8160 = vadd.f32 %v8002, %v8077
        %v8161 = vadd.f32 %v8003, %v8081
        %v8162 = vadd.f32 %v8004, %v8085
        %v8163 = vadd.f32 %v8005, %v8089
        %v8164 = vadd.f32 %v8006, %v8093
        %v8165 = vadd.f32 %v8007, %v8097
        %v8166 = vadd.f32 %v8008, %v8101
        %v8167 = vadd.f32 %v8009, %v8105
        %v8168 = vadd.f32 %v8010, %v8109
        %v8169 = vadd.f32 %v8011, %v8113
        %v8170 = vadd.f32 %v8012, %v8117
        %v8171 = vadd.f32 %v8013, %v8121
        %v8172 = vmax.f32 %v8147, 0.0
        %v8173 = vmax.f32 %v8148, 0.0
        %v8174 = vmax.f32 %v8149, 0.0
        %v8175 = vmax.f32 %v8150, 0.0
        %v8176 = vmax.f32 %v8151, 0.0
        %v8177 = vmax.f32 %v8152, 0.0
        %v8178 = vmax.f32 %v8153, 0.0
        %v8179 = vmax.f32 %v8154, 0.0
        %v8180 = vmax.f32 %v8155, 0.0
        %v8181 = vmax.f32 %v8156, 0.0
        %v8182 = vmax.f32 %v8157, 0.0
        %v8183 = vmax.f32 %v8158, 0.0
        %v8184 = vmax.f32 %v8159, 0.0
        %v8185 = vmax.f32 %v8160, 0.0
        %v8186 = vmax.f32 %v8161, 0.0
        %v8187 = vmax.f32 %v8162, 0.0
        %v8188 = vmax.f32 %v8163, 0.0
        %v8189 = vmax.f32 %v8164, 0.0
        %v8190 = vmax.f32 %v8165, 0.0
        %v8191 = vmax.f32 %v8166, 0.0
        %v8192 = vmax.f32 %v8167, 0.0
        %v8193 = vmax.f32 %v8168, 0.0
        %v8194 = vmax.f32 %v8169, 0.0
        %v8195 = vmax.f32 %v8170, 0.0
        %v8196 = vmax.f32 %v8171, 0.0
        %8197 = vst [vmem:[%s3] sm:$0xff] %v8172
        %8198 = vst [vmem:[%s3 + $0x8] sm:$0xff] %v8173
        %8199 = vst [vmem:[%s3 + $0x10] sm:$0xff] %v8174
        %8200 = vst [vmem:[%s3 + $0x18] sm:$0xff] %v8175
        %8201 = vst [vmem:[%s3 + $0x20] sm:$0xff] %v8176
        %8202 = vst [vmem:[%s3 + $0x28] sm:$0xff] %v8177
        %8203 = vst [vmem:[%s3 + $0x30] sm:$0xff] %v8178
        %8204 = vst [vmem:[%s3 + $0x38] sm:$0xff] %v8179
        %8205 = vst [vmem:[%s3 + $0x40] sm:$0xff] %v8180
        %8206 = vst [vmem:[%s3 + $0x48] sm:$0xff] %v8181
        %8207 = vst [vmem:[%s3 + $0x50] sm:$0xff] %v8182
        %8208 = vst [vmem:[%s3 + $0x58] sm:$0xff] %v8183
        %8209 = vst [vmem:[%s3 + $0x60] sm:$0xff] %v8184
        %8210 = vst [vmem:[%s3 + $0x68] sm:$0xff] %v8185
        %8211 = vst [vmem:[%s3 + $0x70] sm:$0xff] %v8186
        %8212 = vst [vmem:[%s3 + $0x78] sm:$0xff] %v8187
        %8213 = vst [vmem:[%s3 + $0x80] sm:$0xff] %v8188
        %8214 = vst [vmem:[%s3 + $0x88] sm:$0xff] %v8189
        %8215 = vst [vmem:[%s3 + $0x90] sm:$0xff] %v8190
        %8216 = vst [vmem:[%s3 + $0x98] sm:$0xff] %v8191
        %8217 = vst [vmem:[%s3 + $0xa0] sm:$0xff] %v8192
        %8218 = vst [vmem:[%s3 + $0xa8] sm:$0xff] %v8193
        %8219 = vst [vmem:[%s3 + $0xb0] sm:$0xff] %v8194
        %8220 = vst [vmem:[%s3 + $0xb8] sm:$0xff] %v8195
        %8221 = vst [vmem:[%s3 + $0xc0] sm:$0xff] %v8196
      $region40: #{spectra_forward.5} parent=31 // pred_fallthru
        _
      // Predicated region
      $region41: #{spectra_forward.5} parent=31 // pred_check
        %p8222 = pneg %p100
      $region42: #{spectra_forward.5} parent=31 // pred_check_branch
        %8224 = sbr.rel (%p8222) target = $region44
      $region43: #{spectra_forward.5} parent=31 // pred_region
        _
      $region44: #{spectra_forward.5} parent=31 // pred_fallthru
        _
      // Predicated region
      $region45: #{spectra_forward.5} parent=31 // pred_check
        %p8225 = pneg %p100
      $region46: #{spectra_forward.5} parent=31 // pred_check_branch
        %8227 = sbr.rel (%p8225) target = $region48
      $region47: #{spectra_forward.5} parent=31 // pred_region
        _
      $region48: #{spectra_forward.5} parent=31 // pred_fallthru
        _
    $region32: #{spectra_forward.5} parent=5 // pred_fallthru
      _
    %p8228 = scmp.le.s32.totalorder 2, %s9
    // Predicated region
    $region49: #{spectra_forward.5} parent=5 // pred_check
      %p8229 = pneg %p8228
    $region50: #{spectra_forward.5} parent=5 // pred_check_branch
      %8231 = sbr.rel (%p8229) target = $region52
    $region51: #{spectra_forward.5} parent=5 // pred_region
      %s8232 = ssub.s32 %s9, 2
    $region52: #{spectra_forward.5} parent=5 // pred_fallthru
      _
  $region6: #{spectra_forward.5} parent=0 // loop_footer
    %s13 = sadd.s32 1, %s9
  $region7: #{spectra_forward.5} parent=0 // loop_footer_branch
    %8 = sbr.rel target = $region3
  $region8: #{spectra_forward.5} parent=0 // loop_exit
    _

</llo_original>
